<compile_context>
chip_gen: v7x
topology: tpu7x:2x2x1
jax: 0.10.0
libtpu: 0.0.40
codegen_flags: <defaults>
</compile_context>

<pallas_src>
import jax
import jax.numpy as jnp
from jax.experimental import pallas as pl
from jax.experimental.pallas import tpu as pltpu

X_DIM = 2708
K_PAD = 2816          # 22 * 128: lane-aligned contraction dim for layer 1
N_HID = 1024
Z_DIM = 128
TN1 = 512             # layer-1 output-column tile (2 grid steps; multiple of 256)


def _qnet_fused_kernel(x_ref, w1_ref, s1_ref, b1_ref,
                       w2_ref, s2_ref, b2_ref, w3_ref, b3_ref,
                       o_ref, acc2_ref):
    j = pl.program_id(0)

    # Layer 1, one TN1-wide column tile:
    #   h1_t = relu((x @ dequant(W1[:, tile])) * s1[tile] + b1[tile])
    w1_bf = w1_ref[...].astype(jnp.bfloat16)          # int8 -> bf16 (exact)
    h1 = jnp.dot(x_ref[...], w1_bf, preferred_element_type=jnp.float32)
    h1 = jnp.maximum(h1 * s1_ref[...] + b1_ref[...], 0.0).astype(jnp.bfloat16)

    # Layer 2 partial contraction with the matching TN1-row slab of W2 (f32 acc).
    w2_bf = w2_ref[...].astype(jnp.bfloat16)
    partial = jnp.dot(h1, w2_bf, preferred_element_type=jnp.float32)

    @pl.when(j == 0)
    def _():
        acc2_ref[...] = partial                        # direct write: no zero-init RMW

    @pl.when(j > 0)
    def _():
        acc2_ref[...] += partial

    @pl.when(j == pl.num_programs(0) - 1)
    def _():
        h2 = jnp.maximum(acc2_ref[...] * s2_ref[...] + b2_ref[...], 0.0)
        z = jnp.dot(h2.astype(jnp.bfloat16), w3_ref[...],
                    preferred_element_type=jnp.float32)
        o_ref[...] = (z + b3_ref[...]).astype(o_ref.dtype)


def q_net_forward(x, params):
    """x: (M, 2708) f32 -> (M, 128) f32.  W1/W2 int8 (+per-col scales), W3 bf16."""
    M, K = x.shape
    assert K == X_DIM and M % 8 == 0        # M % 16 == 0 preferred (bf16 sublane packing)
    kp = params["w1q"].shape[0]
    assert kp == K_PAD and N_HID % TN1 == 0
    # Cast to bf16 and zero-pad the contraction dim once on the host.
    xp = jnp.pad(x.astype(jnp.bfloat16), ((0, 0), (0, kp - K)))

    return pl.pallas_call(
        _qnet_fused_kernel,
        out_shape=jax.ShapeDtypeStruct((M, Z_DIM), jnp.float32),
        grid_spec=pltpu.PrefetchScalarGridSpec(
            num_scalar_prefetch=0,
            grid=(N_HID // TN1,),
            in_specs=[
                pl.BlockSpec((M, kp), lambda j: (0, 0)),         # x (bf16, resident)
                pl.BlockSpec((kp, TN1), lambda j: (0, j)),       # W1 int8 column tile
                pl.BlockSpec((1, TN1), lambda j: (0, j)),        # s1 slice
                pl.BlockSpec((1, TN1), lambda j: (0, j)),        # b1 slice
                pl.BlockSpec((TN1, N_HID), lambda j: (j, 0)),    # W2 int8 row slab
                pl.BlockSpec((1, N_HID), lambda j: (0, 0)),      # s2 (resident)
                pl.BlockSpec((1, N_HID), lambda j: (0, 0)),      # b2 (resident)
                pl.BlockSpec((N_HID, Z_DIM), lambda j: (0, 0)),  # W3 bf16 (resident)
                pl.BlockSpec((1, Z_DIM), lambda j: (0, 0)),      # b3 (resident)
            ],
            out_specs=pl.BlockSpec((M, Z_DIM), lambda j: (0, 0)),
            scratch_shapes=[pltpu.VMEM((M, N_HID), jnp.float32)],  # layer-2 accumulator
        ),
        compiler_params=pltpu.CompilerParams(
            # Grid axis carries the layer-2 accumulation -> must run sequentially.
            dimension_semantics=("arbitrary",),
        ),
    )(xp, params["w1q"], params["s1"], params["b1"],
      params["w2q"], params["s2"], params["b2"],
      params["w3"], params["b3"])


def _quantize_per_col(w):
    """Weight-only int8 quantization with per-output-column scales."""
    amax = jnp.max(jnp.abs(w), axis=0, keepdims=True)            # (1, N)
    scale = jnp.where(amax > 0, amax / 127.0, 1.0).astype(jnp.float32)
    wq = jnp.clip(jnp.round(w / scale), -127, 127).astype(jnp.int8)
    return wq, scale


def init_params(key):
    ks = jax.random.split(key, 6)

    def u(k, shape, fan_in):
        bound = 1.0 / jnp.sqrt(fan_in)
        return jax.random.uniform(k, shape, jnp.float32, -bound, bound)

    # Full-precision weights (PyTorch nn.Linear-style uniform init).
    w1 = u(ks[0], (X_DIM, N_HID), X_DIM)
    b1 = u(ks[1], (1, N_HID), X_DIM)
    w2 = u(ks[2], (N_HID, N_HID), N_HID)
    b2 = u(ks[3], (1, N_HID), N_HID)
    w3 = u(ks[4], (N_HID, Z_DIM), N_HID)
    b3 = u(ks[5], (1, Z_DIM), N_HID)

    # Kernel-side params: int8 W1/W2 (+ per-col scales), bf16 W3, f32 biases.
    w1q, s1 = _quantize_per_col(w1)
    w1q = jnp.pad(w1q, ((0, K_PAD - X_DIM), (0, 0)))   # zero rows for padded K
    w2q, s2 = _quantize_per_col(w2)

    params = {
        "w1q": w1q, "s1": s1, "b1": b1,
        "w2q": w2q, "s2": s2, "b2": b2,
        "w3": w3.astype(jnp.bfloat16), "b3": b3,
    }
    full = {"w1": w1, "b1": b1, "w2": w2, "b2": b2, "w3": w3, "b3": b3}
    return params, full


def q_net_reference_quant(x, p):
    """Same quantized bf16/int8 math as the kernel, in plain JAX (bit-level check)."""
    xp = jnp.pad(x.astype(jnp.bfloat16), ((0, 0), (0, p["w1q"].shape[0] - x.shape[1])))
    h = jnp.dot(xp, p["w1q"].astype(jnp.bfloat16), preferred_element_type=jnp.float32)
    h = jnp.maximum(h * p["s1"] + p["b1"], 0.0)
    h = jnp.dot(h.astype(jnp.bfloat16), p["w2q"].astype(jnp.bfloat16),
                preferred_element_type=jnp.float32)
    h = jnp.maximum(h * p["s2"] + p["b2"], 0.0)
    z = jnp.dot(h.astype(jnp.bfloat16), p["w3"], preferred_element_type=jnp.float32)
    return z + p["b3"]


def q_net_reference_f32(x, p):
    """Original module math (eval mode) in full f32 — semantic baseline."""
    hi = jax.lax.Precision.HIGHEST
    h = jnp.maximum(jnp.dot(x, p["w1"], precision=hi) + p["b1"], 0.0)
    h = jnp.maximum(jnp.dot(h, p["w2"], precision=hi) + p["b2"], 0.0)
    return jnp.dot(h, p["w3"], precision=hi) + p["b3"]


if __name__ == "__main__":
    key = jax.random.PRNGKey(0)
    kp_key, kx_key = jax.random.split(key)
    params, full = init_params(kp_key)

    # Feature dims are fixed by the module (2708 -> 1024 -> 1024 -> 128).
    # Batch 64: multiple of 16 (full bf16 sublane packing); still small, and the
    # kernel cost is ~all weight streaming so extra rows are essentially free.
    batch = 64
    x = jax.random.normal(kx_key, (batch, X_DIM), jnp.float32)

    out = jax.block_until_ready(q_net_forward(x, params))

    assert out.shape == (batch, Z_DIM)
    # 1) Kernel vs identical quantized math (tight): only accumulation-split noise.
    ref_q = q_net_reference_quant(x, params)
    assert jnp.allclose(out, ref_q, atol=1e-2, rtol=1e-2), \
        float(jnp.max(jnp.abs(out - ref_q)))
    # 2) Kernel vs the full-precision module (loose): covers int8/bf16 quantization.
    ref_f = q_net_reference_f32(x, full)
    assert jnp.allclose(out, ref_f, atol=5e-2, rtol=5e-2), \
        float(jnp.max(jnp.abs(out - ref_f)))

    print("KERNEL_OK")
</pallas_src>

<mosaic_0001>
module attributes {stable_mosaic.version = 11 : i64} {
  func.func @_qnet_fused_kernel(%arg0: i32, %arg1: memref<64x2816xbf16, #tpu.memory_space<vmem>>, %arg2: memref<2816x512xi8, #tpu.memory_space<vmem>>, %arg3: memref<1x512xf32, #tpu.memory_space<vmem>>, %arg4: memref<1x512xf32, #tpu.memory_space<vmem>>, %arg5: memref<512x1024xi8, #tpu.memory_space<vmem>>, %arg6: memref<1x1024xf32, #tpu.memory_space<vmem>>, %arg7: memref<1x1024xf32, #tpu.memory_space<vmem>>, %arg8: memref<1024x128xbf16, #tpu.memory_space<vmem>>, %arg9: memref<1x128xf32, #tpu.memory_space<vmem>>, %arg10: memref<64x128xf32, #tpu.memory_space<vmem>>, %arg11: memref<64x1024xf32, #tpu.memory_space<vmem>>) attributes {dimension_semantics = [#tpu.dimension_semantics<arbitrary>], iteration_bounds = array<i64: 2>, scalar_prefetch = 0 : i64, scratch_operands = 1 : i64, tpu.core_type = #tpu.core_type<tc>, window_params = [{pipeline_mode = #tpu.pipeline_mode<synchronous>, transform_indices = @transform_0, window_bounds = array<i64: 64, 2816>}, {transform_indices = @transform_1, window_bounds = array<i64: 2816, 512>}, {transform_indices = @transform_2, window_bounds = array<i64: 1, 512>}, {transform_indices = @transform_3, window_bounds = array<i64: 1, 512>}, {transform_indices = @transform_4, window_bounds = array<i64: 512, 1024>}, {pipeline_mode = #tpu.pipeline_mode<synchronous>, transform_indices = @transform_5, window_bounds = array<i64: 1, 1024>}, {pipeline_mode = #tpu.pipeline_mode<synchronous>, transform_indices = @transform_6, window_bounds = array<i64: 1, 1024>}, {pipeline_mode = #tpu.pipeline_mode<synchronous>, transform_indices = @transform_7, window_bounds = array<i64: 1024, 128>}, {pipeline_mode = #tpu.pipeline_mode<synchronous>, transform_indices = @transform_8, window_bounds = array<i64: 1, 128>}, {pipeline_mode = #tpu.pipeline_mode<synchronous>, transform_indices = @transform_9, window_bounds = array<i64: 64, 128>}]} {
    %c0 = arith.constant 0 : index
    %c0_0 = arith.constant 0 : index
    %0 = vector.load %arg2[%c0, %c0_0] : memref<2816x512xi8, #tpu.memory_space<vmem>>, vector<2816x512xi8>
    %1 = arith.sitofp %0 : vector<2816x512xi8> to vector<2816x512xbf16>
    %c0_1 = arith.constant 0 : index
    %c0_2 = arith.constant 0 : index
    %2 = vector.load %arg1[%c0_1, %c0_2] : memref<64x2816xbf16, #tpu.memory_space<vmem>>, vector<64x2816xbf16>
    %cst = arith.constant dense<0.000000e+00> : vector<64x512xf32>
    %3 = tpu.matmul %2, %1, %cst {dimension_numbers = #tpu.dot_dimension_numbers<[1], [0], [0], [1], [0, 0, 1, 1], [], []>} : vector<64x2816xbf16>, vector<2816x512xbf16>, vector<64x512xf32> -> vector<64x512xf32>
    %c0_3 = arith.constant 0 : index
    %c0_4 = arith.constant 0 : index
    %4 = vector.load %arg3[%c0_3, %c0_4] : memref<1x512xf32, #tpu.memory_space<vmem>>, vector<1x512xf32>
    %5 = vector.broadcast %4 : vector<1x512xf32> to vector<64x512xf32>
    %6 = arith.mulf %3, %5 : vector<64x512xf32>
    %c0_5 = arith.constant 0 : index
    %c0_6 = arith.constant 0 : index
    %7 = vector.load %arg4[%c0_5, %c0_6] : memref<1x512xf32, #tpu.memory_space<vmem>>, vector<1x512xf32>
    %8 = vector.broadcast %7 : vector<1x512xf32> to vector<64x512xf32>
    %9 = arith.addf %6, %8 : vector<64x512xf32>
    %cst_7 = arith.constant 0.000000e+00 : f32
    %10 = vector.broadcast %cst_7 : f32 to vector<64x512xf32>
    %11 = arith.maximumf %9, %10 : vector<64x512xf32>
    %12 = arith.truncf %11 : vector<64x512xf32> to vector<64x512xbf16>
    %c0_8 = arith.constant 0 : index
    %c0_9 = arith.constant 0 : index
    %13 = vector.load %arg5[%c0_8, %c0_9] : memref<512x1024xi8, #tpu.memory_space<vmem>>, vector<512x1024xi8>
    %14 = arith.sitofp %13 : vector<512x1024xi8> to vector<512x1024xbf16>
    %cst_10 = arith.constant dense<0.000000e+00> : vector<64x1024xf32>
    %15 = tpu.matmul %12, %14, %cst_10 {dimension_numbers = #tpu.dot_dimension_numbers<[1], [0], [0], [1], [0, 0, 1, 1], [], []>} : vector<64x512xbf16>, vector<512x1024xbf16>, vector<64x1024xf32> -> vector<64x1024xf32>
    %c0_i32 = arith.constant 0 : i32
    %16 = arith.cmpi eq, %arg0, %c0_i32 : i32
    %17 = arith.extui %16 : i1 to i32
    %c0_i32_11 = arith.constant 0 : i32
    %18 = arith.cmpi ne, %17, %c0_i32_11 : i32
    scf.if %18 {
      %c0_15 = arith.constant 0 : index
      %c0_16 = arith.constant 0 : index
      %25 = vector.load %arg11[%c0_15, %c0_16] : memref<64x1024xf32, #tpu.memory_space<vmem>>, vector<64x1024xf32>
      tpu.vector_store %arg11[%c0_15, %c0_16], %15 {strides = array<i32>} : memref<64x1024xf32, #tpu.memory_space<vmem>>, vector<64x1024xf32>,
    } else {
    }
    %c0_i32_12 = arith.constant 0 : i32
    %19 = arith.cmpi sgt, %arg0, %c0_i32_12 : i32
    %20 = arith.extui %19 : i1 to i32
    %c0_i32_13 = arith.constant 0 : i32
    %21 = arith.cmpi ne, %20, %c0_i32_13 : i32
    scf.if %21 {
      %c0_15 = arith.constant 0 : index
      %c0_16 = arith.constant 0 : index
      %25 = vector.load %arg11[%c0_15, %c0_16] : memref<64x1024xf32, #tpu.memory_space<vmem>>, vector<64x1024xf32>
      %26 = arith.addf %25, %15 : vector<64x1024xf32>
      %c0_17 = arith.constant 0 : index
      %c0_18 = arith.constant 0 : index
      %27 = vector.load %arg11[%c0_17, %c0_18] : memref<64x1024xf32, #tpu.memory_space<vmem>>, vector<64x1024xf32>
      tpu.vector_store %arg11[%c0_17, %c0_18], %26 {strides = array<i32>} : memref<64x1024xf32, #tpu.memory_space<vmem>>, vector<64x1024xf32>,
    } else {
    }
    %c1_i32 = arith.constant 1 : i32
    %22 = arith.cmpi eq, %arg0, %c1_i32 : i32
    %23 = arith.extui %22 : i1 to i32
    %c0_i32_14 = arith.constant 0 : i32
    %24 = arith.cmpi ne, %23, %c0_i32_14 : i32
    scf.if %24 {
      %c0_15 = arith.constant 0 : index
      %c0_16 = arith.constant 0 : index
      %25 = vector.load %arg11[%c0_15, %c0_16] : memref<64x1024xf32, #tpu.memory_space<vmem>>, vector<64x1024xf32>
      %c0_17 = arith.constant 0 : index
      %c0_18 = arith.constant 0 : index
      %26 = vector.load %arg6[%c0_17, %c0_18] : memref<1x1024xf32, #tpu.memory_space<vmem>>, vector<1x1024xf32>
      %27 = vector.broadcast %26 : vector<1x1024xf32> to vector<64x1024xf32>
      %28 = arith.mulf %25, %27 : vector<64x1024xf32>
      %c0_19 = arith.constant 0 : index
      %c0_20 = arith.constant 0 : index
      %29 = vector.load %arg7[%c0_19, %c0_20] : memref<1x1024xf32, #tpu.memory_space<vmem>>, vector<1x1024xf32>
      %30 = vector.broadcast %29 : vector<1x1024xf32> to vector<64x1024xf32>
      %31 = arith.addf %28, %30 : vector<64x1024xf32>
      %cst_21 = arith.constant 0.000000e+00 : f32
      %32 = vector.broadcast %cst_21 : f32 to vector<64x1024xf32>
      %33 = arith.maximumf %31, %32 : vector<64x1024xf32>
      %34 = arith.truncf %33 : vector<64x1024xf32> to vector<64x1024xbf16>
      %c0_22 = arith.constant 0 : index
      %c0_23 = arith.constant 0 : index
      %35 = vector.load %arg8[%c0_22, %c0_23] : memref<1024x128xbf16, #tpu.memory_space<vmem>>, vector<1024x128xbf16>
      %cst_24 = arith.constant dense<0.000000e+00> : vector<64x128xf32>
      %36 = tpu.matmul %34, %35, %cst_24 {dimension_numbers = #tpu.dot_dimension_numbers<[1], [0], [0], [1], [0, 0, 1, 1], [], []>} : vector<64x1024xbf16>, vector<1024x128xbf16>, vector<64x128xf32> -> vector<64x128xf32>
      %c0_25 = arith.constant 0 : index
      %c0_26 = arith.constant 0 : index
      %37 = vector.load %arg9[%c0_25, %c0_26] : memref<1x128xf32, #tpu.memory_space<vmem>>, vector<1x128xf32>
      %38 = vector.broadcast %37 : vector<1x128xf32> to vector<64x128xf32>
      %39 = arith.addf %36, %38 : vector<64x128xf32>
      %c0_27 = arith.constant 0 : index
      %c0_28 = arith.constant 0 : index
      %40 = vector.load %arg10[%c0_27, %c0_28] : memref<64x128xf32, #tpu.memory_space<vmem>>, vector<64x128xf32>
      tpu.vector_store %arg10[%c0_27, %c0_28], %39 {strides = array<i32>} : memref<64x128xf32, #tpu.memory_space<vmem>>, vector<64x128xf32>,
    } else {
    }
    return
  }
  func.func @transform_0(%arg0: i32) -> (i32, i32) {
    %c0_i32 = arith.constant 0 : i32
    %c0_i32_0 = arith.constant 0 : i32
    %c0_i32_1 = arith.constant 0 : i32
    return %c0_i32, %c0_i32_0 : i32, i32
  }
  func.func @transform_1(%arg0: i32) -> (i32, i32) {
    %c0_i32 = arith.constant 0 : i32
    %c0_i32_0 = arith.constant 0 : i32
    return %c0_i32, %arg0 : i32, i32
  }
  func.func @transform_2(%arg0: i32) -> (i32, i32) {
    %c0_i32 = arith.constant 0 : i32
    %c0_i32_0 = arith.constant 0 : i32
    return %c0_i32, %arg0 : i32, i32
  }
  func.func @transform_3(%arg0: i32) -> (i32, i32) {
    %c0_i32 = arith.constant 0 : i32
    %c0_i32_0 = arith.constant 0 : i32
    return %c0_i32, %arg0 : i32, i32
  }
  func.func @transform_4(%arg0: i32) -> (i32, i32) {
    %c0_i32 = arith.constant 0 : i32
    %c0_i32_0 = arith.constant 0 : i32
    return %arg0, %c0_i32 : i32, i32
  }
  func.func @transform_5(%arg0: i32) -> (i32, i32) {
    %c0_i32 = arith.constant 0 : i32
    %c0_i32_0 = arith.constant 0 : i32
    %c0_i32_1 = arith.constant 0 : i32
    return %c0_i32, %c0_i32_0 : i32, i32
  }
  func.func @transform_6(%arg0: i32) -> (i32, i32) {
    %c0_i32 = arith.constant 0 : i32
    %c0_i32_0 = arith.constant 0 : i32
    %c0_i32_1 = arith.constant 0 : i32
    return %c0_i32, %c0_i32_0 : i32, i32
  }
  func.func @transform_7(%arg0: i32) -> (i32, i32) {
    %c0_i32 = arith.constant 0 : i32
    %c0_i32_0 = arith.constant 0 : i32
    %c0_i32_1 = arith.constant 0 : i32
    return %c0_i32, %c0_i32_0 : i32, i32
  }
  func.func @transform_8(%arg0: i32) -> (i32, i32) {
    %c0_i32 = arith.constant 0 : i32
    %c0_i32_0 = arith.constant 0 : i32
    %c0_i32_1 = arith.constant 0 : i32
    return %c0_i32, %c0_i32_0 : i32, i32
  }
  func.func @transform_9(%arg0: i32) -> (i32, i32) {
    %c0_i32 = arith.constant 0 : i32
    %c0_i32_0 = arith.constant 0 : i32
    %c0_i32_1 = arith.constant 0 : i32
    return %c0_i32, %c0_i32_0 : i32, i32
  }
}

</mosaic_0001>

<llo_original>
// kernel: tpu_custom_call.1
$region0: #{tpu_custom_call.1}
  #allocation0 [shape = 'u32[]', space=smem, size = 0x4, offset = 0x4, fixed_abs, tag = 'smem constant byte address 0x4 - core index']
  #allocation1 [shape = 'u32[144,128]{1,0:T(1,128)}', space=vmem, size = 0x12000, scoped, tag = 'internal scratch']
  #allocation2 [shape = 'f32[64,1024]{1,0:T(8,128)}', space=vmem, size = 0x40000, scoped, tag = 'scratch operand']
  %s0 = inlined_call_operand.hbm [shape: bf16[64,2816], index: 0, kind: input, shape index: {}]
  %s1 = inlined_call_operand.hbm [shape: s8[2816,1024], index: 1, kind: input, shape index: {}]
  %s2 = inlined_call_operand.hbm [shape: f32[1,1024], index: 2, kind: input, shape index: {}]
  %s3 = inlined_call_operand.hbm [shape: f32[1,1024], index: 3, kind: input, shape index: {}]
  %s4 = inlined_call_operand.hbm [shape: s8[1024,1024], index: 4, kind: input, shape index: {}]
  %s5 = inlined_call_operand.hbm [shape: f32[1,1024], index: 5, kind: input, shape index: {}]
  %s6 = inlined_call_operand.hbm [shape: f32[1,1024], index: 6, kind: input, shape index: {}]
  %s7 = inlined_call_operand.hbm [shape: bf16[1024,128], index: 7, kind: input, shape index: {}]
  %s8 = inlined_call_operand.hbm [shape: f32[1,128], index: 8, kind: input, shape index: {}]
  %s9 = inlined_call_operand.hbm [shape: f32[64,128], index: 9, kind: output, shape index: {}]
  %s10 = sld [smem:[#allocation0]]
  $region117: #{tpu_custom_call.1} parent=0
    _
  %s12 = ssub.s32 1, %s10
  %s13 = scalar_select 0, %s12, %s10
  $region1: #{tpu_custom_call.1} parent=0
    #allocation3 [shape = 'u8[360448]{0}', space=vmem, size = 0x58000, scoped, tag = 'input window, operand 0, single buffered']
    #allocation4 [shape = 's32[2]{0}', space=sflag, size = 0x8, scoped, tag = 'scoped memory for tpu_custom_call.1']
    #allocation5 [shape = 's32[2]{0}', space=sflag, size = 0x8, scoped, tag = 'scoped memory for tpu_custom_call.1']
    #allocation6 [shape = 'u8[2883584]{0}', space=vmem, size = 0x2c0000, scoped, tag = 'input window, operand 1']
    #allocation7 [shape = 's32[2]{0}', space=sflag, size = 0x8, scoped, tag = 'scoped memory for tpu_custom_call.1']
    #allocation8 [shape = 'u8[4096]{0}', space=vmem, size = 0x1000, scoped, tag = 'input window, operand 2']
    #allocation9 [shape = 'u8[4096]{0}', space=vmem, size = 0x1000, scoped, tag = 'input window, operand 3']
    #allocation10 [shape = 's32[2]{0}', space=sflag, size = 0x8, scoped, tag = 'scoped memory for tpu_custom_call.1']
    #allocation11 [shape = 'u8[1048576]{0}', space=vmem, size = 0x100000, scoped, tag = 'input window, operand 4']
    #allocation12 [shape = 'u8[4096]{0}', space=vmem, size = 0x1000, scoped, tag = 'input window, operand 5, single buffered']
    #allocation13 [shape = 's32[1]{0}', space=sflag, size = 0x4, scoped, tag = 'scoped memory for tpu_custom_call.1']
    #allocation14 [shape = 'u8[4096]{0}', space=vmem, size = 0x1000, scoped, tag = 'input window, operand 6, single buffered']
    #allocation15 [shape = 'u8[262144]{0}', space=vmem, size = 0x40000, scoped, tag = 'input window, operand 7, single buffered']
    #allocation16 [shape = 's32[1]{0}', space=sflag, size = 0x4, scoped, tag = 'scoped memory for tpu_custom_call.1']
    #allocation17 [shape = 'u8[512]{0}', space=vmem, size = 0x400, scoped, tag = 'input window, operand 8, single buffered']
    #allocation18 [shape = 'u8[32768]{0}', space=vmem, size = 0x8000, scoped, tag = 'output window, operand 0, single buffered']
    %14 = vsyncpa [#allocation4], 0
    %15 = vsyncpa [#allocation7], 0
    %s16 = scalar_lea.sflag [#allocation7], 1
    %17 = vsyncpa %s16, 0
    %18 = vsyncpa [#allocation10], 0
    %s19 = scalar_lea.sflag [#allocation10], 1
    %20 = vsyncpa %s19, 0
    %21 = vsyncpa [#allocation13], 0
    %22 = vsyncpa [#allocation16], 0
    %23 = vsyncpa [#allocation5], 0
    loop: start=0, step=1, limit=4
    $region2: #{tpu_custom_call.1} parent=1 // loop_pre_header
      _
    $region3: #{tpu_custom_call.1} parent=1 // loop_header
      %s25 = sphi 0, %s29
      %p26 = scmp.ge.s32.totalorder %s25, 4
      %s33 = sphi 0, %s33
      %s35 = sphi 0, %s33
      %s36 = sphi 0, %s35
      %s50 = sphi 0, %s36
      %s56 = sphi 0, %s58
      %s59 = sphi 0, %s56
      %s60 = sphi 0, %s59
      %s76 = sphi 0, %s60
      %s82 = sphi 0, %s84
      %s85 = sphi 0, %s82
      %s86 = sphi 0, %s85
      %s102 = sphi 0, %s86
      %s108 = sphi 0, %s110
      %s111 = sphi 0, %s108
      %s112 = sphi 0, %s111
      %s128 = sphi 0, %s112
      %s134 = sphi 0, %s136
      %s137 = sphi 0, %s134
      %s138 = sphi 0, %s137
      %s154 = sphi 0, %s138
      %s158 = sphi 0, %s158
      %s160 = sphi 0, %s158
      %s161 = sphi 0, %s160
      %s175 = sphi 0, %s161
      %s179 = sphi 0, %s179
      %s181 = sphi 0, %s179
      %s182 = sphi 0, %s181
      %s196 = sphi 0, %s182
      %s200 = sphi 0, %s200
      %s202 = sphi 0, %s200
      %s203 = sphi 0, %s202
      %s217 = sphi 0, %s203
      %s221 = sphi 0, %s221
      %s223 = sphi 0, %s221
      %s224 = sphi 0, %s223
      %s238 = sphi 0, %s224
      %s242 = sphi 0, %s242
      %s244 = sphi 0, %s242
      %s245 = sphi 0, %s244
      %s259 = sphi 0, %s245
    $region4: #{tpu_custom_call.1} parent=1 // loop_header_branch
      %28 = sbr.rel (%p26) target = $region8
    $region5: #{tpu_custom_call.1} parent=1 // loop_body
      %s30 = ssub.s32 %s25, 1
      %s31 = ssub.s32 %s25, 2
      %s32 = sadd.s32 %s25, 1
      %s34 = sadd.s32 %s33, 1
      %p37 = scmp.eq.s32.totalorder %s25, 1
      %p38 = scmp.ne.s32.totalorder %s33, %s35
      %p39 = scmp.eq.s32.totalorder %s25, 0
      %p40 = por %p38, %p39
      %p41 = scmp.ne.s32.totalorder %s33, %s35
      %p42 = scmp.eq.s32.totalorder %s30, 1
      %p43 = por %p41, %p42
      %p44 = scmp.ne.s32.totalorder %s35, %s36
      %p45 = scmp.eq.s32.totalorder %s30, 0
      %p46 = por %p44, %p45
      %p47 = scmp.ne.s32.totalorder %s35, %s36
      %p48 = scmp.eq.s32.totalorder %s31, 1
      %p49 = por %p47, %p48
      %p51 = scmp.ne.s32.totalorder %s36, %s50
      %p52 = scmp.eq.s32.totalorder %s31, 0
      %p53 = por %p51, %p52
      %s54 = ssub.s32 %s25, %s32
      %p55 = scmp.eq.s32.totalorder %s54, 0
      %s57 = sadd.s32 %s56, 1
      %s58 = scalar_select %p55, %s56, %s57
      %p61 = pneg %p55
      %p62 = scmp.eq.s32.totalorder %s25, 1
      %p63 = por %p61, %p62
      %p64 = scmp.ne.s32.totalorder %s56, %s59
      %p65 = scmp.eq.s32.totalorder %s25, 0
      %p66 = por %p64, %p65
      %p67 = scmp.ne.s32.totalorder %s56, %s59
      %p68 = scmp.eq.s32.totalorder %s30, 1
      %p69 = por %p67, %p68
      %p70 = scmp.ne.s32.totalorder %s59, %s60
      %p71 = scmp.eq.s32.totalorder %s30, 0
      %p72 = por %p70, %p71
      %p73 = scmp.ne.s32.totalorder %s59, %s60
      %p74 = scmp.eq.s32.totalorder %s31, 1
      %p75 = por %p73, %p74
      %p77 = scmp.ne.s32.totalorder %s60, %s76
      %p78 = scmp.eq.s32.totalorder %s31, 0
      %p79 = por %p77, %p78
      %s80 = ssub.s32 %s25, %s32
      %p81 = scmp.eq.s32.totalorder %s80, 0
      %s83 = sadd.s32 %s82, 1
      %s84 = scalar_select %p81, %s82, %s83
      %p87 = pneg %p81
      %p88 = scmp.eq.s32.totalorder %s25, 1
      %p89 = por %p87, %p88
      %p90 = scmp.ne.s32.totalorder %s82, %s85
      %p91 = scmp.eq.s32.totalorder %s25, 0
      %p92 = por %p90, %p91
      %p93 = scmp.ne.s32.totalorder %s82, %s85
      %p94 = scmp.eq.s32.totalorder %s30, 1
      %p95 = por %p93, %p94
      %p96 = scmp.ne.s32.totalorder %s85, %s86
      %p97 = scmp.eq.s32.totalorder %s30, 0
      %p98 = por %p96, %p97
      %p99 = scmp.ne.s32.totalorder %s85, %s86
      %p100 = scmp.eq.s32.totalorder %s31, 1
      %p101 = por %p99, %p100
      %p103 = scmp.ne.s32.totalorder %s86, %s102
      %p104 = scmp.eq.s32.totalorder %s31, 0
      %p105 = por %p103, %p104
      %s106 = ssub.s32 %s25, %s32
      %p107 = scmp.eq.s32.totalorder %s106, 0
      %s109 = sadd.s32 %s108, 1
      %s110 = scalar_select %p107, %s108, %s109
      %p113 = pneg %p107
      %p114 = scmp.eq.s32.totalorder %s25, 1
      %p115 = por %p113, %p114
      %p116 = scmp.ne.s32.totalorder %s108, %s111
      %p117 = scmp.eq.s32.totalorder %s25, 0
      %p118 = por %p116, %p117
      %p119 = scmp.ne.s32.totalorder %s108, %s111
      %p120 = scmp.eq.s32.totalorder %s30, 1
      %p121 = por %p119, %p120
      %p122 = scmp.ne.s32.totalorder %s111, %s112
      %p123 = scmp.eq.s32.totalorder %s30, 0
      %p124 = por %p122, %p123
      %p125 = scmp.ne.s32.totalorder %s111, %s112
      %p126 = scmp.eq.s32.totalorder %s31, 1
      %p127 = por %p125, %p126
      %p129 = scmp.ne.s32.totalorder %s112, %s128
      %p130 = scmp.eq.s32.totalorder %s31, 0
      %p131 = por %p129, %p130
      %s132 = ssub.s32 %s25, %s32
      %p133 = scmp.eq.s32.totalorder %s132, 0
      %s135 = sadd.s32 %s134, 1
      %s136 = scalar_select %p133, %s134, %s135
      %p139 = pneg %p133
      %p140 = scmp.eq.s32.totalorder %s25, 1
      %p141 = por %p139, %p140
      %p142 = scmp.ne.s32.totalorder %s134, %s137
      %p143 = scmp.eq.s32.totalorder %s25, 0
      %p144 = por %p142, %p143
      %p145 = scmp.ne.s32.totalorder %s134, %s137
      %p146 = scmp.eq.s32.totalorder %s30, 1
      %p147 = por %p145, %p146
      %p148 = scmp.ne.s32.totalorder %s137, %s138
      %p149 = scmp.eq.s32.totalorder %s30, 0
      %p150 = por %p148, %p149
      %p151 = scmp.ne.s32.totalorder %s137, %s138
      %p152 = scmp.eq.s32.totalorder %s31, 1
      %p153 = por %p151, %p152
      %p155 = scmp.ne.s32.totalorder %s138, %s154
      %p156 = scmp.eq.s32.totalorder %s31, 0
      %p157 = por %p155, %p156
      %s159 = sadd.s32 %s158, 1
      %p162 = scmp.eq.s32.totalorder %s25, 1
      %p163 = scmp.ne.s32.totalorder %s158, %s160
      %p164 = scmp.eq.s32.totalorder %s25, 0
      %p165 = por %p163, %p164
      %p166 = scmp.ne.s32.totalorder %s158, %s160
      %p167 = scmp.eq.s32.totalorder %s30, 1
      %p168 = por %p166, %p167
      %p169 = scmp.ne.s32.totalorder %s160, %s161
      %p170 = scmp.eq.s32.totalorder %s30, 0
      %p171 = por %p169, %p170
      %p172 = scmp.ne.s32.totalorder %s160, %s161
      %p173 = scmp.eq.s32.totalorder %s31, 1
      %p174 = por %p172, %p173
      %p176 = scmp.ne.s32.totalorder %s161, %s175
      %p177 = scmp.eq.s32.totalorder %s31, 0
      %p178 = por %p176, %p177
      %s180 = sadd.s32 %s179, 1
      %p183 = scmp.eq.s32.totalorder %s25, 1
      %p184 = scmp.ne.s32.totalorder %s179, %s181
      %p185 = scmp.eq.s32.totalorder %s25, 0
      %p186 = por %p184, %p185
      %p187 = scmp.ne.s32.totalorder %s179, %s181
      %p188 = scmp.eq.s32.totalorder %s30, 1
      %p189 = por %p187, %p188
      %p190 = scmp.ne.s32.totalorder %s181, %s182
      %p191 = scmp.eq.s32.totalorder %s30, 0
      %p192 = por %p190, %p191
      %p193 = scmp.ne.s32.totalorder %s181, %s182
      %p194 = scmp.eq.s32.totalorder %s31, 1
      %p195 = por %p193, %p194
      %p197 = scmp.ne.s32.totalorder %s182, %s196
      %p198 = scmp.eq.s32.totalorder %s31, 0
      %p199 = por %p197, %p198
      %s201 = sadd.s32 %s200, 1
      %p204 = scmp.eq.s32.totalorder %s25, 1
      %p205 = scmp.ne.s32.totalorder %s200, %s202
      %p206 = scmp.eq.s32.totalorder %s25, 0
      %p207 = por %p205, %p206
      %p208 = scmp.ne.s32.totalorder %s200, %s202
      %p209 = scmp.eq.s32.totalorder %s30, 1
      %p210 = por %p208, %p209
      %p211 = scmp.ne.s32.totalorder %s202, %s203
      %p212 = scmp.eq.s32.totalorder %s30, 0
      %p213 = por %p211, %p212
      %p214 = scmp.ne.s32.totalorder %s202, %s203
      %p215 = scmp.eq.s32.totalorder %s31, 1
      %p216 = por %p214, %p215
      %p218 = scmp.ne.s32.totalorder %s203, %s217
      %p219 = scmp.eq.s32.totalorder %s31, 0
      %p220 = por %p218, %p219
      %s222 = sadd.s32 %s221, 1
      %p225 = scmp.eq.s32.totalorder %s25, 1
      %p226 = scmp.ne.s32.totalorder %s221, %s223
      %p227 = scmp.eq.s32.totalorder %s25, 0
      %p228 = por %p226, %p227
      %p229 = scmp.ne.s32.totalorder %s221, %s223
      %p230 = scmp.eq.s32.totalorder %s30, 1
      %p231 = por %p229, %p230
      %p232 = scmp.ne.s32.totalorder %s223, %s224
      %p233 = scmp.eq.s32.totalorder %s30, 0
      %p234 = por %p232, %p233
      %p235 = scmp.ne.s32.totalorder %s223, %s224
      %p236 = scmp.eq.s32.totalorder %s31, 1
      %p237 = por %p235, %p236
      %p239 = scmp.ne.s32.totalorder %s224, %s238
      %p240 = scmp.eq.s32.totalorder %s31, 0
      %p241 = por %p239, %p240
      %s243 = sadd.s32 %s242, 1
      %p246 = scmp.eq.s32.totalorder %s25, 1
      %p247 = scmp.ne.s32.totalorder %s242, %s244
      %p248 = scmp.eq.s32.totalorder %s25, 0
      %p249 = por %p247, %p248
      %p250 = scmp.ne.s32.totalorder %s242, %s244
      %p251 = scmp.eq.s32.totalorder %s30, 1
      %p252 = por %p250, %p251
      %p253 = scmp.ne.s32.totalorder %s244, %s245
      %p254 = scmp.eq.s32.totalorder %s30, 0
      %p255 = por %p253, %p254
      %p256 = scmp.ne.s32.totalorder %s244, %s245
      %p257 = scmp.eq.s32.totalorder %s31, 1
      %p258 = por %p256, %p257
      %p260 = scmp.ne.s32.totalorder %s245, %s259
      %p261 = scmp.eq.s32.totalorder %s31, 0
      %p262 = por %p260, %p261
      %p263 = scmp.le.s32.totalorder 1, %s25
      %p264 = scmp.lt.s32.totalorder %s25, 3
      %p265 = pnand %p263, %p264
      %p266 = pneg %p265
      // Predicated region
      $region9: #{tpu_custom_call.1} parent=5 // pred_check
        _
      $region10: #{tpu_custom_call.1} parent=5 // pred_check_branch
        %268 = sbr.rel (%p265) target = $region12
      $region11: #{tpu_custom_call.1} parent=5 // pred_region
        %s269 = ssub.s32 %s25, 1
        // Predicated region
        $region13: #{tpu_custom_call.1} parent=11 // pred_check
          %p270 = pneg %p46
        $region14: #{tpu_custom_call.1} parent=11 // pred_check_branch
          %272 = sbr.rel (%p270) target = $region16
        $region15: #{tpu_custom_call.1} parent=11 // pred_region
          %s274 = ssub.s32 11264, 11264
          %275 = vsyncadd [#allocation4], %s274
          %s276 = sshll.u32 [#allocation3], 4
          %s277 = int_to_ptr.vmem [resolvable:$true] %s276
          %282 = dma.hbm_to_vmem [thread:$0]  %s0, 11264, %s277, [#allocation4], 1408, 1408, 88
        $region16: #{tpu_custom_call.1} parent=11 // pred_fallthru
          _
        // Predicated region
        $region17: #{tpu_custom_call.1} parent=11 // pred_check
          %p283 = pneg %p171
        $region18: #{tpu_custom_call.1} parent=11 // pred_check_branch
          %285 = sbr.rel (%p283) target = $region20
        $region19: #{tpu_custom_call.1} parent=11 // pred_region
          %s287 = ssub.s32 128, 128
          %288 = vsyncadd [#allocation13], %s287
          %s290 = sshll.u32 [#allocation12], 4
          %s291 = int_to_ptr.vmem [resolvable:$true] %s290
          %293 = dma.hbm_to_vmem [thread:$0]  %s5, 128, %s291, [#allocation13]
        $region20: #{tpu_custom_call.1} parent=11 // pred_fallthru
          _
        // Predicated region
        $region21: #{tpu_custom_call.1} parent=11 // pred_check
          %p294 = pneg %p192
        $region22: #{tpu_custom_call.1} parent=11 // pred_check_branch
          %296 = sbr.rel (%p294) target = $region24
        $region23: #{tpu_custom_call.1} parent=11 // pred_region
          %s298 = ssub.s32 128, 128
          %299 = vsyncadd [#allocation13], %s298
          %s301 = sshll.u32 [#allocation14], 4
          %s302 = int_to_ptr.vmem [resolvable:$true] %s301
          %304 = dma.hbm_to_vmem [thread:$0]  %s6, 128, %s302, [#allocation13]
        $region24: #{tpu_custom_call.1} parent=11 // pred_fallthru
          _
        // Predicated region
        $region25: #{tpu_custom_call.1} parent=11 // pred_check
          %p305 = pneg %p213
        $region26: #{tpu_custom_call.1} parent=11 // pred_check_branch
          %307 = sbr.rel (%p305) target = $region28
        $region27: #{tpu_custom_call.1} parent=11 // pred_region
          %s309 = ssub.s32 8192, 8192
          %310 = vsyncadd [#allocation16], %s309
          %s311 = sshll.u32 [#allocation15], 4
          %s312 = int_to_ptr.vmem [resolvable:$true] %s311
          %317 = dma.hbm_to_vmem [thread:$0]  %s7, 8192, %s312, [#allocation16], 64, 64, 4
        $region28: #{tpu_custom_call.1} parent=11 // pred_fallthru
          _
        // Predicated region
        $region29: #{tpu_custom_call.1} parent=11 // pred_check
          %p318 = pneg %p234
        $region30: #{tpu_custom_call.1} parent=11 // pred_check_branch
          %320 = sbr.rel (%p318) target = $region32
        $region31: #{tpu_custom_call.1} parent=11 // pred_region
          %s322 = ssub.s32 16, 16
          %323 = vsyncadd [#allocation16], %s322
          %s325 = sshll.u32 [#allocation17], 4
          %s326 = int_to_ptr.vmem [resolvable:$true] %s325
          %328 = dma.hbm_to_vmem [thread:$0]  %s8, 16, %s326, [#allocation16]
        $region32: #{tpu_custom_call.1} parent=11 // pred_fallthru
          _
      $region12: #{tpu_custom_call.1} parent=5 // pred_fallthru
        _
      %p329 = scmp.lt.s32.totalorder %s25, 2
      // Predicated region
      $region33: #{tpu_custom_call.1} parent=5 // pred_check
        %p330 = pneg %p329
      $region34: #{tpu_custom_call.1} parent=5 // pred_check_branch
        %332 = sbr.rel (%p330) target = $region36
      $region35: #{tpu_custom_call.1} parent=5 // pred_region
        // Predicated region
        $region37: #{tpu_custom_call.1} parent=35 // pred_check
          %p333 = pneg %p66
        $region38: #{tpu_custom_call.1} parent=35 // pred_check_branch
          %335 = sbr.rel (%p333) target = $region40
        $region39: #{tpu_custom_call.1} parent=35 // pred_region
          %s336 = sand.u32 %s25, 1
          %s337 = scalar_lea.sflag [#allocation7], %s336
          %s338 = sand.u32 %s56, 1
          %s339 = smul.addr %s338, 2816
          %s340 = scalar_lea.vmem [#allocation6], %s339
          %s341 = smul.u32 4, %s25
          %s343 = ssub.s32 45056, 45056
          %344 = vsyncadd %s337, %s343
          %s345 = smul.addr %s341, 128
          %s346 = scalar_lea.hbm %s1, %s345
          %s347 = sshll.u32 %s340, 4
          %s348 = int_to_ptr.vmem [resolvable:$true] %s347
          %353 = dma.hbm_to_vmem [thread:$0]  %s346, 45056, %s348, %s337, 1024, 512, 32
        $region40: #{tpu_custom_call.1} parent=35 // pred_fallthru
          _
        // Predicated region
        $region41: #{tpu_custom_call.1} parent=35 // pred_check
          %p354 = pneg %p92
        $region42: #{tpu_custom_call.1} parent=35 // pred_check_branch
          %356 = sbr.rel (%p354) target = $region44
        $region43: #{tpu_custom_call.1} parent=35 // pred_region
          %s357 = sand.u32 %s25, 1
          %s358 = scalar_lea.sflag [#allocation7], %s357
          %s359 = sand.u32 %s82, 1
          %s360 = smul.addr %s359, 4
          %s361 = scalar_lea.vmem [#allocation8], %s360
          %s362 = smul.u32 4, %s25
          %s364 = ssub.s32 64, 64
          %365 = vsyncadd %s358, %s364
          %s366 = smul.addr %s362, 16
          %s367 = scalar_lea.hbm %s2, %s366
          %s369 = sshll.u32 %s361, 4
          %s370 = int_to_ptr.vmem [resolvable:$true] %s369
          %372 = dma.hbm_to_vmem [thread:$0]  %s367, 64, %s370, %s358
        $region44: #{tpu_custom_call.1} parent=35 // pred_fallthru
          _
        // Predicated region
        $region45: #{tpu_custom_call.1} parent=35 // pred_check
          %p373 = pneg %p118
        $region46: #{tpu_custom_call.1} parent=35 // pred_check_branch
          %375 = sbr.rel (%p373) target = $region48
        $region47: #{tpu_custom_call.1} parent=35 // pred_region
          %s376 = sand.u32 %s25, 1
          %s377 = scalar_lea.sflag [#allocation10], %s376
          %s378 = sand.u32 %s108, 1
          %s379 = smul.addr %s378, 4
          %s380 = scalar_lea.vmem [#allocation9], %s379
          %s381 = smul.u32 4, %s25
          %s383 = ssub.s32 64, 64
          %384 = vsyncadd %s377, %s383
          %s385 = smul.addr %s381, 16
          %s386 = scalar_lea.hbm %s3, %s385
          %s388 = sshll.u32 %s380, 4
          %s389 = int_to_ptr.vmem [resolvable:$true] %s388
          %391 = dma.hbm_to_vmem [thread:$0]  %s386, 64, %s389, %s377
        $region48: #{tpu_custom_call.1} parent=35 // pred_fallthru
          _
        // Predicated region
        $region49: #{tpu_custom_call.1} parent=35 // pred_check
          %p392 = pneg %p144
        $region50: #{tpu_custom_call.1} parent=35 // pred_check_branch
          %394 = sbr.rel (%p392) target = $region52
        $region51: #{tpu_custom_call.1} parent=35 // pred_region
          %s395 = sand.u32 %s25, 1
          %s396 = scalar_lea.sflag [#allocation10], %s395
          %s397 = sand.u32 %s134, 1
          %s398 = smul.addr %s397, 1024
          %s399 = scalar_lea.vmem [#allocation11], %s398
          %s400 = smul.u32 16, %s25
          %s402 = ssub.s32 16384, 16384
          %403 = vsyncadd %s396, %s402
          %s404 = smul.addr %s400, 8
          %s405 = smul.addr %s404, 128
          %s406 = scalar_lea.hbm %s4, %s405
          %s407 = sshll.u32 %s399, 4
          %s408 = int_to_ptr.vmem [resolvable:$true] %s407
          %413 = dma.hbm_to_vmem [thread:$0]  %s406, 16384, %s408, %s396, 1024, 1024, 64
        $region52: #{tpu_custom_call.1} parent=35 // pred_fallthru
          _
      $region36: #{tpu_custom_call.1} parent=5 // pred_fallthru
        _
      %p414 = scmp.le.s32.totalorder 1, %s25
      %p415 = scmp.lt.s32.totalorder %s25, 3
      %p416 = pnand %p414, %p415
      %p417 = pneg %p416
      // Predicated region
      $region53: #{tpu_custom_call.1} parent=5 // pred_check
        _
      $region54: #{tpu_custom_call.1} parent=5 // pred_check_branch
        %419 = sbr.rel (%p416) target = $region56
      $region55: #{tpu_custom_call.1} parent=5 // pred_region
        %s420 = ssub.s32 %s25, 1
        // Predicated region
        $region57: #{tpu_custom_call.1} parent=55 // pred_check
          %p421 = pneg %p46
        $region58: #{tpu_custom_call.1} parent=55 // pred_check_branch
          %423 = sbr.rel (%p421) target = $region60
        $region59: #{tpu_custom_call.1} parent=55 // pred_region
          %424 = dma.done [#allocation4], 11264
        $region60: #{tpu_custom_call.1} parent=55 // pred_fallthru
          _
        %s425 = sand.u32 %s30, 1
        %s426 = scalar_lea.sflag [#allocation7], %s425
        %s427 = sand.u32 %s59, 1
        %s428 = smul.addr %s427, 2816
        %s429 = scalar_lea.vmem [#allocation6], %s428
        // Predicated region
        $region61: #{tpu_custom_call.1} parent=55 // pred_check
          %p430 = pneg %p72
        $region62: #{tpu_custom_call.1} parent=55 // pred_check_branch
          %432 = sbr.rel (%p430) target = $region64
        $region63: #{tpu_custom_call.1} parent=55 // pred_region
          %433 = dma.done %s426, 45056
        $region64: #{tpu_custom_call.1} parent=55 // pred_fallthru
          _
        %s434 = sand.u32 %s30, 1
        %s435 = scalar_lea.sflag [#allocation7], %s434
        %s436 = sand.u32 %s85, 1
        %s437 = smul.addr %s436, 4
        %s438 = scalar_lea.vmem [#allocation8], %s437
        // Predicated region
        $region65: #{tpu_custom_call.1} parent=55 // pred_check
          %p439 = pneg %p98
        $region66: #{tpu_custom_call.1} parent=55 // pred_check_branch
          %441 = sbr.rel (%p439) target = $region68
        $region67: #{tpu_custom_call.1} parent=55 // pred_region
          %442 = dma.done %s435, 64
        $region68: #{tpu_custom_call.1} parent=55 // pred_fallthru
          _
        %s443 = sand.u32 %s30, 1
        %s444 = scalar_lea.sflag [#allocation10], %s443
        %s445 = sand.u32 %s111, 1
        %s446 = smul.addr %s445, 4
        %s447 = scalar_lea.vmem [#allocation9], %s446
        // Predicated region
        $region69: #{tpu_custom_call.1} parent=55 // pred_check
          %p448 = pneg %p124
        $region70: #{tpu_custom_call.1} parent=55 // pred_check_branch
          %450 = sbr.rel (%p448) target = $region72
        $region71: #{tpu_custom_call.1} parent=55 // pred_region
          %451 = dma.done %s444, 64
        $region72: #{tpu_custom_call.1} parent=55 // pred_fallthru
          _
        %s452 = sand.u32 %s30, 1
        %s453 = scalar_lea.sflag [#allocation10], %s452
        %s454 = sand.u32 %s137, 1
        %s455 = smul.addr %s454, 1024
        %s456 = scalar_lea.vmem [#allocation11], %s455
        // Predicated region
        $region73: #{tpu_custom_call.1} parent=55 // pred_check
          %p457 = pneg %p150
        $region74: #{tpu_custom_call.1} parent=55 // pred_check_branch
          %459 = sbr.rel (%p457) target = $region76
        $region75: #{tpu_custom_call.1} parent=55 // pred_region
          %460 = dma.done %s453, 16384
        $region76: #{tpu_custom_call.1} parent=55 // pred_fallthru
          _
        // Predicated region
        $region77: #{tpu_custom_call.1} parent=55 // pred_check
          %p461 = pneg %p171
        $region78: #{tpu_custom_call.1} parent=55 // pred_check_branch
          %463 = sbr.rel (%p461) target = $region80
        $region79: #{tpu_custom_call.1} parent=55 // pred_region
          %464 = dma.done [#allocation13], 128
        $region80: #{tpu_custom_call.1} parent=55 // pred_fallthru
          _
        // Predicated region
        $region81: #{tpu_custom_call.1} parent=55 // pred_check
          %p465 = pneg %p192
        $region82: #{tpu_custom_call.1} parent=55 // pred_check_branch
          %467 = sbr.rel (%p465) target = $region84
        $region83: #{tpu_custom_call.1} parent=55 // pred_region
          %468 = dma.done [#allocation13], 128
        $region84: #{tpu_custom_call.1} parent=55 // pred_fallthru
          _
        // Predicated region
        $region85: #{tpu_custom_call.1} parent=55 // pred_check
          %p469 = pneg %p213
        $region86: #{tpu_custom_call.1} parent=55 // pred_check_branch
          %471 = sbr.rel (%p469) target = $region88
        $region87: #{tpu_custom_call.1} parent=55 // pred_region
          %472 = dma.done [#allocation16], 8192
        $region88: #{tpu_custom_call.1} parent=55 // pred_fallthru
          _
        // Predicated region
        $region89: #{tpu_custom_call.1} parent=55 // pred_check
          %p473 = pneg %p234
        $region90: #{tpu_custom_call.1} parent=55 // pred_check_branch
          %475 = sbr.rel (%p473) target = $region92
        $region91: #{tpu_custom_call.1} parent=55 // pred_region
          %476 = dma.done [#allocation16], 16
        $region92: #{tpu_custom_call.1} parent=55 // pred_fallthru
          _
        %p477 = pneg %p46
        %p478 = pneg %p43
        %s479 = sand.u32 %s30, 1
        %s480 = scalar_lea.sflag [#allocation7], %s479
        %s481 = sand.u32 %s59, 1
        %s482 = smul.addr %s481, 2816
        %s483 = scalar_lea.vmem [#allocation6], %s482
        %p484 = pneg %p72
        %p485 = pneg %p69
        %s486 = sand.u32 %s30, 1
        %s487 = scalar_lea.sflag [#allocation7], %s486
        %s488 = sand.u32 %s85, 1
        %s489 = smul.addr %s488, 4
        %s490 = scalar_lea.vmem [#allocation8], %s489
        %p491 = pneg %p98
        %p492 = pneg %p95
        %s493 = sand.u32 %s30, 1
        %s494 = scalar_lea.sflag [#allocation10], %s493
        %s495 = sand.u32 %s111, 1
        %s496 = smul.addr %s495, 4
        %s497 = scalar_lea.vmem [#allocation9], %s496
        %p498 = pneg %p124
        %p499 = pneg %p121
        %s500 = sand.u32 %s30, 1
        %s501 = scalar_lea.sflag [#allocation10], %s500
        %s502 = sand.u32 %s137, 1
        %s503 = smul.addr %s502, 1024
        %s504 = scalar_lea.vmem [#allocation11], %s503
        %p505 = pneg %p150
        %p506 = pneg %p147
        %p507 = pneg %p171
        %p508 = pneg %p168
        %p509 = pneg %p192
        %p510 = pneg %p189
        %p511 = pneg %p213
        %p512 = pneg %p210
        %p513 = pneg %p234
        %p514 = pneg %p231
        %p515 = pneg %p255
        %p516 = pneg %p252
        %s517 = smul.u32 4, %s30
        %s518 = smul.u32 4, %s30
        %s519 = smul.u32 4, %s30
        %s520 = smul.u32 16, %s30
        %v522 = vld [vmem:[%s429] sm:$0xff]
        %v523 = vld [vmem:[%s429 + $0x8] sm:$0xff]
        %v524 = vld [vmem:[%s429 + $0x10] sm:$0xff]
        %v525 = vld [vmem:[%s429 + $0x18] sm:$0xff]
        %v526 = vld [vmem:[%s429 + $0x20] sm:$0xff]
        %v527 = vld [vmem:[%s429 + $0x28] sm:$0xff]
        %v528 = vld [vmem:[%s429 + $0x30] sm:$0xff]
        %v529 = vld [vmem:[%s429 + $0x38] sm:$0xff]
        %v530 = vld [vmem:[%s429 + $0x40] sm:$0xff]
        %v531 = vld [vmem:[%s429 + $0x48] sm:$0xff]
        %v532 = vld [vmem:[%s429 + $0x50] sm:$0xff]
        %v533 = vld [vmem:[%s429 + $0x58] sm:$0xff]
        %v534 = vld [vmem:[%s429 + $0x60] sm:$0xff]
        %v535 = vld [vmem:[%s429 + $0x68] sm:$0xff]
        %v536 = vld [vmem:[%s429 + $0x70] sm:$0xff]
        %v537 = vld [vmem:[%s429 + $0x78] sm:$0xff]
        %v538 = vld [vmem:[%s429 + $0x80] sm:$0xff]
        %v539 = vld [vmem:[%s429 + $0x88] sm:$0xff]
        %v540 = vld [vmem:[%s429 + $0x90] sm:$0xff]
        %v541 = vld [vmem:[%s429 + $0x98] sm:$0xff]
        %v542 = vld [vmem:[%s429 + $0xa0] sm:$0xff]
        %v543 = vld [vmem:[%s429 + $0xa8] sm:$0xff]
        %v544 = vld [vmem:[%s429 + $0xb0] sm:$0xff]
        %v545 = vld [vmem:[%s429 + $0xb8] sm:$0xff]
        %v546 = vld [vmem:[%s429 + $0xc0] sm:$0xff]
        %v547 = vld [vmem:[%s429 + $0xc8] sm:$0xff]
        %v548 = vld [vmem:[%s429 + $0xd0] sm:$0xff]
        %v549 = vld [vmem:[%s429 + $0xd8] sm:$0xff]
        %v550 = vld [vmem:[%s429 + $0xe0] sm:$0xff]
        %v551 = vld [vmem:[%s429 + $0xe8] sm:$0xff]
        %v552 = vld [vmem:[%s429 + $0xf0] sm:$0xff]
        %v553 = vld [vmem:[%s429 + $0xf8] sm:$0xff]
        %v554 = vld [vmem:[%s429 + $0x100] sm:$0xff]
        %v555 = vld [vmem:[%s429 + $0x108] sm:$0xff]
        %v556 = vld [vmem:[%s429 + $0x110] sm:$0xff]
        %v557 = vld [vmem:[%s429 + $0x118] sm:$0xff]
        %v558 = vld [vmem:[%s429 + $0x120] sm:$0xff]
        %v559 = vld [vmem:[%s429 + $0x128] sm:$0xff]
        %v560 = vld [vmem:[%s429 + $0x130] sm:$0xff]
        %v561 = vld [vmem:[%s429 + $0x138] sm:$0xff]
        %v562 = vld [vmem:[%s429 + $0x140] sm:$0xff]
        %v563 = vld [vmem:[%s429 + $0x148] sm:$0xff]
        %v564 = vld [vmem:[%s429 + $0x150] sm:$0xff]
        %v565 = vld [vmem:[%s429 + $0x158] sm:$0xff]
        %v566 = vld [vmem:[%s429 + $0x160] sm:$0xff]
        %v567 = vld [vmem:[%s429 + $0x168] sm:$0xff]
        %v568 = vld [vmem:[%s429 + $0x170] sm:$0xff]
        %v569 = vld [vmem:[%s429 + $0x178] sm:$0xff]
        %v570 = vld [vmem:[%s429 + $0x180] sm:$0xff]
        %v571 = vld [vmem:[%s429 + $0x188] sm:$0xff]
        %v572 = vld [vmem:[%s429 + $0x190] sm:$0xff]
        %v573 = vld [vmem:[%s429 + $0x198] sm:$0xff]
        %v574 = vld [vmem:[%s429 + $0x1a0] sm:$0xff]
        %v575 = vld [vmem:[%s429 + $0x1a8] sm:$0xff]
        %v576 = vld [vmem:[%s429 + $0x1b0] sm:$0xff]
        %v577 = vld [vmem:[%s429 + $0x1b8] sm:$0xff]
        %v578 = vld [vmem:[%s429 + $0x1c0] sm:$0xff]
        %v579 = vld [vmem:[%s429 + $0x1c8] sm:$0xff]
        %v580 = vld [vmem:[%s429 + $0x1d0] sm:$0xff]
        %v581 = vld [vmem:[%s429 + $0x1d8] sm:$0xff]
        %v582 = vld [vmem:[%s429 + $0x1e0] sm:$0xff]
        %v583 = vld [vmem:[%s429 + $0x1e8] sm:$0xff]
        %v584 = vld [vmem:[%s429 + $0x1f0] sm:$0xff]
        %v585 = vld [vmem:[%s429 + $0x1f8] sm:$0xff]
        %v586 = vld [vmem:[%s429 + $0x200] sm:$0xff]
        %v587 = vld [vmem:[%s429 + $0x208] sm:$0xff]
        %v588 = vld [vmem:[%s429 + $0x210] sm:$0xff]
        %v589 = vld [vmem:[%s429 + $0x218] sm:$0xff]
        %v590 = vld [vmem:[%s429 + $0x220] sm:$0xff]
        %v591 = vld [vmem:[%s429 + $0x228] sm:$0xff]
        %v592 = vld [vmem:[%s429 + $0x230] sm:$0xff]
        %v593 = vld [vmem:[%s429 + $0x238] sm:$0xff]
        %v594 = vld [vmem:[%s429 + $0x240] sm:$0xff]
        %v595 = vld [vmem:[%s429 + $0x248] sm:$0xff]
        %v596 = vld [vmem:[%s429 + $0x250] sm:$0xff]
        %v597 = vld [vmem:[%s429 + $0x258] sm:$0xff]
        %v598 = vld [vmem:[%s429 + $0x260] sm:$0xff]
        %v599 = vld [vmem:[%s429 + $0x268] sm:$0xff]
        %v600 = vld [vmem:[%s429 + $0x270] sm:$0xff]
        %v601 = vld [vmem:[%s429 + $0x278] sm:$0xff]
        %v602 = vld [vmem:[%s429 + $0x280] sm:$0xff]
        %v603 = vld [vmem:[%s429 + $0x288] sm:$0xff]
        %v604 = vld [vmem:[%s429 + $0x290] sm:$0xff]
        %v605 = vld [vmem:[%s429 + $0x298] sm:$0xff]
        %v606 = vld [vmem:[%s429 + $0x2a0] sm:$0xff]
        %v607 = vld [vmem:[%s429 + $0x2a8] sm:$0xff]
        %v608 = vld [vmem:[%s429 + $0x2b0] sm:$0xff]
        %v609 = vld [vmem:[%s429 + $0x2b8] sm:$0xff]
        %v610 = vld [vmem:[%s429 + $0x2c0] sm:$0xff]
        %v611 = vld [vmem:[%s429 + $0x2c8] sm:$0xff]
        %v612 = vld [vmem:[%s429 + $0x2d0] sm:$0xff]
        %v613 = vld [vmem:[%s429 + $0x2d8] sm:$0xff]
        %v614 = vld [vmem:[%s429 + $0x2e0] sm:$0xff]
        %v615 = vld [vmem:[%s429 + $0x2e8] sm:$0xff]
        %v616 = vld [vmem:[%s429 + $0x2f0] sm:$0xff]
        %v617 = vld [vmem:[%s429 + $0x2f8] sm:$0xff]
        %v618 = vld [vmem:[%s429 + $0x300] sm:$0xff]
        %v619 = vld [vmem:[%s429 + $0x308] sm:$0xff]
        %v620 = vld [vmem:[%s429 + $0x310] sm:$0xff]
        %v621 = vld [vmem:[%s429 + $0x318] sm:$0xff]
        %v622 = vld [vmem:[%s429 + $0x320] sm:$0xff]
        %v623 = vld [vmem:[%s429 + $0x328] sm:$0xff]
        %v624 = vld [vmem:[%s429 + $0x330] sm:$0xff]
        %v625 = vld [vmem:[%s429 + $0x338] sm:$0xff]
        %v626 = vld [vmem:[%s429 + $0x340] sm:$0xff]
        %v627 = vld [vmem:[%s429 + $0x348] sm:$0xff]
        %v628 = vld [vmem:[%s429 + $0x350] sm:$0xff]
        %v629 = vld [vmem:[%s429 + $0x358] sm:$0xff]
        %v630 = vld [vmem:[%s429 + $0x360] sm:$0xff]
        %v631 = vld [vmem:[%s429 + $0x368] sm:$0xff]
        %v632 = vld [vmem:[%s429 + $0x370] sm:$0xff]
        %v633 = vld [vmem:[%s429 + $0x378] sm:$0xff]
        %v634 = vld [vmem:[%s429 + $0x380] sm:$0xff]
        %v635 = vld [vmem:[%s429 + $0x388] sm:$0xff]
        %v636 = vld [vmem:[%s429 + $0x390] sm:$0xff]
        %v637 = vld [vmem:[%s429 + $0x398] sm:$0xff]
        %v638 = vld [vmem:[%s429 + $0x3a0] sm:$0xff]
        %v639 = vld [vmem:[%s429 + $0x3a8] sm:$0xff]
        %v640 = vld [vmem:[%s429 + $0x3b0] sm:$0xff]
        %v641 = vld [vmem:[%s429 + $0x3b8] sm:$0xff]
        %v642 = vld [vmem:[%s429 + $0x3c0] sm:$0xff]
        %v643 = vld [vmem:[%s429 + $0x3c8] sm:$0xff]
        %v644 = vld [vmem:[%s429 + $0x3d0] sm:$0xff]
        %v645 = vld [vmem:[%s429 + $0x3d8] sm:$0xff]
        %v646 = vld [vmem:[%s429 + $0x3e0] sm:$0xff]
        %v647 = vld [vmem:[%s429 + $0x3e8] sm:$0xff]
        %v648 = vld [vmem:[%s429 + $0x3f0] sm:$0xff]
        %v649 = vld [vmem:[%s429 + $0x3f8] sm:$0xff]
        %v650 = vld [vmem:[%s429 + $0x400] sm:$0xff]
        %v651 = vld [vmem:[%s429 + $0x408] sm:$0xff]
        %v652 = vld [vmem:[%s429 + $0x410] sm:$0xff]
        %v653 = vld [vmem:[%s429 + $0x418] sm:$0xff]
        %v654 = vld [vmem:[%s429 + $0x420] sm:$0xff]
        %v655 = vld [vmem:[%s429 + $0x428] sm:$0xff]
        %v656 = vld [vmem:[%s429 + $0x430] sm:$0xff]
        %v657 = vld [vmem:[%s429 + $0x438] sm:$0xff]
        %v658 = vld [vmem:[%s429 + $0x440] sm:$0xff]
        %v659 = vld [vmem:[%s429 + $0x448] sm:$0xff]
        %v660 = vld [vmem:[%s429 + $0x450] sm:$0xff]
        %v661 = vld [vmem:[%s429 + $0x458] sm:$0xff]
        %v662 = vld [vmem:[%s429 + $0x460] sm:$0xff]
        %v663 = vld [vmem:[%s429 + $0x468] sm:$0xff]
        %v664 = vld [vmem:[%s429 + $0x470] sm:$0xff]
        %v665 = vld [vmem:[%s429 + $0x478] sm:$0xff]
        %v666 = vld [vmem:[%s429 + $0x480] sm:$0xff]
        %v667 = vld [vmem:[%s429 + $0x488] sm:$0xff]
        %v668 = vld [vmem:[%s429 + $0x490] sm:$0xff]
        %v669 = vld [vmem:[%s429 + $0x498] sm:$0xff]
        %v670 = vld [vmem:[%s429 + $0x4a0] sm:$0xff]
        %v671 = vld [vmem:[%s429 + $0x4a8] sm:$0xff]
        %v672 = vld [vmem:[%s429 + $0x4b0] sm:$0xff]
        %v673 = vld [vmem:[%s429 + $0x4b8] sm:$0xff]
        %v674 = vld [vmem:[%s429 + $0x4c0] sm:$0xff]
        %v675 = vld [vmem:[%s429 + $0x4c8] sm:$0xff]
        %v676 = vld [vmem:[%s429 + $0x4d0] sm:$0xff]
        %v677 = vld [vmem:[%s429 + $0x4d8] sm:$0xff]
        %v678 = vld [vmem:[%s429 + $0x4e0] sm:$0xff]
        %v679 = vld [vmem:[%s429 + $0x4e8] sm:$0xff]
        %v680 = vld [vmem:[%s429 + $0x4f0] sm:$0xff]
        %v681 = vld [vmem:[%s429 + $0x4f8] sm:$0xff]
        %v682 = vld [vmem:[%s429 + $0x500] sm:$0xff]
        %v683 = vld [vmem:[%s429 + $0x508] sm:$0xff]
        %v684 = vld [vmem:[%s429 + $0x510] sm:$0xff]
        %v685 = vld [vmem:[%s429 + $0x518] sm:$0xff]
        %v686 = vld [vmem:[%s429 + $0x520] sm:$0xff]
        %v687 = vld [vmem:[%s429 + $0x528] sm:$0xff]
        %v688 = vld [vmem:[%s429 + $0x530] sm:$0xff]
        %v689 = vld [vmem:[%s429 + $0x538] sm:$0xff]
        %v690 = vld [vmem:[%s429 + $0x540] sm:$0xff]
        %v691 = vld [vmem:[%s429 + $0x548] sm:$0xff]
        %v692 = vld [vmem:[%s429 + $0x550] sm:$0xff]
        %v693 = vld [vmem:[%s429 + $0x558] sm:$0xff]
        %v694 = vld [vmem:[%s429 + $0x560] sm:$0xff]
        %v695 = vld [vmem:[%s429 + $0x568] sm:$0xff]
        %v696 = vld [vmem:[%s429 + $0x570] sm:$0xff]
        %v697 = vld [vmem:[%s429 + $0x578] sm:$0xff]
        %v698 = vld [vmem:[%s429 + $0x580] sm:$0xff]
        %v699 = vld [vmem:[%s429 + $0x588] sm:$0xff]
        %v700 = vld [vmem:[%s429 + $0x590] sm:$0xff]
        %v701 = vld [vmem:[%s429 + $0x598] sm:$0xff]
        %v702 = vld [vmem:[%s429 + $0x5a0] sm:$0xff]
        %v703 = vld [vmem:[%s429 + $0x5a8] sm:$0xff]
        %v704 = vld [vmem:[%s429 + $0x5b0] sm:$0xff]
        %v705 = vld [vmem:[%s429 + $0x5b8] sm:$0xff]
        %v706 = vld [vmem:[%s429 + $0x5c0] sm:$0xff]
        %v707 = vld [vmem:[%s429 + $0x5c8] sm:$0xff]
        %v708 = vld [vmem:[%s429 + $0x5d0] sm:$0xff]
        %v709 = vld [vmem:[%s429 + $0x5d8] sm:$0xff]
        %v710 = vld [vmem:[%s429 + $0x5e0] sm:$0xff]
        %v711 = vld [vmem:[%s429 + $0x5e8] sm:$0xff]
        %v712 = vld [vmem:[%s429 + $0x5f0] sm:$0xff]
        %v713 = vld [vmem:[%s429 + $0x5f8] sm:$0xff]
        %v714 = vld [vmem:[%s429 + $0x600] sm:$0xff]
        %v715 = vld [vmem:[%s429 + $0x608] sm:$0xff]
        %v716 = vld [vmem:[%s429 + $0x610] sm:$0xff]
        %v717 = vld [vmem:[%s429 + $0x618] sm:$0xff]
        %v718 = vld [vmem:[%s429 + $0x620] sm:$0xff]
        %v719 = vld [vmem:[%s429 + $0x628] sm:$0xff]
        %v720 = vld [vmem:[%s429 + $0x630] sm:$0xff]
        %v721 = vld [vmem:[%s429 + $0x638] sm:$0xff]
        %v722 = vld [vmem:[%s429 + $0x640] sm:$0xff]
        %v723 = vld [vmem:[%s429 + $0x648] sm:$0xff]
        %v724 = vld [vmem:[%s429 + $0x650] sm:$0xff]
        %v725 = vld [vmem:[%s429 + $0x658] sm:$0xff]
        %v726 = vld [vmem:[%s429 + $0x660] sm:$0xff]
        %v727 = vld [vmem:[%s429 + $0x668] sm:$0xff]
        %v728 = vld [vmem:[%s429 + $0x670] sm:$0xff]
        %v729 = vld [vmem:[%s429 + $0x678] sm:$0xff]
        %v730 = vld [vmem:[%s429 + $0x680] sm:$0xff]
        %v731 = vld [vmem:[%s429 + $0x688] sm:$0xff]
        %v732 = vld [vmem:[%s429 + $0x690] sm:$0xff]
        %v733 = vld [vmem:[%s429 + $0x698] sm:$0xff]
        %v734 = vld [vmem:[%s429 + $0x6a0] sm:$0xff]
        %v735 = vld [vmem:[%s429 + $0x6a8] sm:$0xff]
        %v736 = vld [vmem:[%s429 + $0x6b0] sm:$0xff]
        %v737 = vld [vmem:[%s429 + $0x6b8] sm:$0xff]
        %v738 = vld [vmem:[%s429 + $0x6c0] sm:$0xff]
        %v739 = vld [vmem:[%s429 + $0x6c8] sm:$0xff]
        %v740 = vld [vmem:[%s429 + $0x6d0] sm:$0xff]
        %v741 = vld [vmem:[%s429 + $0x6d8] sm:$0xff]
        %v742 = vld [vmem:[%s429 + $0x6e0] sm:$0xff]
        %v743 = vld [vmem:[%s429 + $0x6e8] sm:$0xff]
        %v744 = vld [vmem:[%s429 + $0x6f0] sm:$0xff]
        %v745 = vld [vmem:[%s429 + $0x6f8] sm:$0xff]
        %v746 = vld [vmem:[%s429 + $0x700] sm:$0xff]
        %v747 = vld [vmem:[%s429 + $0x708] sm:$0xff]
        %v748 = vld [vmem:[%s429 + $0x710] sm:$0xff]
        %v749 = vld [vmem:[%s429 + $0x718] sm:$0xff]
        %v750 = vld [vmem:[%s429 + $0x720] sm:$0xff]
        %v751 = vld [vmem:[%s429 + $0x728] sm:$0xff]
        %v752 = vld [vmem:[%s429 + $0x730] sm:$0xff]
        %v753 = vld [vmem:[%s429 + $0x738] sm:$0xff]
        %v754 = vld [vmem:[%s429 + $0x740] sm:$0xff]
        %v755 = vld [vmem:[%s429 + $0x748] sm:$0xff]
        %v756 = vld [vmem:[%s429 + $0x750] sm:$0xff]
        %v757 = vld [vmem:[%s429 + $0x758] sm:$0xff]
        %v758 = vld [vmem:[%s429 + $0x760] sm:$0xff]
        %v759 = vld [vmem:[%s429 + $0x768] sm:$0xff]
        %v760 = vld [vmem:[%s429 + $0x770] sm:$0xff]
        %v761 = vld [vmem:[%s429 + $0x778] sm:$0xff]
        %v762 = vld [vmem:[%s429 + $0x780] sm:$0xff]
        %v763 = vld [vmem:[%s429 + $0x788] sm:$0xff]
        %v764 = vld [vmem:[%s429 + $0x790] sm:$0xff]
        %v765 = vld [vmem:[%s429 + $0x798] sm:$0xff]
        %v766 = vld [vmem:[%s429 + $0x7a0] sm:$0xff]
        %v767 = vld [vmem:[%s429 + $0x7a8] sm:$0xff]
        %v768 = vld [vmem:[%s429 + $0x7b0] sm:$0xff]
        %v769 = vld [vmem:[%s429 + $0x7b8] sm:$0xff]
        %v770 = vld [vmem:[%s429 + $0x7c0] sm:$0xff]
        %v771 = vld [vmem:[%s429 + $0x7c8] sm:$0xff]
        %v772 = vld [vmem:[%s429 + $0x7d0] sm:$0xff]
        %v773 = vld [vmem:[%s429 + $0x7d8] sm:$0xff]
        %v774 = vld [vmem:[%s429 + $0x7e0] sm:$0xff]
        %v775 = vld [vmem:[%s429 + $0x7e8] sm:$0xff]
        %v776 = vld [vmem:[%s429 + $0x7f0] sm:$0xff]
        %v777 = vld [vmem:[%s429 + $0x7f8] sm:$0xff]
        %v778 = vld [vmem:[%s429 + $0x800] sm:$0xff]
        %v779 = vld [vmem:[%s429 + $0x808] sm:$0xff]
        %v780 = vld [vmem:[%s429 + $0x810] sm:$0xff]
        %v781 = vld [vmem:[%s429 + $0x818] sm:$0xff]
        %v782 = vld [vmem:[%s429 + $0x820] sm:$0xff]
        %v783 = vld [vmem:[%s429 + $0x828] sm:$0xff]
        %v784 = vld [vmem:[%s429 + $0x830] sm:$0xff]
        %v785 = vld [vmem:[%s429 + $0x838] sm:$0xff]
        %v786 = vld [vmem:[%s429 + $0x840] sm:$0xff]
        %v787 = vld [vmem:[%s429 + $0x848] sm:$0xff]
        %v788 = vld [vmem:[%s429 + $0x850] sm:$0xff]
        %v789 = vld [vmem:[%s429 + $0x858] sm:$0xff]
        %v790 = vld [vmem:[%s429 + $0x860] sm:$0xff]
        %v791 = vld [vmem:[%s429 + $0x868] sm:$0xff]
        %v792 = vld [vmem:[%s429 + $0x870] sm:$0xff]
        %v793 = vld [vmem:[%s429 + $0x878] sm:$0xff]
        %v794 = vld [vmem:[%s429 + $0x880] sm:$0xff]
        %v795 = vld [vmem:[%s429 + $0x888] sm:$0xff]
        %v796 = vld [vmem:[%s429 + $0x890] sm:$0xff]
        %v797 = vld [vmem:[%s429 + $0x898] sm:$0xff]
        %v798 = vld [vmem:[%s429 + $0x8a0] sm:$0xff]
        %v799 = vld [vmem:[%s429 + $0x8a8] sm:$0xff]
        %v800 = vld [vmem:[%s429 + $0x8b0] sm:$0xff]
        %v801 = vld [vmem:[%s429 + $0x8b8] sm:$0xff]
        %v802 = vld [vmem:[%s429 + $0x8c0] sm:$0xff]
        %v803 = vld [vmem:[%s429 + $0x8c8] sm:$0xff]
        %v804 = vld [vmem:[%s429 + $0x8d0] sm:$0xff]
        %v805 = vld [vmem:[%s429 + $0x8d8] sm:$0xff]
        %v806 = vld [vmem:[%s429 + $0x8e0] sm:$0xff]
        %v807 = vld [vmem:[%s429 + $0x8e8] sm:$0xff]
        %v808 = vld [vmem:[%s429 + $0x8f0] sm:$0xff]
        %v809 = vld [vmem:[%s429 + $0x8f8] sm:$0xff]
        %v810 = vld [vmem:[%s429 + $0x900] sm:$0xff]
        %v811 = vld [vmem:[%s429 + $0x908] sm:$0xff]
        %v812 = vld [vmem:[%s429 + $0x910] sm:$0xff]
        %v813 = vld [vmem:[%s429 + $0x918] sm:$0xff]
        %v814 = vld [vmem:[%s429 + $0x920] sm:$0xff]
        %v815 = vld [vmem:[%s429 + $0x928] sm:$0xff]
        %v816 = vld [vmem:[%s429 + $0x930] sm:$0xff]
        %v817 = vld [vmem:[%s429 + $0x938] sm:$0xff]
        %v818 = vld [vmem:[%s429 + $0x940] sm:$0xff]
        %v819 = vld [vmem:[%s429 + $0x948] sm:$0xff]
        %v820 = vld [vmem:[%s429 + $0x950] sm:$0xff]
        %v821 = vld [vmem:[%s429 + $0x958] sm:$0xff]
        %v822 = vld [vmem:[%s429 + $0x960] sm:$0xff]
        %v823 = vld [vmem:[%s429 + $0x968] sm:$0xff]
        %v824 = vld [vmem:[%s429 + $0x970] sm:$0xff]
        %v825 = vld [vmem:[%s429 + $0x978] sm:$0xff]
        %v826 = vld [vmem:[%s429 + $0x980] sm:$0xff]
        %v827 = vld [vmem:[%s429 + $0x988] sm:$0xff]
        %v828 = vld [vmem:[%s429 + $0x990] sm:$0xff]
        %v829 = vld [vmem:[%s429 + $0x998] sm:$0xff]
        %v830 = vld [vmem:[%s429 + $0x9a0] sm:$0xff]
        %v831 = vld [vmem:[%s429 + $0x9a8] sm:$0xff]
        %v832 = vld [vmem:[%s429 + $0x9b0] sm:$0xff]
        %v833 = vld [vmem:[%s429 + $0x9b8] sm:$0xff]
        %v834 = vld [vmem:[%s429 + $0x9c0] sm:$0xff]
        %v835 = vld [vmem:[%s429 + $0x9c8] sm:$0xff]
        %v836 = vld [vmem:[%s429 + $0x9d0] sm:$0xff]
        %v837 = vld [vmem:[%s429 + $0x9d8] sm:$0xff]
        %v838 = vld [vmem:[%s429 + $0x9e0] sm:$0xff]
        %v839 = vld [vmem:[%s429 + $0x9e8] sm:$0xff]
        %v840 = vld [vmem:[%s429 + $0x9f0] sm:$0xff]
        %v841 = vld [vmem:[%s429 + $0x9f8] sm:$0xff]
        %v842 = vld [vmem:[%s429 + $0xa00] sm:$0xff]
        %v843 = vld [vmem:[%s429 + $0xa08] sm:$0xff]
        %v844 = vld [vmem:[%s429 + $0xa10] sm:$0xff]
        %v845 = vld [vmem:[%s429 + $0xa18] sm:$0xff]
        %v846 = vld [vmem:[%s429 + $0xa20] sm:$0xff]
        %v847 = vld [vmem:[%s429 + $0xa28] sm:$0xff]
        %v848 = vld [vmem:[%s429 + $0xa30] sm:$0xff]
        %v849 = vld [vmem:[%s429 + $0xa38] sm:$0xff]
        %v850 = vld [vmem:[%s429 + $0xa40] sm:$0xff]
        %v851 = vld [vmem:[%s429 + $0xa48] sm:$0xff]
        %v852 = vld [vmem:[%s429 + $0xa50] sm:$0xff]
        %v853 = vld [vmem:[%s429 + $0xa58] sm:$0xff]
        %v854 = vld [vmem:[%s429 + $0xa60] sm:$0xff]
        %v855 = vld [vmem:[%s429 + $0xa68] sm:$0xff]
        %v856 = vld [vmem:[%s429 + $0xa70] sm:$0xff]
        %v857 = vld [vmem:[%s429 + $0xa78] sm:$0xff]
        %v858 = vld [vmem:[%s429 + $0xa80] sm:$0xff]
        %v859 = vld [vmem:[%s429 + $0xa88] sm:$0xff]
        %v860 = vld [vmem:[%s429 + $0xa90] sm:$0xff]
        %v861 = vld [vmem:[%s429 + $0xa98] sm:$0xff]
        %v862 = vld [vmem:[%s429 + $0xaa0] sm:$0xff]
        %v863 = vld [vmem:[%s429 + $0xaa8] sm:$0xff]
        %v864 = vld [vmem:[%s429 + $0xab0] sm:$0xff]
        %v865 = vld [vmem:[%s429 + $0xab8] sm:$0xff]
        %v866 = vld [vmem:[%s429 + $0xac0] sm:$0xff]
        %v867 = vld [vmem:[%s429 + $0xac8] sm:$0xff]
        %v868 = vld [vmem:[%s429 + $0xad0] sm:$0xff]
        %v869 = vld [vmem:[%s429 + $0xad8] sm:$0xff]
        %v870 = vld [vmem:[%s429 + $0xae0] sm:$0xff]
        %v871 = vld [vmem:[%s429 + $0xae8] sm:$0xff]
        %v872 = vld [vmem:[%s429 + $0xaf0] sm:$0xff]
        %v873 = vld [vmem:[%s429 + $0xaf8] sm:$0xff]
        %v874 = vunpack.c.l.s8.bf16 %v522
        %v875 = vunpack.c.l.s8.bf16 %v523
        %v876 = vunpack.c.l.s8.bf16 %v524
        %v877 = vunpack.c.l.s8.bf16 %v525
        %v878 = vunpack.c.h.s8.bf16 %v522
        %v879 = vunpack.c.h.s8.bf16 %v523
        %v880 = vunpack.c.h.s8.bf16 %v524
        %v881 = vunpack.c.h.s8.bf16 %v525
        %v882 = vunpack.c.l.s8.bf16 %v526
        %v883 = vunpack.c.l.s8.bf16 %v527
        %v884 = vunpack.c.l.s8.bf16 %v528
        %v885 = vunpack.c.l.s8.bf16 %v529
        %v886 = vunpack.c.h.s8.bf16 %v526
        %v887 = vunpack.c.h.s8.bf16 %v527
        %v888 = vunpack.c.h.s8.bf16 %v528
        %v889 = vunpack.c.h.s8.bf16 %v529
        %v890 = vunpack.c.l.s8.bf16 %v530
        %v891 = vunpack.c.l.s8.bf16 %v531
        %v892 = vunpack.c.l.s8.bf16 %v532
        %v893 = vunpack.c.l.s8.bf16 %v533
        %v894 = vunpack.c.h.s8.bf16 %v530
        %v895 = vunpack.c.h.s8.bf16 %v531
        %v896 = vunpack.c.h.s8.bf16 %v532
        %v897 = vunpack.c.h.s8.bf16 %v533
        %v898 = vunpack.c.l.s8.bf16 %v534
        %v899 = vunpack.c.l.s8.bf16 %v535
        %v900 = vunpack.c.l.s8.bf16 %v536
        %v901 = vunpack.c.l.s8.bf16 %v537
        %v902 = vunpack.c.h.s8.bf16 %v534
        %v903 = vunpack.c.h.s8.bf16 %v535
        %v904 = vunpack.c.h.s8.bf16 %v536
        %v905 = vunpack.c.h.s8.bf16 %v537
        %v906 = vunpack.c.l.s8.bf16 %v538
        %v907 = vunpack.c.l.s8.bf16 %v539
        %v908 = vunpack.c.l.s8.bf16 %v540
        %v909 = vunpack.c.l.s8.bf16 %v541
        %v910 = vunpack.c.h.s8.bf16 %v538
        %v911 = vunpack.c.h.s8.bf16 %v539
        %v912 = vunpack.c.h.s8.bf16 %v540
        %v913 = vunpack.c.h.s8.bf16 %v541
        %v914 = vunpack.c.l.s8.bf16 %v542
        %v915 = vunpack.c.l.s8.bf16 %v543
        %v916 = vunpack.c.l.s8.bf16 %v544
        %v917 = vunpack.c.l.s8.bf16 %v545
        %v918 = vunpack.c.h.s8.bf16 %v542
        %v919 = vunpack.c.h.s8.bf16 %v543
        %v920 = vunpack.c.h.s8.bf16 %v544
        %v921 = vunpack.c.h.s8.bf16 %v545
        %v922 = vunpack.c.l.s8.bf16 %v546
        %v923 = vunpack.c.l.s8.bf16 %v547
        %v924 = vunpack.c.l.s8.bf16 %v548
        %v925 = vunpack.c.l.s8.bf16 %v549
        %v926 = vunpack.c.h.s8.bf16 %v546
        %v927 = vunpack.c.h.s8.bf16 %v547
        %v928 = vunpack.c.h.s8.bf16 %v548
        %v929 = vunpack.c.h.s8.bf16 %v549
        %v930 = vunpack.c.l.s8.bf16 %v550
        %v931 = vunpack.c.l.s8.bf16 %v551
        %v932 = vunpack.c.l.s8.bf16 %v552
        %v933 = vunpack.c.l.s8.bf16 %v553
        %v934 = vunpack.c.h.s8.bf16 %v550
        %v935 = vunpack.c.h.s8.bf16 %v551
        %v936 = vunpack.c.h.s8.bf16 %v552
        %v937 = vunpack.c.h.s8.bf16 %v553
        %v938 = vunpack.c.l.s8.bf16 %v554
        %v939 = vunpack.c.l.s8.bf16 %v555
        %v940 = vunpack.c.l.s8.bf16 %v556
        %v941 = vunpack.c.l.s8.bf16 %v557
        %v942 = vunpack.c.h.s8.bf16 %v554
        %v943 = vunpack.c.h.s8.bf16 %v555
        %v944 = vunpack.c.h.s8.bf16 %v556
        %v945 = vunpack.c.h.s8.bf16 %v557
        %v946 = vunpack.c.l.s8.bf16 %v558
        %v947 = vunpack.c.l.s8.bf16 %v559
        %v948 = vunpack.c.l.s8.bf16 %v560
        %v949 = vunpack.c.l.s8.bf16 %v561
        %v950 = vunpack.c.h.s8.bf16 %v558
        %v951 = vunpack.c.h.s8.bf16 %v559
        %v952 = vunpack.c.h.s8.bf16 %v560
        %v953 = vunpack.c.h.s8.bf16 %v561
        %v954 = vunpack.c.l.s8.bf16 %v562
        %v955 = vunpack.c.l.s8.bf16 %v563
        %v956 = vunpack.c.l.s8.bf16 %v564
        %v957 = vunpack.c.l.s8.bf16 %v565
        %v958 = vunpack.c.h.s8.bf16 %v562
        %v959 = vunpack.c.h.s8.bf16 %v563
        %v960 = vunpack.c.h.s8.bf16 %v564
        %v961 = vunpack.c.h.s8.bf16 %v565
        %v962 = vunpack.c.l.s8.bf16 %v566
        %v963 = vunpack.c.l.s8.bf16 %v567
        %v964 = vunpack.c.l.s8.bf16 %v568
        %v965 = vunpack.c.l.s8.bf16 %v569
        %v966 = vunpack.c.h.s8.bf16 %v566
        %v967 = vunpack.c.h.s8.bf16 %v567
        %v968 = vunpack.c.h.s8.bf16 %v568
        %v969 = vunpack.c.h.s8.bf16 %v569
        %v970 = vunpack.c.l.s8.bf16 %v570
        %v971 = vunpack.c.l.s8.bf16 %v571
        %v972 = vunpack.c.l.s8.bf16 %v572
        %v973 = vunpack.c.l.s8.bf16 %v573
        %v974 = vunpack.c.h.s8.bf16 %v570
        %v975 = vunpack.c.h.s8.bf16 %v571
        %v976 = vunpack.c.h.s8.bf16 %v572
        %v977 = vunpack.c.h.s8.bf16 %v573
        %v978 = vunpack.c.l.s8.bf16 %v574
        %v979 = vunpack.c.l.s8.bf16 %v575
        %v980 = vunpack.c.l.s8.bf16 %v576
        %v981 = vunpack.c.l.s8.bf16 %v577
        %v982 = vunpack.c.h.s8.bf16 %v574
        %v983 = vunpack.c.h.s8.bf16 %v575
        %v984 = vunpack.c.h.s8.bf16 %v576
        %v985 = vunpack.c.h.s8.bf16 %v577
        %v986 = vunpack.c.l.s8.bf16 %v578
        %v987 = vunpack.c.l.s8.bf16 %v579
        %v988 = vunpack.c.l.s8.bf16 %v580
        %v989 = vunpack.c.l.s8.bf16 %v581
        %v990 = vunpack.c.h.s8.bf16 %v578
        %v991 = vunpack.c.h.s8.bf16 %v579
        %v992 = vunpack.c.h.s8.bf16 %v580
        %v993 = vunpack.c.h.s8.bf16 %v581
        %v994 = vunpack.c.l.s8.bf16 %v582
        %v995 = vunpack.c.l.s8.bf16 %v583
        %v996 = vunpack.c.l.s8.bf16 %v584
        %v997 = vunpack.c.l.s8.bf16 %v585
        %v998 = vunpack.c.h.s8.bf16 %v582
        %v999 = vunpack.c.h.s8.bf16 %v583
        %v1000 = vunpack.c.h.s8.bf16 %v584
        %v1001 = vunpack.c.h.s8.bf16 %v585
        %v1002 = vunpack.c.l.s8.bf16 %v586
        %v1003 = vunpack.c.l.s8.bf16 %v587
        %v1004 = vunpack.c.l.s8.bf16 %v588
        %v1005 = vunpack.c.l.s8.bf16 %v589
        %v1006 = vunpack.c.h.s8.bf16 %v586
        %v1007 = vunpack.c.h.s8.bf16 %v587
        %v1008 = vunpack.c.h.s8.bf16 %v588
        %v1009 = vunpack.c.h.s8.bf16 %v589
        %v1010 = vunpack.c.l.s8.bf16 %v590
        %v1011 = vunpack.c.l.s8.bf16 %v591
        %v1012 = vunpack.c.l.s8.bf16 %v592
        %v1013 = vunpack.c.l.s8.bf16 %v593
        %v1014 = vunpack.c.h.s8.bf16 %v590
        %v1015 = vunpack.c.h.s8.bf16 %v591
        %v1016 = vunpack.c.h.s8.bf16 %v592
        %v1017 = vunpack.c.h.s8.bf16 %v593
        %v1018 = vunpack.c.l.s8.bf16 %v594
        %v1019 = vunpack.c.l.s8.bf16 %v595
        %v1020 = vunpack.c.l.s8.bf16 %v596
        %v1021 = vunpack.c.l.s8.bf16 %v597
        %v1022 = vunpack.c.h.s8.bf16 %v594
        %v1023 = vunpack.c.h.s8.bf16 %v595
        %v1024 = vunpack.c.h.s8.bf16 %v596
        %v1025 = vunpack.c.h.s8.bf16 %v597
        %v1026 = vunpack.c.l.s8.bf16 %v598
        %v1027 = vunpack.c.l.s8.bf16 %v599
        %v1028 = vunpack.c.l.s8.bf16 %v600
        %v1029 = vunpack.c.l.s8.bf16 %v601
        %v1030 = vunpack.c.h.s8.bf16 %v598
        %v1031 = vunpack.c.h.s8.bf16 %v599
        %v1032 = vunpack.c.h.s8.bf16 %v600
        %v1033 = vunpack.c.h.s8.bf16 %v601
        %v1034 = vunpack.c.l.s8.bf16 %v602
        %v1035 = vunpack.c.l.s8.bf16 %v603
        %v1036 = vunpack.c.l.s8.bf16 %v604
        %v1037 = vunpack.c.l.s8.bf16 %v605
        %v1038 = vunpack.c.h.s8.bf16 %v602
        %v1039 = vunpack.c.h.s8.bf16 %v603
        %v1040 = vunpack.c.h.s8.bf16 %v604
        %v1041 = vunpack.c.h.s8.bf16 %v605
        %v1042 = vunpack.c.l.s8.bf16 %v606
        %v1043 = vunpack.c.l.s8.bf16 %v607
        %v1044 = vunpack.c.l.s8.bf16 %v608
        %v1045 = vunpack.c.l.s8.bf16 %v609
        %v1046 = vunpack.c.h.s8.bf16 %v606
        %v1047 = vunpack.c.h.s8.bf16 %v607
        %v1048 = vunpack.c.h.s8.bf16 %v608
        %v1049 = vunpack.c.h.s8.bf16 %v609
        %v1050 = vunpack.c.l.s8.bf16 %v610
        %v1051 = vunpack.c.l.s8.bf16 %v611
        %v1052 = vunpack.c.l.s8.bf16 %v612
        %v1053 = vunpack.c.l.s8.bf16 %v613
        %v1054 = vunpack.c.h.s8.bf16 %v610
        %v1055 = vunpack.c.h.s8.bf16 %v611
        %v1056 = vunpack.c.h.s8.bf16 %v612
        %v1057 = vunpack.c.h.s8.bf16 %v613
        %v1058 = vunpack.c.l.s8.bf16 %v614
        %v1059 = vunpack.c.l.s8.bf16 %v615
        %v1060 = vunpack.c.l.s8.bf16 %v616
        %v1061 = vunpack.c.l.s8.bf16 %v617
        %v1062 = vunpack.c.h.s8.bf16 %v614
        %v1063 = vunpack.c.h.s8.bf16 %v615
        %v1064 = vunpack.c.h.s8.bf16 %v616
        %v1065 = vunpack.c.h.s8.bf16 %v617
        %v1066 = vunpack.c.l.s8.bf16 %v618
        %v1067 = vunpack.c.l.s8.bf16 %v619
        %v1068 = vunpack.c.l.s8.bf16 %v620
        %v1069 = vunpack.c.l.s8.bf16 %v621
        %v1070 = vunpack.c.h.s8.bf16 %v618
        %v1071 = vunpack.c.h.s8.bf16 %v619
        %v1072 = vunpack.c.h.s8.bf16 %v620
        %v1073 = vunpack.c.h.s8.bf16 %v621
        %v1074 = vunpack.c.l.s8.bf16 %v622
        %v1075 = vunpack.c.l.s8.bf16 %v623
        %v1076 = vunpack.c.l.s8.bf16 %v624
        %v1077 = vunpack.c.l.s8.bf16 %v625
        %v1078 = vunpack.c.h.s8.bf16 %v622
        %v1079 = vunpack.c.h.s8.bf16 %v623
        %v1080 = vunpack.c.h.s8.bf16 %v624
        %v1081 = vunpack.c.h.s8.bf16 %v625
        %v1082 = vunpack.c.l.s8.bf16 %v626
        %v1083 = vunpack.c.l.s8.bf16 %v627
        %v1084 = vunpack.c.l.s8.bf16 %v628
        %v1085 = vunpack.c.l.s8.bf16 %v629
        %v1086 = vunpack.c.h.s8.bf16 %v626
        %v1087 = vunpack.c.h.s8.bf16 %v627
        %v1088 = vunpack.c.h.s8.bf16 %v628
        %v1089 = vunpack.c.h.s8.bf16 %v629
        %v1090 = vunpack.c.l.s8.bf16 %v630
        %v1091 = vunpack.c.l.s8.bf16 %v631
        %v1092 = vunpack.c.l.s8.bf16 %v632
        %v1093 = vunpack.c.l.s8.bf16 %v633
        %v1094 = vunpack.c.h.s8.bf16 %v630
        %v1095 = vunpack.c.h.s8.bf16 %v631
        %v1096 = vunpack.c.h.s8.bf16 %v632
        %v1097 = vunpack.c.h.s8.bf16 %v633
        %v1098 = vunpack.c.l.s8.bf16 %v634
        %v1099 = vunpack.c.l.s8.bf16 %v635
        %v1100 = vunpack.c.l.s8.bf16 %v636
        %v1101 = vunpack.c.l.s8.bf16 %v637
        %v1102 = vunpack.c.h.s8.bf16 %v634
        %v1103 = vunpack.c.h.s8.bf16 %v635
        %v1104 = vunpack.c.h.s8.bf16 %v636
        %v1105 = vunpack.c.h.s8.bf16 %v637
        %v1106 = vunpack.c.l.s8.bf16 %v638
        %v1107 = vunpack.c.l.s8.bf16 %v639
        %v1108 = vunpack.c.l.s8.bf16 %v640
        %v1109 = vunpack.c.l.s8.bf16 %v641
        %v1110 = vunpack.c.h.s8.bf16 %v638
        %v1111 = vunpack.c.h.s8.bf16 %v639
        %v1112 = vunpack.c.h.s8.bf16 %v640
        %v1113 = vunpack.c.h.s8.bf16 %v641
        %v1114 = vunpack.c.l.s8.bf16 %v642
        %v1115 = vunpack.c.l.s8.bf16 %v643
        %v1116 = vunpack.c.l.s8.bf16 %v644
        %v1117 = vunpack.c.l.s8.bf16 %v645
        %v1118 = vunpack.c.h.s8.bf16 %v642
        %v1119 = vunpack.c.h.s8.bf16 %v643
        %v1120 = vunpack.c.h.s8.bf16 %v644
        %v1121 = vunpack.c.h.s8.bf16 %v645
        %v1122 = vunpack.c.l.s8.bf16 %v646
        %v1123 = vunpack.c.l.s8.bf16 %v647
        %v1124 = vunpack.c.l.s8.bf16 %v648
        %v1125 = vunpack.c.l.s8.bf16 %v649
        %v1126 = vunpack.c.h.s8.bf16 %v646
        %v1127 = vunpack.c.h.s8.bf16 %v647
        %v1128 = vunpack.c.h.s8.bf16 %v648
        %v1129 = vunpack.c.h.s8.bf16 %v649
        %v1130 = vunpack.c.l.s8.bf16 %v650
        %v1131 = vunpack.c.l.s8.bf16 %v651
        %v1132 = vunpack.c.l.s8.bf16 %v652
        %v1133 = vunpack.c.l.s8.bf16 %v653
        %v1134 = vunpack.c.h.s8.bf16 %v650
        %v1135 = vunpack.c.h.s8.bf16 %v651
        %v1136 = vunpack.c.h.s8.bf16 %v652
        %v1137 = vunpack.c.h.s8.bf16 %v653
        %v1138 = vunpack.c.l.s8.bf16 %v654
        %v1139 = vunpack.c.l.s8.bf16 %v655
        %v1140 = vunpack.c.l.s8.bf16 %v656
        %v1141 = vunpack.c.l.s8.bf16 %v657
        %v1142 = vunpack.c.h.s8.bf16 %v654
        %v1143 = vunpack.c.h.s8.bf16 %v655
        %v1144 = vunpack.c.h.s8.bf16 %v656
        %v1145 = vunpack.c.h.s8.bf16 %v657
        %v1146 = vunpack.c.l.s8.bf16 %v658
        %v1147 = vunpack.c.l.s8.bf16 %v659
        %v1148 = vunpack.c.l.s8.bf16 %v660
        %v1149 = vunpack.c.l.s8.bf16 %v661
        %v1150 = vunpack.c.h.s8.bf16 %v658
        %v1151 = vunpack.c.h.s8.bf16 %v659
        %v1152 = vunpack.c.h.s8.bf16 %v660
        %v1153 = vunpack.c.h.s8.bf16 %v661
        %v1154 = vunpack.c.l.s8.bf16 %v662
        %v1155 = vunpack.c.l.s8.bf16 %v663
        %v1156 = vunpack.c.l.s8.bf16 %v664
        %v1157 = vunpack.c.l.s8.bf16 %v665
        %v1158 = vunpack.c.h.s8.bf16 %v662
        %v1159 = vunpack.c.h.s8.bf16 %v663
        %v1160 = vunpack.c.h.s8.bf16 %v664
        %v1161 = vunpack.c.h.s8.bf16 %v665
        %v1162 = vunpack.c.l.s8.bf16 %v666
        %v1163 = vunpack.c.l.s8.bf16 %v667
        %v1164 = vunpack.c.l.s8.bf16 %v668
        %v1165 = vunpack.c.l.s8.bf16 %v669
        %v1166 = vunpack.c.h.s8.bf16 %v666
        %v1167 = vunpack.c.h.s8.bf16 %v667
        %v1168 = vunpack.c.h.s8.bf16 %v668
        %v1169 = vunpack.c.h.s8.bf16 %v669
        %v1170 = vunpack.c.l.s8.bf16 %v670
        %v1171 = vunpack.c.l.s8.bf16 %v671
        %v1172 = vunpack.c.l.s8.bf16 %v672
        %v1173 = vunpack.c.l.s8.bf16 %v673
        %v1174 = vunpack.c.h.s8.bf16 %v670
        %v1175 = vunpack.c.h.s8.bf16 %v671
        %v1176 = vunpack.c.h.s8.bf16 %v672
        %v1177 = vunpack.c.h.s8.bf16 %v673
        %v1178 = vunpack.c.l.s8.bf16 %v674
        %v1179 = vunpack.c.l.s8.bf16 %v675
        %v1180 = vunpack.c.l.s8.bf16 %v676
        %v1181 = vunpack.c.l.s8.bf16 %v677
        %v1182 = vunpack.c.h.s8.bf16 %v674
        %v1183 = vunpack.c.h.s8.bf16 %v675
        %v1184 = vunpack.c.h.s8.bf16 %v676
        %v1185 = vunpack.c.h.s8.bf16 %v677
        %v1186 = vunpack.c.l.s8.bf16 %v678
        %v1187 = vunpack.c.l.s8.bf16 %v679
        %v1188 = vunpack.c.l.s8.bf16 %v680
        %v1189 = vunpack.c.l.s8.bf16 %v681
        %v1190 = vunpack.c.h.s8.bf16 %v678
        %v1191 = vunpack.c.h.s8.bf16 %v679
        %v1192 = vunpack.c.h.s8.bf16 %v680
        %v1193 = vunpack.c.h.s8.bf16 %v681
        %v1194 = vunpack.c.l.s8.bf16 %v682
        %v1195 = vunpack.c.l.s8.bf16 %v683
        %v1196 = vunpack.c.l.s8.bf16 %v684
        %v1197 = vunpack.c.l.s8.bf16 %v685
        %v1198 = vunpack.c.h.s8.bf16 %v682
        %v1199 = vunpack.c.h.s8.bf16 %v683
        %v1200 = vunpack.c.h.s8.bf16 %v684
        %v1201 = vunpack.c.h.s8.bf16 %v685
        %v1202 = vunpack.c.l.s8.bf16 %v686
        %v1203 = vunpack.c.l.s8.bf16 %v687
        %v1204 = vunpack.c.l.s8.bf16 %v688
        %v1205 = vunpack.c.l.s8.bf16 %v689
        %v1206 = vunpack.c.h.s8.bf16 %v686
        %v1207 = vunpack.c.h.s8.bf16 %v687
        %v1208 = vunpack.c.h.s8.bf16 %v688
        %v1209 = vunpack.c.h.s8.bf16 %v689
        %v1210 = vunpack.c.l.s8.bf16 %v690
        %v1211 = vunpack.c.l.s8.bf16 %v691
        %v1212 = vunpack.c.l.s8.bf16 %v692
        %v1213 = vunpack.c.l.s8.bf16 %v693
        %v1214 = vunpack.c.h.s8.bf16 %v690
        %v1215 = vunpack.c.h.s8.bf16 %v691
        %v1216 = vunpack.c.h.s8.bf16 %v692
        %v1217 = vunpack.c.h.s8.bf16 %v693
        %v1218 = vunpack.c.l.s8.bf16 %v694
        %v1219 = vunpack.c.l.s8.bf16 %v695
        %v1220 = vunpack.c.l.s8.bf16 %v696
        %v1221 = vunpack.c.l.s8.bf16 %v697
        %v1222 = vunpack.c.h.s8.bf16 %v694
        %v1223 = vunpack.c.h.s8.bf16 %v695
        %v1224 = vunpack.c.h.s8.bf16 %v696
        %v1225 = vunpack.c.h.s8.bf16 %v697
        %v1226 = vunpack.c.l.s8.bf16 %v698
        %v1227 = vunpack.c.l.s8.bf16 %v699
        %v1228 = vunpack.c.l.s8.bf16 %v700
        %v1229 = vunpack.c.l.s8.bf16 %v701
        %v1230 = vunpack.c.h.s8.bf16 %v698
        %v1231 = vunpack.c.h.s8.bf16 %v699
        %v1232 = vunpack.c.h.s8.bf16 %v700
        %v1233 = vunpack.c.h.s8.bf16 %v701
        %v1234 = vunpack.c.l.s8.bf16 %v702
        %v1235 = vunpack.c.l.s8.bf16 %v703
        %v1236 = vunpack.c.l.s8.bf16 %v704
        %v1237 = vunpack.c.l.s8.bf16 %v705
        %v1238 = vunpack.c.h.s8.bf16 %v702
        %v1239 = vunpack.c.h.s8.bf16 %v703
        %v1240 = vunpack.c.h.s8.bf16 %v704
        %v1241 = vunpack.c.h.s8.bf16 %v705
        %v1242 = vunpack.c.l.s8.bf16 %v706
        %v1243 = vunpack.c.l.s8.bf16 %v707
        %v1244 = vunpack.c.l.s8.bf16 %v708
        %v1245 = vunpack.c.l.s8.bf16 %v709
        %v1246 = vunpack.c.h.s8.bf16 %v706
        %v1247 = vunpack.c.h.s8.bf16 %v707
        %v1248 = vunpack.c.h.s8.bf16 %v708
        %v1249 = vunpack.c.h.s8.bf16 %v709
        %v1250 = vunpack.c.l.s8.bf16 %v710
        %v1251 = vunpack.c.l.s8.bf16 %v711
        %v1252 = vunpack.c.l.s8.bf16 %v712
        %v1253 = vunpack.c.l.s8.bf16 %v713
        %v1254 = vunpack.c.h.s8.bf16 %v710
        %v1255 = vunpack.c.h.s8.bf16 %v711
        %v1256 = vunpack.c.h.s8.bf16 %v712
        %v1257 = vunpack.c.h.s8.bf16 %v713
        %v1258 = vunpack.c.l.s8.bf16 %v714
        %v1259 = vunpack.c.l.s8.bf16 %v715
        %v1260 = vunpack.c.l.s8.bf16 %v716
        %v1261 = vunpack.c.l.s8.bf16 %v717
        %v1262 = vunpack.c.h.s8.bf16 %v714
        %v1263 = vunpack.c.h.s8.bf16 %v715
        %v1264 = vunpack.c.h.s8.bf16 %v716
        %v1265 = vunpack.c.h.s8.bf16 %v717
        %v1266 = vunpack.c.l.s8.bf16 %v718
        %v1267 = vunpack.c.l.s8.bf16 %v719
        %v1268 = vunpack.c.l.s8.bf16 %v720
        %v1269 = vunpack.c.l.s8.bf16 %v721
        %v1270 = vunpack.c.h.s8.bf16 %v718
        %v1271 = vunpack.c.h.s8.bf16 %v719
        %v1272 = vunpack.c.h.s8.bf16 %v720
        %v1273 = vunpack.c.h.s8.bf16 %v721
        %v1274 = vunpack.c.l.s8.bf16 %v722
        %v1275 = vunpack.c.l.s8.bf16 %v723
        %v1276 = vunpack.c.l.s8.bf16 %v724
        %v1277 = vunpack.c.l.s8.bf16 %v725
        %v1278 = vunpack.c.h.s8.bf16 %v722
        %v1279 = vunpack.c.h.s8.bf16 %v723
        %v1280 = vunpack.c.h.s8.bf16 %v724
        %v1281 = vunpack.c.h.s8.bf16 %v725
        %v1282 = vunpack.c.l.s8.bf16 %v726
        %v1283 = vunpack.c.l.s8.bf16 %v727
        %v1284 = vunpack.c.l.s8.bf16 %v728
        %v1285 = vunpack.c.l.s8.bf16 %v729
        %v1286 = vunpack.c.h.s8.bf16 %v726
        %v1287 = vunpack.c.h.s8.bf16 %v727
        %v1288 = vunpack.c.h.s8.bf16 %v728
        %v1289 = vunpack.c.h.s8.bf16 %v729
        %v1290 = vunpack.c.l.s8.bf16 %v730
        %v1291 = vunpack.c.l.s8.bf16 %v731
        %v1292 = vunpack.c.l.s8.bf16 %v732
        %v1293 = vunpack.c.l.s8.bf16 %v733
        %v1294 = vunpack.c.h.s8.bf16 %v730
        %v1295 = vunpack.c.h.s8.bf16 %v731
        %v1296 = vunpack.c.h.s8.bf16 %v732
        %v1297 = vunpack.c.h.s8.bf16 %v733
        %v1298 = vunpack.c.l.s8.bf16 %v734
        %v1299 = vunpack.c.l.s8.bf16 %v735
        %v1300 = vunpack.c.l.s8.bf16 %v736
        %v1301 = vunpack.c.l.s8.bf16 %v737
        %v1302 = vunpack.c.h.s8.bf16 %v734
        %v1303 = vunpack.c.h.s8.bf16 %v735
        %v1304 = vunpack.c.h.s8.bf16 %v736
        %v1305 = vunpack.c.h.s8.bf16 %v737
        %v1306 = vunpack.c.l.s8.bf16 %v738
        %v1307 = vunpack.c.l.s8.bf16 %v739
        %v1308 = vunpack.c.l.s8.bf16 %v740
        %v1309 = vunpack.c.l.s8.bf16 %v741
        %v1310 = vunpack.c.h.s8.bf16 %v738
        %v1311 = vunpack.c.h.s8.bf16 %v739
        %v1312 = vunpack.c.h.s8.bf16 %v740
        %v1313 = vunpack.c.h.s8.bf16 %v741
        %v1314 = vunpack.c.l.s8.bf16 %v742
        %v1315 = vunpack.c.l.s8.bf16 %v743
        %v1316 = vunpack.c.l.s8.bf16 %v744
        %v1317 = vunpack.c.l.s8.bf16 %v745
        %v1318 = vunpack.c.h.s8.bf16 %v742
        %v1319 = vunpack.c.h.s8.bf16 %v743
        %v1320 = vunpack.c.h.s8.bf16 %v744
        %v1321 = vunpack.c.h.s8.bf16 %v745
        %v1322 = vunpack.c.l.s8.bf16 %v746
        %v1323 = vunpack.c.l.s8.bf16 %v747
        %v1324 = vunpack.c.l.s8.bf16 %v748
        %v1325 = vunpack.c.l.s8.bf16 %v749
        %v1326 = vunpack.c.h.s8.bf16 %v746
        %v1327 = vunpack.c.h.s8.bf16 %v747
        %v1328 = vunpack.c.h.s8.bf16 %v748
        %v1329 = vunpack.c.h.s8.bf16 %v749
        %v1330 = vunpack.c.l.s8.bf16 %v750
        %v1331 = vunpack.c.l.s8.bf16 %v751
        %v1332 = vunpack.c.l.s8.bf16 %v752
        %v1333 = vunpack.c.l.s8.bf16 %v753
        %v1334 = vunpack.c.h.s8.bf16 %v750
        %v1335 = vunpack.c.h.s8.bf16 %v751
        %v1336 = vunpack.c.h.s8.bf16 %v752
        %v1337 = vunpack.c.h.s8.bf16 %v753
        %v1338 = vunpack.c.l.s8.bf16 %v754
        %v1339 = vunpack.c.l.s8.bf16 %v755
        %v1340 = vunpack.c.l.s8.bf16 %v756
        %v1341 = vunpack.c.l.s8.bf16 %v757
        %v1342 = vunpack.c.h.s8.bf16 %v754
        %v1343 = vunpack.c.h.s8.bf16 %v755
        %v1344 = vunpack.c.h.s8.bf16 %v756
        %v1345 = vunpack.c.h.s8.bf16 %v757
        %v1346 = vunpack.c.l.s8.bf16 %v758
        %v1347 = vunpack.c.l.s8.bf16 %v759
        %v1348 = vunpack.c.l.s8.bf16 %v760
        %v1349 = vunpack.c.l.s8.bf16 %v761
        %v1350 = vunpack.c.h.s8.bf16 %v758
        %v1351 = vunpack.c.h.s8.bf16 %v759
        %v1352 = vunpack.c.h.s8.bf16 %v760
        %v1353 = vunpack.c.h.s8.bf16 %v761
        %v1354 = vunpack.c.l.s8.bf16 %v762
        %v1355 = vunpack.c.l.s8.bf16 %v763
        %v1356 = vunpack.c.l.s8.bf16 %v764
        %v1357 = vunpack.c.l.s8.bf16 %v765
        %v1358 = vunpack.c.h.s8.bf16 %v762
        %v1359 = vunpack.c.h.s8.bf16 %v763
        %v1360 = vunpack.c.h.s8.bf16 %v764
        %v1361 = vunpack.c.h.s8.bf16 %v765
        %v1362 = vunpack.c.l.s8.bf16 %v766
        %v1363 = vunpack.c.l.s8.bf16 %v767
        %v1364 = vunpack.c.l.s8.bf16 %v768
        %v1365 = vunpack.c.l.s8.bf16 %v769
        %v1366 = vunpack.c.h.s8.bf16 %v766
        %v1367 = vunpack.c.h.s8.bf16 %v767
        %v1368 = vunpack.c.h.s8.bf16 %v768
        %v1369 = vunpack.c.h.s8.bf16 %v769
        %v1370 = vunpack.c.l.s8.bf16 %v770
        %v1371 = vunpack.c.l.s8.bf16 %v771
        %v1372 = vunpack.c.l.s8.bf16 %v772
        %v1373 = vunpack.c.l.s8.bf16 %v773
        %v1374 = vunpack.c.h.s8.bf16 %v770
        %v1375 = vunpack.c.h.s8.bf16 %v771
        %v1376 = vunpack.c.h.s8.bf16 %v772
        %v1377 = vunpack.c.h.s8.bf16 %v773
        %v1378 = vunpack.c.l.s8.bf16 %v774
        %v1379 = vunpack.c.l.s8.bf16 %v775
        %v1380 = vunpack.c.l.s8.bf16 %v776
        %v1381 = vunpack.c.l.s8.bf16 %v777
        %v1382 = vunpack.c.h.s8.bf16 %v774
        %v1383 = vunpack.c.h.s8.bf16 %v775
        %v1384 = vunpack.c.h.s8.bf16 %v776
        %v1385 = vunpack.c.h.s8.bf16 %v777
        %v1386 = vunpack.c.l.s8.bf16 %v778
        %v1387 = vunpack.c.l.s8.bf16 %v779
        %v1388 = vunpack.c.l.s8.bf16 %v780
        %v1389 = vunpack.c.l.s8.bf16 %v781
        %v1390 = vunpack.c.h.s8.bf16 %v778
        %v1391 = vunpack.c.h.s8.bf16 %v779
        %v1392 = vunpack.c.h.s8.bf16 %v780
        %v1393 = vunpack.c.h.s8.bf16 %v781
        %v1394 = vunpack.c.l.s8.bf16 %v782
        %v1395 = vunpack.c.l.s8.bf16 %v783
        %v1396 = vunpack.c.l.s8.bf16 %v784
        %v1397 = vunpack.c.l.s8.bf16 %v785
        %v1398 = vunpack.c.h.s8.bf16 %v782
        %v1399 = vunpack.c.h.s8.bf16 %v783
        %v1400 = vunpack.c.h.s8.bf16 %v784
        %v1401 = vunpack.c.h.s8.bf16 %v785
        %v1402 = vunpack.c.l.s8.bf16 %v786
        %v1403 = vunpack.c.l.s8.bf16 %v787
        %v1404 = vunpack.c.l.s8.bf16 %v788
        %v1405 = vunpack.c.l.s8.bf16 %v789
        %v1406 = vunpack.c.h.s8.bf16 %v786
        %v1407 = vunpack.c.h.s8.bf16 %v787
        %v1408 = vunpack.c.h.s8.bf16 %v788
        %v1409 = vunpack.c.h.s8.bf16 %v789
        %v1410 = vunpack.c.l.s8.bf16 %v790
        %v1411 = vunpack.c.l.s8.bf16 %v791
        %v1412 = vunpack.c.l.s8.bf16 %v792
        %v1413 = vunpack.c.l.s8.bf16 %v793
        %v1414 = vunpack.c.h.s8.bf16 %v790
        %v1415 = vunpack.c.h.s8.bf16 %v791
        %v1416 = vunpack.c.h.s8.bf16 %v792
        %v1417 = vunpack.c.h.s8.bf16 %v793
        %v1418 = vunpack.c.l.s8.bf16 %v794
        %v1419 = vunpack.c.l.s8.bf16 %v795
        %v1420 = vunpack.c.l.s8.bf16 %v796
        %v1421 = vunpack.c.l.s8.bf16 %v797
        %v1422 = vunpack.c.h.s8.bf16 %v794
        %v1423 = vunpack.c.h.s8.bf16 %v795
        %v1424 = vunpack.c.h.s8.bf16 %v796
        %v1425 = vunpack.c.h.s8.bf16 %v797
        %v1426 = vunpack.c.l.s8.bf16 %v798
        %v1427 = vunpack.c.l.s8.bf16 %v799
        %v1428 = vunpack.c.l.s8.bf16 %v800
        %v1429 = vunpack.c.l.s8.bf16 %v801
        %v1430 = vunpack.c.h.s8.bf16 %v798
        %v1431 = vunpack.c.h.s8.bf16 %v799
        %v1432 = vunpack.c.h.s8.bf16 %v800
        %v1433 = vunpack.c.h.s8.bf16 %v801
        %v1434 = vunpack.c.l.s8.bf16 %v802
        %v1435 = vunpack.c.l.s8.bf16 %v803
        %v1436 = vunpack.c.l.s8.bf16 %v804
        %v1437 = vunpack.c.l.s8.bf16 %v805
        %v1438 = vunpack.c.h.s8.bf16 %v802
        %v1439 = vunpack.c.h.s8.bf16 %v803
        %v1440 = vunpack.c.h.s8.bf16 %v804
        %v1441 = vunpack.c.h.s8.bf16 %v805
        %v1442 = vunpack.c.l.s8.bf16 %v806
        %v1443 = vunpack.c.l.s8.bf16 %v807
        %v1444 = vunpack.c.l.s8.bf16 %v808
        %v1445 = vunpack.c.l.s8.bf16 %v809
        %v1446 = vunpack.c.h.s8.bf16 %v806
        %v1447 = vunpack.c.h.s8.bf16 %v807
        %v1448 = vunpack.c.h.s8.bf16 %v808
        %v1449 = vunpack.c.h.s8.bf16 %v809
        %v1450 = vunpack.c.l.s8.bf16 %v810
        %v1451 = vunpack.c.l.s8.bf16 %v811
        %v1452 = vunpack.c.l.s8.bf16 %v812
        %v1453 = vunpack.c.l.s8.bf16 %v813
        %v1454 = vunpack.c.h.s8.bf16 %v810
        %v1455 = vunpack.c.h.s8.bf16 %v811
        %v1456 = vunpack.c.h.s8.bf16 %v812
        %v1457 = vunpack.c.h.s8.bf16 %v813
        %v1458 = vunpack.c.l.s8.bf16 %v814
        %v1459 = vunpack.c.l.s8.bf16 %v815
        %v1460 = vunpack.c.l.s8.bf16 %v816
        %v1461 = vunpack.c.l.s8.bf16 %v817
        %v1462 = vunpack.c.h.s8.bf16 %v814
        %v1463 = vunpack.c.h.s8.bf16 %v815
        %v1464 = vunpack.c.h.s8.bf16 %v816
        %v1465 = vunpack.c.h.s8.bf16 %v817
        %v1466 = vunpack.c.l.s8.bf16 %v818
        %v1467 = vunpack.c.l.s8.bf16 %v819
        %v1468 = vunpack.c.l.s8.bf16 %v820
        %v1469 = vunpack.c.l.s8.bf16 %v821
        %v1470 = vunpack.c.h.s8.bf16 %v818
        %v1471 = vunpack.c.h.s8.bf16 %v819
        %v1472 = vunpack.c.h.s8.bf16 %v820
        %v1473 = vunpack.c.h.s8.bf16 %v821
        %v1474 = vunpack.c.l.s8.bf16 %v822
        %v1475 = vunpack.c.l.s8.bf16 %v823
        %v1476 = vunpack.c.l.s8.bf16 %v824
        %v1477 = vunpack.c.l.s8.bf16 %v825
        %v1478 = vunpack.c.h.s8.bf16 %v822
        %v1479 = vunpack.c.h.s8.bf16 %v823
        %v1480 = vunpack.c.h.s8.bf16 %v824
        %v1481 = vunpack.c.h.s8.bf16 %v825
        %v1482 = vunpack.c.l.s8.bf16 %v826
        %v1483 = vunpack.c.l.s8.bf16 %v827
        %v1484 = vunpack.c.l.s8.bf16 %v828
        %v1485 = vunpack.c.l.s8.bf16 %v829
        %v1486 = vunpack.c.h.s8.bf16 %v826
        %v1487 = vunpack.c.h.s8.bf16 %v827
        %v1488 = vunpack.c.h.s8.bf16 %v828
        %v1489 = vunpack.c.h.s8.bf16 %v829
        %v1490 = vunpack.c.l.s8.bf16 %v830
        %v1491 = vunpack.c.l.s8.bf16 %v831
        %v1492 = vunpack.c.l.s8.bf16 %v832
        %v1493 = vunpack.c.l.s8.bf16 %v833
        %v1494 = vunpack.c.h.s8.bf16 %v830
        %v1495 = vunpack.c.h.s8.bf16 %v831
        %v1496 = vunpack.c.h.s8.bf16 %v832
        %v1497 = vunpack.c.h.s8.bf16 %v833
        %v1498 = vunpack.c.l.s8.bf16 %v834
        %v1499 = vunpack.c.l.s8.bf16 %v835
        %v1500 = vunpack.c.l.s8.bf16 %v836
        %v1501 = vunpack.c.l.s8.bf16 %v837
        %v1502 = vunpack.c.h.s8.bf16 %v834
        %v1503 = vunpack.c.h.s8.bf16 %v835
        %v1504 = vunpack.c.h.s8.bf16 %v836
        %v1505 = vunpack.c.h.s8.bf16 %v837
        %v1506 = vunpack.c.l.s8.bf16 %v838
        %v1507 = vunpack.c.l.s8.bf16 %v839
        %v1508 = vunpack.c.l.s8.bf16 %v840
        %v1509 = vunpack.c.l.s8.bf16 %v841
        %v1510 = vunpack.c.h.s8.bf16 %v838
        %v1511 = vunpack.c.h.s8.bf16 %v839
        %v1512 = vunpack.c.h.s8.bf16 %v840
        %v1513 = vunpack.c.h.s8.bf16 %v841
        %v1514 = vunpack.c.l.s8.bf16 %v842
        %v1515 = vunpack.c.l.s8.bf16 %v843
        %v1516 = vunpack.c.l.s8.bf16 %v844
        %v1517 = vunpack.c.l.s8.bf16 %v845
        %v1518 = vunpack.c.h.s8.bf16 %v842
        %v1519 = vunpack.c.h.s8.bf16 %v843
        %v1520 = vunpack.c.h.s8.bf16 %v844
        %v1521 = vunpack.c.h.s8.bf16 %v845
        %v1522 = vunpack.c.l.s8.bf16 %v846
        %v1523 = vunpack.c.l.s8.bf16 %v847
        %v1524 = vunpack.c.l.s8.bf16 %v848
        %v1525 = vunpack.c.l.s8.bf16 %v849
        %v1526 = vunpack.c.h.s8.bf16 %v846
        %v1527 = vunpack.c.h.s8.bf16 %v847
        %v1528 = vunpack.c.h.s8.bf16 %v848
        %v1529 = vunpack.c.h.s8.bf16 %v849
        %v1530 = vunpack.c.l.s8.bf16 %v850
        %v1531 = vunpack.c.l.s8.bf16 %v851
        %v1532 = vunpack.c.l.s8.bf16 %v852
        %v1533 = vunpack.c.l.s8.bf16 %v853
        %v1534 = vunpack.c.h.s8.bf16 %v850
        %v1535 = vunpack.c.h.s8.bf16 %v851
        %v1536 = vunpack.c.h.s8.bf16 %v852
        %v1537 = vunpack.c.h.s8.bf16 %v853
        %v1538 = vunpack.c.l.s8.bf16 %v854
        %v1539 = vunpack.c.l.s8.bf16 %v855
        %v1540 = vunpack.c.l.s8.bf16 %v856
        %v1541 = vunpack.c.l.s8.bf16 %v857
        %v1542 = vunpack.c.h.s8.bf16 %v854
        %v1543 = vunpack.c.h.s8.bf16 %v855
        %v1544 = vunpack.c.h.s8.bf16 %v856
        %v1545 = vunpack.c.h.s8.bf16 %v857
        %v1546 = vunpack.c.l.s8.bf16 %v858
        %v1547 = vunpack.c.l.s8.bf16 %v859
        %v1548 = vunpack.c.l.s8.bf16 %v860
        %v1549 = vunpack.c.l.s8.bf16 %v861
        %v1550 = vunpack.c.h.s8.bf16 %v858
        %v1551 = vunpack.c.h.s8.bf16 %v859
        %v1552 = vunpack.c.h.s8.bf16 %v860
        %v1553 = vunpack.c.h.s8.bf16 %v861
        %v1554 = vunpack.c.l.s8.bf16 %v862
        %v1555 = vunpack.c.l.s8.bf16 %v863
        %v1556 = vunpack.c.l.s8.bf16 %v864
        %v1557 = vunpack.c.l.s8.bf16 %v865
        %v1558 = vunpack.c.h.s8.bf16 %v862
        %v1559 = vunpack.c.h.s8.bf16 %v863
        %v1560 = vunpack.c.h.s8.bf16 %v864
        %v1561 = vunpack.c.h.s8.bf16 %v865
        %v1562 = vunpack.c.l.s8.bf16 %v866
        %v1563 = vunpack.c.l.s8.bf16 %v867
        %v1564 = vunpack.c.l.s8.bf16 %v868
        %v1565 = vunpack.c.l.s8.bf16 %v869
        %v1566 = vunpack.c.h.s8.bf16 %v866
        %v1567 = vunpack.c.h.s8.bf16 %v867
        %v1568 = vunpack.c.h.s8.bf16 %v868
        %v1569 = vunpack.c.h.s8.bf16 %v869
        %v1570 = vunpack.c.l.s8.bf16 %v870
        %v1571 = vunpack.c.l.s8.bf16 %v871
        %v1572 = vunpack.c.l.s8.bf16 %v872
        %v1573 = vunpack.c.l.s8.bf16 %v873
        %v1574 = vunpack.c.h.s8.bf16 %v870
        %v1575 = vunpack.c.h.s8.bf16 %v871
        %v1576 = vunpack.c.h.s8.bf16 %v872
        %v1577 = vunpack.c.h.s8.bf16 %v873
        %v1578 = vld [vmem:[#allocation3] sm:$0xff]
        %v1579 = vld [vmem:[#allocation3 + $0x8] sm:$0xff]
        %v1580 = vld [vmem:[#allocation3 + $0x10] sm:$0xff]
        %v1581 = vld [vmem:[#allocation3 + $0x18] sm:$0xff]
        %v1582 = vld [vmem:[#allocation3 + $0x20] sm:$0xff]
        %v1583 = vld [vmem:[#allocation3 + $0x28] sm:$0xff]
        %v1584 = vld [vmem:[#allocation3 + $0x30] sm:$0xff]
        %v1585 = vld [vmem:[#allocation3 + $0x38] sm:$0xff]
        %v1586 = vld [vmem:[#allocation3 + $0x40] sm:$0xff]
        %v1587 = vld [vmem:[#allocation3 + $0x48] sm:$0xff]
        %v1588 = vld [vmem:[#allocation3 + $0x50] sm:$0xff]
        %v1589 = vld [vmem:[#allocation3 + $0x58] sm:$0xff]
        %v1590 = vld [vmem:[#allocation3 + $0x60] sm:$0xff]
        %v1591 = vld [vmem:[#allocation3 + $0x68] sm:$0xff]
        %v1592 = vld [vmem:[#allocation3 + $0x70] sm:$0xff]
        %v1593 = vld [vmem:[#allocation3 + $0x78] sm:$0xff]
        %v1594 = vld [vmem:[#allocation3 + $0x80] sm:$0xff]
        %v1595 = vld [vmem:[#allocation3 + $0x88] sm:$0xff]
        %v1596 = vld [vmem:[#allocation3 + $0x90] sm:$0xff]
        %v1597 = vld [vmem:[#allocation3 + $0x98] sm:$0xff]
        %v1598 = vld [vmem:[#allocation3 + $0xa0] sm:$0xff]
        %v1599 = vld [vmem:[#allocation3 + $0xa8] sm:$0xff]
        %v1600 = vld [vmem:[#allocation3 + $0xb0] sm:$0xff]
        %v1601 = vld [vmem:[#allocation3 + $0xb8] sm:$0xff]
        %v1602 = vld [vmem:[#allocation3 + $0xc0] sm:$0xff]
        %v1603 = vld [vmem:[#allocation3 + $0xc8] sm:$0xff]
        %v1604 = vld [vmem:[#allocation3 + $0xd0] sm:$0xff]
        %v1605 = vld [vmem:[#allocation3 + $0xd8] sm:$0xff]
        %v1606 = vld [vmem:[#allocation3 + $0xe0] sm:$0xff]
        %v1607 = vld [vmem:[#allocation3 + $0xe8] sm:$0xff]
        %v1608 = vld [vmem:[#allocation3 + $0xf0] sm:$0xff]
        %v1609 = vld [vmem:[#allocation3 + $0xf8] sm:$0xff]
        %v1610 = vld [vmem:[#allocation3 + $0x100] sm:$0xff]
        %v1611 = vld [vmem:[#allocation3 + $0x108] sm:$0xff]
        %v1612 = vld [vmem:[#allocation3 + $0x110] sm:$0xff]
        %v1613 = vld [vmem:[#allocation3 + $0x118] sm:$0xff]
        %v1614 = vld [vmem:[#allocation3 + $0x120] sm:$0xff]
        %v1615 = vld [vmem:[#allocation3 + $0x128] sm:$0xff]
        %v1616 = vld [vmem:[#allocation3 + $0x130] sm:$0xff]
        %v1617 = vld [vmem:[#allocation3 + $0x138] sm:$0xff]
        %v1618 = vld [vmem:[#allocation3 + $0x140] sm:$0xff]
        %v1619 = vld [vmem:[#allocation3 + $0x148] sm:$0xff]
        %v1620 = vld [vmem:[#allocation3 + $0x150] sm:$0xff]
        %v1621 = vld [vmem:[#allocation3 + $0x158] sm:$0xff]
        %v1622 = vld [vmem:[#allocation3 + $0x160] sm:$0xff]
        %v1623 = vld [vmem:[#allocation3 + $0x168] sm:$0xff]
        %v1624 = vld [vmem:[#allocation3 + $0x170] sm:$0xff]
        %v1625 = vld [vmem:[#allocation3 + $0x178] sm:$0xff]
        %v1626 = vld [vmem:[#allocation3 + $0x180] sm:$0xff]
        %v1627 = vld [vmem:[#allocation3 + $0x188] sm:$0xff]
        %v1628 = vld [vmem:[#allocation3 + $0x190] sm:$0xff]
        %v1629 = vld [vmem:[#allocation3 + $0x198] sm:$0xff]
        %v1630 = vld [vmem:[#allocation3 + $0x1a0] sm:$0xff]
        %v1631 = vld [vmem:[#allocation3 + $0x1a8] sm:$0xff]
        %v1632 = vld [vmem:[#allocation3 + $0x1b0] sm:$0xff]
        %v1633 = vld [vmem:[#allocation3 + $0x1b8] sm:$0xff]
        %v1634 = vld [vmem:[#allocation3 + $0x1c0] sm:$0xff]
        %v1635 = vld [vmem:[#allocation3 + $0x1c8] sm:$0xff]
        %v1636 = vld [vmem:[#allocation3 + $0x1d0] sm:$0xff]
        %v1637 = vld [vmem:[#allocation3 + $0x1d8] sm:$0xff]
        %v1638 = vld [vmem:[#allocation3 + $0x1e0] sm:$0xff]
        %v1639 = vld [vmem:[#allocation3 + $0x1e8] sm:$0xff]
        %v1640 = vld [vmem:[#allocation3 + $0x1f0] sm:$0xff]
        %v1641 = vld [vmem:[#allocation3 + $0x1f8] sm:$0xff]
        %v1642 = vld [vmem:[#allocation3 + $0x200] sm:$0xff]
        %v1643 = vld [vmem:[#allocation3 + $0x208] sm:$0xff]
        %v1644 = vld [vmem:[#allocation3 + $0x210] sm:$0xff]
        %v1645 = vld [vmem:[#allocation3 + $0x218] sm:$0xff]
        %v1646 = vld [vmem:[#allocation3 + $0x220] sm:$0xff]
        %v1647 = vld [vmem:[#allocation3 + $0x228] sm:$0xff]
        %v1648 = vld [vmem:[#allocation3 + $0x230] sm:$0xff]
        %v1649 = vld [vmem:[#allocation3 + $0x238] sm:$0xff]
        %v1650 = vld [vmem:[#allocation3 + $0x240] sm:$0xff]
        %v1651 = vld [vmem:[#allocation3 + $0x248] sm:$0xff]
        %v1652 = vld [vmem:[#allocation3 + $0x250] sm:$0xff]
        %v1653 = vld [vmem:[#allocation3 + $0x258] sm:$0xff]
        %v1654 = vld [vmem:[#allocation3 + $0x260] sm:$0xff]
        %v1655 = vld [vmem:[#allocation3 + $0x268] sm:$0xff]
        %v1656 = vld [vmem:[#allocation3 + $0x270] sm:$0xff]
        %v1657 = vld [vmem:[#allocation3 + $0x278] sm:$0xff]
        %v1658 = vld [vmem:[#allocation3 + $0x280] sm:$0xff]
        %v1659 = vld [vmem:[#allocation3 + $0x288] sm:$0xff]
        %v1660 = vld [vmem:[#allocation3 + $0x290] sm:$0xff]
        %v1661 = vld [vmem:[#allocation3 + $0x298] sm:$0xff]
        %v1662 = vld [vmem:[#allocation3 + $0x2a0] sm:$0xff]
        %v1663 = vld [vmem:[#allocation3 + $0x2a8] sm:$0xff]
        %v1664 = vld [vmem:[#allocation3 + $0x2b0] sm:$0xff]
        %v1665 = vld [vmem:[#allocation3 + $0x2b8] sm:$0xff]
        %v1754 = vunpack.c.l.b16 %v1578
        %v1755 = vunpack.c.h.b16 %v1578
        %v1756 = vunpack.c.l.b16 %v1579
        %v1757 = vunpack.c.h.b16 %v1579
        %v1758 = vunpack.c.l.b16 %v1580
        %v1759 = vunpack.c.h.b16 %v1580
        %v1760 = vunpack.c.l.b16 %v1581
        %v1761 = vunpack.c.h.b16 %v1581
        %v1762 = vunpack.c.l.b16 %v1582
        %v1763 = vunpack.c.h.b16 %v1582
        %v1764 = vunpack.c.l.b16 %v1583
        %v1765 = vunpack.c.h.b16 %v1583
        %v1766 = vunpack.c.l.b16 %v1584
        %v1767 = vunpack.c.h.b16 %v1584
        %v1768 = vunpack.c.l.b16 %v1585
        %v1769 = vunpack.c.h.b16 %v1585
        %v1770 = vunpack.c.l.b16 %v1586
        %v1771 = vunpack.c.h.b16 %v1586
        %v1772 = vunpack.c.l.b16 %v1587
        %v1773 = vunpack.c.h.b16 %v1587
        %v1774 = vunpack.c.l.b16 %v1588
        %v1775 = vunpack.c.h.b16 %v1588
        %v1776 = vunpack.c.l.b16 %v1589
        %v1777 = vunpack.c.h.b16 %v1589
        %v1778 = vunpack.c.l.b16 %v1590
        %v1779 = vunpack.c.h.b16 %v1590
        %v1780 = vunpack.c.l.b16 %v1591
        %v1781 = vunpack.c.h.b16 %v1591
        %v1782 = vunpack.c.l.b16 %v1592
        %v1783 = vunpack.c.h.b16 %v1592
        %v1784 = vunpack.c.l.b16 %v1593
        %v1785 = vunpack.c.h.b16 %v1593
        %v1786 = vunpack.c.l.b16 %v1594
        %v1787 = vunpack.c.h.b16 %v1594
        %v1788 = vunpack.c.l.b16 %v1595
        %v1789 = vunpack.c.h.b16 %v1595
        %v1790 = vunpack.c.l.b16 %v1596
        %v1791 = vunpack.c.h.b16 %v1596
        %v1792 = vunpack.c.l.b16 %v1597
        %v1793 = vunpack.c.h.b16 %v1597
        %v1794 = vunpack.c.l.b16 %v1598
        %v1795 = vunpack.c.h.b16 %v1598
        %v1796 = vunpack.c.l.b16 %v1599
        %v1797 = vunpack.c.h.b16 %v1599
        %v1798 = vunpack.c.l.b16 %v1600
        %v1799 = vunpack.c.h.b16 %v1600
        %v1800 = vunpack.c.l.b16 %v1601
        %v1801 = vunpack.c.h.b16 %v1601
        %v1802 = vunpack.c.l.b16 %v1602
        %v1803 = vunpack.c.h.b16 %v1602
        %v1804 = vunpack.c.l.b16 %v1603
        %v1805 = vunpack.c.h.b16 %v1603
        %v1806 = vunpack.c.l.b16 %v1604
        %v1807 = vunpack.c.h.b16 %v1604
        %v1808 = vunpack.c.l.b16 %v1605
        %v1809 = vunpack.c.h.b16 %v1605
        %v1810 = vunpack.c.l.b16 %v1606
        %v1811 = vunpack.c.h.b16 %v1606
        %v1812 = vunpack.c.l.b16 %v1607
        %v1813 = vunpack.c.h.b16 %v1607
        %v1814 = vunpack.c.l.b16 %v1608
        %v1815 = vunpack.c.h.b16 %v1608
        %v1816 = vunpack.c.l.b16 %v1609
        %v1817 = vunpack.c.h.b16 %v1609
        %v1818 = vunpack.c.l.b16 %v1610
        %v1819 = vunpack.c.h.b16 %v1610
        %v1820 = vunpack.c.l.b16 %v1611
        %v1821 = vunpack.c.h.b16 %v1611
        %v1822 = vunpack.c.l.b16 %v1612
        %v1823 = vunpack.c.h.b16 %v1612
        %v1824 = vunpack.c.l.b16 %v1613
        %v1825 = vunpack.c.h.b16 %v1613
        %v1826 = vunpack.c.l.b16 %v1614
        %v1827 = vunpack.c.h.b16 %v1614
        %v1828 = vunpack.c.l.b16 %v1615
        %v1829 = vunpack.c.h.b16 %v1615
        %v1830 = vunpack.c.l.b16 %v1616
        %v1831 = vunpack.c.h.b16 %v1616
        %v1832 = vunpack.c.l.b16 %v1617
        %v1833 = vunpack.c.h.b16 %v1617
        %v1834 = vunpack.c.l.b16 %v1618
        %v1835 = vunpack.c.h.b16 %v1618
        %v1836 = vunpack.c.l.b16 %v1619
        %v1837 = vunpack.c.h.b16 %v1619
        %v1838 = vunpack.c.l.b16 %v1620
        %v1839 = vunpack.c.h.b16 %v1620
        %v1840 = vunpack.c.l.b16 %v1621
        %v1841 = vunpack.c.h.b16 %v1621
        %v1842 = vunpack.c.l.b16 %v1622
        %v1843 = vunpack.c.h.b16 %v1622
        %v1844 = vunpack.c.l.b16 %v1623
        %v1845 = vunpack.c.h.b16 %v1623
        %v1846 = vunpack.c.l.b16 %v1624
        %v1847 = vunpack.c.h.b16 %v1624
        %v1848 = vunpack.c.l.b16 %v1625
        %v1849 = vunpack.c.h.b16 %v1625
        %v1850 = vunpack.c.l.b16 %v1626
        %v1851 = vunpack.c.h.b16 %v1626
        %v1852 = vunpack.c.l.b16 %v1627
        %v1853 = vunpack.c.h.b16 %v1627
        %v1854 = vunpack.c.l.b16 %v1628
        %v1855 = vunpack.c.h.b16 %v1628
        %v1856 = vunpack.c.l.b16 %v1629
        %v1857 = vunpack.c.h.b16 %v1629
        %v1858 = vunpack.c.l.b16 %v1630
        %v1859 = vunpack.c.h.b16 %v1630
        %v1860 = vunpack.c.l.b16 %v1631
        %v1861 = vunpack.c.h.b16 %v1631
        %v1862 = vunpack.c.l.b16 %v1632
        %v1863 = vunpack.c.h.b16 %v1632
        %v1864 = vunpack.c.l.b16 %v1633
        %v1865 = vunpack.c.h.b16 %v1633
        %v1866 = vunpack.c.l.b16 %v1634
        %v1867 = vunpack.c.h.b16 %v1634
        %v1868 = vunpack.c.l.b16 %v1635
        %v1869 = vunpack.c.h.b16 %v1635
        %v1870 = vunpack.c.l.b16 %v1636
        %v1871 = vunpack.c.h.b16 %v1636
        %v1872 = vunpack.c.l.b16 %v1637
        %v1873 = vunpack.c.h.b16 %v1637
        %v1874 = vunpack.c.l.b16 %v1638
        %v1875 = vunpack.c.h.b16 %v1638
        %v1876 = vunpack.c.l.b16 %v1639
        %v1877 = vunpack.c.h.b16 %v1639
        %v1878 = vunpack.c.l.b16 %v1640
        %v1879 = vunpack.c.h.b16 %v1640
        %v1880 = vunpack.c.l.b16 %v1641
        %v1881 = vunpack.c.h.b16 %v1641
        %v1882 = vunpack.c.l.b16 %v1642
        %v1883 = vunpack.c.h.b16 %v1642
        %v1884 = vunpack.c.l.b16 %v1643
        %v1885 = vunpack.c.h.b16 %v1643
        %v1886 = vunpack.c.l.b16 %v1644
        %v1887 = vunpack.c.h.b16 %v1644
        %v1888 = vunpack.c.l.b16 %v1645
        %v1889 = vunpack.c.h.b16 %v1645
        %v1890 = vunpack.c.l.b16 %v1646
        %v1891 = vunpack.c.h.b16 %v1646
        %v1892 = vunpack.c.l.b16 %v1647
        %v1893 = vunpack.c.h.b16 %v1647
        %v1894 = vunpack.c.l.b16 %v1648
        %v1895 = vunpack.c.h.b16 %v1648
        %v1896 = vunpack.c.l.b16 %v1649
        %v1897 = vunpack.c.h.b16 %v1649
        %v1898 = vunpack.c.l.b16 %v1650
        %v1899 = vunpack.c.h.b16 %v1650
        %v1900 = vunpack.c.l.b16 %v1651
        %v1901 = vunpack.c.h.b16 %v1651
        %v1902 = vunpack.c.l.b16 %v1652
        %v1903 = vunpack.c.h.b16 %v1652
        %v1904 = vunpack.c.l.b16 %v1653
        %v1905 = vunpack.c.h.b16 %v1653
        %v1906 = vunpack.c.l.b16 %v1654
        %v1907 = vunpack.c.h.b16 %v1654
        %v1908 = vunpack.c.l.b16 %v1655
        %v1909 = vunpack.c.h.b16 %v1655
        %v1910 = vunpack.c.l.b16 %v1656
        %v1911 = vunpack.c.h.b16 %v1656
        %v1912 = vunpack.c.l.b16 %v1657
        %v1913 = vunpack.c.h.b16 %v1657
        %v1914 = vunpack.c.l.b16 %v1658
        %v1915 = vunpack.c.h.b16 %v1658
        %v1916 = vunpack.c.l.b16 %v1659
        %v1917 = vunpack.c.h.b16 %v1659
        %v1918 = vunpack.c.l.b16 %v1660
        %v1919 = vunpack.c.h.b16 %v1660
        %v1920 = vunpack.c.l.b16 %v1661
        %v1921 = vunpack.c.h.b16 %v1661
        %v1922 = vunpack.c.l.b16 %v1662
        %v1923 = vunpack.c.h.b16 %v1662
        %v1924 = vunpack.c.l.b16 %v1663
        %v1925 = vunpack.c.h.b16 %v1663
        %v1926 = vunpack.c.l.b16 %v1664
        %v1927 = vunpack.c.h.b16 %v1664
        %v1928 = vunpack.c.l.b16 %v1665
        %v1929 = vunpack.c.h.b16 %v1665
        %v1930 = vpack.c.b16 %v1776, %v1754
        %v1931 = vpack.c.b16 %v1777, %v1755
        %v1932 = vpack.c.b16 %v1778, %v1756
        %v1933 = vpack.c.b16 %v1779, %v1757
        %v1934 = vpack.c.b16 %v1780, %v1758
        %v1935 = vpack.c.b16 %v1781, %v1759
        %v1936 = vpack.c.b16 %v1782, %v1760
        %v1937 = vpack.c.b16 %v1783, %v1761
        %v1938 = vpack.c.b16 %v1784, %v1762
        %v1939 = vpack.c.b16 %v1785, %v1763
        %v1940 = vpack.c.b16 %v1786, %v1764
        %v1941 = vpack.c.b16 %v1787, %v1765
        %v1942 = vpack.c.b16 %v1788, %v1766
        %v1943 = vpack.c.b16 %v1789, %v1767
        %v1944 = vpack.c.b16 %v1790, %v1768
        %v1945 = vpack.c.b16 %v1791, %v1769
        %v1946 = vpack.c.b16 %v1792, %v1770
        %v1947 = vpack.c.b16 %v1793, %v1771
        %v1948 = vpack.c.b16 %v1794, %v1772
        %v1949 = vpack.c.b16 %v1795, %v1773
        %v1950 = vpack.c.b16 %v1796, %v1774
        %v1951 = vpack.c.b16 %v1797, %v1775
        %v1952 = vpack.c.b16 %v1820, %v1798
        %v1953 = vpack.c.b16 %v1821, %v1799
        %v1954 = vpack.c.b16 %v1822, %v1800
        %v1955 = vpack.c.b16 %v1823, %v1801
        %v1956 = vpack.c.b16 %v1824, %v1802
        %v1957 = vpack.c.b16 %v1825, %v1803
        %v1958 = vpack.c.b16 %v1826, %v1804
        %v1959 = vpack.c.b16 %v1827, %v1805
        %v1960 = vpack.c.b16 %v1828, %v1806
        %v1961 = vpack.c.b16 %v1829, %v1807
        %v1962 = vpack.c.b16 %v1830, %v1808
        %v1963 = vpack.c.b16 %v1831, %v1809
        %v1964 = vpack.c.b16 %v1832, %v1810
        %v1965 = vpack.c.b16 %v1833, %v1811
        %v1966 = vpack.c.b16 %v1834, %v1812
        %v1967 = vpack.c.b16 %v1835, %v1813
        %v1968 = vpack.c.b16 %v1836, %v1814
        %v1969 = vpack.c.b16 %v1837, %v1815
        %v1970 = vpack.c.b16 %v1838, %v1816
        %v1971 = vpack.c.b16 %v1839, %v1817
        %v1972 = vpack.c.b16 %v1840, %v1818
        %v1973 = vpack.c.b16 %v1841, %v1819
        %v1974 = vpack.c.b16 %v1864, %v1842
        %v1975 = vpack.c.b16 %v1865, %v1843
        %v1976 = vpack.c.b16 %v1866, %v1844
        %v1977 = vpack.c.b16 %v1867, %v1845
        %v1978 = vpack.c.b16 %v1868, %v1846
        %v1979 = vpack.c.b16 %v1869, %v1847
        %v1980 = vpack.c.b16 %v1870, %v1848
        %v1981 = vpack.c.b16 %v1871, %v1849
        %v1982 = vpack.c.b16 %v1872, %v1850
        %v1983 = vpack.c.b16 %v1873, %v1851
        %v1984 = vpack.c.b16 %v1874, %v1852
        %v1985 = vpack.c.b16 %v1875, %v1853
        %v1986 = vpack.c.b16 %v1876, %v1854
        %v1987 = vpack.c.b16 %v1877, %v1855
        %v1988 = vpack.c.b16 %v1878, %v1856
        %v1989 = vpack.c.b16 %v1879, %v1857
        %v1990 = vpack.c.b16 %v1880, %v1858
        %v1991 = vpack.c.b16 %v1881, %v1859
        %v1992 = vpack.c.b16 %v1882, %v1860
        %v1993 = vpack.c.b16 %v1883, %v1861
        %v1994 = vpack.c.b16 %v1884, %v1862
        %v1995 = vpack.c.b16 %v1885, %v1863
        %v1996 = vpack.c.b16 %v1908, %v1886
        %v1997 = vpack.c.b16 %v1909, %v1887
        %v1998 = vpack.c.b16 %v1910, %v1888
        %v1999 = vpack.c.b16 %v1911, %v1889
        %v2000 = vpack.c.b16 %v1912, %v1890
        %v2001 = vpack.c.b16 %v1913, %v1891
        %v2002 = vpack.c.b16 %v1914, %v1892
        %v2003 = vpack.c.b16 %v1915, %v1893
        %v2004 = vpack.c.b16 %v1916, %v1894
        %v2005 = vpack.c.b16 %v1917, %v1895
        %v2006 = vpack.c.b16 %v1918, %v1896
        %v2007 = vpack.c.b16 %v1919, %v1897
        %v2008 = vpack.c.b16 %v1920, %v1898
        %v2009 = vpack.c.b16 %v1921, %v1899
        %v2010 = vpack.c.b16 %v1922, %v1900
        %v2011 = vpack.c.b16 %v1923, %v1901
        %v2012 = vpack.c.b16 %v1924, %v1902
        %v2013 = vpack.c.b16 %v1925, %v1903
        %v2014 = vpack.c.b16 %v1926, %v1904
        %v2015 = vpack.c.b16 %v1927, %v1905
        %v2016 = vpack.c.b16 %v1928, %v1906
        %v2017 = vpack.c.b16 %v1929, %v1907
        %2106 = vmatprep.subr.bf16.mxu0 %v875
        %2107 = vmatpush1.bf16.msra.mxu0 %v874
        %2108 = vmatprep.subr.bf16.mxu0 %v879
        %2109 = vmatpush1.bf16.msra.mxu0 %v878
        %2110 = vmatprep.subr.bf16.mxu0 %v883
        %2111 = vmatpush1.bf16.msra.mxu0 %v882
        %2112 = vmatprep.subr.bf16.mxu0 %v887
        %2113 = vmatpush1.bf16.msra.mxu0 %v886
        %2114 = vmatprep.subr.bf16.mxu0 %v891
        %2115 = vmatpush1.bf16.msra.mxu0 %v890
        %2116 = vmatprep.subr.bf16.mxu0 %v895
        %2117 = vmatpush1.bf16.msra.mxu0 %v894
        %2118 = vmatprep.subr.bf16.mxu0 %v899
        %2119 = vmatpush1.bf16.msra.mxu0 %v898
        %2120 = vmatprep.subr.bf16.mxu0 %v903
        %2121 = vmatpush1.bf16.msra.mxu0 %v902
        %2122 = vmatprep.subr.bf16.mxu0 %v907
        %2123 = vmatpush1.bf16.msra.mxu0 %v906
        %2124 = vmatprep.subr.bf16.mxu0 %v911
        %2125 = vmatpush1.bf16.msra.mxu0 %v910
        %2126 = vmatprep.subr.bf16.mxu0 %v915
        %2127 = vmatpush1.bf16.msra.mxu0 %v914
        %2128 = vmatprep.subr.bf16.mxu0 %v919
        %2129 = vmatpush1.bf16.msra.mxu0 %v918
        %2130 = vmatprep.subr.bf16.mxu0 %v923
        %2131 = vmatpush1.bf16.msra.mxu0 %v922
        %2132 = vmatprep.subr.bf16.mxu0 %v927
        %2133 = vmatpush1.bf16.msra.mxu0 %v926
        %2134 = vmatprep.subr.bf16.mxu0 %v931
        %2135 = vmatpush1.bf16.msra.mxu0 %v930
        %2136 = vmatprep.subr.bf16.mxu0 %v935
        %2137 = vmatpush1.bf16.msra.mxu0 %v934
        %2138 = vmatprep.mubr.bf16.mxu0 %v1931
        %2139 = vmatmul.mubr.bf16.gmra.mrb[0].mxu0 %v1930
        %v2140 = vpop.f32.mrb[0].mxu0
        %v2141 = vadd.f32 0.0, %v2140
        %v2142 = vpop.f32.mrb[0].mxu0
        %v2143 = vadd.f32 0.0, %v2142
        %v2144 = vpop.f32.mrb[0].mxu0
        %v2145 = vadd.f32 0.0, %v2144
        %v2146 = vpop.f32.mrb[0].mxu0
        %v2147 = vadd.f32 0.0, %v2146
        %2148 = vmatprep.mubr.bf16.mxu0 %v1953
        %2149 = vmatmul.mubr.bf16.gmra.mrb[0].mxu0 %v1952
        %v2150 = vpop.f32.mrb[0].mxu0
        %v2151 = vadd.f32 0.0, %v2150
        %v2152 = vpop.f32.mrb[0].mxu0
        %v2153 = vadd.f32 0.0, %v2152
        %v2154 = vpop.f32.mrb[0].mxu0
        %v2155 = vadd.f32 0.0, %v2154
        %v2156 = vpop.f32.mrb[0].mxu0
        %v2157 = vadd.f32 0.0, %v2156
        %2158 = vmatprep.mubr.bf16.mxu0 %v1975
        %2159 = vmatmul.mubr.bf16.gmra.mrb[0].mxu0 %v1974
        %v2160 = vpop.f32.mrb[0].mxu0
        %v2161 = vadd.f32 0.0, %v2160
        %v2162 = vpop.f32.mrb[0].mxu0
        %v2163 = vadd.f32 0.0, %v2162
        %v2164 = vpop.f32.mrb[0].mxu0
        %v2165 = vadd.f32 0.0, %v2164
        %v2166 = vpop.f32.mrb[0].mxu0
        %v2167 = vadd.f32 0.0, %v2166
        %2168 = vmatprep.mubr.bf16.mxu0 %v1997
        %2169 = vmatmul.mubr.bf16.gmra.mrb[0].mxu0 %v1996
        %v2170 = vpop.f32.mrb[0].mxu0
        %v2171 = vadd.f32 0.0, %v2170
        %v2172 = vpop.f32.mrb[0].mxu0
        %v2173 = vadd.f32 0.0, %v2172
        %v2174 = vpop.f32.mrb[0].mxu0
        %v2175 = vadd.f32 0.0, %v2174
        %v2176 = vpop.f32.mrb[0].mxu0
        %v2177 = vadd.f32 0.0, %v2176
        %2178 = vdwg.mxu0
        %2179 = vmatprep.subr.bf16.mxu0 %v939
        %2180 = vmatpush1.bf16.msra.mxu0 %v938
        %2181 = vmatprep.subr.bf16.mxu0 %v943
        %2182 = vmatpush1.bf16.msra.mxu0 %v942
        %2183 = vmatprep.subr.bf16.mxu0 %v947
        %2184 = vmatpush1.bf16.msra.mxu0 %v946
        %2185 = vmatprep.subr.bf16.mxu0 %v951
        %2186 = vmatpush1.bf16.msra.mxu0 %v950
        %2187 = vmatprep.subr.bf16.mxu0 %v955
        %2188 = vmatpush1.bf16.msra.mxu0 %v954
        %2189 = vmatprep.subr.bf16.mxu0 %v959
        %2190 = vmatpush1.bf16.msra.mxu0 %v958
        %2191 = vmatprep.subr.bf16.mxu0 %v963
        %2192 = vmatpush1.bf16.msra.mxu0 %v962
        %2193 = vmatprep.subr.bf16.mxu0 %v967
        %2194 = vmatpush1.bf16.msra.mxu0 %v966
        %2195 = vmatprep.subr.bf16.mxu0 %v971
        %2196 = vmatpush1.bf16.msra.mxu0 %v970
        %2197 = vmatprep.subr.bf16.mxu0 %v975
        %2198 = vmatpush1.bf16.msra.mxu0 %v974
        %2199 = vmatprep.subr.bf16.mxu0 %v979
        %2200 = vmatpush1.bf16.msra.mxu0 %v978
        %2201 = vmatprep.subr.bf16.mxu0 %v983
        %2202 = vmatpush1.bf16.msra.mxu0 %v982
        %2203 = vmatprep.subr.bf16.mxu0 %v987
        %2204 = vmatpush1.bf16.msra.mxu0 %v986
        %2205 = vmatprep.subr.bf16.mxu0 %v991
        %2206 = vmatpush1.bf16.msra.mxu0 %v990
        %2207 = vmatprep.subr.bf16.mxu0 %v995
        %2208 = vmatpush1.bf16.msra.mxu0 %v994
        %2209 = vmatprep.subr.bf16.mxu0 %v999
        %2210 = vmatpush1.bf16.msra.mxu0 %v998
        %2211 = vmatprep.mubr.bf16.mxu0 %v1933
        %2212 = vmatmul.mubr.bf16.gmra.mrb[0].mxu0 %v1932
        %v2213 = vpop.f32.mrb[0].mxu0
        %v2214 = vadd.f32 %v2141, %v2213
        %v2215 = vpop.f32.mrb[0].mxu0
        %v2216 = vadd.f32 %v2143, %v2215
        %v2217 = vpop.f32.mrb[0].mxu0
        %v2218 = vadd.f32 %v2145, %v2217
        %v2219 = vpop.f32.mrb[0].mxu0
        %v2220 = vadd.f32 %v2147, %v2219
        %2221 = vmatprep.mubr.bf16.mxu0 %v1955
        %2222 = vmatmul.mubr.bf16.gmra.mrb[0].mxu0 %v1954
        %v2223 = vpop.f32.mrb[0].mxu0
        %v2224 = vadd.f32 %v2151, %v2223
        %v2225 = vpop.f32.mrb[0].mxu0
        %v2226 = vadd.f32 %v2153, %v2225
        %v2227 = vpop.f32.mrb[0].mxu0
        %v2228 = vadd.f32 %v2155, %v2227
        %v2229 = vpop.f32.mrb[0].mxu0
        %v2230 = vadd.f32 %v2157, %v2229
        %2231 = vmatprep.mubr.bf16.mxu0 %v1977
        %2232 = vmatmul.mubr.bf16.gmra.mrb[0].mxu0 %v1976
        %v2233 = vpop.f32.mrb[0].mxu0
        %v2234 = vadd.f32 %v2161, %v2233
        %v2235 = vpop.f32.mrb[0].mxu0
        %v2236 = vadd.f32 %v2163, %v2235
        %v2237 = vpop.f32.mrb[0].mxu0
        %v2238 = vadd.f32 %v2165, %v2237
        %v2239 = vpop.f32.mrb[0].mxu0
        %v2240 = vadd.f32 %v2167, %v2239
        %2241 = vmatprep.mubr.bf16.mxu0 %v1999
        %2242 = vmatmul.mubr.bf16.gmra.mrb[0].mxu0 %v1998
        %v2243 = vpop.f32.mrb[0].mxu0
        %v2244 = vadd.f32 %v2171, %v2243
        %v2245 = vpop.f32.mrb[0].mxu0
        %v2246 = vadd.f32 %v2173, %v2245
        %v2247 = vpop.f32.mrb[0].mxu0
        %v2248 = vadd.f32 %v2175, %v2247
        %v2249 = vpop.f32.mrb[0].mxu0
        %v2250 = vadd.f32 %v2177, %v2249
        %2251 = vdwg.mxu0
        %2252 = vmatprep.subr.bf16.mxu0 %v1003
        %2253 = vmatpush1.bf16.msra.mxu0 %v1002
        %2254 = vmatprep.subr.bf16.mxu0 %v1007
        %2255 = vmatpush1.bf16.msra.mxu0 %v1006
        %2256 = vmatprep.subr.bf16.mxu0 %v1011
        %2257 = vmatpush1.bf16.msra.mxu0 %v1010
        %2258 = vmatprep.subr.bf16.mxu0 %v1015
        %2259 = vmatpush1.bf16.msra.mxu0 %v1014
        %2260 = vmatprep.subr.bf16.mxu0 %v1019
        %2261 = vmatpush1.bf16.msra.mxu0 %v1018
        %2262 = vmatprep.subr.bf16.mxu0 %v1023
        %2263 = vmatpush1.bf16.msra.mxu0 %v1022
        %2264 = vmatprep.subr.bf16.mxu0 %v1027
        %2265 = vmatpush1.bf16.msra.mxu0 %v1026
        %2266 = vmatprep.subr.bf16.mxu0 %v1031
        %2267 = vmatpush1.bf16.msra.mxu0 %v1030
        %2268 = vmatprep.subr.bf16.mxu0 %v1035
        %2269 = vmatpush1.bf16.msra.mxu0 %v1034
        %2270 = vmatprep.subr.bf16.mxu0 %v1039
        %2271 = vmatpush1.bf16.msra.mxu0 %v1038
        %2272 = vmatprep.subr.bf16.mxu0 %v1043
        %2273 = vmatpush1.bf16.msra.mxu0 %v1042
        %2274 = vmatprep.subr.bf16.mxu0 %v1047
        %2275 = vmatpush1.bf16.msra.mxu0 %v1046
        %2276 = vmatprep.subr.bf16.mxu0 %v1051
        %2277 = vmatpush1.bf16.msra.mxu0 %v1050
        %2278 = vmatprep.subr.bf16.mxu0 %v1055
        %2279 = vmatpush1.bf16.msra.mxu0 %v1054
        %2280 = vmatprep.subr.bf16.mxu0 %v1059
        %2281 = vmatpush1.bf16.msra.mxu0 %v1058
        %2282 = vmatprep.subr.bf16.mxu0 %v1063
        %2283 = vmatpush1.bf16.msra.mxu0 %v1062
        %2284 = vmatprep.mubr.bf16.mxu0 %v1935
        %2285 = vmatmul.mubr.bf16.gmra.mrb[0].mxu0 %v1934
        %v2286 = vpop.f32.mrb[0].mxu0
        %v2287 = vadd.f32 %v2214, %v2286
        %v2288 = vpop.f32.mrb[0].mxu0
        %v2289 = vadd.f32 %v2216, %v2288
        %v2290 = vpop.f32.mrb[0].mxu0
        %v2291 = vadd.f32 %v2218, %v2290
        %v2292 = vpop.f32.mrb[0].mxu0
        %v2293 = vadd.f32 %v2220, %v2292
        %2294 = vmatprep.mubr.bf16.mxu0 %v1957
        %2295 = vmatmul.mubr.bf16.gmra.mrb[0].mxu0 %v1956
        %v2296 = vpop.f32.mrb[0].mxu0
        %v2297 = vadd.f32 %v2224, %v2296
        %v2298 = vpop.f32.mrb[0].mxu0
        %v2299 = vadd.f32 %v2226, %v2298
        %v2300 = vpop.f32.mrb[0].mxu0
        %v2301 = vadd.f32 %v2228, %v2300
        %v2302 = vpop.f32.mrb[0].mxu0
        %v2303 = vadd.f32 %v2230, %v2302
        %2304 = vmatprep.mubr.bf16.mxu0 %v1979
        %2305 = vmatmul.mubr.bf16.gmra.mrb[0].mxu0 %v1978
        %v2306 = vpop.f32.mrb[0].mxu0
        %v2307 = vadd.f32 %v2234, %v2306
        %v2308 = vpop.f32.mrb[0].mxu0
        %v2309 = vadd.f32 %v2236, %v2308
        %v2310 = vpop.f32.mrb[0].mxu0
        %v2311 = vadd.f32 %v2238, %v2310
        %v2312 = vpop.f32.mrb[0].mxu0
        %v2313 = vadd.f32 %v2240, %v2312
        %2314 = vmatprep.mubr.bf16.mxu0 %v2001
        %2315 = vmatmul.mubr.bf16.gmra.mrb[0].mxu0 %v2000
        %v2316 = vpop.f32.mrb[0].mxu0
        %v2317 = vadd.f32 %v2244, %v2316
        %v2318 = vpop.f32.mrb[0].mxu0
        %v2319 = vadd.f32 %v2246, %v2318
        %v2320 = vpop.f32.mrb[0].mxu0
        %v2321 = vadd.f32 %v2248, %v2320
        %v2322 = vpop.f32.mrb[0].mxu0
        %v2323 = vadd.f32 %v2250, %v2322
        %2324 = vdwg.mxu0
        %2325 = vmatprep.subr.bf16.mxu0 %v1067
        %2326 = vmatpush1.bf16.msra.mxu0 %v1066
        %2327 = vmatprep.subr.bf16.mxu0 %v1071
        %2328 = vmatpush1.bf16.msra.mxu0 %v1070
        %2329 = vmatprep.subr.bf16.mxu0 %v1075
        %2330 = vmatpush1.bf16.msra.mxu0 %v1074
        %2331 = vmatprep.subr.bf16.mxu0 %v1079
        %2332 = vmatpush1.bf16.msra.mxu0 %v1078
        %2333 = vmatprep.subr.bf16.mxu0 %v1083
        %2334 = vmatpush1.bf16.msra.mxu0 %v1082
        %2335 = vmatprep.subr.bf16.mxu0 %v1087
        %2336 = vmatpush1.bf16.msra.mxu0 %v1086
        %2337 = vmatprep.subr.bf16.mxu0 %v1091
        %2338 = vmatpush1.bf16.msra.mxu0 %v1090
        %2339 = vmatprep.subr.bf16.mxu0 %v1095
        %2340 = vmatpush1.bf16.msra.mxu0 %v1094
        %2341 = vmatprep.subr.bf16.mxu0 %v1099
        %2342 = vmatpush1.bf16.msra.mxu0 %v1098
        %2343 = vmatprep.subr.bf16.mxu0 %v1103
        %2344 = vmatpush1.bf16.msra.mxu0 %v1102
        %2345 = vmatprep.subr.bf16.mxu0 %v1107
        %2346 = vmatpush1.bf16.msra.mxu0 %v1106
        %2347 = vmatprep.subr.bf16.mxu0 %v1111
        %2348 = vmatpush1.bf16.msra.mxu0 %v1110
        %2349 = vmatprep.subr.bf16.mxu0 %v1115
        %2350 = vmatpush1.bf16.msra.mxu0 %v1114
        %2351 = vmatprep.subr.bf16.mxu0 %v1119
        %2352 = vmatpush1.bf16.msra.mxu0 %v1118
        %2353 = vmatprep.subr.bf16.mxu0 %v1123
        %2354 = vmatpush1.bf16.msra.mxu0 %v1122
        %2355 = vmatprep.subr.bf16.mxu0 %v1127
        %2356 = vmatpush1.bf16.msra.mxu0 %v1126
        %2357 = vmatprep.mubr.bf16.mxu0 %v1937
        %2358 = vmatmul.mubr.bf16.gmra.mrb[0].mxu0 %v1936
        %v2359 = vpop.f32.mrb[0].mxu0
        %v2360 = vadd.f32 %v2287, %v2359
        %v2361 = vpop.f32.mrb[0].mxu0
        %v2362 = vadd.f32 %v2289, %v2361
        %v2363 = vpop.f32.mrb[0].mxu0
        %v2364 = vadd.f32 %v2291, %v2363
        %v2365 = vpop.f32.mrb[0].mxu0
        %v2366 = vadd.f32 %v2293, %v2365
        %2367 = vmatprep.mubr.bf16.mxu0 %v1959
        %2368 = vmatmul.mubr.bf16.gmra.mrb[0].mxu0 %v1958
        %v2369 = vpop.f32.mrb[0].mxu0
        %v2370 = vadd.f32 %v2297, %v2369
        %v2371 = vpop.f32.mrb[0].mxu0
        %v2372 = vadd.f32 %v2299, %v2371
        %v2373 = vpop.f32.mrb[0].mxu0
        %v2374 = vadd.f32 %v2301, %v2373
        %v2375 = vpop.f32.mrb[0].mxu0
        %v2376 = vadd.f32 %v2303, %v2375
        %2377 = vmatprep.mubr.bf16.mxu0 %v1981
        %2378 = vmatmul.mubr.bf16.gmra.mrb[0].mxu0 %v1980
        %v2379 = vpop.f32.mrb[0].mxu0
        %v2380 = vadd.f32 %v2307, %v2379
        %v2381 = vpop.f32.mrb[0].mxu0
        %v2382 = vadd.f32 %v2309, %v2381
        %v2383 = vpop.f32.mrb[0].mxu0
        %v2384 = vadd.f32 %v2311, %v2383
        %v2385 = vpop.f32.mrb[0].mxu0
        %v2386 = vadd.f32 %v2313, %v2385
        %2387 = vmatprep.mubr.bf16.mxu0 %v2003
        %2388 = vmatmul.mubr.bf16.gmra.mrb[0].mxu0 %v2002
        %v2389 = vpop.f32.mrb[0].mxu0
        %v2390 = vadd.f32 %v2317, %v2389
        %v2391 = vpop.f32.mrb[0].mxu0
        %v2392 = vadd.f32 %v2319, %v2391
        %v2393 = vpop.f32.mrb[0].mxu0
        %v2394 = vadd.f32 %v2321, %v2393
        %v2395 = vpop.f32.mrb[0].mxu0
        %v2396 = vadd.f32 %v2323, %v2395
        %2397 = vdwg.mxu0
        %2398 = vmatprep.subr.bf16.mxu0 %v1131
        %2399 = vmatpush1.bf16.msra.mxu0 %v1130
        %2400 = vmatprep.subr.bf16.mxu0 %v1135
        %2401 = vmatpush1.bf16.msra.mxu0 %v1134
        %2402 = vmatprep.subr.bf16.mxu0 %v1139
        %2403 = vmatpush1.bf16.msra.mxu0 %v1138
        %2404 = vmatprep.subr.bf16.mxu0 %v1143
        %2405 = vmatpush1.bf16.msra.mxu0 %v1142
        %2406 = vmatprep.subr.bf16.mxu0 %v1147
        %2407 = vmatpush1.bf16.msra.mxu0 %v1146
        %2408 = vmatprep.subr.bf16.mxu0 %v1151
        %2409 = vmatpush1.bf16.msra.mxu0 %v1150
        %2410 = vmatprep.subr.bf16.mxu0 %v1155
        %2411 = vmatpush1.bf16.msra.mxu0 %v1154
        %2412 = vmatprep.subr.bf16.mxu0 %v1159
        %2413 = vmatpush1.bf16.msra.mxu0 %v1158
        %2414 = vmatprep.subr.bf16.mxu0 %v1163
        %2415 = vmatpush1.bf16.msra.mxu0 %v1162
        %2416 = vmatprep.subr.bf16.mxu0 %v1167
        %2417 = vmatpush1.bf16.msra.mxu0 %v1166
        %2418 = vmatprep.subr.bf16.mxu0 %v1171
        %2419 = vmatpush1.bf16.msra.mxu0 %v1170
        %2420 = vmatprep.subr.bf16.mxu0 %v1175
        %2421 = vmatpush1.bf16.msra.mxu0 %v1174
        %2422 = vmatprep.subr.bf16.mxu0 %v1179
        %2423 = vmatpush1.bf16.msra.mxu0 %v1178
        %2424 = vmatprep.subr.bf16.mxu0 %v1183
        %2425 = vmatpush1.bf16.msra.mxu0 %v1182
        %2426 = vmatprep.subr.bf16.mxu0 %v1187
        %2427 = vmatpush1.bf16.msra.mxu0 %v1186
        %2428 = vmatprep.subr.bf16.mxu0 %v1191
        %2429 = vmatpush1.bf16.msra.mxu0 %v1190
        %2430 = vmatprep.mubr.bf16.mxu0 %v1939
        %2431 = vmatmul.mubr.bf16.gmra.mrb[0].mxu0 %v1938
        %v2432 = vpop.f32.mrb[0].mxu0
        %v2433 = vadd.f32 %v2360, %v2432
        %v2434 = vpop.f32.mrb[0].mxu0
        %v2435 = vadd.f32 %v2362, %v2434
        %v2436 = vpop.f32.mrb[0].mxu0
        %v2437 = vadd.f32 %v2364, %v2436
        %v2438 = vpop.f32.mrb[0].mxu0
        %v2439 = vadd.f32 %v2366, %v2438
        %2440 = vmatprep.mubr.bf16.mxu0 %v1961
        %2441 = vmatmul.mubr.bf16.gmra.mrb[0].mxu0 %v1960
        %v2442 = vpop.f32.mrb[0].mxu0
        %v2443 = vadd.f32 %v2370, %v2442
        %v2444 = vpop.f32.mrb[0].mxu0
        %v2445 = vadd.f32 %v2372, %v2444
        %v2446 = vpop.f32.mrb[0].mxu0
        %v2447 = vadd.f32 %v2374, %v2446
        %v2448 = vpop.f32.mrb[0].mxu0
        %v2449 = vadd.f32 %v2376, %v2448
        %2450 = vmatprep.mubr.bf16.mxu0 %v1983
        %2451 = vmatmul.mubr.bf16.gmra.mrb[0].mxu0 %v1982
        %v2452 = vpop.f32.mrb[0].mxu0
        %v2453 = vadd.f32 %v2380, %v2452
        %v2454 = vpop.f32.mrb[0].mxu0
        %v2455 = vadd.f32 %v2382, %v2454
        %v2456 = vpop.f32.mrb[0].mxu0
        %v2457 = vadd.f32 %v2384, %v2456
        %v2458 = vpop.f32.mrb[0].mxu0
        %v2459 = vadd.f32 %v2386, %v2458
        %2460 = vmatprep.mubr.bf16.mxu0 %v2005
        %2461 = vmatmul.mubr.bf16.gmra.mrb[0].mxu0 %v2004
        %v2462 = vpop.f32.mrb[0].mxu0
        %v2463 = vadd.f32 %v2390, %v2462
        %v2464 = vpop.f32.mrb[0].mxu0
        %v2465 = vadd.f32 %v2392, %v2464
        %v2466 = vpop.f32.mrb[0].mxu0
        %v2467 = vadd.f32 %v2394, %v2466
        %v2468 = vpop.f32.mrb[0].mxu0
        %v2469 = vadd.f32 %v2396, %v2468
        %2470 = vdwg.mxu0
        %2471 = vmatprep.subr.bf16.mxu0 %v1195
        %2472 = vmatpush1.bf16.msra.mxu0 %v1194
        %2473 = vmatprep.subr.bf16.mxu0 %v1199
        %2474 = vmatpush1.bf16.msra.mxu0 %v1198
        %2475 = vmatprep.subr.bf16.mxu0 %v1203
        %2476 = vmatpush1.bf16.msra.mxu0 %v1202
        %2477 = vmatprep.subr.bf16.mxu0 %v1207
        %2478 = vmatpush1.bf16.msra.mxu0 %v1206
        %2479 = vmatprep.subr.bf16.mxu0 %v1211
        %2480 = vmatpush1.bf16.msra.mxu0 %v1210
        %2481 = vmatprep.subr.bf16.mxu0 %v1215
        %2482 = vmatpush1.bf16.msra.mxu0 %v1214
        %2483 = vmatprep.subr.bf16.mxu0 %v1219
        %2484 = vmatpush1.bf16.msra.mxu0 %v1218
        %2485 = vmatprep.subr.bf16.mxu0 %v1223
        %2486 = vmatpush1.bf16.msra.mxu0 %v1222
        %2487 = vmatprep.subr.bf16.mxu0 %v1227
        %2488 = vmatpush1.bf16.msra.mxu0 %v1226
        %2489 = vmatprep.subr.bf16.mxu0 %v1231
        %2490 = vmatpush1.bf16.msra.mxu0 %v1230
        %2491 = vmatprep.subr.bf16.mxu0 %v1235
        %2492 = vmatpush1.bf16.msra.mxu0 %v1234
        %2493 = vmatprep.subr.bf16.mxu0 %v1239
        %2494 = vmatpush1.bf16.msra.mxu0 %v1238
        %2495 = vmatprep.subr.bf16.mxu0 %v1243
        %2496 = vmatpush1.bf16.msra.mxu0 %v1242
        %2497 = vmatprep.subr.bf16.mxu0 %v1247
        %2498 = vmatpush1.bf16.msra.mxu0 %v1246
        %2499 = vmatprep.subr.bf16.mxu0 %v1251
        %2500 = vmatpush1.bf16.msra.mxu0 %v1250
        %2501 = vmatprep.subr.bf16.mxu0 %v1255
        %2502 = vmatpush1.bf16.msra.mxu0 %v1254
        %2503 = vmatprep.mubr.bf16.mxu0 %v1941
        %2504 = vmatmul.mubr.bf16.gmra.mrb[0].mxu0 %v1940
        %v2505 = vpop.f32.mrb[0].mxu0
        %v2506 = vadd.f32 %v2433, %v2505
        %v2507 = vpop.f32.mrb[0].mxu0
        %v2508 = vadd.f32 %v2435, %v2507
        %v2509 = vpop.f32.mrb[0].mxu0
        %v2510 = vadd.f32 %v2437, %v2509
        %v2511 = vpop.f32.mrb[0].mxu0
        %v2512 = vadd.f32 %v2439, %v2511
        %2513 = vmatprep.mubr.bf16.mxu0 %v1963
        %2514 = vmatmul.mubr.bf16.gmra.mrb[0].mxu0 %v1962
        %v2515 = vpop.f32.mrb[0].mxu0
        %v2516 = vadd.f32 %v2443, %v2515
        %v2517 = vpop.f32.mrb[0].mxu0
        %v2518 = vadd.f32 %v2445, %v2517
        %v2519 = vpop.f32.mrb[0].mxu0
        %v2520 = vadd.f32 %v2447, %v2519
        %v2521 = vpop.f32.mrb[0].mxu0
        %v2522 = vadd.f32 %v2449, %v2521
        %2523 = vmatprep.mubr.bf16.mxu0 %v1985
        %2524 = vmatmul.mubr.bf16.gmra.mrb[0].mxu0 %v1984
        %v2525 = vpop.f32.mrb[0].mxu0
        %v2526 = vadd.f32 %v2453, %v2525
        %v2527 = vpop.f32.mrb[0].mxu0
        %v2528 = vadd.f32 %v2455, %v2527
        %v2529 = vpop.f32.mrb[0].mxu0
        %v2530 = vadd.f32 %v2457, %v2529
        %v2531 = vpop.f32.mrb[0].mxu0
        %v2532 = vadd.f32 %v2459, %v2531
        %2533 = vmatprep.mubr.bf16.mxu0 %v2007
        %2534 = vmatmul.mubr.bf16.gmra.mrb[0].mxu0 %v2006
        %v2535 = vpop.f32.mrb[0].mxu0
        %v2536 = vadd.f32 %v2463, %v2535
        %v2537 = vpop.f32.mrb[0].mxu0
        %v2538 = vadd.f32 %v2465, %v2537
        %v2539 = vpop.f32.mrb[0].mxu0
        %v2540 = vadd.f32 %v2467, %v2539
        %v2541 = vpop.f32.mrb[0].mxu0
        %v2542 = vadd.f32 %v2469, %v2541
        %2543 = vdwg.mxu0
        %2544 = vmatprep.subr.bf16.mxu0 %v1259
        %2545 = vmatpush1.bf16.msra.mxu0 %v1258
        %2546 = vmatprep.subr.bf16.mxu0 %v1263
        %2547 = vmatpush1.bf16.msra.mxu0 %v1262
        %2548 = vmatprep.subr.bf16.mxu0 %v1267
        %2549 = vmatpush1.bf16.msra.mxu0 %v1266
        %2550 = vmatprep.subr.bf16.mxu0 %v1271
        %2551 = vmatpush1.bf16.msra.mxu0 %v1270
        %2552 = vmatprep.subr.bf16.mxu0 %v1275
        %2553 = vmatpush1.bf16.msra.mxu0 %v1274
        %2554 = vmatprep.subr.bf16.mxu0 %v1279
        %2555 = vmatpush1.bf16.msra.mxu0 %v1278
        %2556 = vmatprep.subr.bf16.mxu0 %v1283
        %2557 = vmatpush1.bf16.msra.mxu0 %v1282
        %2558 = vmatprep.subr.bf16.mxu0 %v1287
        %2559 = vmatpush1.bf16.msra.mxu0 %v1286
        %2560 = vmatprep.subr.bf16.mxu0 %v1291
        %2561 = vmatpush1.bf16.msra.mxu0 %v1290
        %2562 = vmatprep.subr.bf16.mxu0 %v1295
        %2563 = vmatpush1.bf16.msra.mxu0 %v1294
        %2564 = vmatprep.subr.bf16.mxu0 %v1299
        %2565 = vmatpush1.bf16.msra.mxu0 %v1298
        %2566 = vmatprep.subr.bf16.mxu0 %v1303
        %2567 = vmatpush1.bf16.msra.mxu0 %v1302
        %2568 = vmatprep.subr.bf16.mxu0 %v1307
        %2569 = vmatpush1.bf16.msra.mxu0 %v1306
        %2570 = vmatprep.subr.bf16.mxu0 %v1311
        %2571 = vmatpush1.bf16.msra.mxu0 %v1310
        %2572 = vmatprep.subr.bf16.mxu0 %v1315
        %2573 = vmatpush1.bf16.msra.mxu0 %v1314
        %2574 = vmatprep.subr.bf16.mxu0 %v1319
        %2575 = vmatpush1.bf16.msra.mxu0 %v1318
        %2576 = vmatprep.mubr.bf16.mxu0 %v1943
        %2577 = vmatmul.mubr.bf16.gmra.mrb[0].mxu0 %v1942
        %v2578 = vpop.f32.mrb[0].mxu0
        %v2579 = vadd.f32 %v2506, %v2578
        %v2580 = vpop.f32.mrb[0].mxu0
        %v2581 = vadd.f32 %v2508, %v2580
        %v2582 = vpop.f32.mrb[0].mxu0
        %v2583 = vadd.f32 %v2510, %v2582
        %v2584 = vpop.f32.mrb[0].mxu0
        %v2585 = vadd.f32 %v2512, %v2584
        %2586 = vmatprep.mubr.bf16.mxu0 %v1965
        %2587 = vmatmul.mubr.bf16.gmra.mrb[0].mxu0 %v1964
        %v2588 = vpop.f32.mrb[0].mxu0
        %v2589 = vadd.f32 %v2516, %v2588
        %v2590 = vpop.f32.mrb[0].mxu0
        %v2591 = vadd.f32 %v2518, %v2590
        %v2592 = vpop.f32.mrb[0].mxu0
        %v2593 = vadd.f32 %v2520, %v2592
        %v2594 = vpop.f32.mrb[0].mxu0
        %v2595 = vadd.f32 %v2522, %v2594
        %2596 = vmatprep.mubr.bf16.mxu0 %v1987
        %2597 = vmatmul.mubr.bf16.gmra.mrb[0].mxu0 %v1986
        %v2598 = vpop.f32.mrb[0].mxu0
        %v2599 = vadd.f32 %v2526, %v2598
        %v2600 = vpop.f32.mrb[0].mxu0
        %v2601 = vadd.f32 %v2528, %v2600
        %v2602 = vpop.f32.mrb[0].mxu0
        %v2603 = vadd.f32 %v2530, %v2602
        %v2604 = vpop.f32.mrb[0].mxu0
        %v2605 = vadd.f32 %v2532, %v2604
        %2606 = vmatprep.mubr.bf16.mxu0 %v2009
        %2607 = vmatmul.mubr.bf16.gmra.mrb[0].mxu0 %v2008
        %v2608 = vpop.f32.mrb[0].mxu0
        %v2609 = vadd.f32 %v2536, %v2608
        %v2610 = vpop.f32.mrb[0].mxu0
        %v2611 = vadd.f32 %v2538, %v2610
        %v2612 = vpop.f32.mrb[0].mxu0
        %v2613 = vadd.f32 %v2540, %v2612
        %v2614 = vpop.f32.mrb[0].mxu0
        %v2615 = vadd.f32 %v2542, %v2614
        %2616 = vdwg.mxu0
        %2617 = vmatprep.subr.bf16.mxu0 %v1323
        %2618 = vmatpush1.bf16.msra.mxu0 %v1322
        %2619 = vmatprep.subr.bf16.mxu0 %v1327
        %2620 = vmatpush1.bf16.msra.mxu0 %v1326
        %2621 = vmatprep.subr.bf16.mxu0 %v1331
        %2622 = vmatpush1.bf16.msra.mxu0 %v1330
        %2623 = vmatprep.subr.bf16.mxu0 %v1335
        %2624 = vmatpush1.bf16.msra.mxu0 %v1334
        %2625 = vmatprep.subr.bf16.mxu0 %v1339
        %2626 = vmatpush1.bf16.msra.mxu0 %v1338
        %2627 = vmatprep.subr.bf16.mxu0 %v1343
        %2628 = vmatpush1.bf16.msra.mxu0 %v1342
        %2629 = vmatprep.subr.bf16.mxu0 %v1347
        %2630 = vmatpush1.bf16.msra.mxu0 %v1346
        %2631 = vmatprep.subr.bf16.mxu0 %v1351
        %2632 = vmatpush1.bf16.msra.mxu0 %v1350
        %2633 = vmatprep.subr.bf16.mxu0 %v1355
        %2634 = vmatpush1.bf16.msra.mxu0 %v1354
        %2635 = vmatprep.subr.bf16.mxu0 %v1359
        %2636 = vmatpush1.bf16.msra.mxu0 %v1358
        %2637 = vmatprep.subr.bf16.mxu0 %v1363
        %2638 = vmatpush1.bf16.msra.mxu0 %v1362
        %2639 = vmatprep.subr.bf16.mxu0 %v1367
        %2640 = vmatpush1.bf16.msra.mxu0 %v1366
        %2641 = vmatprep.subr.bf16.mxu0 %v1371
        %2642 = vmatpush1.bf16.msra.mxu0 %v1370
        %2643 = vmatprep.subr.bf16.mxu0 %v1375
        %2644 = vmatpush1.bf16.msra.mxu0 %v1374
        %2645 = vmatprep.subr.bf16.mxu0 %v1379
        %2646 = vmatpush1.bf16.msra.mxu0 %v1378
        %2647 = vmatprep.subr.bf16.mxu0 %v1383
        %2648 = vmatpush1.bf16.msra.mxu0 %v1382
        %2649 = vmatprep.mubr.bf16.mxu0 %v1945
        %2650 = vmatmul.mubr.bf16.gmra.mrb[0].mxu0 %v1944
        %v2651 = vpop.f32.mrb[0].mxu0
        %v2652 = vadd.f32 %v2579, %v2651
        %v2653 = vpop.f32.mrb[0].mxu0
        %v2654 = vadd.f32 %v2581, %v2653
        %v2655 = vpop.f32.mrb[0].mxu0
        %v2656 = vadd.f32 %v2583, %v2655
        %v2657 = vpop.f32.mrb[0].mxu0
        %v2658 = vadd.f32 %v2585, %v2657
        %2659 = vmatprep.mubr.bf16.mxu0 %v1967
        %2660 = vmatmul.mubr.bf16.gmra.mrb[0].mxu0 %v1966
        %v2661 = vpop.f32.mrb[0].mxu0
        %v2662 = vadd.f32 %v2589, %v2661
        %v2663 = vpop.f32.mrb[0].mxu0
        %v2664 = vadd.f32 %v2591, %v2663
        %v2665 = vpop.f32.mrb[0].mxu0
        %v2666 = vadd.f32 %v2593, %v2665
        %v2667 = vpop.f32.mrb[0].mxu0
        %v2668 = vadd.f32 %v2595, %v2667
        %2669 = vmatprep.mubr.bf16.mxu0 %v1989
        %2670 = vmatmul.mubr.bf16.gmra.mrb[0].mxu0 %v1988
        %v2671 = vpop.f32.mrb[0].mxu0
        %v2672 = vadd.f32 %v2599, %v2671
        %v2673 = vpop.f32.mrb[0].mxu0
        %v2674 = vadd.f32 %v2601, %v2673
        %v2675 = vpop.f32.mrb[0].mxu0
        %v2676 = vadd.f32 %v2603, %v2675
        %v2677 = vpop.f32.mrb[0].mxu0
        %v2678 = vadd.f32 %v2605, %v2677
        %2679 = vmatprep.mubr.bf16.mxu0 %v2011
        %2680 = vmatmul.mubr.bf16.gmra.mrb[0].mxu0 %v2010
        %v2681 = vpop.f32.mrb[0].mxu0
        %v2682 = vadd.f32 %v2609, %v2681
        %v2683 = vpop.f32.mrb[0].mxu0
        %v2684 = vadd.f32 %v2611, %v2683
        %v2685 = vpop.f32.mrb[0].mxu0
        %v2686 = vadd.f32 %v2613, %v2685
        %v2687 = vpop.f32.mrb[0].mxu0
        %v2688 = vadd.f32 %v2615, %v2687
        %2689 = vdwg.mxu0
        %2690 = vmatprep.subr.bf16.mxu0 %v1387
        %2691 = vmatpush1.bf16.msra.mxu0 %v1386
        %2692 = vmatprep.subr.bf16.mxu0 %v1391
        %2693 = vmatpush1.bf16.msra.mxu0 %v1390
        %2694 = vmatprep.subr.bf16.mxu0 %v1395
        %2695 = vmatpush1.bf16.msra.mxu0 %v1394
        %2696 = vmatprep.subr.bf16.mxu0 %v1399
        %2697 = vmatpush1.bf16.msra.mxu0 %v1398
        %2698 = vmatprep.subr.bf16.mxu0 %v1403
        %2699 = vmatpush1.bf16.msra.mxu0 %v1402
        %2700 = vmatprep.subr.bf16.mxu0 %v1407
        %2701 = vmatpush1.bf16.msra.mxu0 %v1406
        %2702 = vmatprep.subr.bf16.mxu0 %v1411
        %2703 = vmatpush1.bf16.msra.mxu0 %v1410
        %2704 = vmatprep.subr.bf16.mxu0 %v1415
        %2705 = vmatpush1.bf16.msra.mxu0 %v1414
        %2706 = vmatprep.subr.bf16.mxu0 %v1419
        %2707 = vmatpush1.bf16.msra.mxu0 %v1418
        %2708 = vmatprep.subr.bf16.mxu0 %v1423
        %2709 = vmatpush1.bf16.msra.mxu0 %v1422
        %2710 = vmatprep.subr.bf16.mxu0 %v1427
        %2711 = vmatpush1.bf16.msra.mxu0 %v1426
        %2712 = vmatprep.subr.bf16.mxu0 %v1431
        %2713 = vmatpush1.bf16.msra.mxu0 %v1430
        %2714 = vmatprep.subr.bf16.mxu0 %v1435
        %2715 = vmatpush1.bf16.msra.mxu0 %v1434
        %2716 = vmatprep.subr.bf16.mxu0 %v1439
        %2717 = vmatpush1.bf16.msra.mxu0 %v1438
        %2718 = vmatprep.subr.bf16.mxu0 %v1443
        %2719 = vmatpush1.bf16.msra.mxu0 %v1442
        %2720 = vmatprep.subr.bf16.mxu0 %v1447
        %2721 = vmatpush1.bf16.msra.mxu0 %v1446
        %2722 = vmatprep.mubr.bf16.mxu0 %v1947
        %2723 = vmatmul.mubr.bf16.gmra.mrb[0].mxu0 %v1946
        %v2724 = vpop.f32.mrb[0].mxu0
        %v2725 = vadd.f32 %v2652, %v2724
        %v2726 = vpop.f32.mrb[0].mxu0
        %v2727 = vadd.f32 %v2654, %v2726
        %v2728 = vpop.f32.mrb[0].mxu0
        %v2729 = vadd.f32 %v2656, %v2728
        %v2730 = vpop.f32.mrb[0].mxu0
        %v2731 = vadd.f32 %v2658, %v2730
        %2732 = vmatprep.mubr.bf16.mxu0 %v1969
        %2733 = vmatmul.mubr.bf16.gmra.mrb[0].mxu0 %v1968
        %v2734 = vpop.f32.mrb[0].mxu0
        %v2735 = vadd.f32 %v2662, %v2734
        %v2736 = vpop.f32.mrb[0].mxu0
        %v2737 = vadd.f32 %v2664, %v2736
        %v2738 = vpop.f32.mrb[0].mxu0
        %v2739 = vadd.f32 %v2666, %v2738
        %v2740 = vpop.f32.mrb[0].mxu0
        %v2741 = vadd.f32 %v2668, %v2740
        %2742 = vmatprep.mubr.bf16.mxu0 %v1991
        %2743 = vmatmul.mubr.bf16.gmra.mrb[0].mxu0 %v1990
        %v2744 = vpop.f32.mrb[0].mxu0
        %v2745 = vadd.f32 %v2672, %v2744
        %v2746 = vpop.f32.mrb[0].mxu0
        %v2747 = vadd.f32 %v2674, %v2746
        %v2748 = vpop.f32.mrb[0].mxu0
        %v2749 = vadd.f32 %v2676, %v2748
        %v2750 = vpop.f32.mrb[0].mxu0
        %v2751 = vadd.f32 %v2678, %v2750
        %2752 = vmatprep.mubr.bf16.mxu0 %v2013
        %2753 = vmatmul.mubr.bf16.gmra.mrb[0].mxu0 %v2012
        %v2754 = vpop.f32.mrb[0].mxu0
        %v2755 = vadd.f32 %v2682, %v2754
        %v2756 = vpop.f32.mrb[0].mxu0
        %v2757 = vadd.f32 %v2684, %v2756
        %v2758 = vpop.f32.mrb[0].mxu0
        %v2759 = vadd.f32 %v2686, %v2758
        %v2760 = vpop.f32.mrb[0].mxu0
        %v2761 = vadd.f32 %v2688, %v2760
        %2762 = vdwg.mxu0
        %2763 = vmatprep.subr.bf16.mxu0 %v1451
        %2764 = vmatpush1.bf16.msra.mxu0 %v1450
        %2765 = vmatprep.subr.bf16.mxu0 %v1455
        %2766 = vmatpush1.bf16.msra.mxu0 %v1454
        %2767 = vmatprep.subr.bf16.mxu0 %v1459
        %2768 = vmatpush1.bf16.msra.mxu0 %v1458
        %2769 = vmatprep.subr.bf16.mxu0 %v1463
        %2770 = vmatpush1.bf16.msra.mxu0 %v1462
        %2771 = vmatprep.subr.bf16.mxu0 %v1467
        %2772 = vmatpush1.bf16.msra.mxu0 %v1466
        %2773 = vmatprep.subr.bf16.mxu0 %v1471
        %2774 = vmatpush1.bf16.msra.mxu0 %v1470
        %2775 = vmatprep.subr.bf16.mxu0 %v1475
        %2776 = vmatpush1.bf16.msra.mxu0 %v1474
        %2777 = vmatprep.subr.bf16.mxu0 %v1479
        %2778 = vmatpush1.bf16.msra.mxu0 %v1478
        %2779 = vmatprep.subr.bf16.mxu0 %v1483
        %2780 = vmatpush1.bf16.msra.mxu0 %v1482
        %2781 = vmatprep.subr.bf16.mxu0 %v1487
        %2782 = vmatpush1.bf16.msra.mxu0 %v1486
        %2783 = vmatprep.subr.bf16.mxu0 %v1491
        %2784 = vmatpush1.bf16.msra.mxu0 %v1490
        %2785 = vmatprep.subr.bf16.mxu0 %v1495
        %2786 = vmatpush1.bf16.msra.mxu0 %v1494
        %2787 = vmatprep.subr.bf16.mxu0 %v1499
        %2788 = vmatpush1.bf16.msra.mxu0 %v1498
        %2789 = vmatprep.subr.bf16.mxu0 %v1503
        %2790 = vmatpush1.bf16.msra.mxu0 %v1502
        %2791 = vmatprep.subr.bf16.mxu0 %v1507
        %2792 = vmatpush1.bf16.msra.mxu0 %v1506
        %2793 = vmatprep.subr.bf16.mxu0 %v1511
        %2794 = vmatpush1.bf16.msra.mxu0 %v1510
        %2795 = vmatprep.mubr.bf16.mxu0 %v1949
        %2796 = vmatmul.mubr.bf16.gmra.mrb[0].mxu0 %v1948
        %v2797 = vpop.f32.mrb[0].mxu0
        %v2798 = vadd.f32 %v2725, %v2797
        %v2799 = vpop.f32.mrb[0].mxu0
        %v2800 = vadd.f32 %v2727, %v2799
        %v2801 = vpop.f32.mrb[0].mxu0
        %v2802 = vadd.f32 %v2729, %v2801
        %v2803 = vpop.f32.mrb[0].mxu0
        %v2804 = vadd.f32 %v2731, %v2803
        %2805 = vmatprep.mubr.bf16.mxu0 %v1971
        %2806 = vmatmul.mubr.bf16.gmra.mrb[0].mxu0 %v1970
        %v2807 = vpop.f32.mrb[0].mxu0
        %v2808 = vadd.f32 %v2735, %v2807
        %v2809 = vpop.f32.mrb[0].mxu0
        %v2810 = vadd.f32 %v2737, %v2809
        %v2811 = vpop.f32.mrb[0].mxu0
        %v2812 = vadd.f32 %v2739, %v2811
        %v2813 = vpop.f32.mrb[0].mxu0
        %v2814 = vadd.f32 %v2741, %v2813
        %2815 = vmatprep.mubr.bf16.mxu0 %v1993
        %2816 = vmatmul.mubr.bf16.gmra.mrb[0].mxu0 %v1992
        %v2817 = vpop.f32.mrb[0].mxu0
        %v2818 = vadd.f32 %v2745, %v2817
        %v2819 = vpop.f32.mrb[0].mxu0
        %v2820 = vadd.f32 %v2747, %v2819
        %v2821 = vpop.f32.mrb[0].mxu0
        %v2822 = vadd.f32 %v2749, %v2821
        %v2823 = vpop.f32.mrb[0].mxu0
        %v2824 = vadd.f32 %v2751, %v2823
        %2825 = vmatprep.mubr.bf16.mxu0 %v2015
        %2826 = vmatmul.mubr.bf16.gmra.mrb[0].mxu0 %v2014
        %v2827 = vpop.f32.mrb[0].mxu0
        %v2828 = vadd.f32 %v2755, %v2827
        %v2829 = vpop.f32.mrb[0].mxu0
        %v2830 = vadd.f32 %v2757, %v2829
        %v2831 = vpop.f32.mrb[0].mxu0
        %v2832 = vadd.f32 %v2759, %v2831
        %v2833 = vpop.f32.mrb[0].mxu0
        %v2834 = vadd.f32 %v2761, %v2833
        %2835 = vdwg.mxu0
        %2836 = vmatprep.subr.bf16.mxu0 %v1515
        %2837 = vmatpush1.bf16.msra.mxu0 %v1514
        %2838 = vmatprep.subr.bf16.mxu0 %v1519
        %2839 = vmatpush1.bf16.msra.mxu0 %v1518
        %2840 = vmatprep.subr.bf16.mxu0 %v1523
        %2841 = vmatpush1.bf16.msra.mxu0 %v1522
        %2842 = vmatprep.subr.bf16.mxu0 %v1527
        %2843 = vmatpush1.bf16.msra.mxu0 %v1526
        %2844 = vmatprep.subr.bf16.mxu0 %v1531
        %2845 = vmatpush1.bf16.msra.mxu0 %v1530
        %2846 = vmatprep.subr.bf16.mxu0 %v1535
        %2847 = vmatpush1.bf16.msra.mxu0 %v1534
        %2848 = vmatprep.subr.bf16.mxu0 %v1539
        %2849 = vmatpush1.bf16.msra.mxu0 %v1538
        %2850 = vmatprep.subr.bf16.mxu0 %v1543
        %2851 = vmatpush1.bf16.msra.mxu0 %v1542
        %2852 = vmatprep.subr.bf16.mxu0 %v1547
        %2853 = vmatpush1.bf16.msra.mxu0 %v1546
        %2854 = vmatprep.subr.bf16.mxu0 %v1551
        %2855 = vmatpush1.bf16.msra.mxu0 %v1550
        %2856 = vmatprep.subr.bf16.mxu0 %v1555
        %2857 = vmatpush1.bf16.msra.mxu0 %v1554
        %2858 = vmatprep.subr.bf16.mxu0 %v1559
        %2859 = vmatpush1.bf16.msra.mxu0 %v1558
        %2860 = vmatprep.subr.bf16.mxu0 %v1563
        %2861 = vmatpush1.bf16.msra.mxu0 %v1562
        %2862 = vmatprep.subr.bf16.mxu0 %v1567
        %2863 = vmatpush1.bf16.msra.mxu0 %v1566
        %2864 = vmatprep.subr.bf16.mxu0 %v1571
        %2865 = vmatpush1.bf16.msra.mxu0 %v1570
        %2866 = vmatprep.subr.bf16.mxu0 %v1575
        %2867 = vmatpush1.bf16.msra.mxu0 %v1574
        %2868 = vmatprep.mubr.bf16.mxu0 %v1951
        %2869 = vmatmul.mubr.bf16.gmra.mrb[0].mxu0 %v1950
        %v2870 = vpop.f32.mrb[0].mxu0
        %v2871 = vadd.f32 %v2798, %v2870
        %v2872 = vpop.f32.mrb[0].mxu0
        %v2873 = vadd.f32 %v2800, %v2872
        %v2874 = vpop.f32.mrb[0].mxu0
        %v2875 = vadd.f32 %v2802, %v2874
        %v2876 = vpop.f32.mrb[0].mxu0
        %v2877 = vadd.f32 %v2804, %v2876
        %2878 = vmatprep.mubr.bf16.mxu0 %v1973
        %2879 = vmatmul.mubr.bf16.gmra.mrb[0].mxu0 %v1972
        %v2880 = vpop.f32.mrb[0].mxu0
        %v2881 = vadd.f32 %v2808, %v2880
        %v2882 = vpop.f32.mrb[0].mxu0
        %v2883 = vadd.f32 %v2810, %v2882
        %v2884 = vpop.f32.mrb[0].mxu0
        %v2885 = vadd.f32 %v2812, %v2884
        %v2886 = vpop.f32.mrb[0].mxu0
        %v2887 = vadd.f32 %v2814, %v2886
        %2888 = vmatprep.mubr.bf16.mxu0 %v1995
        %2889 = vmatmul.mubr.bf16.gmra.mrb[0].mxu0 %v1994
        %v2890 = vpop.f32.mrb[0].mxu0
        %v2891 = vadd.f32 %v2818, %v2890
        %v2892 = vpop.f32.mrb[0].mxu0
        %v2893 = vadd.f32 %v2820, %v2892
        %v2894 = vpop.f32.mrb[0].mxu0
        %v2895 = vadd.f32 %v2822, %v2894
        %v2896 = vpop.f32.mrb[0].mxu0
        %v2897 = vadd.f32 %v2824, %v2896
        %2898 = vmatprep.mubr.bf16.mxu0 %v2017
        %2899 = vmatmul.mubr.bf16.gmra.mrb[0].mxu0 %v2016
        %v2900 = vpop.f32.mrb[0].mxu0
        %v2901 = vadd.f32 %v2828, %v2900
        %v2902 = vpop.f32.mrb[0].mxu0
        %v2903 = vadd.f32 %v2830, %v2902
        %v2904 = vpop.f32.mrb[0].mxu0
        %v2905 = vadd.f32 %v2832, %v2904
        %v2906 = vpop.f32.mrb[0].mxu0
        %v2907 = vadd.f32 %v2834, %v2906
        %2908 = vdwg.mxu0
        %2909 = vmatprep.subr.bf16.mxu0 %v877
        %2910 = vmatpush1.bf16.msra.mxu0 %v876
        %2911 = vmatprep.subr.bf16.mxu0 %v881
        %2912 = vmatpush1.bf16.msra.mxu0 %v880
        %2913 = vmatprep.subr.bf16.mxu0 %v885
        %2914 = vmatpush1.bf16.msra.mxu0 %v884
        %2915 = vmatprep.subr.bf16.mxu0 %v889
        %2916 = vmatpush1.bf16.msra.mxu0 %v888
        %2917 = vmatprep.subr.bf16.mxu0 %v893
        %2918 = vmatpush1.bf16.msra.mxu0 %v892
        %2919 = vmatprep.subr.bf16.mxu0 %v897
        %2920 = vmatpush1.bf16.msra.mxu0 %v896
        %2921 = vmatprep.subr.bf16.mxu0 %v901
        %2922 = vmatpush1.bf16.msra.mxu0 %v900
        %2923 = vmatprep.subr.bf16.mxu0 %v905
        %2924 = vmatpush1.bf16.msra.mxu0 %v904
        %2925 = vmatprep.subr.bf16.mxu0 %v909
        %2926 = vmatpush1.bf16.msra.mxu0 %v908
        %2927 = vmatprep.subr.bf16.mxu0 %v913
        %2928 = vmatpush1.bf16.msra.mxu0 %v912
        %2929 = vmatprep.subr.bf16.mxu0 %v917
        %2930 = vmatpush1.bf16.msra.mxu0 %v916
        %2931 = vmatprep.subr.bf16.mxu0 %v921
        %2932 = vmatpush1.bf16.msra.mxu0 %v920
        %2933 = vmatprep.subr.bf16.mxu0 %v925
        %2934 = vmatpush1.bf16.msra.mxu0 %v924
        %2935 = vmatprep.subr.bf16.mxu0 %v929
        %2936 = vmatpush1.bf16.msra.mxu0 %v928
        %2937 = vmatprep.subr.bf16.mxu0 %v933
        %2938 = vmatpush1.bf16.msra.mxu0 %v932
        %2939 = vmatprep.subr.bf16.mxu0 %v937
        %2940 = vmatpush1.bf16.msra.mxu0 %v936
        %2941 = vmatprep.mubr.bf16.mxu0 %v1931
        %2942 = vmatmul.mubr.bf16.gmra.mrb[0].mxu0 %v1930
        %v2943 = vpop.f32.mrb[0].mxu0
        %v2944 = vadd.f32 0.0, %v2943
        %v2945 = vpop.f32.mrb[0].mxu0
        %v2946 = vadd.f32 0.0, %v2945
        %v2947 = vpop.f32.mrb[0].mxu0
        %v2948 = vadd.f32 0.0, %v2947
        %v2949 = vpop.f32.mrb[0].mxu0
        %v2950 = vadd.f32 0.0, %v2949
        %2951 = vmatprep.mubr.bf16.mxu0 %v1953
        %2952 = vmatmul.mubr.bf16.gmra.mrb[0].mxu0 %v1952
        %v2953 = vpop.f32.mrb[0].mxu0
        %v2954 = vadd.f32 0.0, %v2953
        %v2955 = vpop.f32.mrb[0].mxu0
        %v2956 = vadd.f32 0.0, %v2955
        %v2957 = vpop.f32.mrb[0].mxu0
        %v2958 = vadd.f32 0.0, %v2957
        %v2959 = vpop.f32.mrb[0].mxu0
        %v2960 = vadd.f32 0.0, %v2959
        %2961 = vmatprep.mubr.bf16.mxu0 %v1975
        %2962 = vmatmul.mubr.bf16.gmra.mrb[0].mxu0 %v1974
        %v2963 = vpop.f32.mrb[0].mxu0
        %v2964 = vadd.f32 0.0, %v2963
        %v2965 = vpop.f32.mrb[0].mxu0
        %v2966 = vadd.f32 0.0, %v2965
        %v2967 = vpop.f32.mrb[0].mxu0
        %v2968 = vadd.f32 0.0, %v2967
        %v2969 = vpop.f32.mrb[0].mxu0
        %v2970 = vadd.f32 0.0, %v2969
        %2971 = vmatprep.mubr.bf16.mxu0 %v1997
        %2972 = vmatmul.mubr.bf16.gmra.mrb[0].mxu0 %v1996
        %v2973 = vpop.f32.mrb[0].mxu0
        %v2974 = vadd.f32 0.0, %v2973
        %v2975 = vpop.f32.mrb[0].mxu0
        %v2976 = vadd.f32 0.0, %v2975
        %v2977 = vpop.f32.mrb[0].mxu0
        %v2978 = vadd.f32 0.0, %v2977
        %v2979 = vpop.f32.mrb[0].mxu0
        %v2980 = vadd.f32 0.0, %v2979
        %2981 = vdwg.mxu0
        %2982 = vmatprep.subr.bf16.mxu0 %v941
        %2983 = vmatpush1.bf16.msra.mxu0 %v940
        %2984 = vmatprep.subr.bf16.mxu0 %v945
        %2985 = vmatpush1.bf16.msra.mxu0 %v944
        %2986 = vmatprep.subr.bf16.mxu0 %v949
        %2987 = vmatpush1.bf16.msra.mxu0 %v948
        %2988 = vmatprep.subr.bf16.mxu0 %v953
        %2989 = vmatpush1.bf16.msra.mxu0 %v952
        %2990 = vmatprep.subr.bf16.mxu0 %v957
        %2991 = vmatpush1.bf16.msra.mxu0 %v956
        %2992 = vmatprep.subr.bf16.mxu0 %v961
        %2993 = vmatpush1.bf16.msra.mxu0 %v960
        %2994 = vmatprep.subr.bf16.mxu0 %v965
        %2995 = vmatpush1.bf16.msra.mxu0 %v964
        %2996 = vmatprep.subr.bf16.mxu0 %v969
        %2997 = vmatpush1.bf16.msra.mxu0 %v968
        %2998 = vmatprep.subr.bf16.mxu0 %v973
        %2999 = vmatpush1.bf16.msra.mxu0 %v972
        %3000 = vmatprep.subr.bf16.mxu0 %v977
        %3001 = vmatpush1.bf16.msra.mxu0 %v976
        %3002 = vmatprep.subr.bf16.mxu0 %v981
        %3003 = vmatpush1.bf16.msra.mxu0 %v980
        %3004 = vmatprep.subr.bf16.mxu0 %v985
        %3005 = vmatpush1.bf16.msra.mxu0 %v984
        %3006 = vmatprep.subr.bf16.mxu0 %v989
        %3007 = vmatpush1.bf16.msra.mxu0 %v988
        %3008 = vmatprep.subr.bf16.mxu0 %v993
        %3009 = vmatpush1.bf16.msra.mxu0 %v992
        %3010 = vmatprep.subr.bf16.mxu0 %v997
        %3011 = vmatpush1.bf16.msra.mxu0 %v996
        %3012 = vmatprep.subr.bf16.mxu0 %v1001
        %3013 = vmatpush1.bf16.msra.mxu0 %v1000
        %3014 = vmatprep.mubr.bf16.mxu0 %v1933
        %3015 = vmatmul.mubr.bf16.gmra.mrb[0].mxu0 %v1932
        %v3016 = vpop.f32.mrb[0].mxu0
        %v3017 = vadd.f32 %v2944, %v3016
        %v3018 = vpop.f32.mrb[0].mxu0
        %v3019 = vadd.f32 %v2946, %v3018
        %v3020 = vpop.f32.mrb[0].mxu0
        %v3021 = vadd.f32 %v2948, %v3020
        %v3022 = vpop.f32.mrb[0].mxu0
        %v3023 = vadd.f32 %v2950, %v3022
        %3024 = vmatprep.mubr.bf16.mxu0 %v1955
        %3025 = vmatmul.mubr.bf16.gmra.mrb[0].mxu0 %v1954
        %v3026 = vpop.f32.mrb[0].mxu0
        %v3027 = vadd.f32 %v2954, %v3026
        %v3028 = vpop.f32.mrb[0].mxu0
        %v3029 = vadd.f32 %v2956, %v3028
        %v3030 = vpop.f32.mrb[0].mxu0
        %v3031 = vadd.f32 %v2958, %v3030
        %v3032 = vpop.f32.mrb[0].mxu0
        %v3033 = vadd.f32 %v2960, %v3032
        %3034 = vmatprep.mubr.bf16.mxu0 %v1977
        %3035 = vmatmul.mubr.bf16.gmra.mrb[0].mxu0 %v1976
        %v3036 = vpop.f32.mrb[0].mxu0
        %v3037 = vadd.f32 %v2964, %v3036
        %v3038 = vpop.f32.mrb[0].mxu0
        %v3039 = vadd.f32 %v2966, %v3038
        %v3040 = vpop.f32.mrb[0].mxu0
        %v3041 = vadd.f32 %v2968, %v3040
        %v3042 = vpop.f32.mrb[0].mxu0
        %v3043 = vadd.f32 %v2970, %v3042
        %3044 = vmatprep.mubr.bf16.mxu0 %v1999
        %3045 = vmatmul.mubr.bf16.gmra.mrb[0].mxu0 %v1998
        %v3046 = vpop.f32.mrb[0].mxu0
        %v3047 = vadd.f32 %v2974, %v3046
        %v3048 = vpop.f32.mrb[0].mxu0
        %v3049 = vadd.f32 %v2976, %v3048
        %v3050 = vpop.f32.mrb[0].mxu0
        %v3051 = vadd.f32 %v2978, %v3050
        %v3052 = vpop.f32.mrb[0].mxu0
        %v3053 = vadd.f32 %v2980, %v3052
        %3054 = vdwg.mxu0
        %3055 = vmatprep.subr.bf16.mxu0 %v1005
        %3056 = vmatpush1.bf16.msra.mxu0 %v1004
        %3057 = vmatprep.subr.bf16.mxu0 %v1009
        %3058 = vmatpush1.bf16.msra.mxu0 %v1008
        %3059 = vmatprep.subr.bf16.mxu0 %v1013
        %3060 = vmatpush1.bf16.msra.mxu0 %v1012
        %3061 = vmatprep.subr.bf16.mxu0 %v1017
        %3062 = vmatpush1.bf16.msra.mxu0 %v1016
        %3063 = vmatprep.subr.bf16.mxu0 %v1021
        %3064 = vmatpush1.bf16.msra.mxu0 %v1020
        %3065 = vmatprep.subr.bf16.mxu0 %v1025
        %3066 = vmatpush1.bf16.msra.mxu0 %v1024
        %3067 = vmatprep.subr.bf16.mxu0 %v1029
        %3068 = vmatpush1.bf16.msra.mxu0 %v1028
        %3069 = vmatprep.subr.bf16.mxu0 %v1033
        %3070 = vmatpush1.bf16.msra.mxu0 %v1032
        %3071 = vmatprep.subr.bf16.mxu0 %v1037
        %3072 = vmatpush1.bf16.msra.mxu0 %v1036
        %3073 = vmatprep.subr.bf16.mxu0 %v1041
        %3074 = vmatpush1.bf16.msra.mxu0 %v1040
        %3075 = vmatprep.subr.bf16.mxu0 %v1045
        %3076 = vmatpush1.bf16.msra.mxu0 %v1044
        %3077 = vmatprep.subr.bf16.mxu0 %v1049
        %3078 = vmatpush1.bf16.msra.mxu0 %v1048
        %3079 = vmatprep.subr.bf16.mxu0 %v1053
        %3080 = vmatpush1.bf16.msra.mxu0 %v1052
        %3081 = vmatprep.subr.bf16.mxu0 %v1057
        %3082 = vmatpush1.bf16.msra.mxu0 %v1056
        %3083 = vmatprep.subr.bf16.mxu0 %v1061
        %3084 = vmatpush1.bf16.msra.mxu0 %v1060
        %3085 = vmatprep.subr.bf16.mxu0 %v1065
        %3086 = vmatpush1.bf16.msra.mxu0 %v1064
        %3087 = vmatprep.mubr.bf16.mxu0 %v1935
        %3088 = vmatmul.mubr.bf16.gmra.mrb[0].mxu0 %v1934
        %v3089 = vpop.f32.mrb[0].mxu0
        %v3090 = vadd.f32 %v3017, %v3089
        %v3091 = vpop.f32.mrb[0].mxu0
        %v3092 = vadd.f32 %v3019, %v3091
        %v3093 = vpop.f32.mrb[0].mxu0
        %v3094 = vadd.f32 %v3021, %v3093
        %v3095 = vpop.f32.mrb[0].mxu0
        %v3096 = vadd.f32 %v3023, %v3095
        %3097 = vmatprep.mubr.bf16.mxu0 %v1957
        %3098 = vmatmul.mubr.bf16.gmra.mrb[0].mxu0 %v1956
        %v3099 = vpop.f32.mrb[0].mxu0
        %v3100 = vadd.f32 %v3027, %v3099
        %v3101 = vpop.f32.mrb[0].mxu0
        %v3102 = vadd.f32 %v3029, %v3101
        %v3103 = vpop.f32.mrb[0].mxu0
        %v3104 = vadd.f32 %v3031, %v3103
        %v3105 = vpop.f32.mrb[0].mxu0
        %v3106 = vadd.f32 %v3033, %v3105
        %3107 = vmatprep.mubr.bf16.mxu0 %v1979
        %3108 = vmatmul.mubr.bf16.gmra.mrb[0].mxu0 %v1978
        %v3109 = vpop.f32.mrb[0].mxu0
        %v3110 = vadd.f32 %v3037, %v3109
        %v3111 = vpop.f32.mrb[0].mxu0
        %v3112 = vadd.f32 %v3039, %v3111
        %v3113 = vpop.f32.mrb[0].mxu0
        %v3114 = vadd.f32 %v3041, %v3113
        %v3115 = vpop.f32.mrb[0].mxu0
        %v3116 = vadd.f32 %v3043, %v3115
        %3117 = vmatprep.mubr.bf16.mxu0 %v2001
        %3118 = vmatmul.mubr.bf16.gmra.mrb[0].mxu0 %v2000
        %v3119 = vpop.f32.mrb[0].mxu0
        %v3120 = vadd.f32 %v3047, %v3119
        %v3121 = vpop.f32.mrb[0].mxu0
        %v3122 = vadd.f32 %v3049, %v3121
        %v3123 = vpop.f32.mrb[0].mxu0
        %v3124 = vadd.f32 %v3051, %v3123
        %v3125 = vpop.f32.mrb[0].mxu0
        %v3126 = vadd.f32 %v3053, %v3125
        %3127 = vdwg.mxu0
        %3128 = vmatprep.subr.bf16.mxu0 %v1069
        %3129 = vmatpush1.bf16.msra.mxu0 %v1068
        %3130 = vmatprep.subr.bf16.mxu0 %v1073
        %3131 = vmatpush1.bf16.msra.mxu0 %v1072
        %3132 = vmatprep.subr.bf16.mxu0 %v1077
        %3133 = vmatpush1.bf16.msra.mxu0 %v1076
        %3134 = vmatprep.subr.bf16.mxu0 %v1081
        %3135 = vmatpush1.bf16.msra.mxu0 %v1080
        %3136 = vmatprep.subr.bf16.mxu0 %v1085
        %3137 = vmatpush1.bf16.msra.mxu0 %v1084
        %3138 = vmatprep.subr.bf16.mxu0 %v1089
        %3139 = vmatpush1.bf16.msra.mxu0 %v1088
        %3140 = vmatprep.subr.bf16.mxu0 %v1093
        %3141 = vmatpush1.bf16.msra.mxu0 %v1092
        %3142 = vmatprep.subr.bf16.mxu0 %v1097
        %3143 = vmatpush1.bf16.msra.mxu0 %v1096
        %3144 = vmatprep.subr.bf16.mxu0 %v1101
        %3145 = vmatpush1.bf16.msra.mxu0 %v1100
        %3146 = vmatprep.subr.bf16.mxu0 %v1105
        %3147 = vmatpush1.bf16.msra.mxu0 %v1104
        %3148 = vmatprep.subr.bf16.mxu0 %v1109
        %3149 = vmatpush1.bf16.msra.mxu0 %v1108
        %3150 = vmatprep.subr.bf16.mxu0 %v1113
        %3151 = vmatpush1.bf16.msra.mxu0 %v1112
        %3152 = vmatprep.subr.bf16.mxu0 %v1117
        %3153 = vmatpush1.bf16.msra.mxu0 %v1116
        %3154 = vmatprep.subr.bf16.mxu0 %v1121
        %3155 = vmatpush1.bf16.msra.mxu0 %v1120
        %3156 = vmatprep.subr.bf16.mxu0 %v1125
        %3157 = vmatpush1.bf16.msra.mxu0 %v1124
        %3158 = vmatprep.subr.bf16.mxu0 %v1129
        %3159 = vmatpush1.bf16.msra.mxu0 %v1128
        %3160 = vmatprep.mubr.bf16.mxu0 %v1937
        %3161 = vmatmul.mubr.bf16.gmra.mrb[0].mxu0 %v1936
        %v3162 = vpop.f32.mrb[0].mxu0
        %v3163 = vadd.f32 %v3090, %v3162
        %v3164 = vpop.f32.mrb[0].mxu0
        %v3165 = vadd.f32 %v3092, %v3164
        %v3166 = vpop.f32.mrb[0].mxu0
        %v3167 = vadd.f32 %v3094, %v3166
        %v3168 = vpop.f32.mrb[0].mxu0
        %v3169 = vadd.f32 %v3096, %v3168
        %3170 = vmatprep.mubr.bf16.mxu0 %v1959
        %3171 = vmatmul.mubr.bf16.gmra.mrb[0].mxu0 %v1958
        %v3172 = vpop.f32.mrb[0].mxu0
        %v3173 = vadd.f32 %v3100, %v3172
        %v3174 = vpop.f32.mrb[0].mxu0
        %v3175 = vadd.f32 %v3102, %v3174
        %v3176 = vpop.f32.mrb[0].mxu0
        %v3177 = vadd.f32 %v3104, %v3176
        %v3178 = vpop.f32.mrb[0].mxu0
        %v3179 = vadd.f32 %v3106, %v3178
        %3180 = vmatprep.mubr.bf16.mxu0 %v1981
        %3181 = vmatmul.mubr.bf16.gmra.mrb[0].mxu0 %v1980
        %v3182 = vpop.f32.mrb[0].mxu0
        %v3183 = vadd.f32 %v3110, %v3182
        %v3184 = vpop.f32.mrb[0].mxu0
        %v3185 = vadd.f32 %v3112, %v3184
        %v3186 = vpop.f32.mrb[0].mxu0
        %v3187 = vadd.f32 %v3114, %v3186
        %v3188 = vpop.f32.mrb[0].mxu0
        %v3189 = vadd.f32 %v3116, %v3188
        %3190 = vmatprep.mubr.bf16.mxu0 %v2003
        %3191 = vmatmul.mubr.bf16.gmra.mrb[0].mxu0 %v2002
        %v3192 = vpop.f32.mrb[0].mxu0
        %v3193 = vadd.f32 %v3120, %v3192
        %v3194 = vpop.f32.mrb[0].mxu0
        %v3195 = vadd.f32 %v3122, %v3194
        %v3196 = vpop.f32.mrb[0].mxu0
        %v3197 = vadd.f32 %v3124, %v3196
        %v3198 = vpop.f32.mrb[0].mxu0
        %v3199 = vadd.f32 %v3126, %v3198
        %3200 = vdwg.mxu0
        %3201 = vmatprep.subr.bf16.mxu0 %v1133
        %3202 = vmatpush1.bf16.msra.mxu0 %v1132
        %3203 = vmatprep.subr.bf16.mxu0 %v1137
        %3204 = vmatpush1.bf16.msra.mxu0 %v1136
        %3205 = vmatprep.subr.bf16.mxu0 %v1141
        %3206 = vmatpush1.bf16.msra.mxu0 %v1140
        %3207 = vmatprep.subr.bf16.mxu0 %v1145
        %3208 = vmatpush1.bf16.msra.mxu0 %v1144
        %3209 = vmatprep.subr.bf16.mxu0 %v1149
        %3210 = vmatpush1.bf16.msra.mxu0 %v1148
        %3211 = vmatprep.subr.bf16.mxu0 %v1153
        %3212 = vmatpush1.bf16.msra.mxu0 %v1152
        %3213 = vmatprep.subr.bf16.mxu0 %v1157
        %3214 = vmatpush1.bf16.msra.mxu0 %v1156
        %3215 = vmatprep.subr.bf16.mxu0 %v1161
        %3216 = vmatpush1.bf16.msra.mxu0 %v1160
        %3217 = vmatprep.subr.bf16.mxu0 %v1165
        %3218 = vmatpush1.bf16.msra.mxu0 %v1164
        %3219 = vmatprep.subr.bf16.mxu0 %v1169
        %3220 = vmatpush1.bf16.msra.mxu0 %v1168
        %3221 = vmatprep.subr.bf16.mxu0 %v1173
        %3222 = vmatpush1.bf16.msra.mxu0 %v1172
        %3223 = vmatprep.subr.bf16.mxu0 %v1177
        %3224 = vmatpush1.bf16.msra.mxu0 %v1176
        %3225 = vmatprep.subr.bf16.mxu0 %v1181
        %3226 = vmatpush1.bf16.msra.mxu0 %v1180
        %3227 = vmatprep.subr.bf16.mxu0 %v1185
        %3228 = vmatpush1.bf16.msra.mxu0 %v1184
        %3229 = vmatprep.subr.bf16.mxu0 %v1189
        %3230 = vmatpush1.bf16.msra.mxu0 %v1188
        %3231 = vmatprep.subr.bf16.mxu0 %v1193
        %3232 = vmatpush1.bf16.msra.mxu0 %v1192
        %3233 = vmatprep.mubr.bf16.mxu0 %v1939
        %3234 = vmatmul.mubr.bf16.gmra.mrb[0].mxu0 %v1938
        %v3235 = vpop.f32.mrb[0].mxu0
        %v3236 = vadd.f32 %v3163, %v3235
        %v3237 = vpop.f32.mrb[0].mxu0
        %v3238 = vadd.f32 %v3165, %v3237
        %v3239 = vpop.f32.mrb[0].mxu0
        %v3240 = vadd.f32 %v3167, %v3239
        %v3241 = vpop.f32.mrb[0].mxu0
        %v3242 = vadd.f32 %v3169, %v3241
        %3243 = vmatprep.mubr.bf16.mxu0 %v1961
        %3244 = vmatmul.mubr.bf16.gmra.mrb[0].mxu0 %v1960
        %v3245 = vpop.f32.mrb[0].mxu0
        %v3246 = vadd.f32 %v3173, %v3245
        %v3247 = vpop.f32.mrb[0].mxu0
        %v3248 = vadd.f32 %v3175, %v3247
        %v3249 = vpop.f32.mrb[0].mxu0
        %v3250 = vadd.f32 %v3177, %v3249
        %v3251 = vpop.f32.mrb[0].mxu0
        %v3252 = vadd.f32 %v3179, %v3251
        %3253 = vmatprep.mubr.bf16.mxu0 %v1983
        %3254 = vmatmul.mubr.bf16.gmra.mrb[0].mxu0 %v1982
        %v3255 = vpop.f32.mrb[0].mxu0
        %v3256 = vadd.f32 %v3183, %v3255
        %v3257 = vpop.f32.mrb[0].mxu0
        %v3258 = vadd.f32 %v3185, %v3257
        %v3259 = vpop.f32.mrb[0].mxu0
        %v3260 = vadd.f32 %v3187, %v3259
        %v3261 = vpop.f32.mrb[0].mxu0
        %v3262 = vadd.f32 %v3189, %v3261
        %3263 = vmatprep.mubr.bf16.mxu0 %v2005
        %3264 = vmatmul.mubr.bf16.gmra.mrb[0].mxu0 %v2004
        %v3265 = vpop.f32.mrb[0].mxu0
        %v3266 = vadd.f32 %v3193, %v3265
        %v3267 = vpop.f32.mrb[0].mxu0
        %v3268 = vadd.f32 %v3195, %v3267
        %v3269 = vpop.f32.mrb[0].mxu0
        %v3270 = vadd.f32 %v3197, %v3269
        %v3271 = vpop.f32.mrb[0].mxu0
        %v3272 = vadd.f32 %v3199, %v3271
        %3273 = vdwg.mxu0
        %3274 = vmatprep.subr.bf16.mxu0 %v1197
        %3275 = vmatpush1.bf16.msra.mxu0 %v1196
        %3276 = vmatprep.subr.bf16.mxu0 %v1201
        %3277 = vmatpush1.bf16.msra.mxu0 %v1200
        %3278 = vmatprep.subr.bf16.mxu0 %v1205
        %3279 = vmatpush1.bf16.msra.mxu0 %v1204
        %3280 = vmatprep.subr.bf16.mxu0 %v1209
        %3281 = vmatpush1.bf16.msra.mxu0 %v1208
        %3282 = vmatprep.subr.bf16.mxu0 %v1213
        %3283 = vmatpush1.bf16.msra.mxu0 %v1212
        %3284 = vmatprep.subr.bf16.mxu0 %v1217
        %3285 = vmatpush1.bf16.msra.mxu0 %v1216
        %3286 = vmatprep.subr.bf16.mxu0 %v1221
        %3287 = vmatpush1.bf16.msra.mxu0 %v1220
        %3288 = vmatprep.subr.bf16.mxu0 %v1225
        %3289 = vmatpush1.bf16.msra.mxu0 %v1224
        %3290 = vmatprep.subr.bf16.mxu0 %v1229
        %3291 = vmatpush1.bf16.msra.mxu0 %v1228
        %3292 = vmatprep.subr.bf16.mxu0 %v1233
        %3293 = vmatpush1.bf16.msra.mxu0 %v1232
        %3294 = vmatprep.subr.bf16.mxu0 %v1237
        %3295 = vmatpush1.bf16.msra.mxu0 %v1236
        %3296 = vmatprep.subr.bf16.mxu0 %v1241
        %3297 = vmatpush1.bf16.msra.mxu0 %v1240
        %3298 = vmatprep.subr.bf16.mxu0 %v1245
        %3299 = vmatpush1.bf16.msra.mxu0 %v1244
        %3300 = vmatprep.subr.bf16.mxu0 %v1249
        %3301 = vmatpush1.bf16.msra.mxu0 %v1248
        %3302 = vmatprep.subr.bf16.mxu0 %v1253
        %3303 = vmatpush1.bf16.msra.mxu0 %v1252
        %3304 = vmatprep.subr.bf16.mxu0 %v1257
        %3305 = vmatpush1.bf16.msra.mxu0 %v1256
        %3306 = vmatprep.mubr.bf16.mxu0 %v1941
        %3307 = vmatmul.mubr.bf16.gmra.mrb[0].mxu0 %v1940
        %v3308 = vpop.f32.mrb[0].mxu0
        %v3309 = vadd.f32 %v3236, %v3308
        %v3310 = vpop.f32.mrb[0].mxu0
        %v3311 = vadd.f32 %v3238, %v3310
        %v3312 = vpop.f32.mrb[0].mxu0
        %v3313 = vadd.f32 %v3240, %v3312
        %v3314 = vpop.f32.mrb[0].mxu0
        %v3315 = vadd.f32 %v3242, %v3314
        %3316 = vmatprep.mubr.bf16.mxu0 %v1963
        %3317 = vmatmul.mubr.bf16.gmra.mrb[0].mxu0 %v1962
        %v3318 = vpop.f32.mrb[0].mxu0
        %v3319 = vadd.f32 %v3246, %v3318
        %v3320 = vpop.f32.mrb[0].mxu0
        %v3321 = vadd.f32 %v3248, %v3320
        %v3322 = vpop.f32.mrb[0].mxu0
        %v3323 = vadd.f32 %v3250, %v3322
        %v3324 = vpop.f32.mrb[0].mxu0
        %v3325 = vadd.f32 %v3252, %v3324
        %3326 = vmatprep.mubr.bf16.mxu0 %v1985
        %3327 = vmatmul.mubr.bf16.gmra.mrb[0].mxu0 %v1984
        %v3328 = vpop.f32.mrb[0].mxu0
        %v3329 = vadd.f32 %v3256, %v3328
        %v3330 = vpop.f32.mrb[0].mxu0
        %v3331 = vadd.f32 %v3258, %v3330
        %v3332 = vpop.f32.mrb[0].mxu0
        %v3333 = vadd.f32 %v3260, %v3332
        %v3334 = vpop.f32.mrb[0].mxu0
        %v3335 = vadd.f32 %v3262, %v3334
        %3336 = vmatprep.mubr.bf16.mxu0 %v2007
        %3337 = vmatmul.mubr.bf16.gmra.mrb[0].mxu0 %v2006
        %v3338 = vpop.f32.mrb[0].mxu0
        %v3339 = vadd.f32 %v3266, %v3338
        %v3340 = vpop.f32.mrb[0].mxu0
        %v3341 = vadd.f32 %v3268, %v3340
        %v3342 = vpop.f32.mrb[0].mxu0
        %v3343 = vadd.f32 %v3270, %v3342
        %v3344 = vpop.f32.mrb[0].mxu0
        %v3345 = vadd.f32 %v3272, %v3344
        %3346 = vdwg.mxu0
        %3347 = vmatprep.subr.bf16.mxu0 %v1261
        %3348 = vmatpush1.bf16.msra.mxu0 %v1260
        %3349 = vmatprep.subr.bf16.mxu0 %v1265
        %3350 = vmatpush1.bf16.msra.mxu0 %v1264
        %3351 = vmatprep.subr.bf16.mxu0 %v1269
        %3352 = vmatpush1.bf16.msra.mxu0 %v1268
        %3353 = vmatprep.subr.bf16.mxu0 %v1273
        %3354 = vmatpush1.bf16.msra.mxu0 %v1272
        %3355 = vmatprep.subr.bf16.mxu0 %v1277
        %3356 = vmatpush1.bf16.msra.mxu0 %v1276
        %3357 = vmatprep.subr.bf16.mxu0 %v1281
        %3358 = vmatpush1.bf16.msra.mxu0 %v1280
        %3359 = vmatprep.subr.bf16.mxu0 %v1285
        %3360 = vmatpush1.bf16.msra.mxu0 %v1284
        %3361 = vmatprep.subr.bf16.mxu0 %v1289
        %3362 = vmatpush1.bf16.msra.mxu0 %v1288
        %3363 = vmatprep.subr.bf16.mxu0 %v1293
        %3364 = vmatpush1.bf16.msra.mxu0 %v1292
        %3365 = vmatprep.subr.bf16.mxu0 %v1297
        %3366 = vmatpush1.bf16.msra.mxu0 %v1296
        %3367 = vmatprep.subr.bf16.mxu0 %v1301
        %3368 = vmatpush1.bf16.msra.mxu0 %v1300
        %3369 = vmatprep.subr.bf16.mxu0 %v1305
        %3370 = vmatpush1.bf16.msra.mxu0 %v1304
        %3371 = vmatprep.subr.bf16.mxu0 %v1309
        %3372 = vmatpush1.bf16.msra.mxu0 %v1308
        %3373 = vmatprep.subr.bf16.mxu0 %v1313
        %3374 = vmatpush1.bf16.msra.mxu0 %v1312
        %3375 = vmatprep.subr.bf16.mxu0 %v1317
        %3376 = vmatpush1.bf16.msra.mxu0 %v1316
        %3377 = vmatprep.subr.bf16.mxu0 %v1321
        %3378 = vmatpush1.bf16.msra.mxu0 %v1320
        %3379 = vmatprep.mubr.bf16.mxu0 %v1943
        %3380 = vmatmul.mubr.bf16.gmra.mrb[0].mxu0 %v1942
        %v3381 = vpop.f32.mrb[0].mxu0
        %v3382 = vadd.f32 %v3309, %v3381
        %v3383 = vpop.f32.mrb[0].mxu0
        %v3384 = vadd.f32 %v3311, %v3383
        %v3385 = vpop.f32.mrb[0].mxu0
        %v3386 = vadd.f32 %v3313, %v3385
        %v3387 = vpop.f32.mrb[0].mxu0
        %v3388 = vadd.f32 %v3315, %v3387
        %3389 = vmatprep.mubr.bf16.mxu0 %v1965
        %3390 = vmatmul.mubr.bf16.gmra.mrb[0].mxu0 %v1964
        %v3391 = vpop.f32.mrb[0].mxu0
        %v3392 = vadd.f32 %v3319, %v3391
        %v3393 = vpop.f32.mrb[0].mxu0
        %v3394 = vadd.f32 %v3321, %v3393
        %v3395 = vpop.f32.mrb[0].mxu0
        %v3396 = vadd.f32 %v3323, %v3395
        %v3397 = vpop.f32.mrb[0].mxu0
        %v3398 = vadd.f32 %v3325, %v3397
        %3399 = vmatprep.mubr.bf16.mxu0 %v1987
        %3400 = vmatmul.mubr.bf16.gmra.mrb[0].mxu0 %v1986
        %v3401 = vpop.f32.mrb[0].mxu0
        %v3402 = vadd.f32 %v3329, %v3401
        %v3403 = vpop.f32.mrb[0].mxu0
        %v3404 = vadd.f32 %v3331, %v3403
        %v3405 = vpop.f32.mrb[0].mxu0
        %v3406 = vadd.f32 %v3333, %v3405
        %v3407 = vpop.f32.mrb[0].mxu0
        %v3408 = vadd.f32 %v3335, %v3407
        %3409 = vmatprep.mubr.bf16.mxu0 %v2009
        %3410 = vmatmul.mubr.bf16.gmra.mrb[0].mxu0 %v2008
        %v3411 = vpop.f32.mrb[0].mxu0
        %v3412 = vadd.f32 %v3339, %v3411
        %v3413 = vpop.f32.mrb[0].mxu0
        %v3414 = vadd.f32 %v3341, %v3413
        %v3415 = vpop.f32.mrb[0].mxu0
        %v3416 = vadd.f32 %v3343, %v3415
        %v3417 = vpop.f32.mrb[0].mxu0
        %v3418 = vadd.f32 %v3345, %v3417
        %3419 = vdwg.mxu0
        %3420 = vmatprep.subr.bf16.mxu0 %v1325
        %3421 = vmatpush1.bf16.msra.mxu0 %v1324
        %3422 = vmatprep.subr.bf16.mxu0 %v1329
        %3423 = vmatpush1.bf16.msra.mxu0 %v1328
        %3424 = vmatprep.subr.bf16.mxu0 %v1333
        %3425 = vmatpush1.bf16.msra.mxu0 %v1332
        %3426 = vmatprep.subr.bf16.mxu0 %v1337
        %3427 = vmatpush1.bf16.msra.mxu0 %v1336
        %3428 = vmatprep.subr.bf16.mxu0 %v1341
        %3429 = vmatpush1.bf16.msra.mxu0 %v1340
        %3430 = vmatprep.subr.bf16.mxu0 %v1345
        %3431 = vmatpush1.bf16.msra.mxu0 %v1344
        %3432 = vmatprep.subr.bf16.mxu0 %v1349
        %3433 = vmatpush1.bf16.msra.mxu0 %v1348
        %3434 = vmatprep.subr.bf16.mxu0 %v1353
        %3435 = vmatpush1.bf16.msra.mxu0 %v1352
        %3436 = vmatprep.subr.bf16.mxu0 %v1357
        %3437 = vmatpush1.bf16.msra.mxu0 %v1356
        %3438 = vmatprep.subr.bf16.mxu0 %v1361
        %3439 = vmatpush1.bf16.msra.mxu0 %v1360
        %3440 = vmatprep.subr.bf16.mxu0 %v1365
        %3441 = vmatpush1.bf16.msra.mxu0 %v1364
        %3442 = vmatprep.subr.bf16.mxu0 %v1369
        %3443 = vmatpush1.bf16.msra.mxu0 %v1368
        %3444 = vmatprep.subr.bf16.mxu0 %v1373
        %3445 = vmatpush1.bf16.msra.mxu0 %v1372
        %3446 = vmatprep.subr.bf16.mxu0 %v1377
        %3447 = vmatpush1.bf16.msra.mxu0 %v1376
        %3448 = vmatprep.subr.bf16.mxu0 %v1381
        %3449 = vmatpush1.bf16.msra.mxu0 %v1380
        %3450 = vmatprep.subr.bf16.mxu0 %v1385
        %3451 = vmatpush1.bf16.msra.mxu0 %v1384
        %3452 = vmatprep.mubr.bf16.mxu0 %v1945
        %3453 = vmatmul.mubr.bf16.gmra.mrb[0].mxu0 %v1944
        %v3454 = vpop.f32.mrb[0].mxu0
        %v3455 = vadd.f32 %v3382, %v3454
        %v3456 = vpop.f32.mrb[0].mxu0
        %v3457 = vadd.f32 %v3384, %v3456
        %v3458 = vpop.f32.mrb[0].mxu0
        %v3459 = vadd.f32 %v3386, %v3458
        %v3460 = vpop.f32.mrb[0].mxu0
        %v3461 = vadd.f32 %v3388, %v3460
        %3462 = vmatprep.mubr.bf16.mxu0 %v1967
        %3463 = vmatmul.mubr.bf16.gmra.mrb[0].mxu0 %v1966
        %v3464 = vpop.f32.mrb[0].mxu0
        %v3465 = vadd.f32 %v3392, %v3464
        %v3466 = vpop.f32.mrb[0].mxu0
        %v3467 = vadd.f32 %v3394, %v3466
        %v3468 = vpop.f32.mrb[0].mxu0
        %v3469 = vadd.f32 %v3396, %v3468
        %v3470 = vpop.f32.mrb[0].mxu0
        %v3471 = vadd.f32 %v3398, %v3470
        %3472 = vmatprep.mubr.bf16.mxu0 %v1989
        %3473 = vmatmul.mubr.bf16.gmra.mrb[0].mxu0 %v1988
        %v3474 = vpop.f32.mrb[0].mxu0
        %v3475 = vadd.f32 %v3402, %v3474
        %v3476 = vpop.f32.mrb[0].mxu0
        %v3477 = vadd.f32 %v3404, %v3476
        %v3478 = vpop.f32.mrb[0].mxu0
        %v3479 = vadd.f32 %v3406, %v3478
        %v3480 = vpop.f32.mrb[0].mxu0
        %v3481 = vadd.f32 %v3408, %v3480
        %3482 = vmatprep.mubr.bf16.mxu0 %v2011
        %3483 = vmatmul.mubr.bf16.gmra.mrb[0].mxu0 %v2010
        %v3484 = vpop.f32.mrb[0].mxu0
        %v3485 = vadd.f32 %v3412, %v3484
        %v3486 = vpop.f32.mrb[0].mxu0
        %v3487 = vadd.f32 %v3414, %v3486
        %v3488 = vpop.f32.mrb[0].mxu0
        %v3489 = vadd.f32 %v3416, %v3488
        %v3490 = vpop.f32.mrb[0].mxu0
        %v3491 = vadd.f32 %v3418, %v3490
        %3492 = vdwg.mxu0
        %3493 = vmatprep.subr.bf16.mxu0 %v1389
        %3494 = vmatpush1.bf16.msra.mxu0 %v1388
        %3495 = vmatprep.subr.bf16.mxu0 %v1393
        %3496 = vmatpush1.bf16.msra.mxu0 %v1392
        %3497 = vmatprep.subr.bf16.mxu0 %v1397
        %3498 = vmatpush1.bf16.msra.mxu0 %v1396
        %3499 = vmatprep.subr.bf16.mxu0 %v1401
        %3500 = vmatpush1.bf16.msra.mxu0 %v1400
        %3501 = vmatprep.subr.bf16.mxu0 %v1405
        %3502 = vmatpush1.bf16.msra.mxu0 %v1404
        %3503 = vmatprep.subr.bf16.mxu0 %v1409
        %3504 = vmatpush1.bf16.msra.mxu0 %v1408
        %3505 = vmatprep.subr.bf16.mxu0 %v1413
        %3506 = vmatpush1.bf16.msra.mxu0 %v1412
        %3507 = vmatprep.subr.bf16.mxu0 %v1417
        %3508 = vmatpush1.bf16.msra.mxu0 %v1416
        %3509 = vmatprep.subr.bf16.mxu0 %v1421
        %3510 = vmatpush1.bf16.msra.mxu0 %v1420
        %3511 = vmatprep.subr.bf16.mxu0 %v1425
        %3512 = vmatpush1.bf16.msra.mxu0 %v1424
        %3513 = vmatprep.subr.bf16.mxu0 %v1429
        %3514 = vmatpush1.bf16.msra.mxu0 %v1428
        %3515 = vmatprep.subr.bf16.mxu0 %v1433
        %3516 = vmatpush1.bf16.msra.mxu0 %v1432
        %3517 = vmatprep.subr.bf16.mxu0 %v1437
        %3518 = vmatpush1.bf16.msra.mxu0 %v1436
        %3519 = vmatprep.subr.bf16.mxu0 %v1441
        %3520 = vmatpush1.bf16.msra.mxu0 %v1440
        %3521 = vmatprep.subr.bf16.mxu0 %v1445
        %3522 = vmatpush1.bf16.msra.mxu0 %v1444
        %3523 = vmatprep.subr.bf16.mxu0 %v1449
        %3524 = vmatpush1.bf16.msra.mxu0 %v1448
        %3525 = vmatprep.mubr.bf16.mxu0 %v1947
        %3526 = vmatmul.mubr.bf16.gmra.mrb[0].mxu0 %v1946
        %v3527 = vpop.f32.mrb[0].mxu0
        %v3528 = vadd.f32 %v3455, %v3527
        %v3529 = vpop.f32.mrb[0].mxu0
        %v3530 = vadd.f32 %v3457, %v3529
        %v3531 = vpop.f32.mrb[0].mxu0
        %v3532 = vadd.f32 %v3459, %v3531
        %v3533 = vpop.f32.mrb[0].mxu0
        %v3534 = vadd.f32 %v3461, %v3533
        %3535 = vmatprep.mubr.bf16.mxu0 %v1969
        %3536 = vmatmul.mubr.bf16.gmra.mrb[0].mxu0 %v1968
        %v3537 = vpop.f32.mrb[0].mxu0
        %v3538 = vadd.f32 %v3465, %v3537
        %v3539 = vpop.f32.mrb[0].mxu0
        %v3540 = vadd.f32 %v3467, %v3539
        %v3541 = vpop.f32.mrb[0].mxu0
        %v3542 = vadd.f32 %v3469, %v3541
        %v3543 = vpop.f32.mrb[0].mxu0
        %v3544 = vadd.f32 %v3471, %v3543
        %3545 = vmatprep.mubr.bf16.mxu0 %v1991
        %3546 = vmatmul.mubr.bf16.gmra.mrb[0].mxu0 %v1990
        %v3547 = vpop.f32.mrb[0].mxu0
        %v3548 = vadd.f32 %v3475, %v3547
        %v3549 = vpop.f32.mrb[0].mxu0
        %v3550 = vadd.f32 %v3477, %v3549
        %v3551 = vpop.f32.mrb[0].mxu0
        %v3552 = vadd.f32 %v3479, %v3551
        %v3553 = vpop.f32.mrb[0].mxu0
        %v3554 = vadd.f32 %v3481, %v3553
        %3555 = vmatprep.mubr.bf16.mxu0 %v2013
        %3556 = vmatmul.mubr.bf16.gmra.mrb[0].mxu0 %v2012
        %v3557 = vpop.f32.mrb[0].mxu0
        %v3558 = vadd.f32 %v3485, %v3557
        %v3559 = vpop.f32.mrb[0].mxu0
        %v3560 = vadd.f32 %v3487, %v3559
        %v3561 = vpop.f32.mrb[0].mxu0
        %v3562 = vadd.f32 %v3489, %v3561
        %v3563 = vpop.f32.mrb[0].mxu0
        %v3564 = vadd.f32 %v3491, %v3563
        %3565 = vdwg.mxu0
        %3566 = vmatprep.subr.bf16.mxu0 %v1453
        %3567 = vmatpush1.bf16.msra.mxu0 %v1452
        %3568 = vmatprep.subr.bf16.mxu0 %v1457
        %3569 = vmatpush1.bf16.msra.mxu0 %v1456
        %3570 = vmatprep.subr.bf16.mxu0 %v1461
        %3571 = vmatpush1.bf16.msra.mxu0 %v1460
        %3572 = vmatprep.subr.bf16.mxu0 %v1465
        %3573 = vmatpush1.bf16.msra.mxu0 %v1464
        %3574 = vmatprep.subr.bf16.mxu0 %v1469
        %3575 = vmatpush1.bf16.msra.mxu0 %v1468
        %3576 = vmatprep.subr.bf16.mxu0 %v1473
        %3577 = vmatpush1.bf16.msra.mxu0 %v1472
        %3578 = vmatprep.subr.bf16.mxu0 %v1477
        %3579 = vmatpush1.bf16.msra.mxu0 %v1476
        %3580 = vmatprep.subr.bf16.mxu0 %v1481
        %3581 = vmatpush1.bf16.msra.mxu0 %v1480
        %3582 = vmatprep.subr.bf16.mxu0 %v1485
        %3583 = vmatpush1.bf16.msra.mxu0 %v1484
        %3584 = vmatprep.subr.bf16.mxu0 %v1489
        %3585 = vmatpush1.bf16.msra.mxu0 %v1488
        %3586 = vmatprep.subr.bf16.mxu0 %v1493
        %3587 = vmatpush1.bf16.msra.mxu0 %v1492
        %3588 = vmatprep.subr.bf16.mxu0 %v1497
        %3589 = vmatpush1.bf16.msra.mxu0 %v1496
        %3590 = vmatprep.subr.bf16.mxu0 %v1501
        %3591 = vmatpush1.bf16.msra.mxu0 %v1500
        %3592 = vmatprep.subr.bf16.mxu0 %v1505
        %3593 = vmatpush1.bf16.msra.mxu0 %v1504
        %3594 = vmatprep.subr.bf16.mxu0 %v1509
        %3595 = vmatpush1.bf16.msra.mxu0 %v1508
        %3596 = vmatprep.subr.bf16.mxu0 %v1513
        %3597 = vmatpush1.bf16.msra.mxu0 %v1512
        %3598 = vmatprep.mubr.bf16.mxu0 %v1949
        %3599 = vmatmul.mubr.bf16.gmra.mrb[0].mxu0 %v1948
        %v3600 = vpop.f32.mrb[0].mxu0
        %v3601 = vadd.f32 %v3528, %v3600
        %v3602 = vpop.f32.mrb[0].mxu0
        %v3603 = vadd.f32 %v3530, %v3602
        %v3604 = vpop.f32.mrb[0].mxu0
        %v3605 = vadd.f32 %v3532, %v3604
        %v3606 = vpop.f32.mrb[0].mxu0
        %v3607 = vadd.f32 %v3534, %v3606
        %3608 = vmatprep.mubr.bf16.mxu0 %v1971
        %3609 = vmatmul.mubr.bf16.gmra.mrb[0].mxu0 %v1970
        %v3610 = vpop.f32.mrb[0].mxu0
        %v3611 = vadd.f32 %v3538, %v3610
        %v3612 = vpop.f32.mrb[0].mxu0
        %v3613 = vadd.f32 %v3540, %v3612
        %v3614 = vpop.f32.mrb[0].mxu0
        %v3615 = vadd.f32 %v3542, %v3614
        %v3616 = vpop.f32.mrb[0].mxu0
        %v3617 = vadd.f32 %v3544, %v3616
        %3618 = vmatprep.mubr.bf16.mxu0 %v1993
        %3619 = vmatmul.mubr.bf16.gmra.mrb[0].mxu0 %v1992
        %v3620 = vpop.f32.mrb[0].mxu0
        %v3621 = vadd.f32 %v3548, %v3620
        %v3622 = vpop.f32.mrb[0].mxu0
        %v3623 = vadd.f32 %v3550, %v3622
        %v3624 = vpop.f32.mrb[0].mxu0
        %v3625 = vadd.f32 %v3552, %v3624
        %v3626 = vpop.f32.mrb[0].mxu0
        %v3627 = vadd.f32 %v3554, %v3626
        %3628 = vmatprep.mubr.bf16.mxu0 %v2015
        %3629 = vmatmul.mubr.bf16.gmra.mrb[0].mxu0 %v2014
        %v3630 = vpop.f32.mrb[0].mxu0
        %v3631 = vadd.f32 %v3558, %v3630
        %v3632 = vpop.f32.mrb[0].mxu0
        %v3633 = vadd.f32 %v3560, %v3632
        %v3634 = vpop.f32.mrb[0].mxu0
        %v3635 = vadd.f32 %v3562, %v3634
        %v3636 = vpop.f32.mrb[0].mxu0
        %v3637 = vadd.f32 %v3564, %v3636
        %3638 = vdwg.mxu0
        %3639 = vmatprep.subr.bf16.mxu0 %v1517
        %3640 = vmatpush1.bf16.msra.mxu0 %v1516
        %3641 = vmatprep.subr.bf16.mxu0 %v1521
        %3642 = vmatpush1.bf16.msra.mxu0 %v1520
        %3643 = vmatprep.subr.bf16.mxu0 %v1525
        %3644 = vmatpush1.bf16.msra.mxu0 %v1524
        %3645 = vmatprep.subr.bf16.mxu0 %v1529
        %3646 = vmatpush1.bf16.msra.mxu0 %v1528
        %3647 = vmatprep.subr.bf16.mxu0 %v1533
        %3648 = vmatpush1.bf16.msra.mxu0 %v1532
        %3649 = vmatprep.subr.bf16.mxu0 %v1537
        %3650 = vmatpush1.bf16.msra.mxu0 %v1536
        %3651 = vmatprep.subr.bf16.mxu0 %v1541
        %3652 = vmatpush1.bf16.msra.mxu0 %v1540
        %3653 = vmatprep.subr.bf16.mxu0 %v1545
        %3654 = vmatpush1.bf16.msra.mxu0 %v1544
        %3655 = vmatprep.subr.bf16.mxu0 %v1549
        %3656 = vmatpush1.bf16.msra.mxu0 %v1548
        %3657 = vmatprep.subr.bf16.mxu0 %v1553
        %3658 = vmatpush1.bf16.msra.mxu0 %v1552
        %3659 = vmatprep.subr.bf16.mxu0 %v1557
        %3660 = vmatpush1.bf16.msra.mxu0 %v1556
        %3661 = vmatprep.subr.bf16.mxu0 %v1561
        %3662 = vmatpush1.bf16.msra.mxu0 %v1560
        %3663 = vmatprep.subr.bf16.mxu0 %v1565
        %3664 = vmatpush1.bf16.msra.mxu0 %v1564
        %3665 = vmatprep.subr.bf16.mxu0 %v1569
        %3666 = vmatpush1.bf16.msra.mxu0 %v1568
        %3667 = vmatprep.subr.bf16.mxu0 %v1573
        %3668 = vmatpush1.bf16.msra.mxu0 %v1572
        %3669 = vmatprep.subr.bf16.mxu0 %v1577
        %3670 = vmatpush1.bf16.msra.mxu0 %v1576
        %3671 = vmatprep.mubr.bf16.mxu0 %v1951
        %3672 = vmatmul.mubr.bf16.gmra.mrb[0].mxu0 %v1950
        %v3673 = vpop.f32.mrb[0].mxu0
        %v3674 = vadd.f32 %v3601, %v3673
        %v3675 = vpop.f32.mrb[0].mxu0
        %v3676 = vadd.f32 %v3603, %v3675
        %v3677 = vpop.f32.mrb[0].mxu0
        %v3678 = vadd.f32 %v3605, %v3677
        %v3679 = vpop.f32.mrb[0].mxu0
        %v3680 = vadd.f32 %v3607, %v3679
        %3681 = vmatprep.mubr.bf16.mxu0 %v1973
        %3682 = vmatmul.mubr.bf16.gmra.mrb[0].mxu0 %v1972
        %v3683 = vpop.f32.mrb[0].mxu0
        %v3684 = vadd.f32 %v3611, %v3683
        %v3685 = vpop.f32.mrb[0].mxu0
        %v3686 = vadd.f32 %v3613, %v3685
        %v3687 = vpop.f32.mrb[0].mxu0
        %v3688 = vadd.f32 %v3615, %v3687
        %v3689 = vpop.f32.mrb[0].mxu0
        %v3690 = vadd.f32 %v3617, %v3689
        %3691 = vmatprep.mubr.bf16.mxu0 %v1995
        %3692 = vmatmul.mubr.bf16.gmra.mrb[0].mxu0 %v1994
        %v3693 = vpop.f32.mrb[0].mxu0
        %v3694 = vadd.f32 %v3621, %v3693
        %v3695 = vpop.f32.mrb[0].mxu0
        %v3696 = vadd.f32 %v3623, %v3695
        %v3697 = vpop.f32.mrb[0].mxu0
        %v3698 = vadd.f32 %v3625, %v3697
        %v3699 = vpop.f32.mrb[0].mxu0
        %v3700 = vadd.f32 %v3627, %v3699
        %3701 = vmatprep.mubr.bf16.mxu0 %v2017
        %3702 = vmatmul.mubr.bf16.gmra.mrb[0].mxu0 %v2016
        %v3703 = vpop.f32.mrb[0].mxu0
        %v3704 = vadd.f32 %v3631, %v3703
        %v3705 = vpop.f32.mrb[0].mxu0
        %v3706 = vadd.f32 %v3633, %v3705
        %v3707 = vpop.f32.mrb[0].mxu0
        %v3708 = vadd.f32 %v3635, %v3707
        %v3709 = vpop.f32.mrb[0].mxu0
        %v3710 = vadd.f32 %v3637, %v3709
        %3711 = vdwg.mxu0
        %v3712 = vld [vmem:[%s438] sm:$0xf]
        %v3714 = vlaneseq
        %v3715 = vshrl.u32 %v3714, 7
        %v3716 = vsub.s32 0, %v3715
        %v3717 = vrot.slane %v3712, %v3716
        %v3718 = vlaneseq
        %v3719 = vshrl.u32 %v3718, 7
        %v3720 = vsub.s32 1, %v3719
        %v3721 = vrot.slane %v3712, %v3720
        %v3722 = vlaneseq
        %v3723 = vshrl.u32 %v3722, 7
        %v3724 = vsub.s32 2, %v3723
        %v3725 = vrot.slane %v3712, %v3724
        %v3726 = vlaneseq
        %v3727 = vshrl.u32 %v3726, 7
        %v3728 = vsub.s32 3, %v3727
        %v3729 = vrot.slane %v3712, %v3728
        %v3734 = vmul.f32 %v2871, %v3717
        %v3735 = vmul.f32 %v2873, %v3721
        %v3736 = vmul.f32 %v3674, %v3725
        %v3737 = vmul.f32 %v3676, %v3729
        %v3738 = vmul.f32 %v2875, %v3717
        %v3739 = vmul.f32 %v2877, %v3721
        %v3740 = vmul.f32 %v3678, %v3725
        %v3741 = vmul.f32 %v3680, %v3729
        %v3742 = vmul.f32 %v2881, %v3717
        %v3743 = vmul.f32 %v2883, %v3721
        %v3744 = vmul.f32 %v3684, %v3725
        %v3745 = vmul.f32 %v3686, %v3729
        %v3746 = vmul.f32 %v2885, %v3717
        %v3747 = vmul.f32 %v2887, %v3721
        %v3748 = vmul.f32 %v3688, %v3725
        %v3749 = vmul.f32 %v3690, %v3729
        %v3750 = vmul.f32 %v2891, %v3717
        %v3751 = vmul.f32 %v2893, %v3721
        %v3752 = vmul.f32 %v3694, %v3725
        %v3753 = vmul.f32 %v3696, %v3729
        %v3754 = vmul.f32 %v2895, %v3717
        %v3755 = vmul.f32 %v2897, %v3721
        %v3756 = vmul.f32 %v3698, %v3725
        %v3757 = vmul.f32 %v3700, %v3729
        %v3758 = vmul.f32 %v2901, %v3717
        %v3759 = vmul.f32 %v2903, %v3721
        %v3760 = vmul.f32 %v3704, %v3725
        %v3761 = vmul.f32 %v3706, %v3729
        %v3762 = vmul.f32 %v2905, %v3717
        %v3763 = vmul.f32 %v2907, %v3721
        %v3764 = vmul.f32 %v3708, %v3725
        %v3765 = vmul.f32 %v3710, %v3729
        %v3766 = vld [vmem:[%s447] sm:$0xf]
        %v3768 = vlaneseq
        %v3769 = vshrl.u32 %v3768, 7
        %v3770 = vsub.s32 0, %v3769
        %v3771 = vrot.slane %v3766, %v3770
        %v3772 = vlaneseq
        %v3773 = vshrl.u32 %v3772, 7
        %v3774 = vsub.s32 1, %v3773
        %v3775 = vrot.slane %v3766, %v3774
        %v3776 = vlaneseq
        %v3777 = vshrl.u32 %v3776, 7
        %v3778 = vsub.s32 2, %v3777
        %v3779 = vrot.slane %v3766, %v3778
        %v3780 = vlaneseq
        %v3781 = vshrl.u32 %v3780, 7
        %v3782 = vsub.s32 3, %v3781
        %v3783 = vrot.slane %v3766, %v3782
        %v3788 = vadd.f32 %v3734, %v3771
        %v3789 = vadd.f32 %v3735, %v3775
        %v3790 = vadd.f32 %v3736, %v3779
        %v3791 = vadd.f32 %v3737, %v3783
        %v3792 = vadd.f32 %v3738, %v3771
        %v3793 = vadd.f32 %v3739, %v3775
        %v3794 = vadd.f32 %v3740, %v3779
        %v3795 = vadd.f32 %v3741, %v3783
        %v3796 = vadd.f32 %v3742, %v3771
        %v3797 = vadd.f32 %v3743, %v3775
        %v3798 = vadd.f32 %v3744, %v3779
        %v3799 = vadd.f32 %v3745, %v3783
        %v3800 = vadd.f32 %v3746, %v3771
        %v3801 = vadd.f32 %v3747, %v3775
        %v3802 = vadd.f32 %v3748, %v3779
        %v3803 = vadd.f32 %v3749, %v3783
        %v3804 = vadd.f32 %v3750, %v3771
        %v3805 = vadd.f32 %v3751, %v3775
        %v3806 = vadd.f32 %v3752, %v3779
        %v3807 = vadd.f32 %v3753, %v3783
        %v3808 = vadd.f32 %v3754, %v3771
        %v3809 = vadd.f32 %v3755, %v3775
        %v3810 = vadd.f32 %v3756, %v3779
        %v3811 = vadd.f32 %v3757, %v3783
        %v3812 = vadd.f32 %v3758, %v3771
        %v3813 = vadd.f32 %v3759, %v3775
        %v3814 = vadd.f32 %v3760, %v3779
        %v3815 = vadd.f32 %v3761, %v3783
        %v3816 = vadd.f32 %v3762, %v3771
        %v3817 = vadd.f32 %v3763, %v3775
        %v3818 = vadd.f32 %v3764, %v3779
        %v3819 = vadd.f32 %v3765, %v3783
        %v3820 = vmax.f32 %v3788, 0.0
        %v3821 = vmax.f32 %v3789, 0.0
        %v3822 = vmax.f32 %v3790, 0.0
        %v3823 = vmax.f32 %v3791, 0.0
        %v3824 = vmax.f32 %v3792, 0.0
        %v3825 = vmax.f32 %v3793, 0.0
        %v3826 = vmax.f32 %v3794, 0.0
        %v3827 = vmax.f32 %v3795, 0.0
        %v3828 = vmax.f32 %v3796, 0.0
        %v3829 = vmax.f32 %v3797, 0.0
        %v3830 = vmax.f32 %v3798, 0.0
        %v3831 = vmax.f32 %v3799, 0.0
        %v3832 = vmax.f32 %v3800, 0.0
        %v3833 = vmax.f32 %v3801, 0.0
        %v3834 = vmax.f32 %v3802, 0.0
        %v3835 = vmax.f32 %v3803, 0.0
        %v3836 = vmax.f32 %v3804, 0.0
        %v3837 = vmax.f32 %v3805, 0.0
        %v3838 = vmax.f32 %v3806, 0.0
        %v3839 = vmax.f32 %v3807, 0.0
        %v3840 = vmax.f32 %v3808, 0.0
        %v3841 = vmax.f32 %v3809, 0.0
        %v3842 = vmax.f32 %v3810, 0.0
        %v3843 = vmax.f32 %v3811, 0.0
        %v3844 = vmax.f32 %v3812, 0.0
        %v3845 = vmax.f32 %v3813, 0.0
        %v3846 = vmax.f32 %v3814, 0.0
        %v3847 = vmax.f32 %v3815, 0.0
        %v3848 = vmax.f32 %v3816, 0.0
        %v3849 = vmax.f32 %v3817, 0.0
        %v3850 = vmax.f32 %v3818, 0.0
        %v3851 = vmax.f32 %v3819, 0.0
        %v3852 = vpack.c.bf16 %v3824, %v3820
        %v3853 = vpack.c.bf16 %v3825, %v3821
        %v3854 = vpack.c.bf16 %v3826, %v3822
        %v3855 = vpack.c.bf16 %v3827, %v3823
        %v3856 = vpack.c.bf16 %v3832, %v3828
        %v3857 = vpack.c.bf16 %v3833, %v3829
        %v3858 = vpack.c.bf16 %v3834, %v3830
        %v3859 = vpack.c.bf16 %v3835, %v3831
        %v3860 = vpack.c.bf16 %v3840, %v3836
        %v3861 = vpack.c.bf16 %v3841, %v3837
        %v3862 = vpack.c.bf16 %v3842, %v3838
        %v3863 = vpack.c.bf16 %v3843, %v3839
        %v3864 = vpack.c.bf16 %v3848, %v3844
        %v3865 = vpack.c.bf16 %v3849, %v3845
        %v3866 = vpack.c.bf16 %v3850, %v3846
        %v3867 = vpack.c.bf16 %v3851, %v3847
        %v3868 = vld [vmem:[%s456] sm:$0xff]
        %v3869 = vld [vmem:[%s456 + $0x8] sm:$0xff]
        %v3870 = vld [vmem:[%s456 + $0x10] sm:$0xff]
        %v3871 = vld [vmem:[%s456 + $0x18] sm:$0xff]
        %v3872 = vld [vmem:[%s456 + $0x20] sm:$0xff]
        %v3873 = vld [vmem:[%s456 + $0x28] sm:$0xff]
        %v3874 = vld [vmem:[%s456 + $0x30] sm:$0xff]
        %v3875 = vld [vmem:[%s456 + $0x38] sm:$0xff]
        %v3876 = vld [vmem:[%s456 + $0x40] sm:$0xff]
        %v3877 = vld [vmem:[%s456 + $0x48] sm:$0xff]
        %v3878 = vld [vmem:[%s456 + $0x50] sm:$0xff]
        %v3879 = vld [vmem:[%s456 + $0x58] sm:$0xff]
        %v3880 = vld [vmem:[%s456 + $0x60] sm:$0xff]
        %v3881 = vld [vmem:[%s456 + $0x68] sm:$0xff]
        %v3882 = vld [vmem:[%s456 + $0x70] sm:$0xff]
        %v3883 = vld [vmem:[%s456 + $0x78] sm:$0xff]
        %v3884 = vld [vmem:[%s456 + $0x80] sm:$0xff]
        %v3885 = vld [vmem:[%s456 + $0x88] sm:$0xff]
        %v3886 = vld [vmem:[%s456 + $0x90] sm:$0xff]
        %v3887 = vld [vmem:[%s456 + $0x98] sm:$0xff]
        %v3888 = vld [vmem:[%s456 + $0xa0] sm:$0xff]
        %v3889 = vld [vmem:[%s456 + $0xa8] sm:$0xff]
        %v3890 = vld [vmem:[%s456 + $0xb0] sm:$0xff]
        %v3891 = vld [vmem:[%s456 + $0xb8] sm:$0xff]
        %v3892 = vld [vmem:[%s456 + $0xc0] sm:$0xff]
        %v3893 = vld [vmem:[%s456 + $0xc8] sm:$0xff]
        %v3894 = vld [vmem:[%s456 + $0xd0] sm:$0xff]
        %v3895 = vld [vmem:[%s456 + $0xd8] sm:$0xff]
        %v3896 = vld [vmem:[%s456 + $0xe0] sm:$0xff]
        %v3897 = vld [vmem:[%s456 + $0xe8] sm:$0xff]
        %v3898 = vld [vmem:[%s456 + $0xf0] sm:$0xff]
        %v3899 = vld [vmem:[%s456 + $0xf8] sm:$0xff]
        %v3900 = vld [vmem:[%s456 + $0x100] sm:$0xff]
        %v3901 = vld [vmem:[%s456 + $0x108] sm:$0xff]
        %v3902 = vld [vmem:[%s456 + $0x110] sm:$0xff]
        %v3903 = vld [vmem:[%s456 + $0x118] sm:$0xff]
        %v3904 = vld [vmem:[%s456 + $0x120] sm:$0xff]
        %v3905 = vld [vmem:[%s456 + $0x128] sm:$0xff]
        %v3906 = vld [vmem:[%s456 + $0x130] sm:$0xff]
        %v3907 = vld [vmem:[%s456 + $0x138] sm:$0xff]
        %v3908 = vld [vmem:[%s456 + $0x140] sm:$0xff]
        %v3909 = vld [vmem:[%s456 + $0x148] sm:$0xff]
        %v3910 = vld [vmem:[%s456 + $0x150] sm:$0xff]
        %v3911 = vld [vmem:[%s456 + $0x158] sm:$0xff]
        %v3912 = vld [vmem:[%s456 + $0x160] sm:$0xff]
        %v3913 = vld [vmem:[%s456 + $0x168] sm:$0xff]
        %v3914 = vld [vmem:[%s456 + $0x170] sm:$0xff]
        %v3915 = vld [vmem:[%s456 + $0x178] sm:$0xff]
        %v3916 = vld [vmem:[%s456 + $0x180] sm:$0xff]
        %v3917 = vld [vmem:[%s456 + $0x188] sm:$0xff]
        %v3918 = vld [vmem:[%s456 + $0x190] sm:$0xff]
        %v3919 = vld [vmem:[%s456 + $0x198] sm:$0xff]
        %v3920 = vld [vmem:[%s456 + $0x1a0] sm:$0xff]
        %v3921 = vld [vmem:[%s456 + $0x1a8] sm:$0xff]
        %v3922 = vld [vmem:[%s456 + $0x1b0] sm:$0xff]
        %v3923 = vld [vmem:[%s456 + $0x1b8] sm:$0xff]
        %v3924 = vld [vmem:[%s456 + $0x1c0] sm:$0xff]
        %v3925 = vld [vmem:[%s456 + $0x1c8] sm:$0xff]
        %v3926 = vld [vmem:[%s456 + $0x1d0] sm:$0xff]
        %v3927 = vld [vmem:[%s456 + $0x1d8] sm:$0xff]
        %v3928 = vld [vmem:[%s456 + $0x1e0] sm:$0xff]
        %v3929 = vld [vmem:[%s456 + $0x1e8] sm:$0xff]
        %v3930 = vld [vmem:[%s456 + $0x1f0] sm:$0xff]
        %v3931 = vld [vmem:[%s456 + $0x1f8] sm:$0xff]
        %v3932 = vld [vmem:[%s456 + $0x200] sm:$0xff]
        %v3933 = vld [vmem:[%s456 + $0x208] sm:$0xff]
        %v3934 = vld [vmem:[%s456 + $0x210] sm:$0xff]
        %v3935 = vld [vmem:[%s456 + $0x218] sm:$0xff]
        %v3936 = vld [vmem:[%s456 + $0x220] sm:$0xff]
        %v3937 = vld [vmem:[%s456 + $0x228] sm:$0xff]
        %v3938 = vld [vmem:[%s456 + $0x230] sm:$0xff]
        %v3939 = vld [vmem:[%s456 + $0x238] sm:$0xff]
        %v3940 = vld [vmem:[%s456 + $0x240] sm:$0xff]
        %v3941 = vld [vmem:[%s456 + $0x248] sm:$0xff]
        %v3942 = vld [vmem:[%s456 + $0x250] sm:$0xff]
        %v3943 = vld [vmem:[%s456 + $0x258] sm:$0xff]
        %v3944 = vld [vmem:[%s456 + $0x260] sm:$0xff]
        %v3945 = vld [vmem:[%s456 + $0x268] sm:$0xff]
        %v3946 = vld [vmem:[%s456 + $0x270] sm:$0xff]
        %v3947 = vld [vmem:[%s456 + $0x278] sm:$0xff]
        %v3948 = vld [vmem:[%s456 + $0x280] sm:$0xff]
        %v3949 = vld [vmem:[%s456 + $0x288] sm:$0xff]
        %v3950 = vld [vmem:[%s456 + $0x290] sm:$0xff]
        %v3951 = vld [vmem:[%s456 + $0x298] sm:$0xff]
        %v3952 = vld [vmem:[%s456 + $0x2a0] sm:$0xff]
        %v3953 = vld [vmem:[%s456 + $0x2a8] sm:$0xff]
        %v3954 = vld [vmem:[%s456 + $0x2b0] sm:$0xff]
        %v3955 = vld [vmem:[%s456 + $0x2b8] sm:$0xff]
        %v3956 = vld [vmem:[%s456 + $0x2c0] sm:$0xff]
        %v3957 = vld [vmem:[%s456 + $0x2c8] sm:$0xff]
        %v3958 = vld [vmem:[%s456 + $0x2d0] sm:$0xff]
        %v3959 = vld [vmem:[%s456 + $0x2d8] sm:$0xff]
        %v3960 = vld [vmem:[%s456 + $0x2e0] sm:$0xff]
        %v3961 = vld [vmem:[%s456 + $0x2e8] sm:$0xff]
        %v3962 = vld [vmem:[%s456 + $0x2f0] sm:$0xff]
        %v3963 = vld [vmem:[%s456 + $0x2f8] sm:$0xff]
        %v3964 = vld [vmem:[%s456 + $0x300] sm:$0xff]
        %v3965 = vld [vmem:[%s456 + $0x308] sm:$0xff]
        %v3966 = vld [vmem:[%s456 + $0x310] sm:$0xff]
        %v3967 = vld [vmem:[%s456 + $0x318] sm:$0xff]
        %v3968 = vld [vmem:[%s456 + $0x320] sm:$0xff]
        %v3969 = vld [vmem:[%s456 + $0x328] sm:$0xff]
        %v3970 = vld [vmem:[%s456 + $0x330] sm:$0xff]
        %v3971 = vld [vmem:[%s456 + $0x338] sm:$0xff]
        %v3972 = vld [vmem:[%s456 + $0x340] sm:$0xff]
        %v3973 = vld [vmem:[%s456 + $0x348] sm:$0xff]
        %v3974 = vld [vmem:[%s456 + $0x350] sm:$0xff]
        %v3975 = vld [vmem:[%s456 + $0x358] sm:$0xff]
        %v3976 = vld [vmem:[%s456 + $0x360] sm:$0xff]
        %v3977 = vld [vmem:[%s456 + $0x368] sm:$0xff]
        %v3978 = vld [vmem:[%s456 + $0x370] sm:$0xff]
        %v3979 = vld [vmem:[%s456 + $0x378] sm:$0xff]
        %v3980 = vld [vmem:[%s456 + $0x380] sm:$0xff]
        %v3981 = vld [vmem:[%s456 + $0x388] sm:$0xff]
        %v3982 = vld [vmem:[%s456 + $0x390] sm:$0xff]
        %v3983 = vld [vmem:[%s456 + $0x398] sm:$0xff]
        %v3984 = vld [vmem:[%s456 + $0x3a0] sm:$0xff]
        %v3985 = vld [vmem:[%s456 + $0x3a8] sm:$0xff]
        %v3986 = vld [vmem:[%s456 + $0x3b0] sm:$0xff]
        %v3987 = vld [vmem:[%s456 + $0x3b8] sm:$0xff]
        %v3988 = vld [vmem:[%s456 + $0x3c0] sm:$0xff]
        %v3989 = vld [vmem:[%s456 + $0x3c8] sm:$0xff]
        %v3990 = vld [vmem:[%s456 + $0x3d0] sm:$0xff]
        %v3991 = vld [vmem:[%s456 + $0x3d8] sm:$0xff]
        %v3992 = vld [vmem:[%s456 + $0x3e0] sm:$0xff]
        %v3993 = vld [vmem:[%s456 + $0x3e8] sm:$0xff]
        %v3994 = vld [vmem:[%s456 + $0x3f0] sm:$0xff]
        %v3995 = vld [vmem:[%s456 + $0x3f8] sm:$0xff]
        %v3996 = vunpack.c.l.s8.bf16 %v3868
        %v3997 = vunpack.c.l.s8.bf16 %v3869
        %v3998 = vunpack.c.l.s8.bf16 %v3870
        %v3999 = vunpack.c.l.s8.bf16 %v3871
        %v4000 = vunpack.c.l.s8.bf16 %v3872
        %v4001 = vunpack.c.l.s8.bf16 %v3873
        %v4002 = vunpack.c.l.s8.bf16 %v3874
        %v4003 = vunpack.c.l.s8.bf16 %v3875
        %v4004 = vunpack.c.h.s8.bf16 %v3868
        %v4005 = vunpack.c.h.s8.bf16 %v3869
        %v4006 = vunpack.c.h.s8.bf16 %v3870
        %v4007 = vunpack.c.h.s8.bf16 %v3871
        %v4008 = vunpack.c.h.s8.bf16 %v3872
        %v4009 = vunpack.c.h.s8.bf16 %v3873
        %v4010 = vunpack.c.h.s8.bf16 %v3874
        %v4011 = vunpack.c.h.s8.bf16 %v3875
        %v4012 = vunpack.c.l.s8.bf16 %v3876
        %v4013 = vunpack.c.l.s8.bf16 %v3877
        %v4014 = vunpack.c.l.s8.bf16 %v3878
        %v4015 = vunpack.c.l.s8.bf16 %v3879
        %v4016 = vunpack.c.l.s8.bf16 %v3880
        %v4017 = vunpack.c.l.s8.bf16 %v3881
        %v4018 = vunpack.c.l.s8.bf16 %v3882
        %v4019 = vunpack.c.l.s8.bf16 %v3883
        %v4020 = vunpack.c.h.s8.bf16 %v3876
        %v4021 = vunpack.c.h.s8.bf16 %v3877
        %v4022 = vunpack.c.h.s8.bf16 %v3878
        %v4023 = vunpack.c.h.s8.bf16 %v3879
        %v4024 = vunpack.c.h.s8.bf16 %v3880
        %v4025 = vunpack.c.h.s8.bf16 %v3881
        %v4026 = vunpack.c.h.s8.bf16 %v3882
        %v4027 = vunpack.c.h.s8.bf16 %v3883
        %v4028 = vunpack.c.l.s8.bf16 %v3884
        %v4029 = vunpack.c.l.s8.bf16 %v3885
        %v4030 = vunpack.c.l.s8.bf16 %v3886
        %v4031 = vunpack.c.l.s8.bf16 %v3887
        %v4032 = vunpack.c.l.s8.bf16 %v3888
        %v4033 = vunpack.c.l.s8.bf16 %v3889
        %v4034 = vunpack.c.l.s8.bf16 %v3890
        %v4035 = vunpack.c.l.s8.bf16 %v3891
        %v4036 = vunpack.c.h.s8.bf16 %v3884
        %v4037 = vunpack.c.h.s8.bf16 %v3885
        %v4038 = vunpack.c.h.s8.bf16 %v3886
        %v4039 = vunpack.c.h.s8.bf16 %v3887
        %v4040 = vunpack.c.h.s8.bf16 %v3888
        %v4041 = vunpack.c.h.s8.bf16 %v3889
        %v4042 = vunpack.c.h.s8.bf16 %v3890
        %v4043 = vunpack.c.h.s8.bf16 %v3891
        %v4044 = vunpack.c.l.s8.bf16 %v3892
        %v4045 = vunpack.c.l.s8.bf16 %v3893
        %v4046 = vunpack.c.l.s8.bf16 %v3894
        %v4047 = vunpack.c.l.s8.bf16 %v3895
        %v4048 = vunpack.c.l.s8.bf16 %v3896
        %v4049 = vunpack.c.l.s8.bf16 %v3897
        %v4050 = vunpack.c.l.s8.bf16 %v3898
        %v4051 = vunpack.c.l.s8.bf16 %v3899
        %v4052 = vunpack.c.h.s8.bf16 %v3892
        %v4053 = vunpack.c.h.s8.bf16 %v3893
        %v4054 = vunpack.c.h.s8.bf16 %v3894
        %v4055 = vunpack.c.h.s8.bf16 %v3895
        %v4056 = vunpack.c.h.s8.bf16 %v3896
        %v4057 = vunpack.c.h.s8.bf16 %v3897
        %v4058 = vunpack.c.h.s8.bf16 %v3898
        %v4059 = vunpack.c.h.s8.bf16 %v3899
        %v4060 = vunpack.c.l.s8.bf16 %v3900
        %v4061 = vunpack.c.l.s8.bf16 %v3901
        %v4062 = vunpack.c.l.s8.bf16 %v3902
        %v4063 = vunpack.c.l.s8.bf16 %v3903
        %v4064 = vunpack.c.l.s8.bf16 %v3904
        %v4065 = vunpack.c.l.s8.bf16 %v3905
        %v4066 = vunpack.c.l.s8.bf16 %v3906
        %v4067 = vunpack.c.l.s8.bf16 %v3907
        %v4068 = vunpack.c.h.s8.bf16 %v3900
        %v4069 = vunpack.c.h.s8.bf16 %v3901
        %v4070 = vunpack.c.h.s8.bf16 %v3902
        %v4071 = vunpack.c.h.s8.bf16 %v3903
        %v4072 = vunpack.c.h.s8.bf16 %v3904
        %v4073 = vunpack.c.h.s8.bf16 %v3905
        %v4074 = vunpack.c.h.s8.bf16 %v3906
        %v4075 = vunpack.c.h.s8.bf16 %v3907
        %v4076 = vunpack.c.l.s8.bf16 %v3908
        %v4077 = vunpack.c.l.s8.bf16 %v3909
        %v4078 = vunpack.c.l.s8.bf16 %v3910
        %v4079 = vunpack.c.l.s8.bf16 %v3911
        %v4080 = vunpack.c.l.s8.bf16 %v3912
        %v4081 = vunpack.c.l.s8.bf16 %v3913
        %v4082 = vunpack.c.l.s8.bf16 %v3914
        %v4083 = vunpack.c.l.s8.bf16 %v3915
        %v4084 = vunpack.c.h.s8.bf16 %v3908
        %v4085 = vunpack.c.h.s8.bf16 %v3909
        %v4086 = vunpack.c.h.s8.bf16 %v3910
        %v4087 = vunpack.c.h.s8.bf16 %v3911
        %v4088 = vunpack.c.h.s8.bf16 %v3912
        %v4089 = vunpack.c.h.s8.bf16 %v3913
        %v4090 = vunpack.c.h.s8.bf16 %v3914
        %v4091 = vunpack.c.h.s8.bf16 %v3915
        %v4092 = vunpack.c.l.s8.bf16 %v3916
        %v4093 = vunpack.c.l.s8.bf16 %v3917
        %v4094 = vunpack.c.l.s8.bf16 %v3918
        %v4095 = vunpack.c.l.s8.bf16 %v3919
        %v4096 = vunpack.c.l.s8.bf16 %v3920
        %v4097 = vunpack.c.l.s8.bf16 %v3921
        %v4098 = vunpack.c.l.s8.bf16 %v3922
        %v4099 = vunpack.c.l.s8.bf16 %v3923
        %v4100 = vunpack.c.h.s8.bf16 %v3916
        %v4101 = vunpack.c.h.s8.bf16 %v3917
        %v4102 = vunpack.c.h.s8.bf16 %v3918
        %v4103 = vunpack.c.h.s8.bf16 %v3919
        %v4104 = vunpack.c.h.s8.bf16 %v3920
        %v4105 = vunpack.c.h.s8.bf16 %v3921
        %v4106 = vunpack.c.h.s8.bf16 %v3922
        %v4107 = vunpack.c.h.s8.bf16 %v3923
        %v4108 = vunpack.c.l.s8.bf16 %v3924
        %v4109 = vunpack.c.l.s8.bf16 %v3925
        %v4110 = vunpack.c.l.s8.bf16 %v3926
        %v4111 = vunpack.c.l.s8.bf16 %v3927
        %v4112 = vunpack.c.l.s8.bf16 %v3928
        %v4113 = vunpack.c.l.s8.bf16 %v3929
        %v4114 = vunpack.c.l.s8.bf16 %v3930
        %v4115 = vunpack.c.l.s8.bf16 %v3931
        %v4116 = vunpack.c.h.s8.bf16 %v3924
        %v4117 = vunpack.c.h.s8.bf16 %v3925
        %v4118 = vunpack.c.h.s8.bf16 %v3926
        %v4119 = vunpack.c.h.s8.bf16 %v3927
        %v4120 = vunpack.c.h.s8.bf16 %v3928
        %v4121 = vunpack.c.h.s8.bf16 %v3929
        %v4122 = vunpack.c.h.s8.bf16 %v3930
        %v4123 = vunpack.c.h.s8.bf16 %v3931
        %v4124 = vunpack.c.l.s8.bf16 %v3932
        %v4125 = vunpack.c.l.s8.bf16 %v3933
        %v4126 = vunpack.c.l.s8.bf16 %v3934
        %v4127 = vunpack.c.l.s8.bf16 %v3935
        %v4128 = vunpack.c.l.s8.bf16 %v3936
        %v4129 = vunpack.c.l.s8.bf16 %v3937
        %v4130 = vunpack.c.l.s8.bf16 %v3938
        %v4131 = vunpack.c.l.s8.bf16 %v3939
        %v4132 = vunpack.c.h.s8.bf16 %v3932
        %v4133 = vunpack.c.h.s8.bf16 %v3933
        %v4134 = vunpack.c.h.s8.bf16 %v3934
        %v4135 = vunpack.c.h.s8.bf16 %v3935
        %v4136 = vunpack.c.h.s8.bf16 %v3936
        %v4137 = vunpack.c.h.s8.bf16 %v3937
        %v4138 = vunpack.c.h.s8.bf16 %v3938
        %v4139 = vunpack.c.h.s8.bf16 %v3939
        %v4140 = vunpack.c.l.s8.bf16 %v3940
        %v4141 = vunpack.c.l.s8.bf16 %v3941
        %v4142 = vunpack.c.l.s8.bf16 %v3942
        %v4143 = vunpack.c.l.s8.bf16 %v3943
        %v4144 = vunpack.c.l.s8.bf16 %v3944
        %v4145 = vunpack.c.l.s8.bf16 %v3945
        %v4146 = vunpack.c.l.s8.bf16 %v3946
        %v4147 = vunpack.c.l.s8.bf16 %v3947
        %v4148 = vunpack.c.h.s8.bf16 %v3940
        %v4149 = vunpack.c.h.s8.bf16 %v3941
        %v4150 = vunpack.c.h.s8.bf16 %v3942
        %v4151 = vunpack.c.h.s8.bf16 %v3943
        %v4152 = vunpack.c.h.s8.bf16 %v3944
        %v4153 = vunpack.c.h.s8.bf16 %v3945
        %v4154 = vunpack.c.h.s8.bf16 %v3946
        %v4155 = vunpack.c.h.s8.bf16 %v3947
        %v4156 = vunpack.c.l.s8.bf16 %v3948
        %v4157 = vunpack.c.l.s8.bf16 %v3949
        %v4158 = vunpack.c.l.s8.bf16 %v3950
        %v4159 = vunpack.c.l.s8.bf16 %v3951
        %v4160 = vunpack.c.l.s8.bf16 %v3952
        %v4161 = vunpack.c.l.s8.bf16 %v3953
        %v4162 = vunpack.c.l.s8.bf16 %v3954
        %v4163 = vunpack.c.l.s8.bf16 %v3955
        %v4164 = vunpack.c.h.s8.bf16 %v3948
        %v4165 = vunpack.c.h.s8.bf16 %v3949
        %v4166 = vunpack.c.h.s8.bf16 %v3950
        %v4167 = vunpack.c.h.s8.bf16 %v3951
        %v4168 = vunpack.c.h.s8.bf16 %v3952
        %v4169 = vunpack.c.h.s8.bf16 %v3953
        %v4170 = vunpack.c.h.s8.bf16 %v3954
        %v4171 = vunpack.c.h.s8.bf16 %v3955
        %v4172 = vunpack.c.l.s8.bf16 %v3956
        %v4173 = vunpack.c.l.s8.bf16 %v3957
        %v4174 = vunpack.c.l.s8.bf16 %v3958
        %v4175 = vunpack.c.l.s8.bf16 %v3959
        %v4176 = vunpack.c.l.s8.bf16 %v3960
        %v4177 = vunpack.c.l.s8.bf16 %v3961
        %v4178 = vunpack.c.l.s8.bf16 %v3962
        %v4179 = vunpack.c.l.s8.bf16 %v3963
        %v4180 = vunpack.c.h.s8.bf16 %v3956
        %v4181 = vunpack.c.h.s8.bf16 %v3957
        %v4182 = vunpack.c.h.s8.bf16 %v3958
        %v4183 = vunpack.c.h.s8.bf16 %v3959
        %v4184 = vunpack.c.h.s8.bf16 %v3960
        %v4185 = vunpack.c.h.s8.bf16 %v3961
        %v4186 = vunpack.c.h.s8.bf16 %v3962
        %v4187 = vunpack.c.h.s8.bf16 %v3963
        %v4188 = vunpack.c.l.s8.bf16 %v3964
        %v4189 = vunpack.c.l.s8.bf16 %v3965
        %v4190 = vunpack.c.l.s8.bf16 %v3966
        %v4191 = vunpack.c.l.s8.bf16 %v3967
        %v4192 = vunpack.c.l.s8.bf16 %v3968
        %v4193 = vunpack.c.l.s8.bf16 %v3969
        %v4194 = vunpack.c.l.s8.bf16 %v3970
        %v4195 = vunpack.c.l.s8.bf16 %v3971
        %v4196 = vunpack.c.h.s8.bf16 %v3964
        %v4197 = vunpack.c.h.s8.bf16 %v3965
        %v4198 = vunpack.c.h.s8.bf16 %v3966
        %v4199 = vunpack.c.h.s8.bf16 %v3967
        %v4200 = vunpack.c.h.s8.bf16 %v3968
        %v4201 = vunpack.c.h.s8.bf16 %v3969
        %v4202 = vunpack.c.h.s8.bf16 %v3970
        %v4203 = vunpack.c.h.s8.bf16 %v3971
        %v4204 = vunpack.c.l.s8.bf16 %v3972
        %v4205 = vunpack.c.l.s8.bf16 %v3973
        %v4206 = vunpack.c.l.s8.bf16 %v3974
        %v4207 = vunpack.c.l.s8.bf16 %v3975
        %v4208 = vunpack.c.l.s8.bf16 %v3976
        %v4209 = vunpack.c.l.s8.bf16 %v3977
        %v4210 = vunpack.c.l.s8.bf16 %v3978
        %v4211 = vunpack.c.l.s8.bf16 %v3979
        %v4212 = vunpack.c.h.s8.bf16 %v3972
        %v4213 = vunpack.c.h.s8.bf16 %v3973
        %v4214 = vunpack.c.h.s8.bf16 %v3974
        %v4215 = vunpack.c.h.s8.bf16 %v3975
        %v4216 = vunpack.c.h.s8.bf16 %v3976
        %v4217 = vunpack.c.h.s8.bf16 %v3977
        %v4218 = vunpack.c.h.s8.bf16 %v3978
        %v4219 = vunpack.c.h.s8.bf16 %v3979
        %v4220 = vunpack.c.l.s8.bf16 %v3980
        %v4221 = vunpack.c.l.s8.bf16 %v3981
        %v4222 = vunpack.c.l.s8.bf16 %v3982
        %v4223 = vunpack.c.l.s8.bf16 %v3983
        %v4224 = vunpack.c.l.s8.bf16 %v3984
        %v4225 = vunpack.c.l.s8.bf16 %v3985
        %v4226 = vunpack.c.l.s8.bf16 %v3986
        %v4227 = vunpack.c.l.s8.bf16 %v3987
        %v4228 = vunpack.c.h.s8.bf16 %v3980
        %v4229 = vunpack.c.h.s8.bf16 %v3981
        %v4230 = vunpack.c.h.s8.bf16 %v3982
        %v4231 = vunpack.c.h.s8.bf16 %v3983
        %v4232 = vunpack.c.h.s8.bf16 %v3984
        %v4233 = vunpack.c.h.s8.bf16 %v3985
        %v4234 = vunpack.c.h.s8.bf16 %v3986
        %v4235 = vunpack.c.h.s8.bf16 %v3987
        %v4236 = vunpack.c.l.s8.bf16 %v3988
        %v4237 = vunpack.c.l.s8.bf16 %v3989
        %v4238 = vunpack.c.l.s8.bf16 %v3990
        %v4239 = vunpack.c.l.s8.bf16 %v3991
        %v4240 = vunpack.c.l.s8.bf16 %v3992
        %v4241 = vunpack.c.l.s8.bf16 %v3993
        %v4242 = vunpack.c.l.s8.bf16 %v3994
        %v4243 = vunpack.c.l.s8.bf16 %v3995
        %v4244 = vunpack.c.h.s8.bf16 %v3988
        %v4245 = vunpack.c.h.s8.bf16 %v3989
        %v4246 = vunpack.c.h.s8.bf16 %v3990
        %v4247 = vunpack.c.h.s8.bf16 %v3991
        %v4248 = vunpack.c.h.s8.bf16 %v3992
        %v4249 = vunpack.c.h.s8.bf16 %v3993
        %v4250 = vunpack.c.h.s8.bf16 %v3994
        %v4251 = vunpack.c.h.s8.bf16 %v3995
        %4252 = vmatprep.subr.bf16.mxu0 %v3997
        %4253 = vmatpush1.bf16.msra.mxu0 %v3996
        %4254 = vmatprep.subr.bf16.mxu0 %v4005
        %4255 = vmatpush1.bf16.msra.mxu0 %v4004
        %4256 = vmatprep.subr.bf16.mxu0 %v4013
        %4257 = vmatpush1.bf16.msra.mxu0 %v4012
        %4258 = vmatprep.subr.bf16.mxu0 %v4021
        %4259 = vmatpush1.bf16.msra.mxu0 %v4020
        %4260 = vmatprep.subr.bf16.mxu0 %v4029
        %4261 = vmatpush1.bf16.msra.mxu0 %v4028
        %4262 = vmatprep.subr.bf16.mxu0 %v4037
        %4263 = vmatpush1.bf16.msra.mxu0 %v4036
        %4264 = vmatprep.subr.bf16.mxu0 %v4045
        %4265 = vmatpush1.bf16.msra.mxu0 %v4044
        %4266 = vmatprep.subr.bf16.mxu0 %v4053
        %4267 = vmatpush1.bf16.msra.mxu0 %v4052
        %4268 = vmatprep.subr.bf16.mxu0 %v4061
        %4269 = vmatpush1.bf16.msra.mxu0 %v4060
        %4270 = vmatprep.subr.bf16.mxu0 %v4069
        %4271 = vmatpush1.bf16.msra.mxu0 %v4068
        %4272 = vmatprep.subr.bf16.mxu0 %v4077
        %4273 = vmatpush1.bf16.msra.mxu0 %v4076
        %4274 = vmatprep.subr.bf16.mxu0 %v4085
        %4275 = vmatpush1.bf16.msra.mxu0 %v4084
        %4276 = vmatprep.subr.bf16.mxu0 %v4093
        %4277 = vmatpush1.bf16.msra.mxu0 %v4092
        %4278 = vmatprep.subr.bf16.mxu0 %v4101
        %4279 = vmatpush1.bf16.msra.mxu0 %v4100
        %4280 = vmatprep.subr.bf16.mxu0 %v4109
        %4281 = vmatpush1.bf16.msra.mxu0 %v4108
        %4282 = vmatprep.subr.bf16.mxu0 %v4117
        %4283 = vmatpush1.bf16.msra.mxu0 %v4116
        %4284 = vmatprep.mubr.bf16.mxu0 %v3853
        %4285 = vmatmul.mubr.bf16.gmra.mrb[0].mxu0 %v3852
        %v4286 = vpop.f32.mrb[0].mxu0
        %v4287 = vadd.f32 0.0, %v4286
        %v4288 = vpop.f32.mrb[0].mxu0
        %v4289 = vadd.f32 0.0, %v4288
        %v4290 = vpop.f32.mrb[0].mxu0
        %v4291 = vadd.f32 0.0, %v4290
        %v4292 = vpop.f32.mrb[0].mxu0
        %v4293 = vadd.f32 0.0, %v4292
        %4294 = vmatprep.mubr.bf16.mxu0 %v3857
        %4295 = vmatmul.mubr.bf16.gmra.mrb[0].mxu0 %v3856
        %v4296 = vpop.f32.mrb[0].mxu0
        %v4297 = vadd.f32 0.0, %v4296
        %v4298 = vpop.f32.mrb[0].mxu0
        %v4299 = vadd.f32 0.0, %v4298
        %v4300 = vpop.f32.mrb[0].mxu0
        %v4301 = vadd.f32 0.0, %v4300
        %v4302 = vpop.f32.mrb[0].mxu0
        %v4303 = vadd.f32 0.0, %v4302
        %4304 = vmatprep.mubr.bf16.mxu0 %v3861
        %4305 = vmatmul.mubr.bf16.gmra.mrb[0].mxu0 %v3860
        %v4306 = vpop.f32.mrb[0].mxu0
        %v4307 = vadd.f32 0.0, %v4306
        %v4308 = vpop.f32.mrb[0].mxu0
        %v4309 = vadd.f32 0.0, %v4308
        %v4310 = vpop.f32.mrb[0].mxu0
        %v4311 = vadd.f32 0.0, %v4310
        %v4312 = vpop.f32.mrb[0].mxu0
        %v4313 = vadd.f32 0.0, %v4312
        %4314 = vmatprep.mubr.bf16.mxu0 %v3865
        %4315 = vmatmul.mubr.bf16.gmra.mrb[0].mxu0 %v3864
        %v4316 = vpop.f32.mrb[0].mxu0
        %v4317 = vadd.f32 0.0, %v4316
        %v4318 = vpop.f32.mrb[0].mxu0
        %v4319 = vadd.f32 0.0, %v4318
        %v4320 = vpop.f32.mrb[0].mxu0
        %v4321 = vadd.f32 0.0, %v4320
        %v4322 = vpop.f32.mrb[0].mxu0
        %v4323 = vadd.f32 0.0, %v4322
        %4324 = vdwg.mxu0
        %4325 = vmatprep.subr.bf16.mxu0 %v4125
        %4326 = vmatpush1.bf16.msra.mxu0 %v4124
        %4327 = vmatprep.subr.bf16.mxu0 %v4133
        %4328 = vmatpush1.bf16.msra.mxu0 %v4132
        %4329 = vmatprep.subr.bf16.mxu0 %v4141
        %4330 = vmatpush1.bf16.msra.mxu0 %v4140
        %4331 = vmatprep.subr.bf16.mxu0 %v4149
        %4332 = vmatpush1.bf16.msra.mxu0 %v4148
        %4333 = vmatprep.subr.bf16.mxu0 %v4157
        %4334 = vmatpush1.bf16.msra.mxu0 %v4156
        %4335 = vmatprep.subr.bf16.mxu0 %v4165
        %4336 = vmatpush1.bf16.msra.mxu0 %v4164
        %4337 = vmatprep.subr.bf16.mxu0 %v4173
        %4338 = vmatpush1.bf16.msra.mxu0 %v4172
        %4339 = vmatprep.subr.bf16.mxu0 %v4181
        %4340 = vmatpush1.bf16.msra.mxu0 %v4180
        %4341 = vmatprep.subr.bf16.mxu0 %v4189
        %4342 = vmatpush1.bf16.msra.mxu0 %v4188
        %4343 = vmatprep.subr.bf16.mxu0 %v4197
        %4344 = vmatpush1.bf16.msra.mxu0 %v4196
        %4345 = vmatprep.subr.bf16.mxu0 %v4205
        %4346 = vmatpush1.bf16.msra.mxu0 %v4204
        %4347 = vmatprep.subr.bf16.mxu0 %v4213
        %4348 = vmatpush1.bf16.msra.mxu0 %v4212
        %4349 = vmatprep.subr.bf16.mxu0 %v4221
        %4350 = vmatpush1.bf16.msra.mxu0 %v4220
        %4351 = vmatprep.subr.bf16.mxu0 %v4229
        %4352 = vmatpush1.bf16.msra.mxu0 %v4228
        %4353 = vmatprep.subr.bf16.mxu0 %v4237
        %4354 = vmatpush1.bf16.msra.mxu0 %v4236
        %4355 = vmatprep.subr.bf16.mxu0 %v4245
        %4356 = vmatpush1.bf16.msra.mxu0 %v4244
        %4357 = vmatprep.mubr.bf16.mxu0 %v3855
        %4358 = vmatmul.mubr.bf16.gmra.mrb[0].mxu0 %v3854
        %v4359 = vpop.f32.mrb[0].mxu0
        %v4360 = vadd.f32 %v4287, %v4359
        %v4361 = vpop.f32.mrb[0].mxu0
        %v4362 = vadd.f32 %v4289, %v4361
        %v4363 = vpop.f32.mrb[0].mxu0
        %v4364 = vadd.f32 %v4291, %v4363
        %v4365 = vpop.f32.mrb[0].mxu0
        %v4366 = vadd.f32 %v4293, %v4365
        %4367 = vmatprep.mubr.bf16.mxu0 %v3859
        %4368 = vmatmul.mubr.bf16.gmra.mrb[0].mxu0 %v3858
        %v4369 = vpop.f32.mrb[0].mxu0
        %v4370 = vadd.f32 %v4297, %v4369
        %v4371 = vpop.f32.mrb[0].mxu0
        %v4372 = vadd.f32 %v4299, %v4371
        %v4373 = vpop.f32.mrb[0].mxu0
        %v4374 = vadd.f32 %v4301, %v4373
        %v4375 = vpop.f32.mrb[0].mxu0
        %v4376 = vadd.f32 %v4303, %v4375
        %4377 = vmatprep.mubr.bf16.mxu0 %v3863
        %4378 = vmatmul.mubr.bf16.gmra.mrb[0].mxu0 %v3862
        %v4379 = vpop.f32.mrb[0].mxu0
        %v4380 = vadd.f32 %v4307, %v4379
        %v4381 = vpop.f32.mrb[0].mxu0
        %v4382 = vadd.f32 %v4309, %v4381
        %v4383 = vpop.f32.mrb[0].mxu0
        %v4384 = vadd.f32 %v4311, %v4383
        %v4385 = vpop.f32.mrb[0].mxu0
        %v4386 = vadd.f32 %v4313, %v4385
        %4387 = vmatprep.mubr.bf16.mxu0 %v3867
        %4388 = vmatmul.mubr.bf16.gmra.mrb[0].mxu0 %v3866
        %v4389 = vpop.f32.mrb[0].mxu0
        %v4390 = vadd.f32 %v4317, %v4389
        %v4391 = vpop.f32.mrb[0].mxu0
        %v4392 = vadd.f32 %v4319, %v4391
        %v4393 = vpop.f32.mrb[0].mxu0
        %v4394 = vadd.f32 %v4321, %v4393
        %v4395 = vpop.f32.mrb[0].mxu0
        %v4396 = vadd.f32 %v4323, %v4395
        %4397 = vdwg.mxu0
        %4398 = vmatprep.subr.bf16.mxu0 %v3999
        %4399 = vmatpush1.bf16.msra.mxu0 %v3998
        %4400 = vmatprep.subr.bf16.mxu0 %v4007
        %4401 = vmatpush1.bf16.msra.mxu0 %v4006
        %4402 = vmatprep.subr.bf16.mxu0 %v4015
        %4403 = vmatpush1.bf16.msra.mxu0 %v4014
        %4404 = vmatprep.subr.bf16.mxu0 %v4023
        %4405 = vmatpush1.bf16.msra.mxu0 %v4022
        %4406 = vmatprep.subr.bf16.mxu0 %v4031
        %4407 = vmatpush1.bf16.msra.mxu0 %v4030
        %4408 = vmatprep.subr.bf16.mxu0 %v4039
        %4409 = vmatpush1.bf16.msra.mxu0 %v4038
        %4410 = vmatprep.subr.bf16.mxu0 %v4047
        %4411 = vmatpush1.bf16.msra.mxu0 %v4046
        %4412 = vmatprep.subr.bf16.mxu0 %v4055
        %4413 = vmatpush1.bf16.msra.mxu0 %v4054
        %4414 = vmatprep.subr.bf16.mxu0 %v4063
        %4415 = vmatpush1.bf16.msra.mxu0 %v4062
        %4416 = vmatprep.subr.bf16.mxu0 %v4071
        %4417 = vmatpush1.bf16.msra.mxu0 %v4070
        %4418 = vmatprep.subr.bf16.mxu0 %v4079
        %4419 = vmatpush1.bf16.msra.mxu0 %v4078
        %4420 = vmatprep.subr.bf16.mxu0 %v4087
        %4421 = vmatpush1.bf16.msra.mxu0 %v4086
        %4422 = vmatprep.subr.bf16.mxu0 %v4095
        %4423 = vmatpush1.bf16.msra.mxu0 %v4094
        %4424 = vmatprep.subr.bf16.mxu0 %v4103
        %4425 = vmatpush1.bf16.msra.mxu0 %v4102
        %4426 = vmatprep.subr.bf16.mxu0 %v4111
        %4427 = vmatpush1.bf16.msra.mxu0 %v4110
        %4428 = vmatprep.subr.bf16.mxu0 %v4119
        %4429 = vmatpush1.bf16.msra.mxu0 %v4118
        %4430 = vmatprep.mubr.bf16.mxu0 %v3853
        %4431 = vmatmul.mubr.bf16.gmra.mrb[0].mxu0 %v3852
        %v4432 = vpop.f32.mrb[0].mxu0
        %v4433 = vadd.f32 0.0, %v4432
        %v4434 = vpop.f32.mrb[0].mxu0
        %v4435 = vadd.f32 0.0, %v4434
        %v4436 = vpop.f32.mrb[0].mxu0
        %v4437 = vadd.f32 0.0, %v4436
        %v4438 = vpop.f32.mrb[0].mxu0
        %v4439 = vadd.f32 0.0, %v4438
        %4440 = vmatprep.mubr.bf16.mxu0 %v3857
        %4441 = vmatmul.mubr.bf16.gmra.mrb[0].mxu0 %v3856
        %v4442 = vpop.f32.mrb[0].mxu0
        %v4443 = vadd.f32 0.0, %v4442
        %v4444 = vpop.f32.mrb[0].mxu0
        %v4445 = vadd.f32 0.0, %v4444
        %v4446 = vpop.f32.mrb[0].mxu0
        %v4447 = vadd.f32 0.0, %v4446
        %v4448 = vpop.f32.mrb[0].mxu0
        %v4449 = vadd.f32 0.0, %v4448
        %4450 = vmatprep.mubr.bf16.mxu0 %v3861
        %4451 = vmatmul.mubr.bf16.gmra.mrb[0].mxu0 %v3860
        %v4452 = vpop.f32.mrb[0].mxu0
        %v4453 = vadd.f32 0.0, %v4452
        %v4454 = vpop.f32.mrb[0].mxu0
        %v4455 = vadd.f32 0.0, %v4454
        %v4456 = vpop.f32.mrb[0].mxu0
        %v4457 = vadd.f32 0.0, %v4456
        %v4458 = vpop.f32.mrb[0].mxu0
        %v4459 = vadd.f32 0.0, %v4458
        %4460 = vmatprep.mubr.bf16.mxu0 %v3865
        %4461 = vmatmul.mubr.bf16.gmra.mrb[0].mxu0 %v3864
        %v4462 = vpop.f32.mrb[0].mxu0
        %v4463 = vadd.f32 0.0, %v4462
        %v4464 = vpop.f32.mrb[0].mxu0
        %v4465 = vadd.f32 0.0, %v4464
        %v4466 = vpop.f32.mrb[0].mxu0
        %v4467 = vadd.f32 0.0, %v4466
        %v4468 = vpop.f32.mrb[0].mxu0
        %v4469 = vadd.f32 0.0, %v4468
        %4470 = vdwg.mxu0
        %4471 = vmatprep.subr.bf16.mxu0 %v4127
        %4472 = vmatpush1.bf16.msra.mxu0 %v4126
        %4473 = vmatprep.subr.bf16.mxu0 %v4135
        %4474 = vmatpush1.bf16.msra.mxu0 %v4134
        %4475 = vmatprep.subr.bf16.mxu0 %v4143
        %4476 = vmatpush1.bf16.msra.mxu0 %v4142
        %4477 = vmatprep.subr.bf16.mxu0 %v4151
        %4478 = vmatpush1.bf16.msra.mxu0 %v4150
        %4479 = vmatprep.subr.bf16.mxu0 %v4159
        %4480 = vmatpush1.bf16.msra.mxu0 %v4158
        %4481 = vmatprep.subr.bf16.mxu0 %v4167
        %4482 = vmatpush1.bf16.msra.mxu0 %v4166
        %4483 = vmatprep.subr.bf16.mxu0 %v4175
        %4484 = vmatpush1.bf16.msra.mxu0 %v4174
        %4485 = vmatprep.subr.bf16.mxu0 %v4183
        %4486 = vmatpush1.bf16.msra.mxu0 %v4182
        %4487 = vmatprep.subr.bf16.mxu0 %v4191
        %4488 = vmatpush1.bf16.msra.mxu0 %v4190
        %4489 = vmatprep.subr.bf16.mxu0 %v4199
        %4490 = vmatpush1.bf16.msra.mxu0 %v4198
        %4491 = vmatprep.subr.bf16.mxu0 %v4207
        %4492 = vmatpush1.bf16.msra.mxu0 %v4206
        %4493 = vmatprep.subr.bf16.mxu0 %v4215
        %4494 = vmatpush1.bf16.msra.mxu0 %v4214
        %4495 = vmatprep.subr.bf16.mxu0 %v4223
        %4496 = vmatpush1.bf16.msra.mxu0 %v4222
        %4497 = vmatprep.subr.bf16.mxu0 %v4231
        %4498 = vmatpush1.bf16.msra.mxu0 %v4230
        %4499 = vmatprep.subr.bf16.mxu0 %v4239
        %4500 = vmatpush1.bf16.msra.mxu0 %v4238
        %4501 = vmatprep.subr.bf16.mxu0 %v4247
        %4502 = vmatpush1.bf16.msra.mxu0 %v4246
        %4503 = vmatprep.mubr.bf16.mxu0 %v3855
        %4504 = vmatmul.mubr.bf16.gmra.mrb[0].mxu0 %v3854
        %v4505 = vpop.f32.mrb[0].mxu0
        %v4506 = vadd.f32 %v4433, %v4505
        %v4507 = vpop.f32.mrb[0].mxu0
        %v4508 = vadd.f32 %v4435, %v4507
        %v4509 = vpop.f32.mrb[0].mxu0
        %v4510 = vadd.f32 %v4437, %v4509
        %v4511 = vpop.f32.mrb[0].mxu0
        %v4512 = vadd.f32 %v4439, %v4511
        %4513 = vmatprep.mubr.bf16.mxu0 %v3859
        %4514 = vmatmul.mubr.bf16.gmra.mrb[0].mxu0 %v3858
        %v4515 = vpop.f32.mrb[0].mxu0
        %v4516 = vadd.f32 %v4443, %v4515
        %v4517 = vpop.f32.mrb[0].mxu0
        %v4518 = vadd.f32 %v4445, %v4517
        %v4519 = vpop.f32.mrb[0].mxu0
        %v4520 = vadd.f32 %v4447, %v4519
        %v4521 = vpop.f32.mrb[0].mxu0
        %v4522 = vadd.f32 %v4449, %v4521
        %4523 = vmatprep.mubr.bf16.mxu0 %v3863
        %4524 = vmatmul.mubr.bf16.gmra.mrb[0].mxu0 %v3862
        %v4525 = vpop.f32.mrb[0].mxu0
        %v4526 = vadd.f32 %v4453, %v4525
        %v4527 = vpop.f32.mrb[0].mxu0
        %v4528 = vadd.f32 %v4455, %v4527
        %v4529 = vpop.f32.mrb[0].mxu0
        %v4530 = vadd.f32 %v4457, %v4529
        %v4531 = vpop.f32.mrb[0].mxu0
        %v4532 = vadd.f32 %v4459, %v4531
        %4533 = vmatprep.mubr.bf16.mxu0 %v3867
        %4534 = vmatmul.mubr.bf16.gmra.mrb[0].mxu0 %v3866
        %v4535 = vpop.f32.mrb[0].mxu0
        %v4536 = vadd.f32 %v4463, %v4535
        %v4537 = vpop.f32.mrb[0].mxu0
        %v4538 = vadd.f32 %v4465, %v4537
        %v4539 = vpop.f32.mrb[0].mxu0
        %v4540 = vadd.f32 %v4467, %v4539
        %v4541 = vpop.f32.mrb[0].mxu0
        %v4542 = vadd.f32 %v4469, %v4541
        %4543 = vdwg.mxu0
        %4544 = vmatprep.subr.bf16.mxu0 %v4001
        %4545 = vmatpush1.bf16.msra.mxu0 %v4000
        %4546 = vmatprep.subr.bf16.mxu0 %v4009
        %4547 = vmatpush1.bf16.msra.mxu0 %v4008
        %4548 = vmatprep.subr.bf16.mxu0 %v4017
        %4549 = vmatpush1.bf16.msra.mxu0 %v4016
        %4550 = vmatprep.subr.bf16.mxu0 %v4025
        %4551 = vmatpush1.bf16.msra.mxu0 %v4024
        %4552 = vmatprep.subr.bf16.mxu0 %v4033
        %4553 = vmatpush1.bf16.msra.mxu0 %v4032
        %4554 = vmatprep.subr.bf16.mxu0 %v4041
        %4555 = vmatpush1.bf16.msra.mxu0 %v4040
        %4556 = vmatprep.subr.bf16.mxu0 %v4049
        %4557 = vmatpush1.bf16.msra.mxu0 %v4048
        %4558 = vmatprep.subr.bf16.mxu0 %v4057
        %4559 = vmatpush1.bf16.msra.mxu0 %v4056
        %4560 = vmatprep.subr.bf16.mxu0 %v4065
        %4561 = vmatpush1.bf16.msra.mxu0 %v4064
        %4562 = vmatprep.subr.bf16.mxu0 %v4073
        %4563 = vmatpush1.bf16.msra.mxu0 %v4072
        %4564 = vmatprep.subr.bf16.mxu0 %v4081
        %4565 = vmatpush1.bf16.msra.mxu0 %v4080
        %4566 = vmatprep.subr.bf16.mxu0 %v4089
        %4567 = vmatpush1.bf16.msra.mxu0 %v4088
        %4568 = vmatprep.subr.bf16.mxu0 %v4097
        %4569 = vmatpush1.bf16.msra.mxu0 %v4096
        %4570 = vmatprep.subr.bf16.mxu0 %v4105
        %4571 = vmatpush1.bf16.msra.mxu0 %v4104
        %4572 = vmatprep.subr.bf16.mxu0 %v4113
        %4573 = vmatpush1.bf16.msra.mxu0 %v4112
        %4574 = vmatprep.subr.bf16.mxu0 %v4121
        %4575 = vmatpush1.bf16.msra.mxu0 %v4120
        %4576 = vmatprep.mubr.bf16.mxu0 %v3853
        %4577 = vmatmul.mubr.bf16.gmra.mrb[0].mxu0 %v3852
        %v4578 = vpop.f32.mrb[0].mxu0
        %v4579 = vadd.f32 0.0, %v4578
        %v4580 = vpop.f32.mrb[0].mxu0
        %v4581 = vadd.f32 0.0, %v4580
        %v4582 = vpop.f32.mrb[0].mxu0
        %v4583 = vadd.f32 0.0, %v4582
        %v4584 = vpop.f32.mrb[0].mxu0
        %v4585 = vadd.f32 0.0, %v4584
        %4586 = vmatprep.mubr.bf16.mxu0 %v3857
        %4587 = vmatmul.mubr.bf16.gmra.mrb[0].mxu0 %v3856
        %v4588 = vpop.f32.mrb[0].mxu0
        %v4589 = vadd.f32 0.0, %v4588
        %v4590 = vpop.f32.mrb[0].mxu0
        %v4591 = vadd.f32 0.0, %v4590
        %v4592 = vpop.f32.mrb[0].mxu0
        %v4593 = vadd.f32 0.0, %v4592
        %v4594 = vpop.f32.mrb[0].mxu0
        %v4595 = vadd.f32 0.0, %v4594
        %4596 = vmatprep.mubr.bf16.mxu0 %v3861
        %4597 = vmatmul.mubr.bf16.gmra.mrb[0].mxu0 %v3860
        %v4598 = vpop.f32.mrb[0].mxu0
        %v4599 = vadd.f32 0.0, %v4598
        %v4600 = vpop.f32.mrb[0].mxu0
        %v4601 = vadd.f32 0.0, %v4600
        %v4602 = vpop.f32.mrb[0].mxu0
        %v4603 = vadd.f32 0.0, %v4602
        %v4604 = vpop.f32.mrb[0].mxu0
        %v4605 = vadd.f32 0.0, %v4604
        %4606 = vmatprep.mubr.bf16.mxu0 %v3865
        %4607 = vmatmul.mubr.bf16.gmra.mrb[0].mxu0 %v3864
        %v4608 = vpop.f32.mrb[0].mxu0
        %v4609 = vadd.f32 0.0, %v4608
        %v4610 = vpop.f32.mrb[0].mxu0
        %v4611 = vadd.f32 0.0, %v4610
        %v4612 = vpop.f32.mrb[0].mxu0
        %v4613 = vadd.f32 0.0, %v4612
        %v4614 = vpop.f32.mrb[0].mxu0
        %v4615 = vadd.f32 0.0, %v4614
        %4616 = vdwg.mxu0
        %4617 = vmatprep.subr.bf16.mxu0 %v4129
        %4618 = vmatpush1.bf16.msra.mxu0 %v4128
        %4619 = vmatprep.subr.bf16.mxu0 %v4137
        %4620 = vmatpush1.bf16.msra.mxu0 %v4136
        %4621 = vmatprep.subr.bf16.mxu0 %v4145
        %4622 = vmatpush1.bf16.msra.mxu0 %v4144
        %4623 = vmatprep.subr.bf16.mxu0 %v4153
        %4624 = vmatpush1.bf16.msra.mxu0 %v4152
        %4625 = vmatprep.subr.bf16.mxu0 %v4161
        %4626 = vmatpush1.bf16.msra.mxu0 %v4160
        %4627 = vmatprep.subr.bf16.mxu0 %v4169
        %4628 = vmatpush1.bf16.msra.mxu0 %v4168
        %4629 = vmatprep.subr.bf16.mxu0 %v4177
        %4630 = vmatpush1.bf16.msra.mxu0 %v4176
        %4631 = vmatprep.subr.bf16.mxu0 %v4185
        %4632 = vmatpush1.bf16.msra.mxu0 %v4184
        %4633 = vmatprep.subr.bf16.mxu0 %v4193
        %4634 = vmatpush1.bf16.msra.mxu0 %v4192
        %4635 = vmatprep.subr.bf16.mxu0 %v4201
        %4636 = vmatpush1.bf16.msra.mxu0 %v4200
        %4637 = vmatprep.subr.bf16.mxu0 %v4209
        %4638 = vmatpush1.bf16.msra.mxu0 %v4208
        %4639 = vmatprep.subr.bf16.mxu0 %v4217
        %4640 = vmatpush1.bf16.msra.mxu0 %v4216
        %4641 = vmatprep.subr.bf16.mxu0 %v4225
        %4642 = vmatpush1.bf16.msra.mxu0 %v4224
        %4643 = vmatprep.subr.bf16.mxu0 %v4233
        %4644 = vmatpush1.bf16.msra.mxu0 %v4232
        %4645 = vmatprep.subr.bf16.mxu0 %v4241
        %4646 = vmatpush1.bf16.msra.mxu0 %v4240
        %4647 = vmatprep.subr.bf16.mxu0 %v4249
        %4648 = vmatpush1.bf16.msra.mxu0 %v4248
        %4649 = vmatprep.mubr.bf16.mxu0 %v3855
        %4650 = vmatmul.mubr.bf16.gmra.mrb[0].mxu0 %v3854
        %v4651 = vpop.f32.mrb[0].mxu0
        %v4652 = vadd.f32 %v4579, %v4651
        %v4653 = vpop.f32.mrb[0].mxu0
        %v4654 = vadd.f32 %v4581, %v4653
        %v4655 = vpop.f32.mrb[0].mxu0
        %v4656 = vadd.f32 %v4583, %v4655
        %v4657 = vpop.f32.mrb[0].mxu0
        %v4658 = vadd.f32 %v4585, %v4657
        %4659 = vmatprep.mubr.bf16.mxu0 %v3859
        %4660 = vmatmul.mubr.bf16.gmra.mrb[0].mxu0 %v3858
        %v4661 = vpop.f32.mrb[0].mxu0
        %v4662 = vadd.f32 %v4589, %v4661
        %v4663 = vpop.f32.mrb[0].mxu0
        %v4664 = vadd.f32 %v4591, %v4663
        %v4665 = vpop.f32.mrb[0].mxu0
        %v4666 = vadd.f32 %v4593, %v4665
        %v4667 = vpop.f32.mrb[0].mxu0
        %v4668 = vadd.f32 %v4595, %v4667
        %4669 = vmatprep.mubr.bf16.mxu0 %v3863
        %4670 = vmatmul.mubr.bf16.gmra.mrb[0].mxu0 %v3862
        %v4671 = vpop.f32.mrb[0].mxu0
        %v4672 = vadd.f32 %v4599, %v4671
        %v4673 = vpop.f32.mrb[0].mxu0
        %v4674 = vadd.f32 %v4601, %v4673
        %v4675 = vpop.f32.mrb[0].mxu0
        %v4676 = vadd.f32 %v4603, %v4675
        %v4677 = vpop.f32.mrb[0].mxu0
        %v4678 = vadd.f32 %v4605, %v4677
        %4679 = vmatprep.mubr.bf16.mxu0 %v3867
        %4680 = vmatmul.mubr.bf16.gmra.mrb[0].mxu0 %v3866
        %v4681 = vpop.f32.mrb[0].mxu0
        %v4682 = vadd.f32 %v4609, %v4681
        %v4683 = vpop.f32.mrb[0].mxu0
        %v4684 = vadd.f32 %v4611, %v4683
        %v4685 = vpop.f32.mrb[0].mxu0
        %v4686 = vadd.f32 %v4613, %v4685
        %v4687 = vpop.f32.mrb[0].mxu0
        %v4688 = vadd.f32 %v4615, %v4687
        %4689 = vdwg.mxu0
        %4690 = vmatprep.subr.bf16.mxu0 %v4003
        %4691 = vmatpush1.bf16.msra.mxu0 %v4002
        %4692 = vmatprep.subr.bf16.mxu0 %v4011
        %4693 = vmatpush1.bf16.msra.mxu0 %v4010
        %4694 = vmatprep.subr.bf16.mxu0 %v4019
        %4695 = vmatpush1.bf16.msra.mxu0 %v4018
        %4696 = vmatprep.subr.bf16.mxu0 %v4027
        %4697 = vmatpush1.bf16.msra.mxu0 %v4026
        %4698 = vmatprep.subr.bf16.mxu0 %v4035
        %4699 = vmatpush1.bf16.msra.mxu0 %v4034
        %4700 = vmatprep.subr.bf16.mxu0 %v4043
        %4701 = vmatpush1.bf16.msra.mxu0 %v4042
        %4702 = vmatprep.subr.bf16.mxu0 %v4051
        %4703 = vmatpush1.bf16.msra.mxu0 %v4050
        %4704 = vmatprep.subr.bf16.mxu0 %v4059
        %4705 = vmatpush1.bf16.msra.mxu0 %v4058
        %4706 = vmatprep.subr.bf16.mxu0 %v4067
        %4707 = vmatpush1.bf16.msra.mxu0 %v4066
        %4708 = vmatprep.subr.bf16.mxu0 %v4075
        %4709 = vmatpush1.bf16.msra.mxu0 %v4074
        %4710 = vmatprep.subr.bf16.mxu0 %v4083
        %4711 = vmatpush1.bf16.msra.mxu0 %v4082
        %4712 = vmatprep.subr.bf16.mxu0 %v4091
        %4713 = vmatpush1.bf16.msra.mxu0 %v4090
        %4714 = vmatprep.subr.bf16.mxu0 %v4099
        %4715 = vmatpush1.bf16.msra.mxu0 %v4098
        %4716 = vmatprep.subr.bf16.mxu0 %v4107
        %4717 = vmatpush1.bf16.msra.mxu0 %v4106
        %4718 = vmatprep.subr.bf16.mxu0 %v4115
        %4719 = vmatpush1.bf16.msra.mxu0 %v4114
        %4720 = vmatprep.subr.bf16.mxu0 %v4123
        %4721 = vmatpush1.bf16.msra.mxu0 %v4122
        %4722 = vmatprep.mubr.bf16.mxu0 %v3853
        %4723 = vmatmul.mubr.bf16.gmra.mrb[0].mxu0 %v3852
        %v4724 = vpop.f32.mrb[0].mxu0
        %v4725 = vadd.f32 0.0, %v4724
        %v4726 = vpop.f32.mrb[0].mxu0
        %v4727 = vadd.f32 0.0, %v4726
        %v4728 = vpop.f32.mrb[0].mxu0
        %v4729 = vadd.f32 0.0, %v4728
        %v4730 = vpop.f32.mrb[0].mxu0
        %v4731 = vadd.f32 0.0, %v4730
        %4732 = vmatprep.mubr.bf16.mxu0 %v3857
        %4733 = vmatmul.mubr.bf16.gmra.mrb[0].mxu0 %v3856
        %v4734 = vpop.f32.mrb[0].mxu0
        %v4735 = vadd.f32 0.0, %v4734
        %v4736 = vpop.f32.mrb[0].mxu0
        %v4737 = vadd.f32 0.0, %v4736
        %v4738 = vpop.f32.mrb[0].mxu0
        %v4739 = vadd.f32 0.0, %v4738
        %v4740 = vpop.f32.mrb[0].mxu0
        %v4741 = vadd.f32 0.0, %v4740
        %4742 = vmatprep.mubr.bf16.mxu0 %v3861
        %4743 = vmatmul.mubr.bf16.gmra.mrb[0].mxu0 %v3860
        %v4744 = vpop.f32.mrb[0].mxu0
        %v4745 = vadd.f32 0.0, %v4744
        %v4746 = vpop.f32.mrb[0].mxu0
        %v4747 = vadd.f32 0.0, %v4746
        %v4748 = vpop.f32.mrb[0].mxu0
        %v4749 = vadd.f32 0.0, %v4748
        %v4750 = vpop.f32.mrb[0].mxu0
        %v4751 = vadd.f32 0.0, %v4750
        %4752 = vmatprep.mubr.bf16.mxu0 %v3865
        %4753 = vmatmul.mubr.bf16.gmra.mrb[0].mxu0 %v3864
        %v4754 = vpop.f32.mrb[0].mxu0
        %v4755 = vadd.f32 0.0, %v4754
        %v4756 = vpop.f32.mrb[0].mxu0
        %v4757 = vadd.f32 0.0, %v4756
        %v4758 = vpop.f32.mrb[0].mxu0
        %v4759 = vadd.f32 0.0, %v4758
        %v4760 = vpop.f32.mrb[0].mxu0
        %v4761 = vadd.f32 0.0, %v4760
        %4762 = vdwg.mxu0
        %4763 = vmatprep.subr.bf16.mxu0 %v4131
        %4764 = vmatpush1.bf16.msra.mxu0 %v4130
        %4765 = vmatprep.subr.bf16.mxu0 %v4139
        %4766 = vmatpush1.bf16.msra.mxu0 %v4138
        %4767 = vmatprep.subr.bf16.mxu0 %v4147
        %4768 = vmatpush1.bf16.msra.mxu0 %v4146
        %4769 = vmatprep.subr.bf16.mxu0 %v4155
        %4770 = vmatpush1.bf16.msra.mxu0 %v4154
        %4771 = vmatprep.subr.bf16.mxu0 %v4163
        %4772 = vmatpush1.bf16.msra.mxu0 %v4162
        %4773 = vmatprep.subr.bf16.mxu0 %v4171
        %4774 = vmatpush1.bf16.msra.mxu0 %v4170
        %4775 = vmatprep.subr.bf16.mxu0 %v4179
        %4776 = vmatpush1.bf16.msra.mxu0 %v4178
        %4777 = vmatprep.subr.bf16.mxu0 %v4187
        %4778 = vmatpush1.bf16.msra.mxu0 %v4186
        %4779 = vmatprep.subr.bf16.mxu0 %v4195
        %4780 = vmatpush1.bf16.msra.mxu0 %v4194
        %4781 = vmatprep.subr.bf16.mxu0 %v4203
        %4782 = vmatpush1.bf16.msra.mxu0 %v4202
        %4783 = vmatprep.subr.bf16.mxu0 %v4211
        %4784 = vmatpush1.bf16.msra.mxu0 %v4210
        %4785 = vmatprep.subr.bf16.mxu0 %v4219
        %4786 = vmatpush1.bf16.msra.mxu0 %v4218
        %4787 = vmatprep.subr.bf16.mxu0 %v4227
        %4788 = vmatpush1.bf16.msra.mxu0 %v4226
        %4789 = vmatprep.subr.bf16.mxu0 %v4235
        %4790 = vmatpush1.bf16.msra.mxu0 %v4234
        %4791 = vmatprep.subr.bf16.mxu0 %v4243
        %4792 = vmatpush1.bf16.msra.mxu0 %v4242
        %4793 = vmatprep.subr.bf16.mxu0 %v4251
        %4794 = vmatpush1.bf16.msra.mxu0 %v4250
        %4795 = vmatprep.mubr.bf16.mxu0 %v3855
        %4796 = vmatmul.mubr.bf16.gmra.mrb[0].mxu0 %v3854
        %v4797 = vpop.f32.mrb[0].mxu0
        %v4798 = vadd.f32 %v4725, %v4797
        %v4799 = vpop.f32.mrb[0].mxu0
        %v4800 = vadd.f32 %v4727, %v4799
        %v4801 = vpop.f32.mrb[0].mxu0
        %v4802 = vadd.f32 %v4729, %v4801
        %v4803 = vpop.f32.mrb[0].mxu0
        %v4804 = vadd.f32 %v4731, %v4803
        %4805 = vmatprep.mubr.bf16.mxu0 %v3859
        %4806 = vmatmul.mubr.bf16.gmra.mrb[0].mxu0 %v3858
        %v4807 = vpop.f32.mrb[0].mxu0
        %v4808 = vadd.f32 %v4735, %v4807
        %v4809 = vpop.f32.mrb[0].mxu0
        %v4810 = vadd.f32 %v4737, %v4809
        %v4811 = vpop.f32.mrb[0].mxu0
        %v4812 = vadd.f32 %v4739, %v4811
        %v4813 = vpop.f32.mrb[0].mxu0
        %v4814 = vadd.f32 %v4741, %v4813
        %4815 = vmatprep.mubr.bf16.mxu0 %v3863
        %4816 = vmatmul.mubr.bf16.gmra.mrb[0].mxu0 %v3862
        %v4817 = vpop.f32.mrb[0].mxu0
        %v4818 = vadd.f32 %v4745, %v4817
        %v4819 = vpop.f32.mrb[0].mxu0
        %v4820 = vadd.f32 %v4747, %v4819
        %v4821 = vpop.f32.mrb[0].mxu0
        %v4822 = vadd.f32 %v4749, %v4821
        %v4823 = vpop.f32.mrb[0].mxu0
        %v4824 = vadd.f32 %v4751, %v4823
        %4825 = vmatprep.mubr.bf16.mxu0 %v3867
        %4826 = vmatmul.mubr.bf16.gmra.mrb[0].mxu0 %v3866
        %v4827 = vpop.f32.mrb[0].mxu0
        %v4828 = vadd.f32 %v4755, %v4827
        %v4829 = vpop.f32.mrb[0].mxu0
        %v4830 = vadd.f32 %v4757, %v4829
        %v4831 = vpop.f32.mrb[0].mxu0
        %v4832 = vadd.f32 %v4759, %v4831
        %v4833 = vpop.f32.mrb[0].mxu0
        %v4834 = vadd.f32 %v4761, %v4833
        %4835 = vdwg.mxu0
        %p4836 = scmp.eq.s32.totalorder %s30, 0
        // Predicated region
        $region93: #{tpu_custom_call.1} parent=55 // pred_check
          %p4837 = pneg %p4836
        $region94: #{tpu_custom_call.1} parent=55 // pred_check_branch
          %4839 = sbr.rel (%p4837) target = $region96
        $region95: #{tpu_custom_call.1} parent=55 // pred_region
          %4840 = vst [vmem:[#allocation2] sm:$0xff] %v4360
          %4841 = vst [vmem:[#allocation2 + $0x8] sm:$0xff] %v4362
          %4842 = vst [vmem:[#allocation2 + $0x10] sm:$0xff] %v4506
          %4843 = vst [vmem:[#allocation2 + $0x18] sm:$0xff] %v4508
          %4844 = vst [vmem:[#allocation2 + $0x20] sm:$0xff] %v4652
          %4845 = vst [vmem:[#allocation2 + $0x28] sm:$0xff] %v4654
          %4846 = vst [vmem:[#allocation2 + $0x30] sm:$0xff] %v4798
          %4847 = vst [vmem:[#allocation2 + $0x38] sm:$0xff] %v4800
          %4848 = vst [vmem:[#allocation2 + $0x40] sm:$0xff] %v4364
          %4849 = vst [vmem:[#allocation2 + $0x48] sm:$0xff] %v4366
          %4850 = vst [vmem:[#allocation2 + $0x50] sm:$0xff] %v4510
          %4851 = vst [vmem:[#allocation2 + $0x58] sm:$0xff] %v4512
          %4852 = vst [vmem:[#allocation2 + $0x60] sm:$0xff] %v4656
          %4853 = vst [vmem:[#allocation2 + $0x68] sm:$0xff] %v4658
          %4854 = vst [vmem:[#allocation2 + $0x70] sm:$0xff] %v4802
          %4855 = vst [vmem:[#allocation2 + $0x78] sm:$0xff] %v4804
          %4856 = vst [vmem:[#allocation2 + $0x80] sm:$0xff] %v4370
          %4857 = vst [vmem:[#allocation2 + $0x88] sm:$0xff] %v4372
          %4858 = vst [vmem:[#allocation2 + $0x90] sm:$0xff] %v4516
          %4859 = vst [vmem:[#allocation2 + $0x98] sm:$0xff] %v4518
          %4860 = vst [vmem:[#allocation2 + $0xa0] sm:$0xff] %v4662
          %4861 = vst [vmem:[#allocation2 + $0xa8] sm:$0xff] %v4664
          %4862 = vst [vmem:[#allocation2 + $0xb0] sm:$0xff] %v4808
          %4863 = vst [vmem:[#allocation2 + $0xb8] sm:$0xff] %v4810
          %4864 = vst [vmem:[#allocation2 + $0xc0] sm:$0xff] %v4374
          %4865 = vst [vmem:[#allocation2 + $0xc8] sm:$0xff] %v4376
          %4866 = vst [vmem:[#allocation2 + $0xd0] sm:$0xff] %v4520
          %4867 = vst [vmem:[#allocation2 + $0xd8] sm:$0xff] %v4522
          %4868 = vst [vmem:[#allocation2 + $0xe0] sm:$0xff] %v4666
          %4869 = vst [vmem:[#allocation2 + $0xe8] sm:$0xff] %v4668
          %4870 = vst [vmem:[#allocation2 + $0xf0] sm:$0xff] %v4812
          %4871 = vst [vmem:[#allocation2 + $0xf8] sm:$0xff] %v4814
          %4872 = vst [vmem:[#allocation2 + $0x100] sm:$0xff] %v4380
          %4873 = vst [vmem:[#allocation2 + $0x108] sm:$0xff] %v4382
          %4874 = vst [vmem:[#allocation2 + $0x110] sm:$0xff] %v4526
          %4875 = vst [vmem:[#allocation2 + $0x118] sm:$0xff] %v4528
          %4876 = vst [vmem:[#allocation2 + $0x120] sm:$0xff] %v4672
          %4877 = vst [vmem:[#allocation2 + $0x128] sm:$0xff] %v4674
          %4878 = vst [vmem:[#allocation2 + $0x130] sm:$0xff] %v4818
          %4879 = vst [vmem:[#allocation2 + $0x138] sm:$0xff] %v4820
          %4880 = vst [vmem:[#allocation2 + $0x140] sm:$0xff] %v4384
          %4881 = vst [vmem:[#allocation2 + $0x148] sm:$0xff] %v4386
          %4882 = vst [vmem:[#allocation2 + $0x150] sm:$0xff] %v4530
          %4883 = vst [vmem:[#allocation2 + $0x158] sm:$0xff] %v4532
          %4884 = vst [vmem:[#allocation2 + $0x160] sm:$0xff] %v4676
          %4885 = vst [vmem:[#allocation2 + $0x168] sm:$0xff] %v4678
          %4886 = vst [vmem:[#allocation2 + $0x170] sm:$0xff] %v4822
          %4887 = vst [vmem:[#allocation2 + $0x178] sm:$0xff] %v4824
          %4888 = vst [vmem:[#allocation2 + $0x180] sm:$0xff] %v4390
          %4889 = vst [vmem:[#allocation2 + $0x188] sm:$0xff] %v4392
          %4890 = vst [vmem:[#allocation2 + $0x190] sm:$0xff] %v4536
          %4891 = vst [vmem:[#allocation2 + $0x198] sm:$0xff] %v4538
          %4892 = vst [vmem:[#allocation2 + $0x1a0] sm:$0xff] %v4682
          %4893 = vst [vmem:[#allocation2 + $0x1a8] sm:$0xff] %v4684
          %4894 = vst [vmem:[#allocation2 + $0x1b0] sm:$0xff] %v4828
          %4895 = vst [vmem:[#allocation2 + $0x1b8] sm:$0xff] %v4830
          %4896 = vst [vmem:[#allocation2 + $0x1c0] sm:$0xff] %v4394
          %4897 = vst [vmem:[#allocation2 + $0x1c8] sm:$0xff] %v4396
          %4898 = vst [vmem:[#allocation2 + $0x1d0] sm:$0xff] %v4540
          %4899 = vst [vmem:[#allocation2 + $0x1d8] sm:$0xff] %v4542
          %4900 = vst [vmem:[#allocation2 + $0x1e0] sm:$0xff] %v4686
          %4901 = vst [vmem:[#allocation2 + $0x1e8] sm:$0xff] %v4688
          %4902 = vst [vmem:[#allocation2 + $0x1f0] sm:$0xff] %v4832
          %4903 = vst [vmem:[#allocation2 + $0x1f8] sm:$0xff] %v4834
        $region96: #{tpu_custom_call.1} parent=55 // pred_fallthru
          _
        %p4904 = scmp.gt.s32.totalorder %s30, 0
        // Predicated region
        $region97: #{tpu_custom_call.1} parent=55 // pred_check
          %p4905 = pneg %p4904
        $region98: #{tpu_custom_call.1} parent=55 // pred_check_branch
          %4907 = sbr.rel (%p4905) target = $region100
        $region99: #{tpu_custom_call.1} parent=55 // pred_region
          %v4908 = vld [vmem:[#allocation2] sm:$0xff]
          %v4909 = vld [vmem:[#allocation2 + $0x8] sm:$0xff]
          %v4910 = vld [vmem:[#allocation2 + $0x10] sm:$0xff]
          %v4911 = vld [vmem:[#allocation2 + $0x18] sm:$0xff]
          %v4912 = vld [vmem:[#allocation2 + $0x20] sm:$0xff]
          %v4913 = vld [vmem:[#allocation2 + $0x28] sm:$0xff]
          %v4914 = vld [vmem:[#allocation2 + $0x30] sm:$0xff]
          %v4915 = vld [vmem:[#allocation2 + $0x38] sm:$0xff]
          %v4916 = vld [vmem:[#allocation2 + $0x40] sm:$0xff]
          %v4917 = vld [vmem:[#allocation2 + $0x48] sm:$0xff]
          %v4918 = vld [vmem:[#allocation2 + $0x50] sm:$0xff]
          %v4919 = vld [vmem:[#allocation2 + $0x58] sm:$0xff]
          %v4920 = vld [vmem:[#allocation2 + $0x60] sm:$0xff]
          %v4921 = vld [vmem:[#allocation2 + $0x68] sm:$0xff]
          %v4922 = vld [vmem:[#allocation2 + $0x70] sm:$0xff]
          %v4923 = vld [vmem:[#allocation2 + $0x78] sm:$0xff]
          %v4924 = vld [vmem:[#allocation2 + $0x80] sm:$0xff]
          %v4925 = vld [vmem:[#allocation2 + $0x88] sm:$0xff]
          %v4926 = vld [vmem:[#allocation2 + $0x90] sm:$0xff]
          %v4927 = vld [vmem:[#allocation2 + $0x98] sm:$0xff]
          %v4928 = vld [vmem:[#allocation2 + $0xa0] sm:$0xff]
          %v4929 = vld [vmem:[#allocation2 + $0xa8] sm:$0xff]
          %v4930 = vld [vmem:[#allocation2 + $0xb0] sm:$0xff]
          %v4931 = vld [vmem:[#allocation2 + $0xb8] sm:$0xff]
          %v4932 = vld [vmem:[#allocation2 + $0xc0] sm:$0xff]
          %v4933 = vld [vmem:[#allocation2 + $0xc8] sm:$0xff]
          %v4934 = vld [vmem:[#allocation2 + $0xd0] sm:$0xff]
          %v4935 = vld [vmem:[#allocation2 + $0xd8] sm:$0xff]
          %v4936 = vld [vmem:[#allocation2 + $0xe0] sm:$0xff]
          %v4937 = vld [vmem:[#allocation2 + $0xe8] sm:$0xff]
          %v4938 = vld [vmem:[#allocation2 + $0xf0] sm:$0xff]
          %v4939 = vld [vmem:[#allocation2 + $0xf8] sm:$0xff]
          %v4940 = vld [vmem:[#allocation2 + $0x100] sm:$0xff]
          %v4941 = vld [vmem:[#allocation2 + $0x108] sm:$0xff]
          %v4942 = vld [vmem:[#allocation2 + $0x110] sm:$0xff]
          %v4943 = vld [vmem:[#allocation2 + $0x118] sm:$0xff]
          %v4944 = vld [vmem:[#allocation2 + $0x120] sm:$0xff]
          %v4945 = vld [vmem:[#allocation2 + $0x128] sm:$0xff]
          %v4946 = vld [vmem:[#allocation2 + $0x130] sm:$0xff]
          %v4947 = vld [vmem:[#allocation2 + $0x138] sm:$0xff]
          %v4948 = vld [vmem:[#allocation2 + $0x140] sm:$0xff]
          %v4949 = vld [vmem:[#allocation2 + $0x148] sm:$0xff]
          %v4950 = vld [vmem:[#allocation2 + $0x150] sm:$0xff]
          %v4951 = vld [vmem:[#allocation2 + $0x158] sm:$0xff]
          %v4952 = vld [vmem:[#allocation2 + $0x160] sm:$0xff]
          %v4953 = vld [vmem:[#allocation2 + $0x168] sm:$0xff]
          %v4954 = vld [vmem:[#allocation2 + $0x170] sm:$0xff]
          %v4955 = vld [vmem:[#allocation2 + $0x178] sm:$0xff]
          %v4956 = vld [vmem:[#allocation2 + $0x180] sm:$0xff]
          %v4957 = vld [vmem:[#allocation2 + $0x188] sm:$0xff]
          %v4958 = vld [vmem:[#allocation2 + $0x190] sm:$0xff]
          %v4959 = vld [vmem:[#allocation2 + $0x198] sm:$0xff]
          %v4960 = vld [vmem:[#allocation2 + $0x1a0] sm:$0xff]
          %v4961 = vld [vmem:[#allocation2 + $0x1a8] sm:$0xff]
          %v4962 = vld [vmem:[#allocation2 + $0x1b0] sm:$0xff]
          %v4963 = vld [vmem:[#allocation2 + $0x1b8] sm:$0xff]
          %v4964 = vld [vmem:[#allocation2 + $0x1c0] sm:$0xff]
          %v4965 = vld [vmem:[#allocation2 + $0x1c8] sm:$0xff]
          %v4966 = vld [vmem:[#allocation2 + $0x1d0] sm:$0xff]
          %v4967 = vld [vmem:[#allocation2 + $0x1d8] sm:$0xff]
          %v4968 = vld [vmem:[#allocation2 + $0x1e0] sm:$0xff]
          %v4969 = vld [vmem:[#allocation2 + $0x1e8] sm:$0xff]
          %v4970 = vld [vmem:[#allocation2 + $0x1f0] sm:$0xff]
          %v4971 = vld [vmem:[#allocation2 + $0x1f8] sm:$0xff]
          %v4972 = vadd.f32 %v4908, %v4360
          %v4973 = vadd.f32 %v4909, %v4362
          %v4974 = vadd.f32 %v4910, %v4506
          %v4975 = vadd.f32 %v4911, %v4508
          %v4976 = vadd.f32 %v4912, %v4652
          %v4977 = vadd.f32 %v4913, %v4654
          %v4978 = vadd.f32 %v4914, %v4798
          %v4979 = vadd.f32 %v4915, %v4800
          %v4980 = vadd.f32 %v4916, %v4364
          %v4981 = vadd.f32 %v4917, %v4366
          %v4982 = vadd.f32 %v4918, %v4510
          %v4983 = vadd.f32 %v4919, %v4512
          %v4984 = vadd.f32 %v4920, %v4656
          %v4985 = vadd.f32 %v4921, %v4658
          %v4986 = vadd.f32 %v4922, %v4802
          %v4987 = vadd.f32 %v4923, %v4804
          %v4988 = vadd.f32 %v4924, %v4370
          %v4989 = vadd.f32 %v4925, %v4372
          %v4990 = vadd.f32 %v4926, %v4516
          %v4991 = vadd.f32 %v4927, %v4518
          %v4992 = vadd.f32 %v4928, %v4662
          %v4993 = vadd.f32 %v4929, %v4664
          %v4994 = vadd.f32 %v4930, %v4808
          %v4995 = vadd.f32 %v4931, %v4810
          %v4996 = vadd.f32 %v4932, %v4374
          %v4997 = vadd.f32 %v4933, %v4376
          %v4998 = vadd.f32 %v4934, %v4520
          %v4999 = vadd.f32 %v4935, %v4522
          %v5000 = vadd.f32 %v4936, %v4666
          %v5001 = vadd.f32 %v4937, %v4668
          %v5002 = vadd.f32 %v4938, %v4812
          %v5003 = vadd.f32 %v4939, %v4814
          %v5004 = vadd.f32 %v4940, %v4380
          %v5005 = vadd.f32 %v4941, %v4382
          %v5006 = vadd.f32 %v4942, %v4526
          %v5007 = vadd.f32 %v4943, %v4528
          %v5008 = vadd.f32 %v4944, %v4672
          %v5009 = vadd.f32 %v4945, %v4674
          %v5010 = vadd.f32 %v4946, %v4818
          %v5011 = vadd.f32 %v4947, %v4820
          %v5012 = vadd.f32 %v4948, %v4384
          %v5013 = vadd.f32 %v4949, %v4386
          %v5014 = vadd.f32 %v4950, %v4530
          %v5015 = vadd.f32 %v4951, %v4532
          %v5016 = vadd.f32 %v4952, %v4676
          %v5017 = vadd.f32 %v4953, %v4678
          %v5018 = vadd.f32 %v4954, %v4822
          %v5019 = vadd.f32 %v4955, %v4824
          %v5020 = vadd.f32 %v4956, %v4390
          %v5021 = vadd.f32 %v4957, %v4392
          %v5022 = vadd.f32 %v4958, %v4536
          %v5023 = vadd.f32 %v4959, %v4538
          %v5024 = vadd.f32 %v4960, %v4682
          %v5025 = vadd.f32 %v4961, %v4684
          %v5026 = vadd.f32 %v4962, %v4828
          %v5027 = vadd.f32 %v4963, %v4830
          %v5028 = vadd.f32 %v4964, %v4394
          %v5029 = vadd.f32 %v4965, %v4396
          %v5030 = vadd.f32 %v4966, %v4540
          %v5031 = vadd.f32 %v4967, %v4542
          %v5032 = vadd.f32 %v4968, %v4686
          %v5033 = vadd.f32 %v4969, %v4688
          %v5034 = vadd.f32 %v4970, %v4832
          %v5035 = vadd.f32 %v4971, %v4834
          %5036 = vst [vmem:[#allocation2] sm:$0xff] %v4972
          %5037 = vst [vmem:[#allocation2 + $0x8] sm:$0xff] %v4973
          %5038 = vst [vmem:[#allocation2 + $0x10] sm:$0xff] %v4974
          %5039 = vst [vmem:[#allocation2 + $0x18] sm:$0xff] %v4975
          %5040 = vst [vmem:[#allocation2 + $0x20] sm:$0xff] %v4976
          %5041 = vst [vmem:[#allocation2 + $0x28] sm:$0xff] %v4977
          %5042 = vst [vmem:[#allocation2 + $0x30] sm:$0xff] %v4978
          %5043 = vst [vmem:[#allocation2 + $0x38] sm:$0xff] %v4979
          %5044 = vst [vmem:[#allocation2 + $0x40] sm:$0xff] %v4980
          %5045 = vst [vmem:[#allocation2 + $0x48] sm:$0xff] %v4981
          %5046 = vst [vmem:[#allocation2 + $0x50] sm:$0xff] %v4982
          %5047 = vst [vmem:[#allocation2 + $0x58] sm:$0xff] %v4983
          %5048 = vst [vmem:[#allocation2 + $0x60] sm:$0xff] %v4984
          %5049 = vst [vmem:[#allocation2 + $0x68] sm:$0xff] %v4985
          %5050 = vst [vmem:[#allocation2 + $0x70] sm:$0xff] %v4986
          %5051 = vst [vmem:[#allocation2 + $0x78] sm:$0xff] %v4987
          %5052 = vst [vmem:[#allocation2 + $0x80] sm:$0xff] %v4988
          %5053 = vst [vmem:[#allocation2 + $0x88] sm:$0xff] %v4989
          %5054 = vst [vmem:[#allocation2 + $0x90] sm:$0xff] %v4990
          %5055 = vst [vmem:[#allocation2 + $0x98] sm:$0xff] %v4991
          %5056 = vst [vmem:[#allocation2 + $0xa0] sm:$0xff] %v4992
          %5057 = vst [vmem:[#allocation2 + $0xa8] sm:$0xff] %v4993
          %5058 = vst [vmem:[#allocation2 + $0xb0] sm:$0xff] %v4994
          %5059 = vst [vmem:[#allocation2 + $0xb8] sm:$0xff] %v4995
          %5060 = vst [vmem:[#allocation2 + $0xc0] sm:$0xff] %v4996
          %5061 = vst [vmem:[#allocation2 + $0xc8] sm:$0xff] %v4997
          %5062 = vst [vmem:[#allocation2 + $0xd0] sm:$0xff] %v4998
          %5063 = vst [vmem:[#allocation2 + $0xd8] sm:$0xff] %v4999
          %5064 = vst [vmem:[#allocation2 + $0xe0] sm:$0xff] %v5000
          %5065 = vst [vmem:[#allocation2 + $0xe8] sm:$0xff] %v5001
          %5066 = vst [vmem:[#allocation2 + $0xf0] sm:$0xff] %v5002
          %5067 = vst [vmem:[#allocation2 + $0xf8] sm:$0xff] %v5003
          %5068 = vst [vmem:[#allocation2 + $0x100] sm:$0xff] %v5004
          %5069 = vst [vmem:[#allocation2 + $0x108] sm:$0xff] %v5005
          %5070 = vst [vmem:[#allocation2 + $0x110] sm:$0xff] %v5006
          %5071 = vst [vmem:[#allocation2 + $0x118] sm:$0xff] %v5007
          %5072 = vst [vmem:[#allocation2 + $0x120] sm:$0xff] %v5008
          %5073 = vst [vmem:[#allocation2 + $0x128] sm:$0xff] %v5009
          %5074 = vst [vmem:[#allocation2 + $0x130] sm:$0xff] %v5010
          %5075 = vst [vmem:[#allocation2 + $0x138] sm:$0xff] %v5011
          %5076 = vst [vmem:[#allocation2 + $0x140] sm:$0xff] %v5012
          %5077 = vst [vmem:[#allocation2 + $0x148] sm:$0xff] %v5013
          %5078 = vst [vmem:[#allocation2 + $0x150] sm:$0xff] %v5014
          %5079 = vst [vmem:[#allocation2 + $0x158] sm:$0xff] %v5015
          %5080 = vst [vmem:[#allocation2 + $0x160] sm:$0xff] %v5016
          %5081 = vst [vmem:[#allocation2 + $0x168] sm:$0xff] %v5017
          %5082 = vst [vmem:[#allocation2 + $0x170] sm:$0xff] %v5018
          %5083 = vst [vmem:[#allocation2 + $0x178] sm:$0xff] %v5019
          %5084 = vst [vmem:[#allocation2 + $0x180] sm:$0xff] %v5020
          %5085 = vst [vmem:[#allocation2 + $0x188] sm:$0xff] %v5021
          %5086 = vst [vmem:[#allocation2 + $0x190] sm:$0xff] %v5022
          %5087 = vst [vmem:[#allocation2 + $0x198] sm:$0xff] %v5023
          %5088 = vst [vmem:[#allocation2 + $0x1a0] sm:$0xff] %v5024
          %5089 = vst [vmem:[#allocation2 + $0x1a8] sm:$0xff] %v5025
          %5090 = vst [vmem:[#allocation2 + $0x1b0] sm:$0xff] %v5026
          %5091 = vst [vmem:[#allocation2 + $0x1b8] sm:$0xff] %v5027
          %5092 = vst [vmem:[#allocation2 + $0x1c0] sm:$0xff] %v5028
          %5093 = vst [vmem:[#allocation2 + $0x1c8] sm:$0xff] %v5029
          %5094 = vst [vmem:[#allocation2 + $0x1d0] sm:$0xff] %v5030
          %5095 = vst [vmem:[#allocation2 + $0x1d8] sm:$0xff] %v5031
          %5096 = vst [vmem:[#allocation2 + $0x1e0] sm:$0xff] %v5032
          %5097 = vst [vmem:[#allocation2 + $0x1e8] sm:$0xff] %v5033
          %5098 = vst [vmem:[#allocation2 + $0x1f0] sm:$0xff] %v5034
          %5099 = vst [vmem:[#allocation2 + $0x1f8] sm:$0xff] %v5035
        $region100: #{tpu_custom_call.1} parent=55 // pred_fallthru
          _
        %p5100 = scmp.eq.s32.totalorder %s30, 1
        // Predicated region
        $region101: #{tpu_custom_call.1} parent=55 // pred_check
          %p5101 = pneg %p5100
        $region102: #{tpu_custom_call.1} parent=55 // pred_check_branch
          %5103 = sbr.rel (%p5101) target = $region104
        $region103: #{tpu_custom_call.1} parent=55 // pred_region
          %v5104 = vld [vmem:[#allocation2] sm:$0xff]
          %v5105 = vld [vmem:[#allocation2 + $0x8] sm:$0xff]
          %v5106 = vld [vmem:[#allocation2 + $0x10] sm:$0xff]
          %v5107 = vld [vmem:[#allocation2 + $0x18] sm:$0xff]
          %v5108 = vld [vmem:[#allocation2 + $0x20] sm:$0xff]
          %v5109 = vld [vmem:[#allocation2 + $0x28] sm:$0xff]
          %v5110 = vld [vmem:[#allocation2 + $0x30] sm:$0xff]
          %v5111 = vld [vmem:[#allocation2 + $0x38] sm:$0xff]
          %v5112 = vld [vmem:[#allocation2 + $0x40] sm:$0xff]
          %v5113 = vld [vmem:[#allocation2 + $0x48] sm:$0xff]
          %v5114 = vld [vmem:[#allocation2 + $0x50] sm:$0xff]
          %v5115 = vld [vmem:[#allocation2 + $0x58] sm:$0xff]
          %v5116 = vld [vmem:[#allocation2 + $0x60] sm:$0xff]
          %v5117 = vld [vmem:[#allocation2 + $0x68] sm:$0xff]
          %v5118 = vld [vmem:[#allocation2 + $0x70] sm:$0xff]
          %v5119 = vld [vmem:[#allocation2 + $0x78] sm:$0xff]
          %v5120 = vld [vmem:[#allocation2 + $0x80] sm:$0xff]
          %v5121 = vld [vmem:[#allocation2 + $0x88] sm:$0xff]
          %v5122 = vld [vmem:[#allocation2 + $0x90] sm:$0xff]
          %v5123 = vld [vmem:[#allocation2 + $0x98] sm:$0xff]
          %v5124 = vld [vmem:[#allocation2 + $0xa0] sm:$0xff]
          %v5125 = vld [vmem:[#allocation2 + $0xa8] sm:$0xff]
          %v5126 = vld [vmem:[#allocation2 + $0xb0] sm:$0xff]
          %v5127 = vld [vmem:[#allocation2 + $0xb8] sm:$0xff]
          %v5128 = vld [vmem:[#allocation2 + $0xc0] sm:$0xff]
          %v5129 = vld [vmem:[#allocation2 + $0xc8] sm:$0xff]
          %v5130 = vld [vmem:[#allocation2 + $0xd0] sm:$0xff]
          %v5131 = vld [vmem:[#allocation2 + $0xd8] sm:$0xff]
          %v5132 = vld [vmem:[#allocation2 + $0xe0] sm:$0xff]
          %v5133 = vld [vmem:[#allocation2 + $0xe8] sm:$0xff]
          %v5134 = vld [vmem:[#allocation2 + $0xf0] sm:$0xff]
          %v5135 = vld [vmem:[#allocation2 + $0xf8] sm:$0xff]
          %v5136 = vld [vmem:[#allocation2 + $0x100] sm:$0xff]
          %v5137 = vld [vmem:[#allocation2 + $0x108] sm:$0xff]
          %v5138 = vld [vmem:[#allocation2 + $0x110] sm:$0xff]
          %v5139 = vld [vmem:[#allocation2 + $0x118] sm:$0xff]
          %v5140 = vld [vmem:[#allocation2 + $0x120] sm:$0xff]
          %v5141 = vld [vmem:[#allocation2 + $0x128] sm:$0xff]
          %v5142 = vld [vmem:[#allocation2 + $0x130] sm:$0xff]
          %v5143 = vld [vmem:[#allocation2 + $0x138] sm:$0xff]
          %v5144 = vld [vmem:[#allocation2 + $0x140] sm:$0xff]
          %v5145 = vld [vmem:[#allocation2 + $0x148] sm:$0xff]
          %v5146 = vld [vmem:[#allocation2 + $0x150] sm:$0xff]
          %v5147 = vld [vmem:[#allocation2 + $0x158] sm:$0xff]
          %v5148 = vld [vmem:[#allocation2 + $0x160] sm:$0xff]
          %v5149 = vld [vmem:[#allocation2 + $0x168] sm:$0xff]
          %v5150 = vld [vmem:[#allocation2 + $0x170] sm:$0xff]
          %v5151 = vld [vmem:[#allocation2 + $0x178] sm:$0xff]
          %v5152 = vld [vmem:[#allocation2 + $0x180] sm:$0xff]
          %v5153 = vld [vmem:[#allocation2 + $0x188] sm:$0xff]
          %v5154 = vld [vmem:[#allocation2 + $0x190] sm:$0xff]
          %v5155 = vld [vmem:[#allocation2 + $0x198] sm:$0xff]
          %v5156 = vld [vmem:[#allocation2 + $0x1a0] sm:$0xff]
          %v5157 = vld [vmem:[#allocation2 + $0x1a8] sm:$0xff]
          %v5158 = vld [vmem:[#allocation2 + $0x1b0] sm:$0xff]
          %v5159 = vld [vmem:[#allocation2 + $0x1b8] sm:$0xff]
          %v5160 = vld [vmem:[#allocation2 + $0x1c0] sm:$0xff]
          %v5161 = vld [vmem:[#allocation2 + $0x1c8] sm:$0xff]
          %v5162 = vld [vmem:[#allocation2 + $0x1d0] sm:$0xff]
          %v5163 = vld [vmem:[#allocation2 + $0x1d8] sm:$0xff]
          %v5164 = vld [vmem:[#allocation2 + $0x1e0] sm:$0xff]
          %v5165 = vld [vmem:[#allocation2 + $0x1e8] sm:$0xff]
          %v5166 = vld [vmem:[#allocation2 + $0x1f0] sm:$0xff]
          %v5167 = vld [vmem:[#allocation2 + $0x1f8] sm:$0xff]
          %v5168 = vld [vmem:[#allocation12] sm:$0xff]
          %v5170 = vlaneseq
          %v5171 = vshrl.u32 %v5170, 7
          %v5172 = vsub.s32 0, %v5171
          %v5173 = vrot.slane %v5168, %v5172
          %v5174 = vlaneseq
          %v5175 = vshrl.u32 %v5174, 7
          %v5176 = vsub.s32 1, %v5175
          %v5177 = vrot.slane %v5168, %v5176
          %v5178 = vlaneseq
          %v5179 = vshrl.u32 %v5178, 7
          %v5180 = vsub.s32 2, %v5179
          %v5181 = vrot.slane %v5168, %v5180
          %v5182 = vlaneseq
          %v5183 = vshrl.u32 %v5182, 7
          %v5184 = vsub.s32 3, %v5183
          %v5185 = vrot.slane %v5168, %v5184
          %v5186 = vlaneseq
          %v5187 = vshrl.u32 %v5186, 7
          %v5188 = vsub.s32 4, %v5187
          %v5189 = vrot.slane %v5168, %v5188
          %v5190 = vlaneseq
          %v5191 = vshrl.u32 %v5190, 7
          %v5192 = vsub.s32 5, %v5191
          %v5193 = vrot.slane %v5168, %v5192
          %v5194 = vlaneseq
          %v5195 = vshrl.u32 %v5194, 7
          %v5196 = vsub.s32 6, %v5195
          %v5197 = vrot.slane %v5168, %v5196
          %v5198 = vlaneseq
          %v5199 = vshrl.u32 %v5198, 7
          %v5200 = vsub.s32 7, %v5199
          %v5201 = vrot.slane %v5168, %v5200
          %v5210 = vmul.f32 %v5104, %v5173
          %v5211 = vmul.f32 %v5105, %v5177
          %v5212 = vmul.f32 %v5106, %v5181
          %v5213 = vmul.f32 %v5107, %v5185
          %v5214 = vmul.f32 %v5108, %v5189
          %v5215 = vmul.f32 %v5109, %v5193
          %v5216 = vmul.f32 %v5110, %v5197
          %v5217 = vmul.f32 %v5111, %v5201
          %v5218 = vmul.f32 %v5112, %v5173
          %v5219 = vmul.f32 %v5113, %v5177
          %v5220 = vmul.f32 %v5114, %v5181
          %v5221 = vmul.f32 %v5115, %v5185
          %v5222 = vmul.f32 %v5116, %v5189
          %v5223 = vmul.f32 %v5117, %v5193
          %v5224 = vmul.f32 %v5118, %v5197
          %v5225 = vmul.f32 %v5119, %v5201
          %v5226 = vmul.f32 %v5120, %v5173
          %v5227 = vmul.f32 %v5121, %v5177
          %v5228 = vmul.f32 %v5122, %v5181
          %v5229 = vmul.f32 %v5123, %v5185
          %v5230 = vmul.f32 %v5124, %v5189
          %v5231 = vmul.f32 %v5125, %v5193
          %v5232 = vmul.f32 %v5126, %v5197
          %v5233 = vmul.f32 %v5127, %v5201
          %v5234 = vmul.f32 %v5128, %v5173
          %v5235 = vmul.f32 %v5129, %v5177
          %v5236 = vmul.f32 %v5130, %v5181
          %v5237 = vmul.f32 %v5131, %v5185
          %v5238 = vmul.f32 %v5132, %v5189
          %v5239 = vmul.f32 %v5133, %v5193
          %v5240 = vmul.f32 %v5134, %v5197
          %v5241 = vmul.f32 %v5135, %v5201
          %v5242 = vmul.f32 %v5136, %v5173
          %v5243 = vmul.f32 %v5137, %v5177
          %v5244 = vmul.f32 %v5138, %v5181
          %v5245 = vmul.f32 %v5139, %v5185
          %v5246 = vmul.f32 %v5140, %v5189
          %v5247 = vmul.f32 %v5141, %v5193
          %v5248 = vmul.f32 %v5142, %v5197
          %v5249 = vmul.f32 %v5143, %v5201
          %v5250 = vmul.f32 %v5144, %v5173
          %v5251 = vmul.f32 %v5145, %v5177
          %v5252 = vmul.f32 %v5146, %v5181
          %v5253 = vmul.f32 %v5147, %v5185
          %v5254 = vmul.f32 %v5148, %v5189
          %v5255 = vmul.f32 %v5149, %v5193
          %v5256 = vmul.f32 %v5150, %v5197
          %v5257 = vmul.f32 %v5151, %v5201
          %v5258 = vmul.f32 %v5152, %v5173
          %v5259 = vmul.f32 %v5153, %v5177
          %v5260 = vmul.f32 %v5154, %v5181
          %v5261 = vmul.f32 %v5155, %v5185
          %v5262 = vmul.f32 %v5156, %v5189
          %v5263 = vmul.f32 %v5157, %v5193
          %v5264 = vmul.f32 %v5158, %v5197
          %v5265 = vmul.f32 %v5159, %v5201
          %v5266 = vmul.f32 %v5160, %v5173
          %v5267 = vmul.f32 %v5161, %v5177
          %v5268 = vmul.f32 %v5162, %v5181
          %v5269 = vmul.f32 %v5163, %v5185
          %v5270 = vmul.f32 %v5164, %v5189
          %v5271 = vmul.f32 %v5165, %v5193
          %v5272 = vmul.f32 %v5166, %v5197
          %v5273 = vmul.f32 %v5167, %v5201
          %v5274 = vld [vmem:[#allocation14] sm:$0xff]
          %v5276 = vlaneseq
          %v5277 = vshrl.u32 %v5276, 7
          %v5278 = vsub.s32 0, %v5277
          %v5279 = vrot.slane %v5274, %v5278
          %v5280 = vlaneseq
          %v5281 = vshrl.u32 %v5280, 7
          %v5282 = vsub.s32 1, %v5281
          %v5283 = vrot.slane %v5274, %v5282
          %v5284 = vlaneseq
          %v5285 = vshrl.u32 %v5284, 7
          %v5286 = vsub.s32 2, %v5285
          %v5287 = vrot.slane %v5274, %v5286
          %v5288 = vlaneseq
          %v5289 = vshrl.u32 %v5288, 7
          %v5290 = vsub.s32 3, %v5289
          %v5291 = vrot.slane %v5274, %v5290
          %v5292 = vlaneseq
          %v5293 = vshrl.u32 %v5292, 7
          %v5294 = vsub.s32 4, %v5293
          %v5295 = vrot.slane %v5274, %v5294
          %v5296 = vlaneseq
          %v5297 = vshrl.u32 %v5296, 7
          %v5298 = vsub.s32 5, %v5297
          %v5299 = vrot.slane %v5274, %v5298
          %v5300 = vlaneseq
          %v5301 = vshrl.u32 %v5300, 7
          %v5302 = vsub.s32 6, %v5301
          %v5303 = vrot.slane %v5274, %v5302
          %v5304 = vlaneseq
          %v5305 = vshrl.u32 %v5304, 7
          %v5306 = vsub.s32 7, %v5305
          %v5307 = vrot.slane %v5274, %v5306
          %v5316 = vadd.f32 %v5210, %v5279
          %v5317 = vadd.f32 %v5211, %v5283
          %v5318 = vadd.f32 %v5212, %v5287
          %v5319 = vadd.f32 %v5213, %v5291
          %v5320 = vadd.f32 %v5214, %v5295
          %v5321 = vadd.f32 %v5215, %v5299
          %v5322 = vadd.f32 %v5216, %v5303
          %v5323 = vadd.f32 %v5217, %v5307
          %v5324 = vadd.f32 %v5218, %v5279
          %v5325 = vadd.f32 %v5219, %v5283
          %v5326 = vadd.f32 %v5220, %v5287
          %v5327 = vadd.f32 %v5221, %v5291
          %v5328 = vadd.f32 %v5222, %v5295
          %v5329 = vadd.f32 %v5223, %v5299
          %v5330 = vadd.f32 %v5224, %v5303
          %v5331 = vadd.f32 %v5225, %v5307
          %v5332 = vadd.f32 %v5226, %v5279
          %v5333 = vadd.f32 %v5227, %v5283
          %v5334 = vadd.f32 %v5228, %v5287
          %v5335 = vadd.f32 %v5229, %v5291
          %v5336 = vadd.f32 %v5230, %v5295
          %v5337 = vadd.f32 %v5231, %v5299
          %v5338 = vadd.f32 %v5232, %v5303
          %v5339 = vadd.f32 %v5233, %v5307
          %v5340 = vadd.f32 %v5234, %v5279
          %v5341 = vadd.f32 %v5235, %v5283
          %v5342 = vadd.f32 %v5236, %v5287
          %v5343 = vadd.f32 %v5237, %v5291
          %v5344 = vadd.f32 %v5238, %v5295
          %v5345 = vadd.f32 %v5239, %v5299
          %v5346 = vadd.f32 %v5240, %v5303
          %v5347 = vadd.f32 %v5241, %v5307
          %v5348 = vadd.f32 %v5242, %v5279
          %v5349 = vadd.f32 %v5243, %v5283
          %v5350 = vadd.f32 %v5244, %v5287
          %v5351 = vadd.f32 %v5245, %v5291
          %v5352 = vadd.f32 %v5246, %v5295
          %v5353 = vadd.f32 %v5247, %v5299
          %v5354 = vadd.f32 %v5248, %v5303
          %v5355 = vadd.f32 %v5249, %v5307
          %v5356 = vadd.f32 %v5250, %v5279
          %v5357 = vadd.f32 %v5251, %v5283
          %v5358 = vadd.f32 %v5252, %v5287
          %v5359 = vadd.f32 %v5253, %v5291
          %v5360 = vadd.f32 %v5254, %v5295
          %v5361 = vadd.f32 %v5255, %v5299
          %v5362 = vadd.f32 %v5256, %v5303
          %v5363 = vadd.f32 %v5257, %v5307
          %v5364 = vadd.f32 %v5258, %v5279
          %v5365 = vadd.f32 %v5259, %v5283
          %v5366 = vadd.f32 %v5260, %v5287
          %v5367 = vadd.f32 %v5261, %v5291
          %v5368 = vadd.f32 %v5262, %v5295
          %v5369 = vadd.f32 %v5263, %v5299
          %v5370 = vadd.f32 %v5264, %v5303
          %v5371 = vadd.f32 %v5265, %v5307
          %v5372 = vadd.f32 %v5266, %v5279
          %v5373 = vadd.f32 %v5267, %v5283
          %v5374 = vadd.f32 %v5268, %v5287
          %v5375 = vadd.f32 %v5269, %v5291
          %v5376 = vadd.f32 %v5270, %v5295
          %v5377 = vadd.f32 %v5271, %v5299
          %v5378 = vadd.f32 %v5272, %v5303
          %v5379 = vadd.f32 %v5273, %v5307
          %v5380 = vmax.f32 %v5316, 0.0
          %v5381 = vmax.f32 %v5317, 0.0
          %v5382 = vmax.f32 %v5318, 0.0
          %v5383 = vmax.f32 %v5319, 0.0
          %v5384 = vmax.f32 %v5320, 0.0
          %v5385 = vmax.f32 %v5321, 0.0
          %v5386 = vmax.f32 %v5322, 0.0
          %v5387 = vmax.f32 %v5323, 0.0
          %v5388 = vmax.f32 %v5324, 0.0
          %v5389 = vmax.f32 %v5325, 0.0
          %v5390 = vmax.f32 %v5326, 0.0
          %v5391 = vmax.f32 %v5327, 0.0
          %v5392 = vmax.f32 %v5328, 0.0
          %v5393 = vmax.f32 %v5329, 0.0
          %v5394 = vmax.f32 %v5330, 0.0
          %v5395 = vmax.f32 %v5331, 0.0
          %v5396 = vmax.f32 %v5332, 0.0
          %v5397 = vmax.f32 %v5333, 0.0
          %v5398 = vmax.f32 %v5334, 0.0
          %v5399 = vmax.f32 %v5335, 0.0
          %v5400 = vmax.f32 %v5336, 0.0
          %v5401 = vmax.f32 %v5337, 0.0
          %v5402 = vmax.f32 %v5338, 0.0
          %v5403 = vmax.f32 %v5339, 0.0
          %v5404 = vmax.f32 %v5340, 0.0
          %v5405 = vmax.f32 %v5341, 0.0
          %v5406 = vmax.f32 %v5342, 0.0
          %v5407 = vmax.f32 %v5343, 0.0
          %v5408 = vmax.f32 %v5344, 0.0
          %v5409 = vmax.f32 %v5345, 0.0
          %v5410 = vmax.f32 %v5346, 0.0
          %v5411 = vmax.f32 %v5347, 0.0
          %v5412 = vmax.f32 %v5348, 0.0
          %v5413 = vmax.f32 %v5349, 0.0
          %v5414 = vmax.f32 %v5350, 0.0
          %v5415 = vmax.f32 %v5351, 0.0
          %v5416 = vmax.f32 %v5352, 0.0
          %v5417 = vmax.f32 %v5353, 0.0
          %v5418 = vmax.f32 %v5354, 0.0
          %v5419 = vmax.f32 %v5355, 0.0
          %v5420 = vmax.f32 %v5356, 0.0
          %v5421 = vmax.f32 %v5357, 0.0
          %v5422 = vmax.f32 %v5358, 0.0
          %v5423 = vmax.f32 %v5359, 0.0
          %v5424 = vmax.f32 %v5360, 0.0
          %v5425 = vmax.f32 %v5361, 0.0
          %v5426 = vmax.f32 %v5362, 0.0
          %v5427 = vmax.f32 %v5363, 0.0
          %v5428 = vmax.f32 %v5364, 0.0
          %v5429 = vmax.f32 %v5365, 0.0
          %v5430 = vmax.f32 %v5366, 0.0
          %v5431 = vmax.f32 %v5367, 0.0
          %v5432 = vmax.f32 %v5368, 0.0
          %v5433 = vmax.f32 %v5369, 0.0
          %v5434 = vmax.f32 %v5370, 0.0
          %v5435 = vmax.f32 %v5371, 0.0
          %v5436 = vmax.f32 %v5372, 0.0
          %v5437 = vmax.f32 %v5373, 0.0
          %v5438 = vmax.f32 %v5374, 0.0
          %v5439 = vmax.f32 %v5375, 0.0
          %v5440 = vmax.f32 %v5376, 0.0
          %v5441 = vmax.f32 %v5377, 0.0
          %v5442 = vmax.f32 %v5378, 0.0
          %v5443 = vmax.f32 %v5379, 0.0
          %v5444 = vpack.c.bf16 %v5388, %v5380
          %v5445 = vpack.c.bf16 %v5389, %v5381
          %v5446 = vpack.c.bf16 %v5390, %v5382
          %v5447 = vpack.c.bf16 %v5391, %v5383
          %v5448 = vpack.c.bf16 %v5392, %v5384
          %v5449 = vpack.c.bf16 %v5393, %v5385
          %v5450 = vpack.c.bf16 %v5394, %v5386
          %v5451 = vpack.c.bf16 %v5395, %v5387
          %v5452 = vpack.c.bf16 %v5404, %v5396
          %v5453 = vpack.c.bf16 %v5405, %v5397
          %v5454 = vpack.c.bf16 %v5406, %v5398
          %v5455 = vpack.c.bf16 %v5407, %v5399
          %v5456 = vpack.c.bf16 %v5408, %v5400
          %v5457 = vpack.c.bf16 %v5409, %v5401
          %v5458 = vpack.c.bf16 %v5410, %v5402
          %v5459 = vpack.c.bf16 %v5411, %v5403
          %v5460 = vpack.c.bf16 %v5420, %v5412
          %v5461 = vpack.c.bf16 %v5421, %v5413
          %v5462 = vpack.c.bf16 %v5422, %v5414
          %v5463 = vpack.c.bf16 %v5423, %v5415
          %v5464 = vpack.c.bf16 %v5424, %v5416
          %v5465 = vpack.c.bf16 %v5425, %v5417
          %v5466 = vpack.c.bf16 %v5426, %v5418
          %v5467 = vpack.c.bf16 %v5427, %v5419
          %v5468 = vpack.c.bf16 %v5436, %v5428
          %v5469 = vpack.c.bf16 %v5437, %v5429
          %v5470 = vpack.c.bf16 %v5438, %v5430
          %v5471 = vpack.c.bf16 %v5439, %v5431
          %v5472 = vpack.c.bf16 %v5440, %v5432
          %v5473 = vpack.c.bf16 %v5441, %v5433
          %v5474 = vpack.c.bf16 %v5442, %v5434
          %v5475 = vpack.c.bf16 %v5443, %v5435
          %v5476 = vld [vmem:[#allocation15] sm:$0xf]
          %v5477 = vld [vmem:[#allocation15 + $0x4] sm:$0xf]
          %v5478 = vld [vmem:[#allocation15 + $0x8] sm:$0xf]
          %v5479 = vld [vmem:[#allocation15 + $0xc] sm:$0xf]
          %v5480 = vld [vmem:[#allocation15 + $0x10] sm:$0xf]
          %v5481 = vld [vmem:[#allocation15 + $0x14] sm:$0xf]
          %v5482 = vld [vmem:[#allocation15 + $0x18] sm:$0xf]
          %v5483 = vld [vmem:[#allocation15 + $0x1c] sm:$0xf]
          %v5484 = vld [vmem:[#allocation15 + $0x20] sm:$0xf]
          %v5485 = vld [vmem:[#allocation15 + $0x24] sm:$0xf]
          %v5486 = vld [vmem:[#allocation15 + $0x28] sm:$0xf]
          %v5487 = vld [vmem:[#allocation15 + $0x2c] sm:$0xf]
          %v5488 = vld [vmem:[#allocation15 + $0x30] sm:$0xf]
          %v5489 = vld [vmem:[#allocation15 + $0x34] sm:$0xf]
          %v5490 = vld [vmem:[#allocation15 + $0x38] sm:$0xf]
          %v5491 = vld [vmem:[#allocation15 + $0x3c] sm:$0xf]
          %v5492 = vld [vmem:[#allocation15 + $0x40] sm:$0xf]
          %v5493 = vld [vmem:[#allocation15 + $0x44] sm:$0xf]
          %v5494 = vld [vmem:[#allocation15 + $0x48] sm:$0xf]
          %v5495 = vld [vmem:[#allocation15 + $0x4c] sm:$0xf]
          %v5496 = vld [vmem:[#allocation15 + $0x50] sm:$0xf]
          %v5497 = vld [vmem:[#allocation15 + $0x54] sm:$0xf]
          %v5498 = vld [vmem:[#allocation15 + $0x58] sm:$0xf]
          %v5499 = vld [vmem:[#allocation15 + $0x5c] sm:$0xf]
          %v5500 = vld [vmem:[#allocation15 + $0x60] sm:$0xf]
          %v5501 = vld [vmem:[#allocation15 + $0x64] sm:$0xf]
          %v5502 = vld [vmem:[#allocation15 + $0x68] sm:$0xf]
          %v5503 = vld [vmem:[#allocation15 + $0x6c] sm:$0xf]
          %v5504 = vld [vmem:[#allocation15 + $0x70] sm:$0xf]
          %v5505 = vld [vmem:[#allocation15 + $0x74] sm:$0xf]
          %v5506 = vld [vmem:[#allocation15 + $0x78] sm:$0xf]
          %v5507 = vld [vmem:[#allocation15 + $0x7c] sm:$0xf]
          %v5508 = vld [vmem:[#allocation15 + $0x80] sm:$0xf]
          %v5509 = vld [vmem:[#allocation15 + $0x84] sm:$0xf]
          %v5510 = vld [vmem:[#allocation15 + $0x88] sm:$0xf]
          %v5511 = vld [vmem:[#allocation15 + $0x8c] sm:$0xf]
          %v5512 = vld [vmem:[#allocation15 + $0x90] sm:$0xf]
          %v5513 = vld [vmem:[#allocation15 + $0x94] sm:$0xf]
          %v5514 = vld [vmem:[#allocation15 + $0x98] sm:$0xf]
          %v5515 = vld [vmem:[#allocation15 + $0x9c] sm:$0xf]
          %v5516 = vld [vmem:[#allocation15 + $0xa0] sm:$0xf]
          %v5517 = vld [vmem:[#allocation15 + $0xa4] sm:$0xf]
          %v5518 = vld [vmem:[#allocation15 + $0xa8] sm:$0xf]
          %v5519 = vld [vmem:[#allocation15 + $0xac] sm:$0xf]
          %v5520 = vld [vmem:[#allocation15 + $0xb0] sm:$0xf]
          %v5521 = vld [vmem:[#allocation15 + $0xb4] sm:$0xf]
          %v5522 = vld [vmem:[#allocation15 + $0xb8] sm:$0xf]
          %v5523 = vld [vmem:[#allocation15 + $0xbc] sm:$0xf]
          %v5524 = vld [vmem:[#allocation15 + $0xc0] sm:$0xf]
          %v5525 = vld [vmem:[#allocation15 + $0xc4] sm:$0xf]
          %v5526 = vld [vmem:[#allocation15 + $0xc8] sm:$0xf]
          %v5527 = vld [vmem:[#allocation15 + $0xcc] sm:$0xf]
          %v5528 = vld [vmem:[#allocation15 + $0xd0] sm:$0xf]
          %v5529 = vld [vmem:[#allocation15 + $0xd4] sm:$0xf]
          %v5530 = vld [vmem:[#allocation15 + $0xd8] sm:$0xf]
          %v5531 = vld [vmem:[#allocation15 + $0xdc] sm:$0xf]
          %v5532 = vld [vmem:[#allocation15 + $0xe0] sm:$0xf]
          %v5533 = vld [vmem:[#allocation15 + $0xe4] sm:$0xf]
          %v5534 = vld [vmem:[#allocation15 + $0xe8] sm:$0xf]
          %v5535 = vld [vmem:[#allocation15 + $0xec] sm:$0xf]
          %v5536 = vld [vmem:[#allocation15 + $0xf0] sm:$0xf]
          %v5537 = vld [vmem:[#allocation15 + $0xf4] sm:$0xf]
          %v5538 = vld [vmem:[#allocation15 + $0xf8] sm:$0xf]
          %v5539 = vld [vmem:[#allocation15 + $0xfc] sm:$0xf]
          %v5540 = vld [vmem:[#allocation15 + $0x100] sm:$0xf]
          %v5541 = vld [vmem:[#allocation15 + $0x104] sm:$0xf]
          %v5542 = vld [vmem:[#allocation15 + $0x108] sm:$0xf]
          %v5543 = vld [vmem:[#allocation15 + $0x10c] sm:$0xf]
          %v5544 = vld [vmem:[#allocation15 + $0x110] sm:$0xf]
          %v5545 = vld [vmem:[#allocation15 + $0x114] sm:$0xf]
          %v5546 = vld [vmem:[#allocation15 + $0x118] sm:$0xf]
          %v5547 = vld [vmem:[#allocation15 + $0x11c] sm:$0xf]
          %v5548 = vld [vmem:[#allocation15 + $0x120] sm:$0xf]
          %v5549 = vld [vmem:[#allocation15 + $0x124] sm:$0xf]
          %v5550 = vld [vmem:[#allocation15 + $0x128] sm:$0xf]
          %v5551 = vld [vmem:[#allocation15 + $0x12c] sm:$0xf]
          %v5552 = vld [vmem:[#allocation15 + $0x130] sm:$0xf]
          %v5553 = vld [vmem:[#allocation15 + $0x134] sm:$0xf]
          %v5554 = vld [vmem:[#allocation15 + $0x138] sm:$0xf]
          %v5555 = vld [vmem:[#allocation15 + $0x13c] sm:$0xf]
          %v5556 = vld [vmem:[#allocation15 + $0x140] sm:$0xf]
          %v5557 = vld [vmem:[#allocation15 + $0x144] sm:$0xf]
          %v5558 = vld [vmem:[#allocation15 + $0x148] sm:$0xf]
          %v5559 = vld [vmem:[#allocation15 + $0x14c] sm:$0xf]
          %v5560 = vld [vmem:[#allocation15 + $0x150] sm:$0xf]
          %v5561 = vld [vmem:[#allocation15 + $0x154] sm:$0xf]
          %v5562 = vld [vmem:[#allocation15 + $0x158] sm:$0xf]
          %v5563 = vld [vmem:[#allocation15 + $0x15c] sm:$0xf]
          %v5564 = vld [vmem:[#allocation15 + $0x160] sm:$0xf]
          %v5565 = vld [vmem:[#allocation15 + $0x164] sm:$0xf]
          %v5566 = vld [vmem:[#allocation15 + $0x168] sm:$0xf]
          %v5567 = vld [vmem:[#allocation15 + $0x16c] sm:$0xf]
          %v5568 = vld [vmem:[#allocation15 + $0x170] sm:$0xf]
          %v5569 = vld [vmem:[#allocation15 + $0x174] sm:$0xf]
          %v5570 = vld [vmem:[#allocation15 + $0x178] sm:$0xf]
          %v5571 = vld [vmem:[#allocation15 + $0x17c] sm:$0xf]
          %v5572 = vld [vmem:[#allocation15 + $0x180] sm:$0xf]
          %v5573 = vld [vmem:[#allocation15 + $0x184] sm:$0xf]
          %v5574 = vld [vmem:[#allocation15 + $0x188] sm:$0xf]
          %v5575 = vld [vmem:[#allocation15 + $0x18c] sm:$0xf]
          %v5576 = vld [vmem:[#allocation15 + $0x190] sm:$0xf]
          %v5577 = vld [vmem:[#allocation15 + $0x194] sm:$0xf]
          %v5578 = vld [vmem:[#allocation15 + $0x198] sm:$0xf]
          %v5579 = vld [vmem:[#allocation15 + $0x19c] sm:$0xf]
          %v5580 = vld [vmem:[#allocation15 + $0x1a0] sm:$0xf]
          %v5581 = vld [vmem:[#allocation15 + $0x1a4] sm:$0xf]
          %v5582 = vld [vmem:[#allocation15 + $0x1a8] sm:$0xf]
          %v5583 = vld [vmem:[#allocation15 + $0x1ac] sm:$0xf]
          %v5584 = vld [vmem:[#allocation15 + $0x1b0] sm:$0xf]
          %v5585 = vld [vmem:[#allocation15 + $0x1b4] sm:$0xf]
          %v5586 = vld [vmem:[#allocation15 + $0x1b8] sm:$0xf]
          %v5587 = vld [vmem:[#allocation15 + $0x1bc] sm:$0xf]
          %v5588 = vld [vmem:[#allocation15 + $0x1c0] sm:$0xf]
          %v5589 = vld [vmem:[#allocation15 + $0x1c4] sm:$0xf]
          %v5590 = vld [vmem:[#allocation15 + $0x1c8] sm:$0xf]
          %v5591 = vld [vmem:[#allocation15 + $0x1cc] sm:$0xf]
          %v5592 = vld [vmem:[#allocation15 + $0x1d0] sm:$0xf]
          %v5593 = vld [vmem:[#allocation15 + $0x1d4] sm:$0xf]
          %v5594 = vld [vmem:[#allocation15 + $0x1d8] sm:$0xf]
          %v5595 = vld [vmem:[#allocation15 + $0x1dc] sm:$0xf]
          %v5596 = vld [vmem:[#allocation15 + $0x1e0] sm:$0xf]
          %v5597 = vld [vmem:[#allocation15 + $0x1e4] sm:$0xf]
          %v5598 = vld [vmem:[#allocation15 + $0x1e8] sm:$0xf]
          %v5599 = vld [vmem:[#allocation15 + $0x1ec] sm:$0xf]
          %v5600 = vld [vmem:[#allocation15 + $0x1f0] sm:$0xf]
          %v5601 = vld [vmem:[#allocation15 + $0x1f4] sm:$0xf]
          %v5602 = vld [vmem:[#allocation15 + $0x1f8] sm:$0xf]
          %v5603 = vld [vmem:[#allocation15 + $0x1fc] sm:$0xf]
          %v5604 = vld [vmem:[#allocation17] sm:$0x1]
          %v5606 = vlaneseq
          %v5607 = vshrl.u32 %v5606, 7
          %v5608 = vsub.s32 0, %v5607
          %v5609 = vrot.slane %v5604, %v5608
          %v5739 = vunpack.c.l.b16 %v5476
          %v5740 = vunpack.c.l.b16 %v5477
          %v5741 = vunpack.c.l.b16 %v5478
          %v5742 = vunpack.c.l.b16 %v5479
          %v5743 = vunpack.c.l.b16 %v5480
          %v5744 = vunpack.c.l.b16 %v5481
          %v5745 = vunpack.c.l.b16 %v5482
          %v5746 = vunpack.c.l.b16 %v5483
          %v5747 = vunpack.c.l.b16 %v5484
          %v5748 = vunpack.c.l.b16 %v5485
          %v5749 = vunpack.c.l.b16 %v5486
          %v5750 = vunpack.c.l.b16 %v5487
          %v5751 = vunpack.c.l.b16 %v5488
          %v5752 = vunpack.c.l.b16 %v5489
          %v5753 = vunpack.c.l.b16 %v5490
          %v5754 = vunpack.c.l.b16 %v5491
          %v5755 = vunpack.c.l.b16 %v5492
          %v5756 = vunpack.c.l.b16 %v5493
          %v5757 = vunpack.c.l.b16 %v5494
          %v5758 = vunpack.c.l.b16 %v5495
          %v5759 = vunpack.c.l.b16 %v5496
          %v5760 = vunpack.c.l.b16 %v5497
          %v5761 = vunpack.c.l.b16 %v5498
          %v5762 = vunpack.c.l.b16 %v5499
          %v5763 = vunpack.c.l.b16 %v5500
          %v5764 = vunpack.c.l.b16 %v5501
          %v5765 = vunpack.c.l.b16 %v5502
          %v5766 = vunpack.c.l.b16 %v5503
          %v5767 = vunpack.c.l.b16 %v5504
          %v5768 = vunpack.c.l.b16 %v5505
          %v5769 = vunpack.c.l.b16 %v5506
          %v5770 = vunpack.c.l.b16 %v5507
          %v5771 = vunpack.c.l.b16 %v5508
          %v5772 = vunpack.c.l.b16 %v5509
          %v5773 = vunpack.c.l.b16 %v5510
          %v5774 = vunpack.c.l.b16 %v5511
          %v5775 = vunpack.c.l.b16 %v5512
          %v5776 = vunpack.c.l.b16 %v5513
          %v5777 = vunpack.c.l.b16 %v5514
          %v5778 = vunpack.c.l.b16 %v5515
          %v5779 = vunpack.c.l.b16 %v5516
          %v5780 = vunpack.c.l.b16 %v5517
          %v5781 = vunpack.c.l.b16 %v5518
          %v5782 = vunpack.c.l.b16 %v5519
          %v5783 = vunpack.c.l.b16 %v5520
          %v5784 = vunpack.c.l.b16 %v5521
          %v5785 = vunpack.c.l.b16 %v5522
          %v5786 = vunpack.c.l.b16 %v5523
          %v5787 = vunpack.c.l.b16 %v5524
          %v5788 = vunpack.c.l.b16 %v5525
          %v5789 = vunpack.c.l.b16 %v5526
          %v5790 = vunpack.c.l.b16 %v5527
          %v5791 = vunpack.c.l.b16 %v5528
          %v5792 = vunpack.c.l.b16 %v5529
          %v5793 = vunpack.c.l.b16 %v5530
          %v5794 = vunpack.c.l.b16 %v5531
          %v5795 = vunpack.c.l.b16 %v5532
          %v5796 = vunpack.c.l.b16 %v5533
          %v5797 = vunpack.c.l.b16 %v5534
          %v5798 = vunpack.c.l.b16 %v5535
          %v5799 = vunpack.c.l.b16 %v5536
          %v5800 = vunpack.c.l.b16 %v5537
          %v5801 = vunpack.c.l.b16 %v5538
          %v5802 = vunpack.c.l.b16 %v5539
          %v5803 = vunpack.c.l.b16 %v5540
          %v5804 = vunpack.c.l.b16 %v5541
          %v5805 = vunpack.c.l.b16 %v5542
          %v5806 = vunpack.c.l.b16 %v5543
          %v5807 = vunpack.c.l.b16 %v5544
          %v5808 = vunpack.c.l.b16 %v5545
          %v5809 = vunpack.c.l.b16 %v5546
          %v5810 = vunpack.c.l.b16 %v5547
          %v5811 = vunpack.c.l.b16 %v5548
          %v5812 = vunpack.c.l.b16 %v5549
          %v5813 = vunpack.c.l.b16 %v5550
          %v5814 = vunpack.c.l.b16 %v5551
          %v5815 = vunpack.c.l.b16 %v5552
          %v5816 = vunpack.c.l.b16 %v5553
          %v5817 = vunpack.c.l.b16 %v5554
          %v5818 = vunpack.c.l.b16 %v5555
          %v5819 = vunpack.c.l.b16 %v5556
          %v5820 = vunpack.c.l.b16 %v5557
          %v5821 = vunpack.c.l.b16 %v5558
          %v5822 = vunpack.c.l.b16 %v5559
          %v5823 = vunpack.c.l.b16 %v5560
          %v5824 = vunpack.c.l.b16 %v5561
          %v5825 = vunpack.c.l.b16 %v5562
          %v5826 = vunpack.c.l.b16 %v5563
          %v5827 = vunpack.c.l.b16 %v5564
          %v5828 = vunpack.c.l.b16 %v5565
          %v5829 = vunpack.c.l.b16 %v5566
          %v5830 = vunpack.c.l.b16 %v5567
          %v5831 = vunpack.c.l.b16 %v5568
          %v5832 = vunpack.c.l.b16 %v5569
          %v5833 = vunpack.c.l.b16 %v5570
          %v5834 = vunpack.c.l.b16 %v5571
          %v5835 = vunpack.c.l.b16 %v5572
          %v5836 = vunpack.c.l.b16 %v5573
          %v5837 = vunpack.c.l.b16 %v5574
          %v5838 = vunpack.c.l.b16 %v5575
          %v5839 = vunpack.c.l.b16 %v5576
          %v5840 = vunpack.c.l.b16 %v5577
          %v5841 = vunpack.c.l.b16 %v5578
          %v5842 = vunpack.c.l.b16 %v5579
          %v5843 = vunpack.c.l.b16 %v5580
          %v5844 = vunpack.c.l.b16 %v5581
          %v5845 = vunpack.c.l.b16 %v5582
          %v5846 = vunpack.c.l.b16 %v5583
          %v5847 = vunpack.c.l.b16 %v5584
          %v5848 = vunpack.c.l.b16 %v5585
          %v5849 = vunpack.c.l.b16 %v5586
          %v5850 = vunpack.c.l.b16 %v5587
          %v5851 = vunpack.c.l.b16 %v5588
          %v5852 = vunpack.c.l.b16 %v5589
          %v5853 = vunpack.c.l.b16 %v5590
          %v5854 = vunpack.c.l.b16 %v5591
          %v5855 = vunpack.c.l.b16 %v5592
          %v5856 = vunpack.c.l.b16 %v5593
          %v5857 = vunpack.c.l.b16 %v5594
          %v5858 = vunpack.c.l.b16 %v5595
          %v5859 = vunpack.c.l.b16 %v5596
          %v5860 = vunpack.c.l.b16 %v5597
          %v5861 = vunpack.c.l.b16 %v5598
          %v5862 = vunpack.c.l.b16 %v5599
          %v5863 = vunpack.c.l.b16 %v5600
          %v5864 = vunpack.c.l.b16 %v5601
          %v5865 = vunpack.c.l.b16 %v5602
          %v5866 = vunpack.c.l.b16 %v5603
          %v5867 = vpack.c.b16 %v5740, %v5739
          %v5868 = vpack.c.b16 %v5742, %v5741
          %v5869 = vpack.c.b16 %v5744, %v5743
          %v5870 = vpack.c.b16 %v5746, %v5745
          %v5871 = vpack.c.b16 %v5748, %v5747
          %v5872 = vpack.c.b16 %v5750, %v5749
          %v5873 = vpack.c.b16 %v5752, %v5751
          %v5874 = vpack.c.b16 %v5754, %v5753
          %v5875 = vpack.c.b16 %v5756, %v5755
          %v5876 = vpack.c.b16 %v5758, %v5757
          %v5877 = vpack.c.b16 %v5760, %v5759
          %v5878 = vpack.c.b16 %v5762, %v5761
          %v5879 = vpack.c.b16 %v5764, %v5763
          %v5880 = vpack.c.b16 %v5766, %v5765
          %v5881 = vpack.c.b16 %v5768, %v5767
          %v5882 = vpack.c.b16 %v5770, %v5769
          %v5883 = vpack.c.b16 %v5772, %v5771
          %v5884 = vpack.c.b16 %v5774, %v5773
          %v5885 = vpack.c.b16 %v5776, %v5775
          %v5886 = vpack.c.b16 %v5778, %v5777
          %v5887 = vpack.c.b16 %v5780, %v5779
          %v5888 = vpack.c.b16 %v5782, %v5781
          %v5889 = vpack.c.b16 %v5784, %v5783
          %v5890 = vpack.c.b16 %v5786, %v5785
          %v5891 = vpack.c.b16 %v5788, %v5787
          %v5892 = vpack.c.b16 %v5790, %v5789
          %v5893 = vpack.c.b16 %v5792, %v5791
          %v5894 = vpack.c.b16 %v5794, %v5793
          %v5895 = vpack.c.b16 %v5796, %v5795
          %v5896 = vpack.c.b16 %v5798, %v5797
          %v5897 = vpack.c.b16 %v5800, %v5799
          %v5898 = vpack.c.b16 %v5802, %v5801
          %v5899 = vpack.c.b16 %v5804, %v5803
          %v5900 = vpack.c.b16 %v5806, %v5805
          %v5901 = vpack.c.b16 %v5808, %v5807
          %v5902 = vpack.c.b16 %v5810, %v5809
          %v5903 = vpack.c.b16 %v5812, %v5811
          %v5904 = vpack.c.b16 %v5814, %v5813
          %v5905 = vpack.c.b16 %v5816, %v5815
          %v5906 = vpack.c.b16 %v5818, %v5817
          %v5907 = vpack.c.b16 %v5820, %v5819
          %v5908 = vpack.c.b16 %v5822, %v5821
          %v5909 = vpack.c.b16 %v5824, %v5823
          %v5910 = vpack.c.b16 %v5826, %v5825
          %v5911 = vpack.c.b16 %v5828, %v5827
          %v5912 = vpack.c.b16 %v5830, %v5829
          %v5913 = vpack.c.b16 %v5832, %v5831
          %v5914 = vpack.c.b16 %v5834, %v5833
          %v5915 = vpack.c.b16 %v5836, %v5835
          %v5916 = vpack.c.b16 %v5838, %v5837
          %v5917 = vpack.c.b16 %v5840, %v5839
          %v5918 = vpack.c.b16 %v5842, %v5841
          %v5919 = vpack.c.b16 %v5844, %v5843
          %v5920 = vpack.c.b16 %v5846, %v5845
          %v5921 = vpack.c.b16 %v5848, %v5847
          %v5922 = vpack.c.b16 %v5850, %v5849
          %v5923 = vpack.c.b16 %v5852, %v5851
          %v5924 = vpack.c.b16 %v5854, %v5853
          %v5925 = vpack.c.b16 %v5856, %v5855
          %v5926 = vpack.c.b16 %v5858, %v5857
          %v5927 = vpack.c.b16 %v5860, %v5859
          %v5928 = vpack.c.b16 %v5862, %v5861
          %v5929 = vpack.c.b16 %v5864, %v5863
          %v5930 = vpack.c.b16 %v5866, %v5865
          %5995 = vmatprep.subr.bf16.mxu0 0
          %5996 = vmatpush1.bf16.msra.mxu0 %v5867
          %5997 = vmatprep.subr.bf16.mxu0 0
          %5998 = vmatpush1.bf16.msra.mxu0 %v5868
          %5999 = vmatprep.subr.bf16.mxu0 0
          %6000 = vmatpush1.bf16.msra.mxu0 %v5869
          %6001 = vmatprep.subr.bf16.mxu0 0
          %6002 = vmatpush1.bf16.msra.mxu0 %v5870
          %6003 = vmatprep.subr.bf16.mxu0 0
          %6004 = vmatpush1.bf16.msra.mxu0 %v5871
          %6005 = vmatprep.subr.bf16.mxu0 0
          %6006 = vmatpush1.bf16.msra.mxu0 %v5872
          %6007 = vmatprep.subr.bf16.mxu0 0
          %6008 = vmatpush1.bf16.msra.mxu0 %v5873
          %6009 = vmatprep.subr.bf16.mxu0 0
          %6010 = vmatpush1.bf16.msra.mxu0 %v5874
          %6011 = vmatprep.subr.bf16.mxu0 0
          %6012 = vmatpush1.bf16.msra.mxu0 %v5875
          %6013 = vmatprep.subr.bf16.mxu0 0
          %6014 = vmatpush1.bf16.msra.mxu0 %v5876
          %6015 = vmatprep.subr.bf16.mxu0 0
          %6016 = vmatpush1.bf16.msra.mxu0 %v5877
          %6017 = vmatprep.subr.bf16.mxu0 0
          %6018 = vmatpush1.bf16.msra.mxu0 %v5878
          %6019 = vmatprep.subr.bf16.mxu0 0
          %6020 = vmatpush1.bf16.msra.mxu0 %v5879
          %6021 = vmatprep.subr.bf16.mxu0 0
          %6022 = vmatpush1.bf16.msra.mxu0 %v5880
          %6023 = vmatprep.subr.bf16.mxu0 0
          %6024 = vmatpush1.bf16.msra.mxu0 %v5881
          %6025 = vmatprep.subr.bf16.mxu0 0
          %6026 = vmatpush1.bf16.msra.mxu0 %v5882
          %6027 = vmatprep.mubr.bf16.mxu0 %v5445
          %6028 = vmatmul.mubr.bf16.gmra.mrb[0].mxu0 %v5444
          %v6029 = vpop.f32.mrb[0].mxu0
          %v6030 = vadd.f32 %v5609, %v6029
          %v6031 = vpop.f32.mrb[0].mxu0
          %v6032 = vpop.f32.mrb[0].mxu0
          %v6033 = vadd.f32 %v5609, %v6032
          %v6034 = vpop.f32.mrb[0].mxu0
          %6035 = vmatprep.mubr.bf16.mxu0 %v5453
          %6036 = vmatmul.mubr.bf16.gmra.mrb[0].mxu0 %v5452
          %v6037 = vpop.f32.mrb[0].mxu0
          %v6038 = vadd.f32 %v5609, %v6037
          %v6039 = vpop.f32.mrb[0].mxu0
          %v6040 = vpop.f32.mrb[0].mxu0
          %v6041 = vadd.f32 %v5609, %v6040
          %v6042 = vpop.f32.mrb[0].mxu0
          %6043 = vmatprep.mubr.bf16.mxu0 %v5461
          %6044 = vmatmul.mubr.bf16.gmra.mrb[0].mxu0 %v5460
          %v6045 = vpop.f32.mrb[0].mxu0
          %v6046 = vadd.f32 %v5609, %v6045
          %v6047 = vpop.f32.mrb[0].mxu0
          %v6048 = vpop.f32.mrb[0].mxu0
          %v6049 = vadd.f32 %v5609, %v6048
          %v6050 = vpop.f32.mrb[0].mxu0
          %6051 = vmatprep.mubr.bf16.mxu0 %v5469
          %6052 = vmatmul.mubr.bf16.gmra.mrb[0].mxu0 %v5468
          %v6053 = vpop.f32.mrb[0].mxu0
          %v6054 = vadd.f32 %v5609, %v6053
          %v6055 = vpop.f32.mrb[0].mxu0
          %v6056 = vpop.f32.mrb[0].mxu0
          %v6057 = vadd.f32 %v5609, %v6056
          %v6058 = vpop.f32.mrb[0].mxu0
          %6059 = vdwg.mxu0
          %6060 = vmatprep.subr.bf16.mxu0 0
          %6061 = vmatpush1.bf16.msra.mxu0 %v5883
          %6062 = vmatprep.subr.bf16.mxu0 0
          %6063 = vmatpush1.bf16.msra.mxu0 %v5884
          %6064 = vmatprep.subr.bf16.mxu0 0
          %6065 = vmatpush1.bf16.msra.mxu0 %v5885
          %6066 = vmatprep.subr.bf16.mxu0 0
          %6067 = vmatpush1.bf16.msra.mxu0 %v5886
          %6068 = vmatprep.subr.bf16.mxu0 0
          %6069 = vmatpush1.bf16.msra.mxu0 %v5887
          %6070 = vmatprep.subr.bf16.mxu0 0
          %6071 = vmatpush1.bf16.msra.mxu0 %v5888
          %6072 = vmatprep.subr.bf16.mxu0 0
          %6073 = vmatpush1.bf16.msra.mxu0 %v5889
          %6074 = vmatprep.subr.bf16.mxu0 0
          %6075 = vmatpush1.bf16.msra.mxu0 %v5890
          %6076 = vmatprep.subr.bf16.mxu0 0
          %6077 = vmatpush1.bf16.msra.mxu0 %v5891
          %6078 = vmatprep.subr.bf16.mxu0 0
          %6079 = vmatpush1.bf16.msra.mxu0 %v5892
          %6080 = vmatprep.subr.bf16.mxu0 0
          %6081 = vmatpush1.bf16.msra.mxu0 %v5893
          %6082 = vmatprep.subr.bf16.mxu0 0
          %6083 = vmatpush1.bf16.msra.mxu0 %v5894
          %6084 = vmatprep.subr.bf16.mxu0 0
          %6085 = vmatpush1.bf16.msra.mxu0 %v5895
          %6086 = vmatprep.subr.bf16.mxu0 0
          %6087 = vmatpush1.bf16.msra.mxu0 %v5896
          %6088 = vmatprep.subr.bf16.mxu0 0
          %6089 = vmatpush1.bf16.msra.mxu0 %v5897
          %6090 = vmatprep.subr.bf16.mxu0 0
          %6091 = vmatpush1.bf16.msra.mxu0 %v5898
          %6092 = vmatprep.mubr.bf16.mxu0 %v5447
          %6093 = vmatmul.mubr.bf16.gmra.mrb[0].mxu0 %v5446
          %v6094 = vpop.f32.mrb[0].mxu0
          %v6095 = vadd.f32 %v6030, %v6094
          %v6096 = vpop.f32.mrb[0].mxu0
          %v6097 = vpop.f32.mrb[0].mxu0
          %v6098 = vadd.f32 %v6033, %v6097
          %v6099 = vpop.f32.mrb[0].mxu0
          %6100 = vmatprep.mubr.bf16.mxu0 %v5455
          %6101 = vmatmul.mubr.bf16.gmra.mrb[0].mxu0 %v5454
          %v6102 = vpop.f32.mrb[0].mxu0
          %v6103 = vadd.f32 %v6038, %v6102
          %v6104 = vpop.f32.mrb[0].mxu0
          %v6105 = vpop.f32.mrb[0].mxu0
          %v6106 = vadd.f32 %v6041, %v6105
          %v6107 = vpop.f32.mrb[0].mxu0
          %6108 = vmatprep.mubr.bf16.mxu0 %v5463
          %6109 = vmatmul.mubr.bf16.gmra.mrb[0].mxu0 %v5462
          %v6110 = vpop.f32.mrb[0].mxu0
          %v6111 = vadd.f32 %v6046, %v6110
          %v6112 = vpop.f32.mrb[0].mxu0
          %v6113 = vpop.f32.mrb[0].mxu0
          %v6114 = vadd.f32 %v6049, %v6113
          %v6115 = vpop.f32.mrb[0].mxu0
          %6116 = vmatprep.mubr.bf16.mxu0 %v5471
          %6117 = vmatmul.mubr.bf16.gmra.mrb[0].mxu0 %v5470
          %v6118 = vpop.f32.mrb[0].mxu0
          %v6119 = vadd.f32 %v6054, %v6118
          %v6120 = vpop.f32.mrb[0].mxu0
          %v6121 = vpop.f32.mrb[0].mxu0
          %v6122 = vadd.f32 %v6057, %v6121
          %v6123 = vpop.f32.mrb[0].mxu0
          %6124 = vdwg.mxu0
          %6125 = vmatprep.subr.bf16.mxu0 0
          %6126 = vmatpush1.bf16.msra.mxu0 %v5899
          %6127 = vmatprep.subr.bf16.mxu0 0
          %6128 = vmatpush1.bf16.msra.mxu0 %v5900
          %6129 = vmatprep.subr.bf16.mxu0 0
          %6130 = vmatpush1.bf16.msra.mxu0 %v5901
          %6131 = vmatprep.subr.bf16.mxu0 0
          %6132 = vmatpush1.bf16.msra.mxu0 %v5902
          %6133 = vmatprep.subr.bf16.mxu0 0
          %6134 = vmatpush1.bf16.msra.mxu0 %v5903
          %6135 = vmatprep.subr.bf16.mxu0 0
          %6136 = vmatpush1.bf16.msra.mxu0 %v5904
          %6137 = vmatprep.subr.bf16.mxu0 0
          %6138 = vmatpush1.bf16.msra.mxu0 %v5905
          %6139 = vmatprep.subr.bf16.mxu0 0
          %6140 = vmatpush1.bf16.msra.mxu0 %v5906
          %6141 = vmatprep.subr.bf16.mxu0 0
          %6142 = vmatpush1.bf16.msra.mxu0 %v5907
          %6143 = vmatprep.subr.bf16.mxu0 0
          %6144 = vmatpush1.bf16.msra.mxu0 %v5908
          %6145 = vmatprep.subr.bf16.mxu0 0
          %6146 = vmatpush1.bf16.msra.mxu0 %v5909
          %6147 = vmatprep.subr.bf16.mxu0 0
          %6148 = vmatpush1.bf16.msra.mxu0 %v5910
          %6149 = vmatprep.subr.bf16.mxu0 0
          %6150 = vmatpush1.bf16.msra.mxu0 %v5911
          %6151 = vmatprep.subr.bf16.mxu0 0
          %6152 = vmatpush1.bf16.msra.mxu0 %v5912
          %6153 = vmatprep.subr.bf16.mxu0 0
          %6154 = vmatpush1.bf16.msra.mxu0 %v5913
          %6155 = vmatprep.subr.bf16.mxu0 0
          %6156 = vmatpush1.bf16.msra.mxu0 %v5914
          %6157 = vmatprep.mubr.bf16.mxu0 %v5449
          %6158 = vmatmul.mubr.bf16.gmra.mrb[0].mxu0 %v5448
          %v6159 = vpop.f32.mrb[0].mxu0
          %v6160 = vadd.f32 %v6095, %v6159
          %v6161 = vpop.f32.mrb[0].mxu0
          %v6162 = vpop.f32.mrb[0].mxu0
          %v6163 = vadd.f32 %v6098, %v6162
          %v6164 = vpop.f32.mrb[0].mxu0
          %6165 = vmatprep.mubr.bf16.mxu0 %v5457
          %6166 = vmatmul.mubr.bf16.gmra.mrb[0].mxu0 %v5456
          %v6167 = vpop.f32.mrb[0].mxu0
          %v6168 = vadd.f32 %v6103, %v6167
          %v6169 = vpop.f32.mrb[0].mxu0
          %v6170 = vpop.f32.mrb[0].mxu0
          %v6171 = vadd.f32 %v6106, %v6170
          %v6172 = vpop.f32.mrb[0].mxu0
          %6173 = vmatprep.mubr.bf16.mxu0 %v5465
          %6174 = vmatmul.mubr.bf16.gmra.mrb[0].mxu0 %v5464
          %v6175 = vpop.f32.mrb[0].mxu0
          %v6176 = vadd.f32 %v6111, %v6175
          %v6177 = vpop.f32.mrb[0].mxu0
          %v6178 = vpop.f32.mrb[0].mxu0
          %v6179 = vadd.f32 %v6114, %v6178
          %v6180 = vpop.f32.mrb[0].mxu0
          %6181 = vmatprep.mubr.bf16.mxu0 %v5473
          %6182 = vmatmul.mubr.bf16.gmra.mrb[0].mxu0 %v5472
          %v6183 = vpop.f32.mrb[0].mxu0
          %v6184 = vadd.f32 %v6119, %v6183
          %v6185 = vpop.f32.mrb[0].mxu0
          %v6186 = vpop.f32.mrb[0].mxu0
          %v6187 = vadd.f32 %v6122, %v6186
          %v6188 = vpop.f32.mrb[0].mxu0
          %6189 = vdwg.mxu0
          %6190 = vmatprep.subr.bf16.mxu0 0
          %6191 = vmatpush1.bf16.msra.mxu0 %v5915
          %6192 = vmatprep.subr.bf16.mxu0 0
          %6193 = vmatpush1.bf16.msra.mxu0 %v5916
          %6194 = vmatprep.subr.bf16.mxu0 0
          %6195 = vmatpush1.bf16.msra.mxu0 %v5917
          %6196 = vmatprep.subr.bf16.mxu0 0
          %6197 = vmatpush1.bf16.msra.mxu0 %v5918
          %6198 = vmatprep.subr.bf16.mxu0 0
          %6199 = vmatpush1.bf16.msra.mxu0 %v5919
          %6200 = vmatprep.subr.bf16.mxu0 0
          %6201 = vmatpush1.bf16.msra.mxu0 %v5920
          %6202 = vmatprep.subr.bf16.mxu0 0
          %6203 = vmatpush1.bf16.msra.mxu0 %v5921
          %6204 = vmatprep.subr.bf16.mxu0 0
          %6205 = vmatpush1.bf16.msra.mxu0 %v5922
          %6206 = vmatprep.subr.bf16.mxu0 0
          %6207 = vmatpush1.bf16.msra.mxu0 %v5923
          %6208 = vmatprep.subr.bf16.mxu0 0
          %6209 = vmatpush1.bf16.msra.mxu0 %v5924
          %6210 = vmatprep.subr.bf16.mxu0 0
          %6211 = vmatpush1.bf16.msra.mxu0 %v5925
          %6212 = vmatprep.subr.bf16.mxu0 0
          %6213 = vmatpush1.bf16.msra.mxu0 %v5926
          %6214 = vmatprep.subr.bf16.mxu0 0
          %6215 = vmatpush1.bf16.msra.mxu0 %v5927
          %6216 = vmatprep.subr.bf16.mxu0 0
          %6217 = vmatpush1.bf16.msra.mxu0 %v5928
          %6218 = vmatprep.subr.bf16.mxu0 0
          %6219 = vmatpush1.bf16.msra.mxu0 %v5929
          %6220 = vmatprep.subr.bf16.mxu0 0
          %6221 = vmatpush1.bf16.msra.mxu0 %v5930
          %6222 = vmatprep.mubr.bf16.mxu0 %v5451
          %6223 = vmatmul.mubr.bf16.gmra.mrb[0].mxu0 %v5450
          %v6224 = vpop.f32.mrb[0].mxu0
          %v6225 = vadd.f32 %v6160, %v6224
          %v6226 = vpop.f32.mrb[0].mxu0
          %v6227 = vpop.f32.mrb[0].mxu0
          %v6228 = vadd.f32 %v6163, %v6227
          %v6229 = vpop.f32.mrb[0].mxu0
          %6230 = vmatprep.mubr.bf16.mxu0 %v5459
          %6231 = vmatmul.mubr.bf16.gmra.mrb[0].mxu0 %v5458
          %v6232 = vpop.f32.mrb[0].mxu0
          %v6233 = vadd.f32 %v6168, %v6232
          %v6234 = vpop.f32.mrb[0].mxu0
          %v6235 = vpop.f32.mrb[0].mxu0
          %v6236 = vadd.f32 %v6171, %v6235
          %v6237 = vpop.f32.mrb[0].mxu0
          %6238 = vmatprep.mubr.bf16.mxu0 %v5467
          %6239 = vmatmul.mubr.bf16.gmra.mrb[0].mxu0 %v5466
          %v6240 = vpop.f32.mrb[0].mxu0
          %v6241 = vadd.f32 %v6176, %v6240
          %v6242 = vpop.f32.mrb[0].mxu0
          %v6243 = vpop.f32.mrb[0].mxu0
          %v6244 = vadd.f32 %v6179, %v6243
          %v6245 = vpop.f32.mrb[0].mxu0
          %6246 = vmatprep.mubr.bf16.mxu0 %v5475
          %6247 = vmatmul.mubr.bf16.gmra.mrb[0].mxu0 %v5474
          %v6248 = vpop.f32.mrb[0].mxu0
          %v6249 = vadd.f32 %v6184, %v6248
          %v6250 = vpop.f32.mrb[0].mxu0
          %v6251 = vpop.f32.mrb[0].mxu0
          %v6252 = vadd.f32 %v6187, %v6251
          %v6253 = vpop.f32.mrb[0].mxu0
          %6254 = vdwg.mxu0
          %6255 = vst [vmem:[#allocation18] sm:$0xff] %v6225
          %6256 = vst [vmem:[#allocation18 + $0x8] sm:$0xff] %v6228
          %6257 = vst [vmem:[#allocation18 + $0x10] sm:$0xff] %v6233
          %6258 = vst [vmem:[#allocation18 + $0x18] sm:$0xff] %v6236
          %6259 = vst [vmem:[#allocation18 + $0x20] sm:$0xff] %v6241
          %6260 = vst [vmem:[#allocation18 + $0x28] sm:$0xff] %v6244
          %6261 = vst [vmem:[#allocation18 + $0x30] sm:$0xff] %v6249
          %6262 = vst [vmem:[#allocation18 + $0x38] sm:$0xff] %v6252
        $region104: #{tpu_custom_call.1} parent=55 // pred_fallthru
          _
        // Predicated region
        $region105: #{tpu_custom_call.1} parent=55 // pred_check
          %p6263 = pneg %p252
        $region106: #{tpu_custom_call.1} parent=55 // pred_check_branch
          %6265 = sbr.rel (%p6263) target = $region108
        $region107: #{tpu_custom_call.1} parent=55 // pred_region
          %s6267 = ssub.s32 1024, 1024
          %6268 = vsyncadd [#allocation5], %s6267
          %s6269 = sshll.u32 [#allocation18], 4
          %s6270 = int_to_ptr.vmem [resolvable:$true] %s6269
          %6275 = dma.vmem_to_hbm [thread:$0]  %s6270, 1024, %s9, [#allocation5], 128, 128, 8
        $region108: #{tpu_custom_call.1} parent=55 // pred_fallthru
          _
        // Predicated region
        $region109: #{tpu_custom_call.1} parent=55 // pred_check
          %p6276 = pneg %p252
        $region110: #{tpu_custom_call.1} parent=55 // pred_check_branch
          %6278 = sbr.rel (%p6276) target = $region112
        $region111: #{tpu_custom_call.1} parent=55 // pred_region
          %6279 = dma.done [#allocation5], 1024
        $region112: #{tpu_custom_call.1} parent=55 // pred_fallthru
          _
      $region56: #{tpu_custom_call.1} parent=5 // pred_fallthru
        _
      %p6280 = scmp.le.s32.totalorder 2, %s25
      // Predicated region
      $region113: #{tpu_custom_call.1} parent=5 // pred_check
        %p6281 = pneg %p6280
      $region114: #{tpu_custom_call.1} parent=5 // pred_check_branch
        %6283 = sbr.rel (%p6281) target = $region116
      $region115: #{tpu_custom_call.1} parent=5 // pred_region
        %s6284 = ssub.s32 %s25, 2
      $region116: #{tpu_custom_call.1} parent=5 // pred_fallthru
        _
    $region6: #{tpu_custom_call.1} parent=1 // loop_footer
      %s29 = sadd.s32 1, %s25
    $region7: #{tpu_custom_call.1} parent=1 // loop_footer_branch
      %24 = sbr.rel target = $region3
    $region8: #{tpu_custom_call.1} parent=1 // loop_exit
      _
    %6285 = vsyncpa [#allocation4], 1
    %s6286 = scalar_lea.sflag [#allocation4], 1
    %6287 = vsyncpa %s6286, 1
    %6288 = vsyncpa [#allocation7], 1
    %s6289 = scalar_lea.sflag [#allocation7], 1
    %6290 = vsyncpa %s6289, 1
    %6291 = vsyncpa [#allocation10], 1
    %s6292 = scalar_lea.sflag [#allocation10], 1
    %6293 = vsyncpa %s6292, 1
    %6294 = vsyncpa [#allocation13], 1
    %6295 = vsyncpa [#allocation16], 1
    %6296 = vsyncpa [#allocation5], 1
    %s6297 = scalar_lea.sflag [#allocation5], 1
    %6298 = vsyncpa %s6297, 1

</llo_original>
